<compile_context>
chip_gen: v7x
topology: tpu7x:2x2x1
jax: 0.10.0
libtpu: 0.0.40
codegen_flags: <defaults>
</compile_context>

<pallas_src>
import jax
import jax.numpy as jnp
from jax.experimental import pallas as pl
from jax.experimental.pallas import tpu as pltpu


_BN_EPS = 1e-5


# ----------------------------------------------------------------------------
# Kernel.  Grid = (batch tiles, point tiles); point axis is the reduction axis.
#   x_ref    : (TB, 3, TN)  native channels-first block (lane-dense in points)
#   w*/b*    : folded (conv|fc)+BN weights (C_out, C_in) / biases (C_out, 1)
#   w6/b6/id : fc3 weight/bias and identity, padded to 128 output channels
#   o_ref    : (1, 128, TB) per-batch-tile output block
#   feat_ref : (1024, TB)   VMEM scratch, running max over point tiles
# ----------------------------------------------------------------------------
def stn3d_kernel(x_ref,
                 w1_ref, b1_ref,
                 w2_ref, b2_ref,
                 w3_ref, b3_ref,
                 w4_ref, b4_ref,
                 w5_ref, b5_ref,
                 w6_ref, b6_ref,
                 iden_ref,
                 o_ref,
                 feat_ref):
    n = pl.program_id(1)
    TB = x_ref.shape[0]

    @pl.when(n == 0)
    def _init():
        feat_ref[...] = jnp.full(feat_ref.shape, -jnp.inf, feat_ref.dtype)

    w1 = w1_ref[...]                                   # (64, 3)   f32
    b1 = b1_ref[...]                                   # (64, 1)   f32
    b2 = b2_ref[...]                                   # (128, 1)  f32

    cols = []
    for b in range(TB):                                # static unroll, TB <= 8
        xb = x_ref[b]                                  # (3, TN) f32
        # conv1 + bn1 + relu on the VPU (a K=3 matmul would waste MXU depth).
        h = (w1[:, 0:1] * xb[0:1, :]
             + w1[:, 1:2] * xb[1:2, :]
             + w1[:, 2:3] * xb[2:3, :]
             + b1)
        h = jnp.maximum(h, 0.0)                        # (64, TN)
        # conv2 + bn2 + relu on the MXU: bf16 inputs, f32 accumulation.
        h = jnp.dot(w2_ref[...], h.astype(jnp.bfloat16),
                    preferred_element_type=jnp.float32) + b2
        h = jnp.maximum(h, 0.0)                        # (128, TN)
        # conv3 raw scores only; bn3 bias + relu commute with the per-channel
        # max over points, so they are deferred to the FC stage.
        s = jnp.dot(w3_ref[...], h.astype(jnp.bfloat16),
                    preferred_element_type=jnp.float32)  # (1024, TN)
        cols.append(jnp.max(s, axis=1, keepdims=True))   # (1024, 1)

    tile_max = jnp.concatenate(cols, axis=1)           # (1024, TB)
    feat_ref[...] = jnp.maximum(feat_ref[...], tile_max)

    @pl.when(n == pl.num_programs(1) - 1)
    def _fc():
        # Deferred bn3 bias + relu on the pooled feature.
        feat = jnp.maximum(feat_ref[...] + b3_ref[...], 0.0)    # (1024, TB)
        g = jnp.dot(w4_ref[...], feat.astype(jnp.bfloat16),
                    preferred_element_type=jnp.float32) + b4_ref[...]
        g = jnp.maximum(g, 0.0)                                 # (512, TB)
        g = jnp.dot(w5_ref[...], g.astype(jnp.bfloat16),
                    preferred_element_type=jnp.float32) + b5_ref[...]
        g = jnp.maximum(g, 0.0)                                 # (256, TB)
        # fc3 tail stays f32; output channels padded to 128.
        g = (jnp.dot(w6_ref[...], g, preferred_element_type=jnp.float32)
             + b6_ref[...] + iden_ref[...])                     # (128, TB)
        o_ref[0] = g


# ----------------------------------------------------------------------------
# Parameter construction (deterministic PyTorch-like uniform init) + BN fold.
# Weights are stored channels-first: (C_out, C_in); biases as (C_out, 1).
# ----------------------------------------------------------------------------
def _uniform(key, shape, fan_in):
    bound = 1.0 / jnp.sqrt(jnp.asarray(fan_in, jnp.float32))
    return jax.random.uniform(key, shape, jnp.float32, -bound, bound)


def _make_layer(key, c_in, c_out, w_dtype=jnp.float32):
    kw, kb = jax.random.split(key)
    w = _uniform(kw, (c_out, c_in), c_in)
    b = _uniform(kb, (c_out, 1), c_in)
    scale = (1.0 + _BN_EPS) ** -0.5   # BN eval: gamma=1, beta=0, mean=0, var=1
    return (w * scale).astype(w_dtype), (b * scale).astype(jnp.float32)


def make_params(seed=0):
    keys = jax.random.split(jax.random.PRNGKey(seed), 6)
    w1, b1 = _make_layer(keys[0], 3, 64, jnp.float32)       # conv1+bn1 (VPU)
    w2, b2 = _make_layer(keys[1], 64, 128, jnp.bfloat16)    # conv2+bn2
    w3, b3 = _make_layer(keys[2], 128, 1024, jnp.bfloat16)  # conv3+bn3
    w4, b4 = _make_layer(keys[3], 1024, 512, jnp.bfloat16)  # fc1+bn4
    w5, b5 = _make_layer(keys[4], 512, 256, jnp.bfloat16)   # fc2+bn5
    kw, kb = jax.random.split(keys[5])                       # fc3 (no BN)
    w6 = _uniform(kw, (9, 256), 256)
    b6 = _uniform(kb, (9, 1), 256)
    # Pad fc3's output dim 9 -> 128 (sublane-friendly, sliced off in wrapper).
    w6p = jnp.zeros((128, 256), jnp.float32).at[:9, :].set(w6)
    b6p = jnp.zeros((128, 1), jnp.float32).at[:9, :].set(b6)
    idenp = jnp.zeros((128, 1), jnp.float32).at[jnp.array([0, 4, 8]), 0].set(1.0)
    return (w1, b1, w2, b2, w3, b3, w4, b4, w5, b5, w6p, b6p, idenp)


# ----------------------------------------------------------------------------
# Wrapper
# ----------------------------------------------------------------------------
def _choose_tiles(B, N):
    TB = min(B, 8)
    TN = N
    if N > 1024:
        for cand in (512, 256, 128):
            if N % cand == 0:
                TN = cand
                break
    # TODO(synk): very large N that is not a multiple of 128 runs as a single
    # point tile; pad + mask the point axis if that ever exceeds VMEM.
    return TB, TN


def _full_spec(p):
    nd = p.ndim
    return pl.BlockSpec(p.shape, lambda b, n: (0,) * nd)


@jax.jit
def stn3d_forward(x, params):
    """x: (B, 3, N) in PyTorch NCW layout.  Returns (B, 3, 3)."""
    B, C, N = x.shape
    assert C == 3
    x = x.astype(jnp.float32)

    TB, TN = _choose_tiles(B, N)
    n_btiles = -(-B // TB)
    B_pad = n_btiles * TB
    if B_pad != B:
        # Padded batch rows are computed independently and sliced off below.
        x = jnp.pad(x, ((0, B_pad - B), (0, 0), (0, 0)))

    grid = (n_btiles, N // TN)

    in_specs = [pl.BlockSpec((TB, 3, TN), lambda b, n: (b, 0, n))]
    in_specs += [_full_spec(p) for p in params]

    flops = 2 * B_pad * (N * (3 * 64 + 64 * 128 + 128 * 1024)
                         + 1024 * 512 + 512 * 256 + 256 * 128)
    bytes_accessed = int(x.size * 4 + n_btiles * 128 * TB * 4
                         + sum(p.size * p.dtype.itemsize for p in params))

    out = pl.pallas_call(
        stn3d_kernel,
        out_shape=jax.ShapeDtypeStruct((n_btiles, 128, TB), jnp.float32),
        grid_spec=pltpu.PrefetchScalarGridSpec(
            num_scalar_prefetch=0,
            grid=grid,
            in_specs=in_specs,
            out_specs=pl.BlockSpec((1, 128, TB), lambda b, n: (b, 0, 0)),
            scratch_shapes=[pltpu.VMEM((1024, TB), jnp.float32)],
        ),
        compiler_params=pltpu.CompilerParams(
            dimension_semantics=("parallel", "arbitrary"),
            vmem_limit_bytes=32 * 1024 * 1024,
        ),
        cost_estimate=pl.CostEstimate(
            flops=int(flops), transcendentals=0,
            bytes_accessed=bytes_accessed),
    )(x, *params)

    out = jnp.transpose(out, (0, 2, 1)).reshape(B_pad, 128)    # tiny XLA fixup
    return out[:B, :9].reshape(B, 3, 3)


# Pure-JAX reference (mirrors the kernel's bf16 casts so tolerances stay tight).
def stn3d_reference(x, params):
    (w1, b1, w2, b2, w3, b3, w4, b4, w5, b5, w6p, b6p, idenp) = params
    f32, bf16 = jnp.float32, jnp.bfloat16
    x = x.astype(f32)                                           # (B, 3, N)
    h = jnp.maximum(jnp.einsum('oc,bcn->bon', w1, x) + b1[None], 0.0)
    h = jnp.maximum(jnp.einsum('oc,bcn->bon', w2, h.astype(bf16),
                               preferred_element_type=f32) + b2[None], 0.0)
    s = jnp.einsum('oc,bcn->bon', w3, h.astype(bf16),
                   preferred_element_type=f32)                  # (B, 1024, N)
    feat = jnp.maximum(jnp.max(s, axis=2) + b3[:, 0][None], 0.0)  # (B, 1024)
    g = jnp.maximum(jnp.einsum('oc,bc->bo', w4, feat.astype(bf16),
                               preferred_element_type=f32) + b4[:, 0][None], 0.0)
    g = jnp.maximum(jnp.einsum('oc,bc->bo', w5, g.astype(bf16),
                               preferred_element_type=f32) + b5[:, 0][None], 0.0)
    g = (jnp.einsum('oc,bc->bo', w6p, g, preferred_element_type=f32)
         + b6p[:, 0][None] + idenp[:, 0][None])
    return g[:, :9].reshape(-1, 3, 3)


if __name__ == "__main__":
    key = jax.random.PRNGKey(0)
    B, N = 2, 32
    x = jax.random.normal(key, (B, 3, N), jnp.float32)          # PyTorch NCW input

    params = make_params(seed=0)

    out = jax.block_until_ready(stn3d_forward(x, params))
    ref = stn3d_reference(x, params)

    assert out.shape == (B, 3, 3), out.shape
    err = float(jnp.max(jnp.abs(out - ref)))
    assert jnp.allclose(out, ref, atol=2e-2, rtol=2e-2), f"max abs err {err}"

    print("KERNEL_OK")
</pallas_src>

<mosaic_0001>
module attributes {stable_mosaic.version = 11 : i64} {
  func.func @stn3d_kernel(%arg0: i32, %arg1: i32, %arg2: memref<2x3x32xf32, #tpu.memory_space<vmem>>, %arg3: memref<64x3xf32, #tpu.memory_space<vmem>>, %arg4: memref<64x1xf32, #tpu.memory_space<vmem>>, %arg5: memref<128x64xbf16, #tpu.memory_space<vmem>>, %arg6: memref<128x1xf32, #tpu.memory_space<vmem>>, %arg7: memref<1024x128xbf16, #tpu.memory_space<vmem>>, %arg8: memref<1024x1xf32, #tpu.memory_space<vmem>>, %arg9: memref<512x1024xbf16, #tpu.memory_space<vmem>>, %arg10: memref<512x1xf32, #tpu.memory_space<vmem>>, %arg11: memref<256x512xbf16, #tpu.memory_space<vmem>>, %arg12: memref<256x1xf32, #tpu.memory_space<vmem>>, %arg13: memref<128x256xf32, #tpu.memory_space<vmem>>, %arg14: memref<128x1xf32, #tpu.memory_space<vmem>>, %arg15: memref<128x1xf32, #tpu.memory_space<vmem>>, %arg16: memref<1x128x2xf32, #tpu.memory_space<vmem>>, %arg17: memref<1024x2xf32, #tpu.memory_space<vmem>>) attributes {dimension_semantics = [#tpu.dimension_semantics<parallel>, #tpu.dimension_semantics<arbitrary>], iteration_bounds = array<i64: 1, 1>, scalar_prefetch = 0 : i64, scratch_operands = 1 : i64, tpu.core_type = #tpu.core_type<tc>, window_params = [{transform_indices = @transform_0, window_bounds = array<i64: 2, 3, 32>}, {pipeline_mode = #tpu.pipeline_mode<synchronous>, transform_indices = @transform_1, window_bounds = array<i64: 64, 3>}, {pipeline_mode = #tpu.pipeline_mode<synchronous>, transform_indices = @transform_2, window_bounds = array<i64: 64, 1>}, {pipeline_mode = #tpu.pipeline_mode<synchronous>, transform_indices = @transform_3, window_bounds = array<i64: 128, 64>}, {pipeline_mode = #tpu.pipeline_mode<synchronous>, transform_indices = @transform_4, window_bounds = array<i64: 128, 1>}, {pipeline_mode = #tpu.pipeline_mode<synchronous>, transform_indices = @transform_5, window_bounds = array<i64: 1024, 128>}, {pipeline_mode = #tpu.pipeline_mode<synchronous>, transform_indices = @transform_6, window_bounds = array<i64: 1024, 1>}, {pipeline_mode = #tpu.pipeline_mode<synchronous>, transform_indices = @transform_7, window_bounds = array<i64: 512, 1024>}, {pipeline_mode = #tpu.pipeline_mode<synchronous>, transform_indices = @transform_8, window_bounds = array<i64: 512, 1>}, {pipeline_mode = #tpu.pipeline_mode<synchronous>, transform_indices = @transform_9, window_bounds = array<i64: 256, 512>}, {pipeline_mode = #tpu.pipeline_mode<synchronous>, transform_indices = @transform_10, window_bounds = array<i64: 256, 1>}, {pipeline_mode = #tpu.pipeline_mode<synchronous>, transform_indices = @transform_11, window_bounds = array<i64: 128, 256>}, {pipeline_mode = #tpu.pipeline_mode<synchronous>, transform_indices = @transform_12, window_bounds = array<i64: 128, 1>}, {pipeline_mode = #tpu.pipeline_mode<synchronous>, transform_indices = @transform_13, window_bounds = array<i64: 128, 1>}, {transform_indices = @transform_14, window_bounds = array<i64: 1, 128, 2>}]} {
    %c0_i32 = arith.constant 0 : i32
    %0 = arith.cmpi eq, %arg1, %c0_i32 : i32
    %1 = arith.extui %0 : i1 to i32
    %c0_i32_0 = arith.constant 0 : i32
    %2 = arith.cmpi ne, %1, %c0_i32_0 : i32
    scf.if %2 {
      %cst_34 = arith.constant 0xFF800000 : f32
      %83 = vector.broadcast %cst_34 : f32 to vector<1024x2xf32>
      %c0_35 = arith.constant 0 : index
      %c0_36 = arith.constant 0 : index
      %84 = vector.load %arg17[%c0_35, %c0_36] : memref<1024x2xf32, #tpu.memory_space<vmem>>, vector<1024x2xf32>
      tpu.vector_store %arg17[%c0_35, %c0_36], %83 {strides = array<i32>} : memref<1024x2xf32, #tpu.memory_space<vmem>>, vector<1024x2xf32>,
    } else {
    }
    %c0 = arith.constant 0 : index
    %c0_1 = arith.constant 0 : index
    %3 = vector.load %arg3[%c0, %c0_1] : memref<64x3xf32, #tpu.memory_space<vmem>>, vector<64x3xf32>
    %c0_2 = arith.constant 0 : index
    %c0_3 = arith.constant 0 : index
    %4 = vector.load %arg4[%c0_2, %c0_3] : memref<64x1xf32, #tpu.memory_space<vmem>>, vector<64x1xf32>
    %c0_4 = arith.constant 0 : index
    %c0_5 = arith.constant 0 : index
    %5 = vector.load %arg6[%c0_4, %c0_5] : memref<128x1xf32, #tpu.memory_space<vmem>>, vector<128x1xf32>
    %c0_6 = arith.constant 0 : index
    %c0_7 = arith.constant 0 : index
    %c0_8 = arith.constant 0 : index
    %6 = vector.load %arg2[%c0_6, %c0_7, %c0_8] : memref<2x3x32xf32, #tpu.memory_space<vmem>>, vector<1x3x32xf32>
    %7 = vector.shape_cast %6 : vector<1x3x32xf32> to vector<3x32xf32>
    %8 = vector.extract_strided_slice %3 {offsets = [0, 0], sizes = [64, 1], strides = [1, 1]} : vector<64x3xf32> to vector<64x1xf32>
    %9 = vector.extract_strided_slice %7 {offsets = [0, 0], sizes = [1, 32], strides = [1, 1]} : vector<3x32xf32> to vector<1x32xf32>
    %10 = vector.broadcast %8 : vector<64x1xf32> to vector<64x32xf32>
    %11 = vector.broadcast %9 : vector<1x32xf32> to vector<64x32xf32>
    %12 = arith.mulf %10, %11 : vector<64x32xf32>
    %13 = vector.extract_strided_slice %3 {offsets = [0, 1], sizes = [64, 1], strides = [1, 1]} : vector<64x3xf32> to vector<64x1xf32>
    %14 = vector.extract_strided_slice %7 {offsets = [1, 0], sizes = [1, 32], strides = [1, 1]} : vector<3x32xf32> to vector<1x32xf32>
    %15 = vector.broadcast %13 : vector<64x1xf32> to vector<64x32xf32>
    %16 = vector.broadcast %14 : vector<1x32xf32> to vector<64x32xf32>
    %17 = arith.mulf %15, %16 : vector<64x32xf32>
    %18 = arith.addf %12, %17 : vector<64x32xf32>
    %19 = vector.extract_strided_slice %3 {offsets = [0, 2], sizes = [64, 1], strides = [1, 1]} : vector<64x3xf32> to vector<64x1xf32>
    %20 = vector.extract_strided_slice %7 {offsets = [2, 0], sizes = [1, 32], strides = [1, 1]} : vector<3x32xf32> to vector<1x32xf32>
    %21 = vector.broadcast %19 : vector<64x1xf32> to vector<64x32xf32>
    %22 = vector.broadcast %20 : vector<1x32xf32> to vector<64x32xf32>
    %23 = arith.mulf %21, %22 : vector<64x32xf32>
    %24 = arith.addf %18, %23 : vector<64x32xf32>
    %25 = vector.broadcast %4 : vector<64x1xf32> to vector<64x32xf32>
    %26 = arith.addf %24, %25 : vector<64x32xf32>
    %cst = arith.constant 0.000000e+00 : f32
    %27 = vector.broadcast %cst : f32 to vector<64x32xf32>
    %28 = arith.maximumf %26, %27 : vector<64x32xf32>
    %c0_9 = arith.constant 0 : index
    %c0_10 = arith.constant 0 : index
    %29 = vector.load %arg5[%c0_9, %c0_10] : memref<128x64xbf16, #tpu.memory_space<vmem>>, vector<128x64xbf16>
    %30 = arith.truncf %28 : vector<64x32xf32> to vector<64x32xbf16>
    %cst_11 = arith.constant dense<0.000000e+00> : vector<128x32xf32>
    %31 = tpu.matmul %29, %30, %cst_11 {dimension_numbers = #tpu.dot_dimension_numbers<[1], [0], [0], [1], [0, 0, 1, 1], [], []>} : vector<128x64xbf16>, vector<64x32xbf16>, vector<128x32xf32> -> vector<128x32xf32>
    %32 = vector.broadcast %5 : vector<128x1xf32> to vector<128x32xf32>
    %33 = arith.addf %31, %32 : vector<128x32xf32>
    %cst_12 = arith.constant 0.000000e+00 : f32
    %34 = vector.broadcast %cst_12 : f32 to vector<128x32xf32>
    %35 = arith.maximumf %33, %34 : vector<128x32xf32>
    %c0_13 = arith.constant 0 : index
    %c0_14 = arith.constant 0 : index
    %36 = vector.load %arg7[%c0_13, %c0_14] : memref<1024x128xbf16, #tpu.memory_space<vmem>>, vector<1024x128xbf16>
    %37 = arith.truncf %35 : vector<128x32xf32> to vector<128x32xbf16>
    %cst_15 = arith.constant dense<0.000000e+00> : vector<1024x32xf32>
    %38 = tpu.matmul %36, %37, %cst_15 {dimension_numbers = #tpu.dot_dimension_numbers<[1], [0], [0], [1], [0, 0, 1, 1], [], []>} : vector<1024x128xbf16>, vector<128x32xbf16>, vector<1024x32xf32> -> vector<1024x32xf32>
    %cst_16 = arith.constant dense<0xFF800000> : vector<1024xf32>
    %39 = vector.multi_reduction <maximumf>, %38, %cst_16 [1] : vector<1024x32xf32> to vector<1024xf32>
    %40 = vector.shape_cast %39 : vector<1024xf32> to vector<1024x1xf32>
    %c1 = arith.constant 1 : index
    %c0_17 = arith.constant 0 : index
    %c0_18 = arith.constant 0 : index
    %41 = vector.load %arg2[%c1, %c0_17, %c0_18] : memref<2x3x32xf32, #tpu.memory_space<vmem>>, vector<1x3x32xf32>
    %42 = vector.shape_cast %41 : vector<1x3x32xf32> to vector<3x32xf32>
    %43 = vector.extract_strided_slice %3 {offsets = [0, 0], sizes = [64, 1], strides = [1, 1]} : vector<64x3xf32> to vector<64x1xf32>
    %44 = vector.extract_strided_slice %42 {offsets = [0, 0], sizes = [1, 32], strides = [1, 1]} : vector<3x32xf32> to vector<1x32xf32>
    %45 = vector.broadcast %43 : vector<64x1xf32> to vector<64x32xf32>
    %46 = vector.broadcast %44 : vector<1x32xf32> to vector<64x32xf32>
    %47 = arith.mulf %45, %46 : vector<64x32xf32>
    %48 = vector.extract_strided_slice %3 {offsets = [0, 1], sizes = [64, 1], strides = [1, 1]} : vector<64x3xf32> to vector<64x1xf32>
    %49 = vector.extract_strided_slice %42 {offsets = [1, 0], sizes = [1, 32], strides = [1, 1]} : vector<3x32xf32> to vector<1x32xf32>
    %50 = vector.broadcast %48 : vector<64x1xf32> to vector<64x32xf32>
    %51 = vector.broadcast %49 : vector<1x32xf32> to vector<64x32xf32>
    %52 = arith.mulf %50, %51 : vector<64x32xf32>
    %53 = arith.addf %47, %52 : vector<64x32xf32>
    %54 = vector.extract_strided_slice %3 {offsets = [0, 2], sizes = [64, 1], strides = [1, 1]} : vector<64x3xf32> to vector<64x1xf32>
    %55 = vector.extract_strided_slice %42 {offsets = [2, 0], sizes = [1, 32], strides = [1, 1]} : vector<3x32xf32> to vector<1x32xf32>
    %56 = vector.broadcast %54 : vector<64x1xf32> to vector<64x32xf32>
    %57 = vector.broadcast %55 : vector<1x32xf32> to vector<64x32xf32>
    %58 = arith.mulf %56, %57 : vector<64x32xf32>
    %59 = arith.addf %53, %58 : vector<64x32xf32>
    %60 = vector.broadcast %4 : vector<64x1xf32> to vector<64x32xf32>
    %61 = arith.addf %59, %60 : vector<64x32xf32>
    %cst_19 = arith.constant 0.000000e+00 : f32
    %62 = vector.broadcast %cst_19 : f32 to vector<64x32xf32>
    %63 = arith.maximumf %61, %62 : vector<64x32xf32>
    %c0_20 = arith.constant 0 : index
    %c0_21 = arith.constant 0 : index
    %64 = vector.load %arg5[%c0_20, %c0_21] : memref<128x64xbf16, #tpu.memory_space<vmem>>, vector<128x64xbf16>
    %65 = arith.truncf %63 : vector<64x32xf32> to vector<64x32xbf16>
    %cst_22 = arith.constant dense<0.000000e+00> : vector<128x32xf32>
    %66 = tpu.matmul %64, %65, %cst_22 {dimension_numbers = #tpu.dot_dimension_numbers<[1], [0], [0], [1], [0, 0, 1, 1], [], []>} : vector<128x64xbf16>, vector<64x32xbf16>, vector<128x32xf32> -> vector<128x32xf32>
    %67 = vector.broadcast %5 : vector<128x1xf32> to vector<128x32xf32>
    %68 = arith.addf %66, %67 : vector<128x32xf32>
    %cst_23 = arith.constant 0.000000e+00 : f32
    %69 = vector.broadcast %cst_23 : f32 to vector<128x32xf32>
    %70 = arith.maximumf %68, %69 : vector<128x32xf32>
    %c0_24 = arith.constant 0 : index
    %c0_25 = arith.constant 0 : index
    %71 = vector.load %arg7[%c0_24, %c0_25] : memref<1024x128xbf16, #tpu.memory_space<vmem>>, vector<1024x128xbf16>
    %72 = arith.truncf %70 : vector<128x32xf32> to vector<128x32xbf16>
    %cst_26 = arith.constant dense<0.000000e+00> : vector<1024x32xf32>
    %73 = tpu.matmul %71, %72, %cst_26 {dimension_numbers = #tpu.dot_dimension_numbers<[1], [0], [0], [1], [0, 0, 1, 1], [], []>} : vector<1024x128xbf16>, vector<128x32xbf16>, vector<1024x32xf32> -> vector<1024x32xf32>
    %cst_27 = arith.constant dense<0xFF800000> : vector<1024xf32>
    %74 = vector.multi_reduction <maximumf>, %73, %cst_27 [1] : vector<1024x32xf32> to vector<1024xf32>
    %75 = vector.shape_cast %74 : vector<1024xf32> to vector<1024x1xf32>
    %76 = tpu.concatenate %40, %75 in 1 : vector<1024x1xf32>, vector<1024x1xf32> -> vector<1024x2xf32>
    %c0_28 = arith.constant 0 : index
    %c0_29 = arith.constant 0 : index
    %77 = vector.load %arg17[%c0_28, %c0_29] : memref<1024x2xf32, #tpu.memory_space<vmem>>, vector<1024x2xf32>
    %78 = arith.maximumf %77, %76 : vector<1024x2xf32>
    %c0_30 = arith.constant 0 : index
    %c0_31 = arith.constant 0 : index
    %79 = vector.load %arg17[%c0_30, %c0_31] : memref<1024x2xf32, #tpu.memory_space<vmem>>, vector<1024x2xf32>
    tpu.vector_store %arg17[%c0_30, %c0_31], %78 {strides = array<i32>} : memref<1024x2xf32, #tpu.memory_space<vmem>>, vector<1024x2xf32>,
    %c0_i32_32 = arith.constant 0 : i32
    %80 = arith.cmpi eq, %arg1, %c0_i32_32 : i32
    %81 = arith.extui %80 : i1 to i32
    %c0_i32_33 = arith.constant 0 : i32
    %82 = arith.cmpi ne, %81, %c0_i32_33 : i32
    scf.if %82 {
      %c0_34 = arith.constant 0 : index
      %c0_35 = arith.constant 0 : index
      %83 = vector.load %arg17[%c0_34, %c0_35] : memref<1024x2xf32, #tpu.memory_space<vmem>>, vector<1024x2xf32>
      %c0_36 = arith.constant 0 : index
      %c0_37 = arith.constant 0 : index
      %84 = vector.load %arg8[%c0_36, %c0_37] : memref<1024x1xf32, #tpu.memory_space<vmem>>, vector<1024x1xf32>
      %85 = vector.broadcast %84 : vector<1024x1xf32> to vector<1024x2xf32>
      %86 = arith.addf %83, %85 : vector<1024x2xf32>
      %cst_38 = arith.constant 0.000000e+00 : f32
      %87 = vector.broadcast %cst_38 : f32 to vector<1024x2xf32>
      %88 = arith.maximumf %86, %87 : vector<1024x2xf32>
      %c0_39 = arith.constant 0 : index
      %c0_40 = arith.constant 0 : index
      %89 = vector.load %arg9[%c0_39, %c0_40] : memref<512x1024xbf16, #tpu.memory_space<vmem>>, vector<512x1024xbf16>
      %90 = arith.truncf %88 : vector<1024x2xf32> to vector<1024x2xbf16>
      %cst_41 = arith.constant dense<0.000000e+00> : vector<512x2xf32>
      %91 = tpu.matmul %89, %90, %cst_41 {dimension_numbers = #tpu.dot_dimension_numbers<[1], [0], [0], [1], [0, 0, 1, 1], [], []>} : vector<512x1024xbf16>, vector<1024x2xbf16>, vector<512x2xf32> -> vector<512x2xf32>
      %c0_42 = arith.constant 0 : index
      %c0_43 = arith.constant 0 : index
      %92 = vector.load %arg10[%c0_42, %c0_43] : memref<512x1xf32, #tpu.memory_space<vmem>>, vector<512x1xf32>
      %93 = vector.broadcast %92 : vector<512x1xf32> to vector<512x2xf32>
      %94 = arith.addf %91, %93 : vector<512x2xf32>
      %cst_44 = arith.constant 0.000000e+00 : f32
      %95 = vector.broadcast %cst_44 : f32 to vector<512x2xf32>
      %96 = arith.maximumf %94, %95 : vector<512x2xf32>
      %c0_45 = arith.constant 0 : index
      %c0_46 = arith.constant 0 : index
      %97 = vector.load %arg11[%c0_45, %c0_46] : memref<256x512xbf16, #tpu.memory_space<vmem>>, vector<256x512xbf16>
      %98 = arith.truncf %96 : vector<512x2xf32> to vector<512x2xbf16>
      %cst_47 = arith.constant dense<0.000000e+00> : vector<256x2xf32>
      %99 = tpu.matmul %97, %98, %cst_47 {dimension_numbers = #tpu.dot_dimension_numbers<[1], [0], [0], [1], [0, 0, 1, 1], [], []>} : vector<256x512xbf16>, vector<512x2xbf16>, vector<256x2xf32> -> vector<256x2xf32>
      %c0_48 = arith.constant 0 : index
      %c0_49 = arith.constant 0 : index
      %100 = vector.load %arg12[%c0_48, %c0_49] : memref<256x1xf32, #tpu.memory_space<vmem>>, vector<256x1xf32>
      %101 = vector.broadcast %100 : vector<256x1xf32> to vector<256x2xf32>
      %102 = arith.addf %99, %101 : vector<256x2xf32>
      %cst_50 = arith.constant 0.000000e+00 : f32
      %103 = vector.broadcast %cst_50 : f32 to vector<256x2xf32>
      %104 = arith.maximumf %102, %103 : vector<256x2xf32>
      %c0_51 = arith.constant 0 : index
      %c0_52 = arith.constant 0 : index
      %105 = vector.load %arg13[%c0_51, %c0_52] : memref<128x256xf32, #tpu.memory_space<vmem>>, vector<128x256xf32>
      %cst_53 = arith.constant dense<0.000000e+00> : vector<128x2xf32>
      %106 = tpu.matmul %105, %104, %cst_53 {dimension_numbers = #tpu.dot_dimension_numbers<[1], [0], [0], [1], [0, 0, 1, 1], [], []>} : vector<128x256xf32>, vector<256x2xf32>, vector<128x2xf32> -> vector<128x2xf32>
      %c0_54 = arith.constant 0 : index
      %c0_55 = arith.constant 0 : index
      %107 = vector.load %arg14[%c0_54, %c0_55] : memref<128x1xf32, #tpu.memory_space<vmem>>, vector<128x1xf32>
      %108 = vector.broadcast %107 : vector<128x1xf32> to vector<128x2xf32>
      %109 = arith.addf %106, %108 : vector<128x2xf32>
      %c0_56 = arith.constant 0 : index
      %c0_57 = arith.constant 0 : index
      %110 = vector.load %arg15[%c0_56, %c0_57] : memref<128x1xf32, #tpu.memory_space<vmem>>, vector<128x1xf32>
      %111 = vector.broadcast %110 : vector<128x1xf32> to vector<128x2xf32>
      %112 = arith.addf %109, %111 : vector<128x2xf32>
      %c0_58 = arith.constant 0 : index
      %c0_59 = arith.constant 0 : index
      %c0_60 = arith.constant 0 : index
      %113 = vector.load %arg16[%c0_58, %c0_59, %c0_60] : memref<1x128x2xf32, #tpu.memory_space<vmem>>, vector<1x128x2xf32>
      %114 = vector.shape_cast %113 : vector<1x128x2xf32> to vector<128x2xf32>
      %115 = vector.shape_cast %112 : vector<128x2xf32> to vector<1x128x2xf32>
      tpu.vector_store %arg16[%c0_58, %c0_59, %c0_60], %115 {strides = array<i32>} : memref<1x128x2xf32, #tpu.memory_space<vmem>>, vector<1x128x2xf32>,
    } else {
    }
    return
  }
  func.func @transform_0(%arg0: i32, %arg1: i32) -> (i32, i32, i32) {
    %c0_i32 = arith.constant 0 : i32
    %c0_i32_0 = arith.constant 0 : i32
    return %arg0, %c0_i32, %arg1 : i32, i32, i32
  }
  func.func @transform_1(%arg0: i32, %arg1: i32) -> (i32, i32) {
    %c0_i32 = arith.constant 0 : i32
    %c0_i32_0 = arith.constant 0 : i32
    %c0_i32_1 = arith.constant 0 : i32
    return %c0_i32, %c0_i32_0 : i32, i32
  }
  func.func @transform_2(%arg0: i32, %arg1: i32) -> (i32, i32) {
    %c0_i32 = arith.constant 0 : i32
    %c0_i32_0 = arith.constant 0 : i32
    %c0_i32_1 = arith.constant 0 : i32
    return %c0_i32, %c0_i32_0 : i32, i32
  }
  func.func @transform_3(%arg0: i32, %arg1: i32) -> (i32, i32) {
    %c0_i32 = arith.constant 0 : i32
    %c0_i32_0 = arith.constant 0 : i32
    %c0_i32_1 = arith.constant 0 : i32
    return %c0_i32, %c0_i32_0 : i32, i32
  }
  func.func @transform_4(%arg0: i32, %arg1: i32) -> (i32, i32) {
    %c0_i32 = arith.constant 0 : i32
    %c0_i32_0 = arith.constant 0 : i32
    %c0_i32_1 = arith.constant 0 : i32
    return %c0_i32, %c0_i32_0 : i32, i32
  }
  func.func @transform_5(%arg0: i32, %arg1: i32) -> (i32, i32) {
    %c0_i32 = arith.constant 0 : i32
    %c0_i32_0 = arith.constant 0 : i32
    %c0_i32_1 = arith.constant 0 : i32
    return %c0_i32, %c0_i32_0 : i32, i32
  }
  func.func @transform_6(%arg0: i32, %arg1: i32) -> (i32, i32) {
    %c0_i32 = arith.constant 0 : i32
    %c0_i32_0 = arith.constant 0 : i32
    %c0_i32_1 = arith.constant 0 : i32
    return %c0_i32, %c0_i32_0 : i32, i32
  }
  func.func @transform_7(%arg0: i32, %arg1: i32) -> (i32, i32) {
    %c0_i32 = arith.constant 0 : i32
    %c0_i32_0 = arith.constant 0 : i32
    %c0_i32_1 = arith.constant 0 : i32
    return %c0_i32, %c0_i32_0 : i32, i32
  }
  func.func @transform_8(%arg0: i32, %arg1: i32) -> (i32, i32) {
    %c0_i32 = arith.constant 0 : i32
    %c0_i32_0 = arith.constant 0 : i32
    %c0_i32_1 = arith.constant 0 : i32
    return %c0_i32, %c0_i32_0 : i32, i32
  }
  func.func @transform_9(%arg0: i32, %arg1: i32) -> (i32, i32) {
    %c0_i32 = arith.constant 0 : i32
    %c0_i32_0 = arith.constant 0 : i32
    %c0_i32_1 = arith.constant 0 : i32
    return %c0_i32, %c0_i32_0 : i32, i32
  }
  func.func @transform_10(%arg0: i32, %arg1: i32) -> (i32, i32) {
    %c0_i32 = arith.constant 0 : i32
    %c0_i32_0 = arith.constant 0 : i32
    %c0_i32_1 = arith.constant 0 : i32
    return %c0_i32, %c0_i32_0 : i32, i32
  }
  func.func @transform_11(%arg0: i32, %arg1: i32) -> (i32, i32) {
    %c0_i32 = arith.constant 0 : i32
    %c0_i32_0 = arith.constant 0 : i32
    %c0_i32_1 = arith.constant 0 : i32
    return %c0_i32, %c0_i32_0 : i32, i32
  }
  func.func @transform_12(%arg0: i32, %arg1: i32) -> (i32, i32) {
    %c0_i32 = arith.constant 0 : i32
    %c0_i32_0 = arith.constant 0 : i32
    %c0_i32_1 = arith.constant 0 : i32
    return %c0_i32, %c0_i32_0 : i32, i32
  }
  func.func @transform_13(%arg0: i32, %arg1: i32) -> (i32, i32) {
    %c0_i32 = arith.constant 0 : i32
    %c0_i32_0 = arith.constant 0 : i32
    %c0_i32_1 = arith.constant 0 : i32
    return %c0_i32, %c0_i32_0 : i32, i32
  }
  func.func @transform_14(%arg0: i32, %arg1: i32) -> (i32, i32, i32) {
    %c0_i32 = arith.constant 0 : i32
    %c0_i32_0 = arith.constant 0 : i32
    %c0_i32_1 = arith.constant 0 : i32
    return %arg0, %c0_i32, %c0_i32_0 : i32, i32, i32
  }
}

</mosaic_0001>

<llo_original>
// kernel: stn3d_forward.1
$region0: #{stn3d_forward.1}
  #allocation0 [shape = 'u32[]', space=smem, size = 0x4, offset = 0x4, fixed_abs, tag = 'smem constant byte address 0x4 - core index']
  #allocation1 [shape = 'u32[144,128]{1,0:T(1,128)}', space=vmem, size = 0x12000, scoped, tag = 'internal scratch']
  #allocation2 [shape = 'f32[1024,2]{1,0:T(8,128)}', space=vmem, size = 0x80000, scoped, tag = 'scratch operand']
  %s0 = inlined_call_operand.vmem [shape: f32[2,3,32], index: 0, kind: input, shape index: {}]
  %s1 = inlined_call_operand.vmem [shape: f32[64,3], index: 1, kind: input, shape index: {}]
  %s2 = inlined_call_operand.vmem [shape: f32[64,1], index: 2, kind: input, shape index: {}]
  %s3 = inlined_call_operand.vmem [shape: bf16[128,64], index: 3, kind: input, shape index: {}]
  %s4 = inlined_call_operand.vmem [shape: f32[128,1], index: 4, kind: input, shape index: {}]
  %s5 = inlined_call_operand.hbm [shape: bf16[1024,128], index: 5, kind: input, shape index: {}]
  %s6 = inlined_call_operand.vmem [shape: f32[1024,1], index: 6, kind: input, shape index: {}]
  %s7 = inlined_call_operand.vmem [shape: bf16[512,1024], index: 7, kind: input, shape index: {}]
  %s8 = inlined_call_operand.vmem [shape: f32[512,1], index: 8, kind: input, shape index: {}]
  %s9 = inlined_call_operand.hbm [shape: bf16[256,512], index: 9, kind: input, shape index: {}]
  %s10 = inlined_call_operand.vmem [shape: f32[256,1], index: 10, kind: input, shape index: {}]
  %s11 = inlined_call_operand.vmem [shape: f32[128,256], index: 11, kind: input, shape index: {}]
  %s12 = inlined_call_operand.vmem [shape: f32[128,1], index: 12, kind: input, shape index: {}]
  %s13 = inlined_call_operand.vmem [shape: f32[128,1], index: 13, kind: input, shape index: {}]
  %s14 = inlined_call_operand.vmem [shape: f32[1,128,2], index: 14, kind: output, shape index: {}]
  %s15 = sld [smem:[#allocation0]]
  $region82: #{stn3d_forward.1} parent=0
    _
  %s17 = ssub.s32 1, %s15
  %s18 = scalar_select 0, %s17, %s15
  $region1: #{stn3d_forward.1} parent=0
    #allocation3 [shape = 'u8[262144]{0}', space=vmem, size = 0x40000, scoped, tag = 'input window, operand 5, single buffered']
    #allocation4 [shape = 's32[1]{0}', space=sflag, size = 0x4, scoped, tag = 'scoped memory for stn3d_forward.1']
    #allocation5 [shape = 'u8[262144]{0}', space=vmem, size = 0x40000, scoped, tag = 'input window, operand 9, single buffered']
    #allocation6 [shape = 's32[1]{0}', space=sflag, size = 0x4, scoped, tag = 'scoped memory for stn3d_forward.1']
    %19 = vsyncpa [#allocation4], 0
    %20 = vsyncpa [#allocation6], 0
    // Predicated region
    $region2: #{stn3d_forward.1} parent=1 // pred_check
      _
    $region3: #{stn3d_forward.1} parent=1 // pred_check_branch
      %22 = sbr.rel (0) target = $region5
    $region4: #{stn3d_forward.1} parent=1 // pred_region
      _
    $region5: #{stn3d_forward.1} parent=1 // pred_fallthru
      _
    // Predicated region
    $region6: #{stn3d_forward.1} parent=1 // pred_check
      _
    $region7: #{stn3d_forward.1} parent=1 // pred_check_branch
      %24 = sbr.rel (0) target = $region9
    $region8: #{stn3d_forward.1} parent=1 // pred_region
      _
    $region9: #{stn3d_forward.1} parent=1 // pred_fallthru
      _
    // Predicated region
    $region10: #{stn3d_forward.1} parent=1 // pred_check
      _
    $region11: #{stn3d_forward.1} parent=1 // pred_check_branch
      %26 = sbr.rel (0) target = $region13
    $region12: #{stn3d_forward.1} parent=1 // pred_region
      _
    $region13: #{stn3d_forward.1} parent=1 // pred_fallthru
      _
    // Predicated region
    $region14: #{stn3d_forward.1} parent=1 // pred_check
      _
    $region15: #{stn3d_forward.1} parent=1 // pred_check_branch
      %28 = sbr.rel (0) target = $region17
    $region16: #{stn3d_forward.1} parent=1 // pred_region
      _
    $region17: #{stn3d_forward.1} parent=1 // pred_fallthru
      _
    // Predicated region
    $region18: #{stn3d_forward.1} parent=1 // pred_check
      _
    $region19: #{stn3d_forward.1} parent=1 // pred_check_branch
      %30 = sbr.rel (0) target = $region21
    $region20: #{stn3d_forward.1} parent=1 // pred_region
      _
    $region21: #{stn3d_forward.1} parent=1 // pred_fallthru
      _
    // Predicated region
    $region22: #{stn3d_forward.1} parent=1 // pred_check
      _
    $region23: #{stn3d_forward.1} parent=1 // pred_check_branch
      %32 = sbr.rel (0) target = $region25
    $region24: #{stn3d_forward.1} parent=1 // pred_region
      %s34 = ssub.s32 8192, 8192
      %35 = vsyncadd [#allocation4], %s34
      %s36 = sshll.u32 [#allocation3], 4
      %s37 = int_to_ptr.vmem [resolvable:$true] %s36
      %42 = dma.hbm_to_vmem [thread:$0]  %s5, 8192, %s37, [#allocation4], 64, 64, 4
    $region25: #{stn3d_forward.1} parent=1 // pred_fallthru
      _
    // Predicated region
    $region26: #{stn3d_forward.1} parent=1 // pred_check
      _
    $region27: #{stn3d_forward.1} parent=1 // pred_check_branch
      %44 = sbr.rel (0) target = $region29
    $region28: #{stn3d_forward.1} parent=1 // pred_region
      _
    $region29: #{stn3d_forward.1} parent=1 // pred_fallthru
      _
    // Predicated region
    $region30: #{stn3d_forward.1} parent=1 // pred_check
      _
    $region31: #{stn3d_forward.1} parent=1 // pred_check_branch
      %46 = sbr.rel (0) target = $region33
    $region32: #{stn3d_forward.1} parent=1 // pred_region
      _
    $region33: #{stn3d_forward.1} parent=1 // pred_fallthru
      _
    // Predicated region
    $region34: #{stn3d_forward.1} parent=1 // pred_check
      _
    $region35: #{stn3d_forward.1} parent=1 // pred_check_branch
      %48 = sbr.rel (0) target = $region37
    $region36: #{stn3d_forward.1} parent=1 // pred_region
      _
    $region37: #{stn3d_forward.1} parent=1 // pred_fallthru
      _
    // Predicated region
    $region38: #{stn3d_forward.1} parent=1 // pred_check
      _
    $region39: #{stn3d_forward.1} parent=1 // pred_check_branch
      %50 = sbr.rel (0) target = $region41
    $region40: #{stn3d_forward.1} parent=1 // pred_region
      %s52 = ssub.s32 8192, 8192
      %53 = vsyncadd [#allocation6], %s52
      %s54 = sshll.u32 [#allocation5], 4
      %s55 = int_to_ptr.vmem [resolvable:$true] %s54
      %60 = dma.hbm_to_vmem [thread:$0]  %s9, 8192, %s55, [#allocation6], 256, 256, 16
    $region41: #{stn3d_forward.1} parent=1 // pred_fallthru
      _
    // Predicated region
    $region42: #{stn3d_forward.1} parent=1 // pred_check
      _
    $region43: #{stn3d_forward.1} parent=1 // pred_check_branch
      %62 = sbr.rel (0) target = $region45
    $region44: #{stn3d_forward.1} parent=1 // pred_region
      _
    $region45: #{stn3d_forward.1} parent=1 // pred_fallthru
      _
    // Predicated region
    $region46: #{stn3d_forward.1} parent=1 // pred_check
      _
    $region47: #{stn3d_forward.1} parent=1 // pred_check_branch
      %64 = sbr.rel (0) target = $region49
    $region48: #{stn3d_forward.1} parent=1 // pred_region
      _
    $region49: #{stn3d_forward.1} parent=1 // pred_fallthru
      _
    // Predicated region
    $region50: #{stn3d_forward.1} parent=1 // pred_check
      _
    $region51: #{stn3d_forward.1} parent=1 // pred_check_branch
      %66 = sbr.rel (0) target = $region53
    $region52: #{stn3d_forward.1} parent=1 // pred_region
      _
    $region53: #{stn3d_forward.1} parent=1 // pred_fallthru
      _
    // Predicated region
    $region54: #{stn3d_forward.1} parent=1 // pred_check
      _
    $region55: #{stn3d_forward.1} parent=1 // pred_check_branch
      %68 = sbr.rel (0) target = $region57
    $region56: #{stn3d_forward.1} parent=1 // pred_region
      _
    $region57: #{stn3d_forward.1} parent=1 // pred_fallthru
      _
    // Predicated region
    $region58: #{stn3d_forward.1} parent=1 // pred_check
      _
    $region59: #{stn3d_forward.1} parent=1 // pred_check_branch
      %70 = sbr.rel (0) target = $region61
    $region60: #{stn3d_forward.1} parent=1 // pred_region
      %71 = dma.done [#allocation4], 8192
    $region61: #{stn3d_forward.1} parent=1 // pred_fallthru
      _
    // Predicated region
    $region62: #{stn3d_forward.1} parent=1 // pred_check
      _
    $region63: #{stn3d_forward.1} parent=1 // pred_check_branch
      %73 = sbr.rel (0) target = $region65
    $region64: #{stn3d_forward.1} parent=1 // pred_region
      %74 = dma.done [#allocation6], 8192
    $region65: #{stn3d_forward.1} parent=1 // pred_fallthru
      _
    %p76 = scmp.eq.s32.totalorder 0, 0
    // Predicated region
    $region66: #{stn3d_forward.1} parent=1 // pred_check
      %p77 = pneg %p76
    $region67: #{stn3d_forward.1} parent=1 // pred_check_branch
      %79 = sbr.rel (%p77) target = $region69
    $region68: #{stn3d_forward.1} parent=1 // pred_region
      %vm80 = vcmask 15360
      %81 = vst.msk [vmem:[#allocation2] sm:$0xff] %vm80, -inf
      %82 = vst.msk [vmem:[#allocation2 + $0x8] sm:$0xff] %vm80, -inf
      %83 = vst.msk [vmem:[#allocation2 + $0x10] sm:$0xff] %vm80, -inf
      %84 = vst.msk [vmem:[#allocation2 + $0x18] sm:$0xff] %vm80, -inf
      %85 = vst.msk [vmem:[#allocation2 + $0x20] sm:$0xff] %vm80, -inf
      %86 = vst.msk [vmem:[#allocation2 + $0x28] sm:$0xff] %vm80, -inf
      %87 = vst.msk [vmem:[#allocation2 + $0x30] sm:$0xff] %vm80, -inf
      %88 = vst.msk [vmem:[#allocation2 + $0x38] sm:$0xff] %vm80, -inf
      %89 = vst.msk [vmem:[#allocation2 + $0x40] sm:$0xff] %vm80, -inf
      %90 = vst.msk [vmem:[#allocation2 + $0x48] sm:$0xff] %vm80, -inf
      %91 = vst.msk [vmem:[#allocation2 + $0x50] sm:$0xff] %vm80, -inf
      %92 = vst.msk [vmem:[#allocation2 + $0x58] sm:$0xff] %vm80, -inf
      %93 = vst.msk [vmem:[#allocation2 + $0x60] sm:$0xff] %vm80, -inf
      %94 = vst.msk [vmem:[#allocation2 + $0x68] sm:$0xff] %vm80, -inf
      %95 = vst.msk [vmem:[#allocation2 + $0x70] sm:$0xff] %vm80, -inf
      %96 = vst.msk [vmem:[#allocation2 + $0x78] sm:$0xff] %vm80, -inf
      %97 = vst.msk [vmem:[#allocation2 + $0x80] sm:$0xff] %vm80, -inf
      %98 = vst.msk [vmem:[#allocation2 + $0x88] sm:$0xff] %vm80, -inf
      %99 = vst.msk [vmem:[#allocation2 + $0x90] sm:$0xff] %vm80, -inf
      %100 = vst.msk [vmem:[#allocation2 + $0x98] sm:$0xff] %vm80, -inf
      %101 = vst.msk [vmem:[#allocation2 + $0xa0] sm:$0xff] %vm80, -inf
      %102 = vst.msk [vmem:[#allocation2 + $0xa8] sm:$0xff] %vm80, -inf
      %103 = vst.msk [vmem:[#allocation2 + $0xb0] sm:$0xff] %vm80, -inf
      %104 = vst.msk [vmem:[#allocation2 + $0xb8] sm:$0xff] %vm80, -inf
      %105 = vst.msk [vmem:[#allocation2 + $0xc0] sm:$0xff] %vm80, -inf
      %106 = vst.msk [vmem:[#allocation2 + $0xc8] sm:$0xff] %vm80, -inf
      %107 = vst.msk [vmem:[#allocation2 + $0xd0] sm:$0xff] %vm80, -inf
      %108 = vst.msk [vmem:[#allocation2 + $0xd8] sm:$0xff] %vm80, -inf
      %109 = vst.msk [vmem:[#allocation2 + $0xe0] sm:$0xff] %vm80, -inf
      %110 = vst.msk [vmem:[#allocation2 + $0xe8] sm:$0xff] %vm80, -inf
      %111 = vst.msk [vmem:[#allocation2 + $0xf0] sm:$0xff] %vm80, -inf
      %112 = vst.msk [vmem:[#allocation2 + $0xf8] sm:$0xff] %vm80, -inf
      %113 = vst.msk [vmem:[#allocation2 + $0x100] sm:$0xff] %vm80, -inf
      %114 = vst.msk [vmem:[#allocation2 + $0x108] sm:$0xff] %vm80, -inf
      %115 = vst.msk [vmem:[#allocation2 + $0x110] sm:$0xff] %vm80, -inf
      %116 = vst.msk [vmem:[#allocation2 + $0x118] sm:$0xff] %vm80, -inf
      %117 = vst.msk [vmem:[#allocation2 + $0x120] sm:$0xff] %vm80, -inf
      %118 = vst.msk [vmem:[#allocation2 + $0x128] sm:$0xff] %vm80, -inf
      %119 = vst.msk [vmem:[#allocation2 + $0x130] sm:$0xff] %vm80, -inf
      %120 = vst.msk [vmem:[#allocation2 + $0x138] sm:$0xff] %vm80, -inf
      %121 = vst.msk [vmem:[#allocation2 + $0x140] sm:$0xff] %vm80, -inf
      %122 = vst.msk [vmem:[#allocation2 + $0x148] sm:$0xff] %vm80, -inf
      %123 = vst.msk [vmem:[#allocation2 + $0x150] sm:$0xff] %vm80, -inf
      %124 = vst.msk [vmem:[#allocation2 + $0x158] sm:$0xff] %vm80, -inf
      %125 = vst.msk [vmem:[#allocation2 + $0x160] sm:$0xff] %vm80, -inf
      %126 = vst.msk [vmem:[#allocation2 + $0x168] sm:$0xff] %vm80, -inf
      %127 = vst.msk [vmem:[#allocation2 + $0x170] sm:$0xff] %vm80, -inf
      %128 = vst.msk [vmem:[#allocation2 + $0x178] sm:$0xff] %vm80, -inf
      %129 = vst.msk [vmem:[#allocation2 + $0x180] sm:$0xff] %vm80, -inf
      %130 = vst.msk [vmem:[#allocation2 + $0x188] sm:$0xff] %vm80, -inf
      %131 = vst.msk [vmem:[#allocation2 + $0x190] sm:$0xff] %vm80, -inf
      %132 = vst.msk [vmem:[#allocation2 + $0x198] sm:$0xff] %vm80, -inf
      %133 = vst.msk [vmem:[#allocation2 + $0x1a0] sm:$0xff] %vm80, -inf
      %134 = vst.msk [vmem:[#allocation2 + $0x1a8] sm:$0xff] %vm80, -inf
      %135 = vst.msk [vmem:[#allocation2 + $0x1b0] sm:$0xff] %vm80, -inf
      %136 = vst.msk [vmem:[#allocation2 + $0x1b8] sm:$0xff] %vm80, -inf
      %137 = vst.msk [vmem:[#allocation2 + $0x1c0] sm:$0xff] %vm80, -inf
      %138 = vst.msk [vmem:[#allocation2 + $0x1c8] sm:$0xff] %vm80, -inf
      %139 = vst.msk [vmem:[#allocation2 + $0x1d0] sm:$0xff] %vm80, -inf
      %140 = vst.msk [vmem:[#allocation2 + $0x1d8] sm:$0xff] %vm80, -inf
      %141 = vst.msk [vmem:[#allocation2 + $0x1e0] sm:$0xff] %vm80, -inf
      %142 = vst.msk [vmem:[#allocation2 + $0x1e8] sm:$0xff] %vm80, -inf
      %143 = vst.msk [vmem:[#allocation2 + $0x1f0] sm:$0xff] %vm80, -inf
      %144 = vst.msk [vmem:[#allocation2 + $0x1f8] sm:$0xff] %vm80, -inf
      %145 = vst.msk [vmem:[#allocation2 + $0x200] sm:$0xff] %vm80, -inf
      %146 = vst.msk [vmem:[#allocation2 + $0x208] sm:$0xff] %vm80, -inf
      %147 = vst.msk [vmem:[#allocation2 + $0x210] sm:$0xff] %vm80, -inf
      %148 = vst.msk [vmem:[#allocation2 + $0x218] sm:$0xff] %vm80, -inf
      %149 = vst.msk [vmem:[#allocation2 + $0x220] sm:$0xff] %vm80, -inf
      %150 = vst.msk [vmem:[#allocation2 + $0x228] sm:$0xff] %vm80, -inf
      %151 = vst.msk [vmem:[#allocation2 + $0x230] sm:$0xff] %vm80, -inf
      %152 = vst.msk [vmem:[#allocation2 + $0x238] sm:$0xff] %vm80, -inf
      %153 = vst.msk [vmem:[#allocation2 + $0x240] sm:$0xff] %vm80, -inf
      %154 = vst.msk [vmem:[#allocation2 + $0x248] sm:$0xff] %vm80, -inf
      %155 = vst.msk [vmem:[#allocation2 + $0x250] sm:$0xff] %vm80, -inf
      %156 = vst.msk [vmem:[#allocation2 + $0x258] sm:$0xff] %vm80, -inf
      %157 = vst.msk [vmem:[#allocation2 + $0x260] sm:$0xff] %vm80, -inf
      %158 = vst.msk [vmem:[#allocation2 + $0x268] sm:$0xff] %vm80, -inf
      %159 = vst.msk [vmem:[#allocation2 + $0x270] sm:$0xff] %vm80, -inf
      %160 = vst.msk [vmem:[#allocation2 + $0x278] sm:$0xff] %vm80, -inf
      %161 = vst.msk [vmem:[#allocation2 + $0x280] sm:$0xff] %vm80, -inf
      %162 = vst.msk [vmem:[#allocation2 + $0x288] sm:$0xff] %vm80, -inf
      %163 = vst.msk [vmem:[#allocation2 + $0x290] sm:$0xff] %vm80, -inf
      %164 = vst.msk [vmem:[#allocation2 + $0x298] sm:$0xff] %vm80, -inf
      %165 = vst.msk [vmem:[#allocation2 + $0x2a0] sm:$0xff] %vm80, -inf
      %166 = vst.msk [vmem:[#allocation2 + $0x2a8] sm:$0xff] %vm80, -inf
      %167 = vst.msk [vmem:[#allocation2 + $0x2b0] sm:$0xff] %vm80, -inf
      %168 = vst.msk [vmem:[#allocation2 + $0x2b8] sm:$0xff] %vm80, -inf
      %169 = vst.msk [vmem:[#allocation2 + $0x2c0] sm:$0xff] %vm80, -inf
      %170 = vst.msk [vmem:[#allocation2 + $0x2c8] sm:$0xff] %vm80, -inf
      %171 = vst.msk [vmem:[#allocation2 + $0x2d0] sm:$0xff] %vm80, -inf
      %172 = vst.msk [vmem:[#allocation2 + $0x2d8] sm:$0xff] %vm80, -inf
      %173 = vst.msk [vmem:[#allocation2 + $0x2e0] sm:$0xff] %vm80, -inf
      %174 = vst.msk [vmem:[#allocation2 + $0x2e8] sm:$0xff] %vm80, -inf
      %175 = vst.msk [vmem:[#allocation2 + $0x2f0] sm:$0xff] %vm80, -inf
      %176 = vst.msk [vmem:[#allocation2 + $0x2f8] sm:$0xff] %vm80, -inf
      %177 = vst.msk [vmem:[#allocation2 + $0x300] sm:$0xff] %vm80, -inf
      %178 = vst.msk [vmem:[#allocation2 + $0x308] sm:$0xff] %vm80, -inf
      %179 = vst.msk [vmem:[#allocation2 + $0x310] sm:$0xff] %vm80, -inf
      %180 = vst.msk [vmem:[#allocation2 + $0x318] sm:$0xff] %vm80, -inf
      %181 = vst.msk [vmem:[#allocation2 + $0x320] sm:$0xff] %vm80, -inf
      %182 = vst.msk [vmem:[#allocation2 + $0x328] sm:$0xff] %vm80, -inf
      %183 = vst.msk [vmem:[#allocation2 + $0x330] sm:$0xff] %vm80, -inf
      %184 = vst.msk [vmem:[#allocation2 + $0x338] sm:$0xff] %vm80, -inf
      %185 = vst.msk [vmem:[#allocation2 + $0x340] sm:$0xff] %vm80, -inf
      %186 = vst.msk [vmem:[#allocation2 + $0x348] sm:$0xff] %vm80, -inf
      %187 = vst.msk [vmem:[#allocation2 + $0x350] sm:$0xff] %vm80, -inf
      %188 = vst.msk [vmem:[#allocation2 + $0x358] sm:$0xff] %vm80, -inf
      %189 = vst.msk [vmem:[#allocation2 + $0x360] sm:$0xff] %vm80, -inf
      %190 = vst.msk [vmem:[#allocation2 + $0x368] sm:$0xff] %vm80, -inf
      %191 = vst.msk [vmem:[#allocation2 + $0x370] sm:$0xff] %vm80, -inf
      %192 = vst.msk [vmem:[#allocation2 + $0x378] sm:$0xff] %vm80, -inf
      %193 = vst.msk [vmem:[#allocation2 + $0x380] sm:$0xff] %vm80, -inf
      %194 = vst.msk [vmem:[#allocation2 + $0x388] sm:$0xff] %vm80, -inf
      %195 = vst.msk [vmem:[#allocation2 + $0x390] sm:$0xff] %vm80, -inf
      %196 = vst.msk [vmem:[#allocation2 + $0x398] sm:$0xff] %vm80, -inf
      %197 = vst.msk [vmem:[#allocation2 + $0x3a0] sm:$0xff] %vm80, -inf
      %198 = vst.msk [vmem:[#allocation2 + $0x3a8] sm:$0xff] %vm80, -inf
      %199 = vst.msk [vmem:[#allocation2 + $0x3b0] sm:$0xff] %vm80, -inf
      %200 = vst.msk [vmem:[#allocation2 + $0x3b8] sm:$0xff] %vm80, -inf
      %201 = vst.msk [vmem:[#allocation2 + $0x3c0] sm:$0xff] %vm80, -inf
      %202 = vst.msk [vmem:[#allocation2 + $0x3c8] sm:$0xff] %vm80, -inf
      %203 = vst.msk [vmem:[#allocation2 + $0x3d0] sm:$0xff] %vm80, -inf
      %204 = vst.msk [vmem:[#allocation2 + $0x3d8] sm:$0xff] %vm80, -inf
      %205 = vst.msk [vmem:[#allocation2 + $0x3e0] sm:$0xff] %vm80, -inf
      %206 = vst.msk [vmem:[#allocation2 + $0x3e8] sm:$0xff] %vm80, -inf
      %207 = vst.msk [vmem:[#allocation2 + $0x3f0] sm:$0xff] %vm80, -inf
      %208 = vst.msk [vmem:[#allocation2 + $0x3f8] sm:$0xff] %vm80, -inf
    $region69: #{stn3d_forward.1} parent=1 // pred_fallthru
      _
    %v209 = vld [vmem:[%s1] sm:$0xff]
    %v210 = vld [vmem:[%s1 + $0x8] sm:$0xff]
    %v211 = vld [vmem:[%s1 + $0x10] sm:$0xff]
    %v212 = vld [vmem:[%s1 + $0x18] sm:$0xff]
    %v213 = vld [vmem:[%s1 + $0x20] sm:$0xff]
    %v214 = vld [vmem:[%s1 + $0x28] sm:$0xff]
    %v215 = vld [vmem:[%s1 + $0x30] sm:$0xff]
    %v216 = vld [vmem:[%s1 + $0x38] sm:$0xff]
    %v217 = vld [vmem:[%s2] sm:$0xff]
    %v218 = vld [vmem:[%s2 + $0x8] sm:$0xff]
    %v219 = vld [vmem:[%s2 + $0x10] sm:$0xff]
    %v220 = vld [vmem:[%s2 + $0x18] sm:$0xff]
    %v221 = vld [vmem:[%s2 + $0x20] sm:$0xff]
    %v222 = vld [vmem:[%s2 + $0x28] sm:$0xff]
    %v223 = vld [vmem:[%s2 + $0x30] sm:$0xff]
    %v224 = vld [vmem:[%s2 + $0x38] sm:$0xff]
    %v225 = vld [vmem:[%s4] sm:$0xff]
    %v226 = vld [vmem:[%s4 + $0x8] sm:$0xff]
    %v227 = vld [vmem:[%s4 + $0x10] sm:$0xff]
    %v228 = vld [vmem:[%s4 + $0x18] sm:$0xff]
    %v229 = vld [vmem:[%s4 + $0x20] sm:$0xff]
    %v230 = vld [vmem:[%s4 + $0x28] sm:$0xff]
    %v231 = vld [vmem:[%s4 + $0x30] sm:$0xff]
    %v232 = vld [vmem:[%s4 + $0x38] sm:$0xff]
    %v233 = vld [vmem:[%s4 + $0x40] sm:$0xff]
    %v234 = vld [vmem:[%s4 + $0x48] sm:$0xff]
    %v235 = vld [vmem:[%s4 + $0x50] sm:$0xff]
    %v236 = vld [vmem:[%s4 + $0x58] sm:$0xff]
    %v237 = vld [vmem:[%s4 + $0x60] sm:$0xff]
    %v238 = vld [vmem:[%s4 + $0x68] sm:$0xff]
    %v239 = vld [vmem:[%s4 + $0x70] sm:$0xff]
    %v240 = vld [vmem:[%s4 + $0x78] sm:$0xff]
    %v241 = vld [vmem:[%s0] sm:$0x7]
    %243 = vset.pattern.permute.xlu0 0
    %244 = vperm.xlu0 %243, %v209
    %v245 = vpop.permute.xlu0 %244
    %248 = vset.pattern.permute.xlu0 0
    %249 = vperm.xlu0 %248, %v210
    %v250 = vpop.permute.xlu0 %249
    %253 = vset.pattern.permute.xlu0 0
    %254 = vperm.xlu0 %253, %v211
    %v255 = vpop.permute.xlu0 %254
    %258 = vset.pattern.permute.xlu0 0
    %259 = vperm.xlu0 %258, %v212
    %v260 = vpop.permute.xlu0 %259
    %263 = vset.pattern.permute.xlu0 0
    %264 = vperm.xlu0 %263, %v213
    %v265 = vpop.permute.xlu0 %264
    %268 = vset.pattern.permute.xlu0 0
    %269 = vperm.xlu0 %268, %v214
    %v270 = vpop.permute.xlu0 %269
    %273 = vset.pattern.permute.xlu0 0
    %274 = vperm.xlu0 %273, %v215
    %v275 = vpop.permute.xlu0 %274
    %278 = vset.pattern.permute.xlu0 0
    %279 = vperm.xlu0 %278, %v216
    %v280 = vpop.permute.xlu0 %279
    %v282 = vlaneseq
    %v283 = vshrl.u32 %v282, 7
    %v284 = vsub.s32 0, %v283
    %v285 = vrot.slane %v241, %v284
    %v286 = vmul.f32 %v245, %v285
    %v287 = vmul.f32 %v250, %v285
    %v288 = vmul.f32 %v255, %v285
    %v289 = vmul.f32 %v260, %v285
    %v290 = vmul.f32 %v265, %v285
    %v291 = vmul.f32 %v270, %v285
    %v292 = vmul.f32 %v275, %v285
    %v293 = vmul.f32 %v280, %v285
    %294 = vset.pattern.permute.xlu0 1
    %295 = vperm.xlu0 %294, %v209
    %v296 = vpop.permute.xlu0 %295
    %298 = vset.pattern.permute.xlu0 1
    %299 = vperm.xlu0 %298, %v210
    %v300 = vpop.permute.xlu0 %299
    %302 = vset.pattern.permute.xlu0 1
    %303 = vperm.xlu0 %302, %v211
    %v304 = vpop.permute.xlu0 %303
    %306 = vset.pattern.permute.xlu0 1
    %307 = vperm.xlu0 %306, %v212
    %v308 = vpop.permute.xlu0 %307
    %310 = vset.pattern.permute.xlu0 1
    %311 = vperm.xlu0 %310, %v213
    %v312 = vpop.permute.xlu0 %311
    %314 = vset.pattern.permute.xlu0 1
    %315 = vperm.xlu0 %314, %v214
    %v316 = vpop.permute.xlu0 %315
    %318 = vset.pattern.permute.xlu0 1
    %319 = vperm.xlu0 %318, %v215
    %v320 = vpop.permute.xlu0 %319
    %322 = vset.pattern.permute.xlu0 1
    %323 = vperm.xlu0 %322, %v216
    %v324 = vpop.permute.xlu0 %323
    %v326 = vlaneseq
    %v327 = vshrl.u32 %v326, 7
    %v328 = vsub.s32 1, %v327
    %v329 = vrot.slane %v241, %v328
    %v330 = vmul.f32 %v296, %v329
    %v331 = vmul.f32 %v300, %v329
    %v332 = vmul.f32 %v304, %v329
    %v333 = vmul.f32 %v308, %v329
    %v334 = vmul.f32 %v312, %v329
    %v335 = vmul.f32 %v316, %v329
    %v336 = vmul.f32 %v320, %v329
    %v337 = vmul.f32 %v324, %v329
    %v338 = vadd.f32 %v286, %v330
    %v339 = vadd.f32 %v287, %v331
    %v340 = vadd.f32 %v288, %v332
    %v341 = vadd.f32 %v289, %v333
    %v342 = vadd.f32 %v290, %v334
    %v343 = vadd.f32 %v291, %v335
    %v344 = vadd.f32 %v292, %v336
    %v345 = vadd.f32 %v293, %v337
    %346 = vset.pattern.permute.xlu0 2
    %347 = vperm.xlu0 %346, %v209
    %v348 = vpop.permute.xlu0 %347
    %350 = vset.pattern.permute.xlu0 2
    %351 = vperm.xlu0 %350, %v210
    %v352 = vpop.permute.xlu0 %351
    %354 = vset.pattern.permute.xlu0 2
    %355 = vperm.xlu0 %354, %v211
    %v356 = vpop.permute.xlu0 %355
    %358 = vset.pattern.permute.xlu0 2
    %359 = vperm.xlu0 %358, %v212
    %v360 = vpop.permute.xlu0 %359
    %362 = vset.pattern.permute.xlu0 2
    %363 = vperm.xlu0 %362, %v213
    %v364 = vpop.permute.xlu0 %363
    %366 = vset.pattern.permute.xlu0 2
    %367 = vperm.xlu0 %366, %v214
    %v368 = vpop.permute.xlu0 %367
    %370 = vset.pattern.permute.xlu0 2
    %371 = vperm.xlu0 %370, %v215
    %v372 = vpop.permute.xlu0 %371
    %374 = vset.pattern.permute.xlu0 2
    %375 = vperm.xlu0 %374, %v216
    %v376 = vpop.permute.xlu0 %375
    %v378 = vlaneseq
    %v379 = vshrl.u32 %v378, 7
    %v380 = vsub.s32 2, %v379
    %v381 = vrot.slane %v241, %v380
    %v382 = vmul.f32 %v348, %v381
    %v383 = vmul.f32 %v352, %v381
    %v384 = vmul.f32 %v356, %v381
    %v385 = vmul.f32 %v360, %v381
    %v386 = vmul.f32 %v364, %v381
    %v387 = vmul.f32 %v368, %v381
    %v388 = vmul.f32 %v372, %v381
    %v389 = vmul.f32 %v376, %v381
    %v390 = vadd.f32 %v338, %v382
    %v391 = vadd.f32 %v339, %v383
    %v392 = vadd.f32 %v340, %v384
    %v393 = vadd.f32 %v341, %v385
    %v394 = vadd.f32 %v342, %v386
    %v395 = vadd.f32 %v343, %v387
    %v396 = vadd.f32 %v344, %v388
    %v397 = vadd.f32 %v345, %v389
    %399 = vset.pattern.permute.xlu0 0
    %400 = vperm.xlu0 %399, %v217
    %v401 = vpop.permute.xlu0 %400
    %404 = vset.pattern.permute.xlu0 0
    %405 = vperm.xlu0 %404, %v218
    %v406 = vpop.permute.xlu0 %405
    %409 = vset.pattern.permute.xlu0 0
    %410 = vperm.xlu0 %409, %v219
    %v411 = vpop.permute.xlu0 %410
    %414 = vset.pattern.permute.xlu0 0
    %415 = vperm.xlu0 %414, %v220
    %v416 = vpop.permute.xlu0 %415
    %419 = vset.pattern.permute.xlu0 0
    %420 = vperm.xlu0 %419, %v221
    %v421 = vpop.permute.xlu0 %420
    %424 = vset.pattern.permute.xlu0 0
    %425 = vperm.xlu0 %424, %v222
    %v426 = vpop.permute.xlu0 %425
    %429 = vset.pattern.permute.xlu0 0
    %430 = vperm.xlu0 %429, %v223
    %v431 = vpop.permute.xlu0 %430
    %434 = vset.pattern.permute.xlu0 0
    %435 = vperm.xlu0 %434, %v224
    %v436 = vpop.permute.xlu0 %435
    %v438 = vadd.f32 %v390, %v401
    %v439 = vadd.f32 %v391, %v406
    %v440 = vadd.f32 %v392, %v411
    %v441 = vadd.f32 %v393, %v416
    %v442 = vadd.f32 %v394, %v421
    %v443 = vadd.f32 %v395, %v426
    %v444 = vadd.f32 %v396, %v431
    %v445 = vadd.f32 %v397, %v436
    %v446 = vmax.f32 %v438, 0.0
    %v447 = vmax.f32 %v439, 0.0
    %v448 = vmax.f32 %v440, 0.0
    %v449 = vmax.f32 %v441, 0.0
    %v450 = vmax.f32 %v442, 0.0
    %v451 = vmax.f32 %v443, 0.0
    %v452 = vmax.f32 %v444, 0.0
    %v453 = vmax.f32 %v445, 0.0
    %v454 = vld [vmem:[%s3] sm:$0xf]
    %v455 = vld [vmem:[%s3 + $0x4] sm:$0xf]
    %v456 = vld [vmem:[%s3 + $0x8] sm:$0xf]
    %v457 = vld [vmem:[%s3 + $0xc] sm:$0xf]
    %v458 = vld [vmem:[%s3 + $0x10] sm:$0xf]
    %v459 = vld [vmem:[%s3 + $0x14] sm:$0xf]
    %v460 = vld [vmem:[%s3 + $0x18] sm:$0xf]
    %v461 = vld [vmem:[%s3 + $0x1c] sm:$0xf]
    %v462 = vld [vmem:[%s3 + $0x20] sm:$0xf]
    %v463 = vld [vmem:[%s3 + $0x24] sm:$0xf]
    %v464 = vld [vmem:[%s3 + $0x28] sm:$0xf]
    %v465 = vld [vmem:[%s3 + $0x2c] sm:$0xf]
    %v466 = vld [vmem:[%s3 + $0x30] sm:$0xf]
    %v467 = vld [vmem:[%s3 + $0x34] sm:$0xf]
    %v468 = vld [vmem:[%s3 + $0x38] sm:$0xf]
    %v469 = vld [vmem:[%s3 + $0x3c] sm:$0xf]
    %v470 = vpack.c.bf16 %v447, %v446
    %v471 = vpack.c.bf16 %v449, %v448
    %v472 = vpack.c.bf16 %v451, %v450
    %v473 = vpack.c.bf16 %v453, %v452
    %475 = vset.pattern.permute.xlu0 0
    %476 = vperm.xlu0 %475, %v225
    %v477 = vpop.permute.xlu0 %476
    %480 = vset.pattern.permute.xlu0 0
    %481 = vperm.xlu0 %480, %v226
    %v482 = vpop.permute.xlu0 %481
    %485 = vset.pattern.permute.xlu0 0
    %486 = vperm.xlu0 %485, %v227
    %v487 = vpop.permute.xlu0 %486
    %490 = vset.pattern.permute.xlu0 0
    %491 = vperm.xlu0 %490, %v228
    %v492 = vpop.permute.xlu0 %491
    %495 = vset.pattern.permute.xlu0 0
    %496 = vperm.xlu0 %495, %v229
    %v497 = vpop.permute.xlu0 %496
    %500 = vset.pattern.permute.xlu0 0
    %501 = vperm.xlu0 %500, %v230
    %v502 = vpop.permute.xlu0 %501
    %505 = vset.pattern.permute.xlu0 0
    %506 = vperm.xlu0 %505, %v231
    %v507 = vpop.permute.xlu0 %506
    %510 = vset.pattern.permute.xlu0 0
    %511 = vperm.xlu0 %510, %v232
    %v512 = vpop.permute.xlu0 %511
    %515 = vset.pattern.permute.xlu0 0
    %516 = vperm.xlu0 %515, %v233
    %v517 = vpop.permute.xlu0 %516
    %520 = vset.pattern.permute.xlu0 0
    %521 = vperm.xlu0 %520, %v234
    %v522 = vpop.permute.xlu0 %521
    %525 = vset.pattern.permute.xlu0 0
    %526 = vperm.xlu0 %525, %v235
    %v527 = vpop.permute.xlu0 %526
    %530 = vset.pattern.permute.xlu0 0
    %531 = vperm.xlu0 %530, %v236
    %v532 = vpop.permute.xlu0 %531
    %535 = vset.pattern.permute.xlu0 0
    %536 = vperm.xlu0 %535, %v237
    %v537 = vpop.permute.xlu0 %536
    %540 = vset.pattern.permute.xlu0 0
    %541 = vperm.xlu0 %540, %v238
    %v542 = vpop.permute.xlu0 %541
    %545 = vset.pattern.permute.xlu0 0
    %546 = vperm.xlu0 %545, %v239
    %v547 = vpop.permute.xlu0 %546
    %550 = vset.pattern.permute.xlu0 0
    %551 = vperm.xlu0 %550, %v240
    %v552 = vpop.permute.xlu0 %551
    %v570 = vunpack.c.l.b16 %v454
    %v571 = vunpack.c.l.b16 %v455
    %v572 = vunpack.c.l.b16 %v456
    %v573 = vunpack.c.l.b16 %v457
    %v574 = vunpack.c.l.b16 %v458
    %v575 = vunpack.c.l.b16 %v459
    %v576 = vunpack.c.l.b16 %v460
    %v577 = vunpack.c.l.b16 %v461
    %v578 = vunpack.c.l.b16 %v462
    %v579 = vunpack.c.l.b16 %v463
    %v580 = vunpack.c.l.b16 %v464
    %v581 = vunpack.c.l.b16 %v465
    %v582 = vunpack.c.l.b16 %v466
    %v583 = vunpack.c.l.b16 %v467
    %v584 = vunpack.c.l.b16 %v468
    %v585 = vunpack.c.l.b16 %v469
    %v586 = vpack.c.b16 %v571, %v570
    %v587 = vpack.c.b16 %v573, %v572
    %v588 = vpack.c.b16 %v575, %v574
    %v589 = vpack.c.b16 %v577, %v576
    %v590 = vpack.c.b16 %v579, %v578
    %v591 = vpack.c.b16 %v581, %v580
    %v592 = vpack.c.b16 %v583, %v582
    %v593 = vpack.c.b16 %v585, %v584
    %vm594 = vcmask 523264
    %v596 = vsel %vm594, %v586, 0
    %v599 = vsel %vm594, %v587, 0
    %v602 = vsel %vm594, %v588, 0
    %v605 = vsel %vm594, %v589, 0
    %v608 = vsel %vm594, %v590, 0
    %v611 = vsel %vm594, %v591, 0
    %v614 = vsel %vm594, %v592, 0
    %v617 = vsel %vm594, %v593, 0
    %619 = vmatprep.subr.bf16.mxu0 0
    %620 = vmatpush1.bf16.msra.mxu0 %v470
    %621 = vmatprep.subr.bf16.mxu0 0
    %622 = vmatpush1.bf16.msra.mxu0 %v471
    %623 = vmatprep.subr.bf16.mxu0 0
    %624 = vmatpush1.bf16.msra.mxu0 %v472
    %625 = vmatprep.subr.bf16.mxu0 0
    %626 = vmatpush1.bf16.msra.mxu0 %v473
    %627 = vmatprep.subr.bf16.mxu0 0
    %628 = vmatpush1.bf16.msra.mxu0 0
    %629 = vmatprep.subr.bf16.mxu0 0
    %630 = vmatpush1.bf16.msra.mxu0 0
    %631 = vmatprep.subr.bf16.mxu0 0
    %632 = vmatpush1.bf16.msra.mxu0 0
    %633 = vmatprep.subr.bf16.mxu0 0
    %634 = vmatpush1.bf16.msra.mxu0 0
    %635 = vmatprep.subr.bf16.mxu0 0
    %636 = vmatpush1.bf16.msra.mxu0 0
    %637 = vmatprep.subr.bf16.mxu0 0
    %638 = vmatpush1.bf16.msra.mxu0 0
    %639 = vmatprep.subr.bf16.mxu0 0
    %640 = vmatpush1.bf16.msra.mxu0 0
    %641 = vmatprep.subr.bf16.mxu0 0
    %642 = vmatpush1.bf16.msra.mxu0 0
    %643 = vmatprep.subr.bf16.mxu0 0
    %644 = vmatpush1.bf16.msra.mxu0 0
    %645 = vmatprep.subr.bf16.mxu0 0
    %646 = vmatpush1.bf16.msra.mxu0 0
    %647 = vmatprep.subr.bf16.mxu0 0
    %648 = vmatpush1.bf16.msra.mxu0 0
    %649 = vmatprep.subr.bf16.mxu0 0
    %650 = vmatpush1.bf16.msra.mxu0 0
    %651 = vmatprep.mubr.bf16.mxu0 0
    %652 = vmatmul.mubr.bf16.gmra.mrb[0].mxu0 %v596
    %v653 = vpop.f32.mrb[0].mxu0
    %v654 = vadd.f32 %v477, %v653
    %v655 = vpop.f32.mrb[0].mxu0
    %v656 = vpop.f32.mrb[0].mxu0
    %v657 = vadd.f32 %v482, %v656
    %v658 = vpop.f32.mrb[0].mxu0
    %659 = vmatprep.mubr.bf16.mxu0 0
    %660 = vmatmul.mubr.bf16.gmra.mrb[0].mxu0 %v599
    %v661 = vpop.f32.mrb[0].mxu0
    %v662 = vadd.f32 %v487, %v661
    %v663 = vpop.f32.mrb[0].mxu0
    %v664 = vpop.f32.mrb[0].mxu0
    %v665 = vadd.f32 %v492, %v664
    %v666 = vpop.f32.mrb[0].mxu0
    %667 = vmatprep.mubr.bf16.mxu0 0
    %668 = vmatmul.mubr.bf16.gmra.mrb[0].mxu0 %v602
    %v669 = vpop.f32.mrb[0].mxu0
    %v670 = vadd.f32 %v497, %v669
    %v671 = vpop.f32.mrb[0].mxu0
    %v672 = vpop.f32.mrb[0].mxu0
    %v673 = vadd.f32 %v502, %v672
    %v674 = vpop.f32.mrb[0].mxu0
    %675 = vmatprep.mubr.bf16.mxu0 0
    %676 = vmatmul.mubr.bf16.gmra.mrb[0].mxu0 %v605
    %v677 = vpop.f32.mrb[0].mxu0
    %v678 = vadd.f32 %v507, %v677
    %v679 = vpop.f32.mrb[0].mxu0
    %v680 = vpop.f32.mrb[0].mxu0
    %v681 = vadd.f32 %v512, %v680
    %v682 = vpop.f32.mrb[0].mxu0
    %683 = vmatprep.mubr.bf16.mxu0 0
    %684 = vmatmul.mubr.bf16.gmra.mrb[0].mxu0 %v608
    %v685 = vpop.f32.mrb[0].mxu0
    %v686 = vadd.f32 %v517, %v685
    %v687 = vpop.f32.mrb[0].mxu0
    %v688 = vpop.f32.mrb[0].mxu0
    %v689 = vadd.f32 %v522, %v688
    %v690 = vpop.f32.mrb[0].mxu0
    %691 = vmatprep.mubr.bf16.mxu0 0
    %692 = vmatmul.mubr.bf16.gmra.mrb[0].mxu0 %v611
    %v693 = vpop.f32.mrb[0].mxu0
    %v694 = vadd.f32 %v527, %v693
    %v695 = vpop.f32.mrb[0].mxu0
    %v696 = vpop.f32.mrb[0].mxu0
    %v697 = vadd.f32 %v532, %v696
    %v698 = vpop.f32.mrb[0].mxu0
    %699 = vmatprep.mubr.bf16.mxu0 0
    %700 = vmatmul.mubr.bf16.gmra.mrb[0].mxu0 %v614
    %v701 = vpop.f32.mrb[0].mxu0
    %v702 = vadd.f32 %v537, %v701
    %v703 = vpop.f32.mrb[0].mxu0
    %v704 = vpop.f32.mrb[0].mxu0
    %v705 = vadd.f32 %v542, %v704
    %v706 = vpop.f32.mrb[0].mxu0
    %707 = vmatprep.mubr.bf16.mxu0 0
    %708 = vmatmul.mubr.bf16.gmra.mrb[0].mxu0 %v617
    %v709 = vpop.f32.mrb[0].mxu0
    %v710 = vadd.f32 %v547, %v709
    %v711 = vpop.f32.mrb[0].mxu0
    %v712 = vpop.f32.mrb[0].mxu0
    %v713 = vadd.f32 %v552, %v712
    %v714 = vpop.f32.mrb[0].mxu0
    %715 = vdwg.mxu0
    %v716 = vmax.f32 %v654, 0.0
    %v717 = vmax.f32 %v657, 0.0
    %v718 = vmax.f32 %v662, 0.0
    %v719 = vmax.f32 %v665, 0.0
    %v720 = vmax.f32 %v670, 0.0
    %v721 = vmax.f32 %v673, 0.0
    %v722 = vmax.f32 %v678, 0.0
    %v723 = vmax.f32 %v681, 0.0
    %v724 = vmax.f32 %v686, 0.0
    %v725 = vmax.f32 %v689, 0.0
    %v726 = vmax.f32 %v694, 0.0
    %v727 = vmax.f32 %v697, 0.0
    %v728 = vmax.f32 %v702, 0.0
    %v729 = vmax.f32 %v705, 0.0
    %v730 = vmax.f32 %v710, 0.0
    %v731 = vmax.f32 %v713, 0.0
    %v732 = vld [vmem:[#allocation3] sm:$0xf]
    %v733 = vld [vmem:[#allocation3 + $0x4] sm:$0xf]
    %v734 = vld [vmem:[#allocation3 + $0x8] sm:$0xf]
    %v735 = vld [vmem:[#allocation3 + $0xc] sm:$0xf]
    %v736 = vld [vmem:[#allocation3 + $0x10] sm:$0xf]
    %v737 = vld [vmem:[#allocation3 + $0x14] sm:$0xf]
    %v738 = vld [vmem:[#allocation3 + $0x18] sm:$0xf]
    %v739 = vld [vmem:[#allocation3 + $0x1c] sm:$0xf]
    %v740 = vld [vmem:[#allocation3 + $0x20] sm:$0xf]
    %v741 = vld [vmem:[#allocation3 + $0x24] sm:$0xf]
    %v742 = vld [vmem:[#allocation3 + $0x28] sm:$0xf]
    %v743 = vld [vmem:[#allocation3 + $0x2c] sm:$0xf]
    %v744 = vld [vmem:[#allocation3 + $0x30] sm:$0xf]
    %v745 = vld [vmem:[#allocation3 + $0x34] sm:$0xf]
    %v746 = vld [vmem:[#allocation3 + $0x38] sm:$0xf]
    %v747 = vld [vmem:[#allocation3 + $0x3c] sm:$0xf]
    %v748 = vld [vmem:[#allocation3 + $0x40] sm:$0xf]
    %v749 = vld [vmem:[#allocation3 + $0x44] sm:$0xf]
    %v750 = vld [vmem:[#allocation3 + $0x48] sm:$0xf]
    %v751 = vld [vmem:[#allocation3 + $0x4c] sm:$0xf]
    %v752 = vld [vmem:[#allocation3 + $0x50] sm:$0xf]
    %v753 = vld [vmem:[#allocation3 + $0x54] sm:$0xf]
    %v754 = vld [vmem:[#allocation3 + $0x58] sm:$0xf]
    %v755 = vld [vmem:[#allocation3 + $0x5c] sm:$0xf]
    %v756 = vld [vmem:[#allocation3 + $0x60] sm:$0xf]
    %v757 = vld [vmem:[#allocation3 + $0x64] sm:$0xf]
    %v758 = vld [vmem:[#allocation3 + $0x68] sm:$0xf]
    %v759 = vld [vmem:[#allocation3 + $0x6c] sm:$0xf]
    %v760 = vld [vmem:[#allocation3 + $0x70] sm:$0xf]
    %v761 = vld [vmem:[#allocation3 + $0x74] sm:$0xf]
    %v762 = vld [vmem:[#allocation3 + $0x78] sm:$0xf]
    %v763 = vld [vmem:[#allocation3 + $0x7c] sm:$0xf]
    %v764 = vld [vmem:[#allocation3 + $0x80] sm:$0xf]
    %v765 = vld [vmem:[#allocation3 + $0x84] sm:$0xf]
    %v766 = vld [vmem:[#allocation3 + $0x88] sm:$0xf]
    %v767 = vld [vmem:[#allocation3 + $0x8c] sm:$0xf]
    %v768 = vld [vmem:[#allocation3 + $0x90] sm:$0xf]
    %v769 = vld [vmem:[#allocation3 + $0x94] sm:$0xf]
    %v770 = vld [vmem:[#allocation3 + $0x98] sm:$0xf]
    %v771 = vld [vmem:[#allocation3 + $0x9c] sm:$0xf]
    %v772 = vld [vmem:[#allocation3 + $0xa0] sm:$0xf]
    %v773 = vld [vmem:[#allocation3 + $0xa4] sm:$0xf]
    %v774 = vld [vmem:[#allocation3 + $0xa8] sm:$0xf]
    %v775 = vld [vmem:[#allocation3 + $0xac] sm:$0xf]
    %v776 = vld [vmem:[#allocation3 + $0xb0] sm:$0xf]
    %v777 = vld [vmem:[#allocation3 + $0xb4] sm:$0xf]
    %v778 = vld [vmem:[#allocation3 + $0xb8] sm:$0xf]
    %v779 = vld [vmem:[#allocation3 + $0xbc] sm:$0xf]
    %v780 = vld [vmem:[#allocation3 + $0xc0] sm:$0xf]
    %v781 = vld [vmem:[#allocation3 + $0xc4] sm:$0xf]
    %v782 = vld [vmem:[#allocation3 + $0xc8] sm:$0xf]
    %v783 = vld [vmem:[#allocation3 + $0xcc] sm:$0xf]
    %v784 = vld [vmem:[#allocation3 + $0xd0] sm:$0xf]
    %v785 = vld [vmem:[#allocation3 + $0xd4] sm:$0xf]
    %v786 = vld [vmem:[#allocation3 + $0xd8] sm:$0xf]
    %v787 = vld [vmem:[#allocation3 + $0xdc] sm:$0xf]
    %v788 = vld [vmem:[#allocation3 + $0xe0] sm:$0xf]
    %v789 = vld [vmem:[#allocation3 + $0xe4] sm:$0xf]
    %v790 = vld [vmem:[#allocation3 + $0xe8] sm:$0xf]
    %v791 = vld [vmem:[#allocation3 + $0xec] sm:$0xf]
    %v792 = vld [vmem:[#allocation3 + $0xf0] sm:$0xf]
    %v793 = vld [vmem:[#allocation3 + $0xf4] sm:$0xf]
    %v794 = vld [vmem:[#allocation3 + $0xf8] sm:$0xf]
    %v795 = vld [vmem:[#allocation3 + $0xfc] sm:$0xf]
    %v796 = vld [vmem:[#allocation3 + $0x100] sm:$0xf]
    %v797 = vld [vmem:[#allocation3 + $0x104] sm:$0xf]
    %v798 = vld [vmem:[#allocation3 + $0x108] sm:$0xf]
    %v799 = vld [vmem:[#allocation3 + $0x10c] sm:$0xf]
    %v800 = vld [vmem:[#allocation3 + $0x110] sm:$0xf]
    %v801 = vld [vmem:[#allocation3 + $0x114] sm:$0xf]
    %v802 = vld [vmem:[#allocation3 + $0x118] sm:$0xf]
    %v803 = vld [vmem:[#allocation3 + $0x11c] sm:$0xf]
    %v804 = vld [vmem:[#allocation3 + $0x120] sm:$0xf]
    %v805 = vld [vmem:[#allocation3 + $0x124] sm:$0xf]
    %v806 = vld [vmem:[#allocation3 + $0x128] sm:$0xf]
    %v807 = vld [vmem:[#allocation3 + $0x12c] sm:$0xf]
    %v808 = vld [vmem:[#allocation3 + $0x130] sm:$0xf]
    %v809 = vld [vmem:[#allocation3 + $0x134] sm:$0xf]
    %v810 = vld [vmem:[#allocation3 + $0x138] sm:$0xf]
    %v811 = vld [vmem:[#allocation3 + $0x13c] sm:$0xf]
    %v812 = vld [vmem:[#allocation3 + $0x140] sm:$0xf]
    %v813 = vld [vmem:[#allocation3 + $0x144] sm:$0xf]
    %v814 = vld [vmem:[#allocation3 + $0x148] sm:$0xf]
    %v815 = vld [vmem:[#allocation3 + $0x14c] sm:$0xf]
    %v816 = vld [vmem:[#allocation3 + $0x150] sm:$0xf]
    %v817 = vld [vmem:[#allocation3 + $0x154] sm:$0xf]
    %v818 = vld [vmem:[#allocation3 + $0x158] sm:$0xf]
    %v819 = vld [vmem:[#allocation3 + $0x15c] sm:$0xf]
    %v820 = vld [vmem:[#allocation3 + $0x160] sm:$0xf]
    %v821 = vld [vmem:[#allocation3 + $0x164] sm:$0xf]
    %v822 = vld [vmem:[#allocation3 + $0x168] sm:$0xf]
    %v823 = vld [vmem:[#allocation3 + $0x16c] sm:$0xf]
    %v824 = vld [vmem:[#allocation3 + $0x170] sm:$0xf]
    %v825 = vld [vmem:[#allocation3 + $0x174] sm:$0xf]
    %v826 = vld [vmem:[#allocation3 + $0x178] sm:$0xf]
    %v827 = vld [vmem:[#allocation3 + $0x17c] sm:$0xf]
    %v828 = vld [vmem:[#allocation3 + $0x180] sm:$0xf]
    %v829 = vld [vmem:[#allocation3 + $0x184] sm:$0xf]
    %v830 = vld [vmem:[#allocation3 + $0x188] sm:$0xf]
    %v831 = vld [vmem:[#allocation3 + $0x18c] sm:$0xf]
    %v832 = vld [vmem:[#allocation3 + $0x190] sm:$0xf]
    %v833 = vld [vmem:[#allocation3 + $0x194] sm:$0xf]
    %v834 = vld [vmem:[#allocation3 + $0x198] sm:$0xf]
    %v835 = vld [vmem:[#allocation3 + $0x19c] sm:$0xf]
    %v836 = vld [vmem:[#allocation3 + $0x1a0] sm:$0xf]
    %v837 = vld [vmem:[#allocation3 + $0x1a4] sm:$0xf]
    %v838 = vld [vmem:[#allocation3 + $0x1a8] sm:$0xf]
    %v839 = vld [vmem:[#allocation3 + $0x1ac] sm:$0xf]
    %v840 = vld [vmem:[#allocation3 + $0x1b0] sm:$0xf]
    %v841 = vld [vmem:[#allocation3 + $0x1b4] sm:$0xf]
    %v842 = vld [vmem:[#allocation3 + $0x1b8] sm:$0xf]
    %v843 = vld [vmem:[#allocation3 + $0x1bc] sm:$0xf]
    %v844 = vld [vmem:[#allocation3 + $0x1c0] sm:$0xf]
    %v845 = vld [vmem:[#allocation3 + $0x1c4] sm:$0xf]
    %v846 = vld [vmem:[#allocation3 + $0x1c8] sm:$0xf]
    %v847 = vld [vmem:[#allocation3 + $0x1cc] sm:$0xf]
    %v848 = vld [vmem:[#allocation3 + $0x1d0] sm:$0xf]
    %v849 = vld [vmem:[#allocation3 + $0x1d4] sm:$0xf]
    %v850 = vld [vmem:[#allocation3 + $0x1d8] sm:$0xf]
    %v851 = vld [vmem:[#allocation3 + $0x1dc] sm:$0xf]
    %v852 = vld [vmem:[#allocation3 + $0x1e0] sm:$0xf]
    %v853 = vld [vmem:[#allocation3 + $0x1e4] sm:$0xf]
    %v854 = vld [vmem:[#allocation3 + $0x1e8] sm:$0xf]
    %v855 = vld [vmem:[#allocation3 + $0x1ec] sm:$0xf]
    %v856 = vld [vmem:[#allocation3 + $0x1f0] sm:$0xf]
    %v857 = vld [vmem:[#allocation3 + $0x1f4] sm:$0xf]
    %v858 = vld [vmem:[#allocation3 + $0x1f8] sm:$0xf]
    %v859 = vld [vmem:[#allocation3 + $0x1fc] sm:$0xf]
    %v860 = vpack.c.bf16 %v717, %v716
    %v861 = vpack.c.bf16 %v719, %v718
    %v862 = vpack.c.bf16 %v721, %v720
    %v863 = vpack.c.bf16 %v723, %v722
    %v864 = vpack.c.bf16 %v725, %v724
    %v865 = vpack.c.bf16 %v727, %v726
    %v866 = vpack.c.bf16 %v729, %v728
    %v867 = vpack.c.bf16 %v731, %v730
    %v996 = vunpack.c.l.b16 %v732
    %v997 = vunpack.c.l.b16 %v733
    %v998 = vunpack.c.l.b16 %v734
    %v999 = vunpack.c.l.b16 %v735
    %v1000 = vunpack.c.l.b16 %v736
    %v1001 = vunpack.c.l.b16 %v737
    %v1002 = vunpack.c.l.b16 %v738
    %v1003 = vunpack.c.l.b16 %v739
    %v1004 = vunpack.c.l.b16 %v740
    %v1005 = vunpack.c.l.b16 %v741
    %v1006 = vunpack.c.l.b16 %v742
    %v1007 = vunpack.c.l.b16 %v743
    %v1008 = vunpack.c.l.b16 %v744
    %v1009 = vunpack.c.l.b16 %v745
    %v1010 = vunpack.c.l.b16 %v746
    %v1011 = vunpack.c.l.b16 %v747
    %v1012 = vunpack.c.l.b16 %v748
    %v1013 = vunpack.c.l.b16 %v749
    %v1014 = vunpack.c.l.b16 %v750
    %v1015 = vunpack.c.l.b16 %v751
    %v1016 = vunpack.c.l.b16 %v752
    %v1017 = vunpack.c.l.b16 %v753
    %v1018 = vunpack.c.l.b16 %v754
    %v1019 = vunpack.c.l.b16 %v755
    %v1020 = vunpack.c.l.b16 %v756
    %v1021 = vunpack.c.l.b16 %v757
    %v1022 = vunpack.c.l.b16 %v758
    %v1023 = vunpack.c.l.b16 %v759
    %v1024 = vunpack.c.l.b16 %v760
    %v1025 = vunpack.c.l.b16 %v761
    %v1026 = vunpack.c.l.b16 %v762
    %v1027 = vunpack.c.l.b16 %v763
    %v1028 = vunpack.c.l.b16 %v764
    %v1029 = vunpack.c.l.b16 %v765
    %v1030 = vunpack.c.l.b16 %v766
    %v1031 = vunpack.c.l.b16 %v767
    %v1032 = vunpack.c.l.b16 %v768
    %v1033 = vunpack.c.l.b16 %v769
    %v1034 = vunpack.c.l.b16 %v770
    %v1035 = vunpack.c.l.b16 %v771
    %v1036 = vunpack.c.l.b16 %v772
    %v1037 = vunpack.c.l.b16 %v773
    %v1038 = vunpack.c.l.b16 %v774
    %v1039 = vunpack.c.l.b16 %v775
    %v1040 = vunpack.c.l.b16 %v776
    %v1041 = vunpack.c.l.b16 %v777
    %v1042 = vunpack.c.l.b16 %v778
    %v1043 = vunpack.c.l.b16 %v779
    %v1044 = vunpack.c.l.b16 %v780
    %v1045 = vunpack.c.l.b16 %v781
    %v1046 = vunpack.c.l.b16 %v782
    %v1047 = vunpack.c.l.b16 %v783
    %v1048 = vunpack.c.l.b16 %v784
    %v1049 = vunpack.c.l.b16 %v785
    %v1050 = vunpack.c.l.b16 %v786
    %v1051 = vunpack.c.l.b16 %v787
    %v1052 = vunpack.c.l.b16 %v788
    %v1053 = vunpack.c.l.b16 %v789
    %v1054 = vunpack.c.l.b16 %v790
    %v1055 = vunpack.c.l.b16 %v791
    %v1056 = vunpack.c.l.b16 %v792
    %v1057 = vunpack.c.l.b16 %v793
    %v1058 = vunpack.c.l.b16 %v794
    %v1059 = vunpack.c.l.b16 %v795
    %v1060 = vunpack.c.l.b16 %v796
    %v1061 = vunpack.c.l.b16 %v797
    %v1062 = vunpack.c.l.b16 %v798
    %v1063 = vunpack.c.l.b16 %v799
    %v1064 = vunpack.c.l.b16 %v800
    %v1065 = vunpack.c.l.b16 %v801
    %v1066 = vunpack.c.l.b16 %v802
    %v1067 = vunpack.c.l.b16 %v803
    %v1068 = vunpack.c.l.b16 %v804
    %v1069 = vunpack.c.l.b16 %v805
    %v1070 = vunpack.c.l.b16 %v806
    %v1071 = vunpack.c.l.b16 %v807
    %v1072 = vunpack.c.l.b16 %v808
    %v1073 = vunpack.c.l.b16 %v809
    %v1074 = vunpack.c.l.b16 %v810
    %v1075 = vunpack.c.l.b16 %v811
    %v1076 = vunpack.c.l.b16 %v812
    %v1077 = vunpack.c.l.b16 %v813
    %v1078 = vunpack.c.l.b16 %v814
    %v1079 = vunpack.c.l.b16 %v815
    %v1080 = vunpack.c.l.b16 %v816
    %v1081 = vunpack.c.l.b16 %v817
    %v1082 = vunpack.c.l.b16 %v818
    %v1083 = vunpack.c.l.b16 %v819
    %v1084 = vunpack.c.l.b16 %v820
    %v1085 = vunpack.c.l.b16 %v821
    %v1086 = vunpack.c.l.b16 %v822
    %v1087 = vunpack.c.l.b16 %v823
    %v1088 = vunpack.c.l.b16 %v824
    %v1089 = vunpack.c.l.b16 %v825
    %v1090 = vunpack.c.l.b16 %v826
    %v1091 = vunpack.c.l.b16 %v827
    %v1092 = vunpack.c.l.b16 %v828
    %v1093 = vunpack.c.l.b16 %v829
    %v1094 = vunpack.c.l.b16 %v830
    %v1095 = vunpack.c.l.b16 %v831
    %v1096 = vunpack.c.l.b16 %v832
    %v1097 = vunpack.c.l.b16 %v833
    %v1098 = vunpack.c.l.b16 %v834
    %v1099 = vunpack.c.l.b16 %v835
    %v1100 = vunpack.c.l.b16 %v836
    %v1101 = vunpack.c.l.b16 %v837
    %v1102 = vunpack.c.l.b16 %v838
    %v1103 = vunpack.c.l.b16 %v839
    %v1104 = vunpack.c.l.b16 %v840
    %v1105 = vunpack.c.l.b16 %v841
    %v1106 = vunpack.c.l.b16 %v842
    %v1107 = vunpack.c.l.b16 %v843
    %v1108 = vunpack.c.l.b16 %v844
    %v1109 = vunpack.c.l.b16 %v845
    %v1110 = vunpack.c.l.b16 %v846
    %v1111 = vunpack.c.l.b16 %v847
    %v1112 = vunpack.c.l.b16 %v848
    %v1113 = vunpack.c.l.b16 %v849
    %v1114 = vunpack.c.l.b16 %v850
    %v1115 = vunpack.c.l.b16 %v851
    %v1116 = vunpack.c.l.b16 %v852
    %v1117 = vunpack.c.l.b16 %v853
    %v1118 = vunpack.c.l.b16 %v854
    %v1119 = vunpack.c.l.b16 %v855
    %v1120 = vunpack.c.l.b16 %v856
    %v1121 = vunpack.c.l.b16 %v857
    %v1122 = vunpack.c.l.b16 %v858
    %v1123 = vunpack.c.l.b16 %v859
    %v1124 = vpack.c.b16 %v997, %v996
    %v1125 = vpack.c.b16 %v999, %v998
    %v1126 = vpack.c.b16 %v1001, %v1000
    %v1127 = vpack.c.b16 %v1003, %v1002
    %v1128 = vpack.c.b16 %v1005, %v1004
    %v1129 = vpack.c.b16 %v1007, %v1006
    %v1130 = vpack.c.b16 %v1009, %v1008
    %v1131 = vpack.c.b16 %v1011, %v1010
    %v1132 = vpack.c.b16 %v1013, %v1012
    %v1133 = vpack.c.b16 %v1015, %v1014
    %v1134 = vpack.c.b16 %v1017, %v1016
    %v1135 = vpack.c.b16 %v1019, %v1018
    %v1136 = vpack.c.b16 %v1021, %v1020
    %v1137 = vpack.c.b16 %v1023, %v1022
    %v1138 = vpack.c.b16 %v1025, %v1024
    %v1139 = vpack.c.b16 %v1027, %v1026
    %v1140 = vpack.c.b16 %v1029, %v1028
    %v1141 = vpack.c.b16 %v1031, %v1030
    %v1142 = vpack.c.b16 %v1033, %v1032
    %v1143 = vpack.c.b16 %v1035, %v1034
    %v1144 = vpack.c.b16 %v1037, %v1036
    %v1145 = vpack.c.b16 %v1039, %v1038
    %v1146 = vpack.c.b16 %v1041, %v1040
    %v1147 = vpack.c.b16 %v1043, %v1042
    %v1148 = vpack.c.b16 %v1045, %v1044
    %v1149 = vpack.c.b16 %v1047, %v1046
    %v1150 = vpack.c.b16 %v1049, %v1048
    %v1151 = vpack.c.b16 %v1051, %v1050
    %v1152 = vpack.c.b16 %v1053, %v1052
    %v1153 = vpack.c.b16 %v1055, %v1054
    %v1154 = vpack.c.b16 %v1057, %v1056
    %v1155 = vpack.c.b16 %v1059, %v1058
    %v1156 = vpack.c.b16 %v1061, %v1060
    %v1157 = vpack.c.b16 %v1063, %v1062
    %v1158 = vpack.c.b16 %v1065, %v1064
    %v1159 = vpack.c.b16 %v1067, %v1066
    %v1160 = vpack.c.b16 %v1069, %v1068
    %v1161 = vpack.c.b16 %v1071, %v1070
    %v1162 = vpack.c.b16 %v1073, %v1072
    %v1163 = vpack.c.b16 %v1075, %v1074
    %v1164 = vpack.c.b16 %v1077, %v1076
    %v1165 = vpack.c.b16 %v1079, %v1078
    %v1166 = vpack.c.b16 %v1081, %v1080
    %v1167 = vpack.c.b16 %v1083, %v1082
    %v1168 = vpack.c.b16 %v1085, %v1084
    %v1169 = vpack.c.b16 %v1087, %v1086
    %v1170 = vpack.c.b16 %v1089, %v1088
    %v1171 = vpack.c.b16 %v1091, %v1090
    %v1172 = vpack.c.b16 %v1093, %v1092
    %v1173 = vpack.c.b16 %v1095, %v1094
    %v1174 = vpack.c.b16 %v1097, %v1096
    %v1175 = vpack.c.b16 %v1099, %v1098
    %v1176 = vpack.c.b16 %v1101, %v1100
    %v1177 = vpack.c.b16 %v1103, %v1102
    %v1178 = vpack.c.b16 %v1105, %v1104
    %v1179 = vpack.c.b16 %v1107, %v1106
    %v1180 = vpack.c.b16 %v1109, %v1108
    %v1181 = vpack.c.b16 %v1111, %v1110
    %v1182 = vpack.c.b16 %v1113, %v1112
    %v1183 = vpack.c.b16 %v1115, %v1114
    %v1184 = vpack.c.b16 %v1117, %v1116
    %v1185 = vpack.c.b16 %v1119, %v1118
    %v1186 = vpack.c.b16 %v1121, %v1120
    %v1187 = vpack.c.b16 %v1123, %v1122
    %1252 = vmatprep.subr.bf16.mxu0 0
    %1253 = vmatpush1.bf16.msra.mxu0 %v860
    %1254 = vmatprep.subr.bf16.mxu0 0
    %1255 = vmatpush1.bf16.msra.mxu0 %v861
    %1256 = vmatprep.subr.bf16.mxu0 0
    %1257 = vmatpush1.bf16.msra.mxu0 %v862
    %1258 = vmatprep.subr.bf16.mxu0 0
    %1259 = vmatpush1.bf16.msra.mxu0 %v863
    %1260 = vmatprep.subr.bf16.mxu0 0
    %1261 = vmatpush1.bf16.msra.mxu0 %v864
    %1262 = vmatprep.subr.bf16.mxu0 0
    %1263 = vmatpush1.bf16.msra.mxu0 %v865
    %1264 = vmatprep.subr.bf16.mxu0 0
    %1265 = vmatpush1.bf16.msra.mxu0 %v866
    %1266 = vmatprep.subr.bf16.mxu0 0
    %1267 = vmatpush1.bf16.msra.mxu0 %v867
    %1268 = vmatprep.subr.bf16.mxu0 0
    %1269 = vmatpush1.bf16.msra.mxu0 0
    %1270 = vmatprep.subr.bf16.mxu0 0
    %1271 = vmatpush1.bf16.msra.mxu0 0
    %1272 = vmatprep.subr.bf16.mxu0 0
    %1273 = vmatpush1.bf16.msra.mxu0 0
    %1274 = vmatprep.subr.bf16.mxu0 0
    %1275 = vmatpush1.bf16.msra.mxu0 0
    %1276 = vmatprep.subr.bf16.mxu0 0
    %1277 = vmatpush1.bf16.msra.mxu0 0
    %1278 = vmatprep.subr.bf16.mxu0 0
    %1279 = vmatpush1.bf16.msra.mxu0 0
    %1280 = vmatprep.subr.bf16.mxu0 0
    %1281 = vmatpush1.bf16.msra.mxu0 0
    %1282 = vmatprep.subr.bf16.mxu0 0
    %1283 = vmatpush1.bf16.msra.mxu0 0
    %1284 = vmatprep.mubr.bf16.mxu0 0
    %1285 = vmatmul.mubr.bf16.gmra.mrb[0].mxu0 %v1124
    %v1286 = vpop.f32.mrb[0].mxu0
    %v1287 = vadd.f32 0.0, %v1286
    %v1288 = vpop.f32.mrb[0].mxu0
    %v1289 = vpop.f32.mrb[0].mxu0
    %v1290 = vadd.f32 0.0, %v1289
    %v1291 = vpop.f32.mrb[0].mxu0
    %1292 = vmatprep.mubr.bf16.mxu0 0
    %1293 = vmatmul.mubr.bf16.gmra.mrb[0].mxu0 %v1125
    %v1294 = vpop.f32.mrb[0].mxu0
    %v1295 = vadd.f32 0.0, %v1294
    %v1296 = vpop.f32.mrb[0].mxu0
    %v1297 = vpop.f32.mrb[0].mxu0
    %v1298 = vadd.f32 0.0, %v1297
    %v1299 = vpop.f32.mrb[0].mxu0
    %1300 = vmatprep.mubr.bf16.mxu0 0
    %1301 = vmatmul.mubr.bf16.gmra.mrb[0].mxu0 %v1126
    %v1302 = vpop.f32.mrb[0].mxu0
    %v1303 = vadd.f32 0.0, %v1302
    %v1304 = vpop.f32.mrb[0].mxu0
    %v1305 = vpop.f32.mrb[0].mxu0
    %v1306 = vadd.f32 0.0, %v1305
    %v1307 = vpop.f32.mrb[0].mxu0
    %1308 = vmatprep.mubr.bf16.mxu0 0
    %1309 = vmatmul.mubr.bf16.gmra.mrb[0].mxu0 %v1127
    %v1310 = vpop.f32.mrb[0].mxu0
    %v1311 = vadd.f32 0.0, %v1310
    %v1312 = vpop.f32.mrb[0].mxu0
    %v1313 = vpop.f32.mrb[0].mxu0
    %v1314 = vadd.f32 0.0, %v1313
    %v1315 = vpop.f32.mrb[0].mxu0
    %1316 = vmatprep.mubr.bf16.mxu0 0
    %1317 = vmatmul.mubr.bf16.gmra.mrb[0].mxu0 %v1128
    %v1318 = vpop.f32.mrb[0].mxu0
    %v1319 = vadd.f32 0.0, %v1318
    %v1320 = vpop.f32.mrb[0].mxu0
    %v1321 = vpop.f32.mrb[0].mxu0
    %v1322 = vadd.f32 0.0, %v1321
    %v1323 = vpop.f32.mrb[0].mxu0
    %1324 = vmatprep.mubr.bf16.mxu0 0
    %1325 = vmatmul.mubr.bf16.gmra.mrb[0].mxu0 %v1129
    %v1326 = vpop.f32.mrb[0].mxu0
    %v1327 = vadd.f32 0.0, %v1326
    %v1328 = vpop.f32.mrb[0].mxu0
    %v1329 = vpop.f32.mrb[0].mxu0
    %v1330 = vadd.f32 0.0, %v1329
    %v1331 = vpop.f32.mrb[0].mxu0
    %1332 = vmatprep.mubr.bf16.mxu0 0
    %1333 = vmatmul.mubr.bf16.gmra.mrb[0].mxu0 %v1130
    %v1334 = vpop.f32.mrb[0].mxu0
    %v1335 = vadd.f32 0.0, %v1334
    %v1336 = vpop.f32.mrb[0].mxu0
    %v1337 = vpop.f32.mrb[0].mxu0
    %v1338 = vadd.f32 0.0, %v1337
    %v1339 = vpop.f32.mrb[0].mxu0
    %1340 = vmatprep.mubr.bf16.mxu0 0
    %1341 = vmatmul.mubr.bf16.gmra.mrb[0].mxu0 %v1131
    %v1342 = vpop.f32.mrb[0].mxu0
    %v1343 = vadd.f32 0.0, %v1342
    %v1344 = vpop.f32.mrb[0].mxu0
    %v1345 = vpop.f32.mrb[0].mxu0
    %v1346 = vadd.f32 0.0, %v1345
    %v1347 = vpop.f32.mrb[0].mxu0
    %1348 = vmatprep.mubr.bf16.mxu0 0
    %1349 = vmatmul.mubr.bf16.gmra.mrb[0].mxu0 %v1132
    %v1350 = vpop.f32.mrb[0].mxu0
    %v1351 = vadd.f32 0.0, %v1350
    %v1352 = vpop.f32.mrb[0].mxu0
    %v1353 = vpop.f32.mrb[0].mxu0
    %v1354 = vadd.f32 0.0, %v1353
    %v1355 = vpop.f32.mrb[0].mxu0
    %1356 = vmatprep.mubr.bf16.mxu0 0
    %1357 = vmatmul.mubr.bf16.gmra.mrb[0].mxu0 %v1133
    %v1358 = vpop.f32.mrb[0].mxu0
    %v1359 = vadd.f32 0.0, %v1358
    %v1360 = vpop.f32.mrb[0].mxu0
    %v1361 = vpop.f32.mrb[0].mxu0
    %v1362 = vadd.f32 0.0, %v1361
    %v1363 = vpop.f32.mrb[0].mxu0
    %1364 = vmatprep.mubr.bf16.mxu0 0
    %1365 = vmatmul.mubr.bf16.gmra.mrb[0].mxu0 %v1134
    %v1366 = vpop.f32.mrb[0].mxu0
    %v1367 = vadd.f32 0.0, %v1366
    %v1368 = vpop.f32.mrb[0].mxu0
    %v1369 = vpop.f32.mrb[0].mxu0
    %v1370 = vadd.f32 0.0, %v1369
    %v1371 = vpop.f32.mrb[0].mxu0
    %1372 = vmatprep.mubr.bf16.mxu0 0
    %1373 = vmatmul.mubr.bf16.gmra.mrb[0].mxu0 %v1135
    %v1374 = vpop.f32.mrb[0].mxu0
    %v1375 = vadd.f32 0.0, %v1374
    %v1376 = vpop.f32.mrb[0].mxu0
    %v1377 = vpop.f32.mrb[0].mxu0
    %v1378 = vadd.f32 0.0, %v1377
    %v1379 = vpop.f32.mrb[0].mxu0
    %1380 = vmatprep.mubr.bf16.mxu0 0
    %1381 = vmatmul.mubr.bf16.gmra.mrb[0].mxu0 %v1136
    %v1382 = vpop.f32.mrb[0].mxu0
    %v1383 = vadd.f32 0.0, %v1382
    %v1384 = vpop.f32.mrb[0].mxu0
    %v1385 = vpop.f32.mrb[0].mxu0
    %v1386 = vadd.f32 0.0, %v1385
    %v1387 = vpop.f32.mrb[0].mxu0
    %1388 = vmatprep.mubr.bf16.mxu0 0
    %1389 = vmatmul.mubr.bf16.gmra.mrb[0].mxu0 %v1137
    %v1390 = vpop.f32.mrb[0].mxu0
    %v1391 = vadd.f32 0.0, %v1390
    %v1392 = vpop.f32.mrb[0].mxu0
    %v1393 = vpop.f32.mrb[0].mxu0
    %v1394 = vadd.f32 0.0, %v1393
    %v1395 = vpop.f32.mrb[0].mxu0
    %1396 = vmatprep.mubr.bf16.mxu0 0
    %1397 = vmatmul.mubr.bf16.gmra.mrb[0].mxu0 %v1138
    %v1398 = vpop.f32.mrb[0].mxu0
    %v1399 = vadd.f32 0.0, %v1398
    %v1400 = vpop.f32.mrb[0].mxu0
    %v1401 = vpop.f32.mrb[0].mxu0
    %v1402 = vadd.f32 0.0, %v1401
    %v1403 = vpop.f32.mrb[0].mxu0
    %1404 = vmatprep.mubr.bf16.mxu0 0
    %1405 = vmatmul.mubr.bf16.gmra.mrb[0].mxu0 %v1139
    %v1406 = vpop.f32.mrb[0].mxu0
    %v1407 = vadd.f32 0.0, %v1406
    %v1408 = vpop.f32.mrb[0].mxu0
    %v1409 = vpop.f32.mrb[0].mxu0
    %v1410 = vadd.f32 0.0, %v1409
    %v1411 = vpop.f32.mrb[0].mxu0
    %1412 = vmatprep.mubr.bf16.mxu0 0
    %1413 = vmatmul.mubr.bf16.gmra.mrb[0].mxu0 %v1140
    %v1414 = vpop.f32.mrb[0].mxu0
    %v1415 = vadd.f32 0.0, %v1414
    %v1416 = vpop.f32.mrb[0].mxu0
    %v1417 = vpop.f32.mrb[0].mxu0
    %v1418 = vadd.f32 0.0, %v1417
    %v1419 = vpop.f32.mrb[0].mxu0
    %1420 = vmatprep.mubr.bf16.mxu0 0
    %1421 = vmatmul.mubr.bf16.gmra.mrb[0].mxu0 %v1141
    %v1422 = vpop.f32.mrb[0].mxu0
    %v1423 = vadd.f32 0.0, %v1422
    %v1424 = vpop.f32.mrb[0].mxu0
    %v1425 = vpop.f32.mrb[0].mxu0
    %v1426 = vadd.f32 0.0, %v1425
    %v1427 = vpop.f32.mrb[0].mxu0
    %1428 = vmatprep.mubr.bf16.mxu0 0
    %1429 = vmatmul.mubr.bf16.gmra.mrb[0].mxu0 %v1142
    %v1430 = vpop.f32.mrb[0].mxu0
    %v1431 = vadd.f32 0.0, %v1430
    %v1432 = vpop.f32.mrb[0].mxu0
    %v1433 = vpop.f32.mrb[0].mxu0
    %v1434 = vadd.f32 0.0, %v1433
    %v1435 = vpop.f32.mrb[0].mxu0
    %1436 = vmatprep.mubr.bf16.mxu0 0
    %1437 = vmatmul.mubr.bf16.gmra.mrb[0].mxu0 %v1143
    %v1438 = vpop.f32.mrb[0].mxu0
    %v1439 = vadd.f32 0.0, %v1438
    %v1440 = vpop.f32.mrb[0].mxu0
    %v1441 = vpop.f32.mrb[0].mxu0
    %v1442 = vadd.f32 0.0, %v1441
    %v1443 = vpop.f32.mrb[0].mxu0
    %1444 = vmatprep.mubr.bf16.mxu0 0
    %1445 = vmatmul.mubr.bf16.gmra.mrb[0].mxu0 %v1144
    %v1446 = vpop.f32.mrb[0].mxu0
    %v1447 = vadd.f32 0.0, %v1446
    %v1448 = vpop.f32.mrb[0].mxu0
    %v1449 = vpop.f32.mrb[0].mxu0
    %v1450 = vadd.f32 0.0, %v1449
    %v1451 = vpop.f32.mrb[0].mxu0
    %1452 = vmatprep.mubr.bf16.mxu0 0
    %1453 = vmatmul.mubr.bf16.gmra.mrb[0].mxu0 %v1145
    %v1454 = vpop.f32.mrb[0].mxu0
    %v1455 = vadd.f32 0.0, %v1454
    %v1456 = vpop.f32.mrb[0].mxu0
    %v1457 = vpop.f32.mrb[0].mxu0
    %v1458 = vadd.f32 0.0, %v1457
    %v1459 = vpop.f32.mrb[0].mxu0
    %1460 = vmatprep.mubr.bf16.mxu0 0
    %1461 = vmatmul.mubr.bf16.gmra.mrb[0].mxu0 %v1146
    %v1462 = vpop.f32.mrb[0].mxu0
    %v1463 = vadd.f32 0.0, %v1462
    %v1464 = vpop.f32.mrb[0].mxu0
    %v1465 = vpop.f32.mrb[0].mxu0
    %v1466 = vadd.f32 0.0, %v1465
    %v1467 = vpop.f32.mrb[0].mxu0
    %1468 = vmatprep.mubr.bf16.mxu0 0
    %1469 = vmatmul.mubr.bf16.gmra.mrb[0].mxu0 %v1147
    %v1470 = vpop.f32.mrb[0].mxu0
    %v1471 = vadd.f32 0.0, %v1470
    %v1472 = vpop.f32.mrb[0].mxu0
    %v1473 = vpop.f32.mrb[0].mxu0
    %v1474 = vadd.f32 0.0, %v1473
    %v1475 = vpop.f32.mrb[0].mxu0
    %1476 = vmatprep.mubr.bf16.mxu0 0
    %1477 = vmatmul.mubr.bf16.gmra.mrb[0].mxu0 %v1148
    %v1478 = vpop.f32.mrb[0].mxu0
    %v1479 = vadd.f32 0.0, %v1478
    %v1480 = vpop.f32.mrb[0].mxu0
    %v1481 = vpop.f32.mrb[0].mxu0
    %v1482 = vadd.f32 0.0, %v1481
    %v1483 = vpop.f32.mrb[0].mxu0
    %1484 = vmatprep.mubr.bf16.mxu0 0
    %1485 = vmatmul.mubr.bf16.gmra.mrb[0].mxu0 %v1149
    %v1486 = vpop.f32.mrb[0].mxu0
    %v1487 = vadd.f32 0.0, %v1486
    %v1488 = vpop.f32.mrb[0].mxu0
    %v1489 = vpop.f32.mrb[0].mxu0
    %v1490 = vadd.f32 0.0, %v1489
    %v1491 = vpop.f32.mrb[0].mxu0
    %1492 = vmatprep.mubr.bf16.mxu0 0
    %1493 = vmatmul.mubr.bf16.gmra.mrb[0].mxu0 %v1150
    %v1494 = vpop.f32.mrb[0].mxu0
    %v1495 = vadd.f32 0.0, %v1494
    %v1496 = vpop.f32.mrb[0].mxu0
    %v1497 = vpop.f32.mrb[0].mxu0
    %v1498 = vadd.f32 0.0, %v1497
    %v1499 = vpop.f32.mrb[0].mxu0
    %1500 = vmatprep.mubr.bf16.mxu0 0
    %1501 = vmatmul.mubr.bf16.gmra.mrb[0].mxu0 %v1151
    %v1502 = vpop.f32.mrb[0].mxu0
    %v1503 = vadd.f32 0.0, %v1502
    %v1504 = vpop.f32.mrb[0].mxu0
    %v1505 = vpop.f32.mrb[0].mxu0
    %v1506 = vadd.f32 0.0, %v1505
    %v1507 = vpop.f32.mrb[0].mxu0
    %1508 = vmatprep.mubr.bf16.mxu0 0
    %1509 = vmatmul.mubr.bf16.gmra.mrb[0].mxu0 %v1152
    %v1510 = vpop.f32.mrb[0].mxu0
    %v1511 = vadd.f32 0.0, %v1510
    %v1512 = vpop.f32.mrb[0].mxu0
    %v1513 = vpop.f32.mrb[0].mxu0
    %v1514 = vadd.f32 0.0, %v1513
    %v1515 = vpop.f32.mrb[0].mxu0
    %1516 = vmatprep.mubr.bf16.mxu0 0
    %1517 = vmatmul.mubr.bf16.gmra.mrb[0].mxu0 %v1153
    %v1518 = vpop.f32.mrb[0].mxu0
    %v1519 = vadd.f32 0.0, %v1518
    %v1520 = vpop.f32.mrb[0].mxu0
    %v1521 = vpop.f32.mrb[0].mxu0
    %v1522 = vadd.f32 0.0, %v1521
    %v1523 = vpop.f32.mrb[0].mxu0
    %1524 = vmatprep.mubr.bf16.mxu0 0
    %1525 = vmatmul.mubr.bf16.gmra.mrb[0].mxu0 %v1154
    %v1526 = vpop.f32.mrb[0].mxu0
    %v1527 = vadd.f32 0.0, %v1526
    %v1528 = vpop.f32.mrb[0].mxu0
    %v1529 = vpop.f32.mrb[0].mxu0
    %v1530 = vadd.f32 0.0, %v1529
    %v1531 = vpop.f32.mrb[0].mxu0
    %1532 = vmatprep.mubr.bf16.mxu0 0
    %1533 = vmatmul.mubr.bf16.gmra.mrb[0].mxu0 %v1155
    %v1534 = vpop.f32.mrb[0].mxu0
    %v1535 = vadd.f32 0.0, %v1534
    %v1536 = vpop.f32.mrb[0].mxu0
    %v1537 = vpop.f32.mrb[0].mxu0
    %v1538 = vadd.f32 0.0, %v1537
    %v1539 = vpop.f32.mrb[0].mxu0
    %1540 = vmatprep.mubr.bf16.mxu0 0
    %1541 = vmatmul.mubr.bf16.gmra.mrb[0].mxu0 %v1156
    %v1542 = vpop.f32.mrb[0].mxu0
    %v1543 = vadd.f32 0.0, %v1542
    %v1544 = vpop.f32.mrb[0].mxu0
    %v1545 = vpop.f32.mrb[0].mxu0
    %v1546 = vadd.f32 0.0, %v1545
    %v1547 = vpop.f32.mrb[0].mxu0
    %1548 = vmatprep.mubr.bf16.mxu0 0
    %1549 = vmatmul.mubr.bf16.gmra.mrb[0].mxu0 %v1157
    %v1550 = vpop.f32.mrb[0].mxu0
    %v1551 = vadd.f32 0.0, %v1550
    %v1552 = vpop.f32.mrb[0].mxu0
    %v1553 = vpop.f32.mrb[0].mxu0
    %v1554 = vadd.f32 0.0, %v1553
    %v1555 = vpop.f32.mrb[0].mxu0
    %1556 = vmatprep.mubr.bf16.mxu0 0
    %1557 = vmatmul.mubr.bf16.gmra.mrb[0].mxu0 %v1158
    %v1558 = vpop.f32.mrb[0].mxu0
    %v1559 = vadd.f32 0.0, %v1558
    %v1560 = vpop.f32.mrb[0].mxu0
    %v1561 = vpop.f32.mrb[0].mxu0
    %v1562 = vadd.f32 0.0, %v1561
    %v1563 = vpop.f32.mrb[0].mxu0
    %1564 = vmatprep.mubr.bf16.mxu0 0
    %1565 = vmatmul.mubr.bf16.gmra.mrb[0].mxu0 %v1159
    %v1566 = vpop.f32.mrb[0].mxu0
    %v1567 = vadd.f32 0.0, %v1566
    %v1568 = vpop.f32.mrb[0].mxu0
    %v1569 = vpop.f32.mrb[0].mxu0
    %v1570 = vadd.f32 0.0, %v1569
    %v1571 = vpop.f32.mrb[0].mxu0
    %1572 = vmatprep.mubr.bf16.mxu0 0
    %1573 = vmatmul.mubr.bf16.gmra.mrb[0].mxu0 %v1160
    %v1574 = vpop.f32.mrb[0].mxu0
    %v1575 = vadd.f32 0.0, %v1574
    %v1576 = vpop.f32.mrb[0].mxu0
    %v1577 = vpop.f32.mrb[0].mxu0
    %v1578 = vadd.f32 0.0, %v1577
    %v1579 = vpop.f32.mrb[0].mxu0
    %1580 = vmatprep.mubr.bf16.mxu0 0
    %1581 = vmatmul.mubr.bf16.gmra.mrb[0].mxu0 %v1161
    %v1582 = vpop.f32.mrb[0].mxu0
    %v1583 = vadd.f32 0.0, %v1582
    %v1584 = vpop.f32.mrb[0].mxu0
    %v1585 = vpop.f32.mrb[0].mxu0
    %v1586 = vadd.f32 0.0, %v1585
    %v1587 = vpop.f32.mrb[0].mxu0
    %1588 = vmatprep.mubr.bf16.mxu0 0
    %1589 = vmatmul.mubr.bf16.gmra.mrb[0].mxu0 %v1162
    %v1590 = vpop.f32.mrb[0].mxu0
    %v1591 = vadd.f32 0.0, %v1590
    %v1592 = vpop.f32.mrb[0].mxu0
    %v1593 = vpop.f32.mrb[0].mxu0
    %v1594 = vadd.f32 0.0, %v1593
    %v1595 = vpop.f32.mrb[0].mxu0
    %1596 = vmatprep.mubr.bf16.mxu0 0
    %1597 = vmatmul.mubr.bf16.gmra.mrb[0].mxu0 %v1163
    %v1598 = vpop.f32.mrb[0].mxu0
    %v1599 = vadd.f32 0.0, %v1598
    %v1600 = vpop.f32.mrb[0].mxu0
    %v1601 = vpop.f32.mrb[0].mxu0
    %v1602 = vadd.f32 0.0, %v1601
    %v1603 = vpop.f32.mrb[0].mxu0
    %1604 = vmatprep.mubr.bf16.mxu0 0
    %1605 = vmatmul.mubr.bf16.gmra.mrb[0].mxu0 %v1164
    %v1606 = vpop.f32.mrb[0].mxu0
    %v1607 = vadd.f32 0.0, %v1606
    %v1608 = vpop.f32.mrb[0].mxu0
    %v1609 = vpop.f32.mrb[0].mxu0
    %v1610 = vadd.f32 0.0, %v1609
    %v1611 = vpop.f32.mrb[0].mxu0
    %1612 = vmatprep.mubr.bf16.mxu0 0
    %1613 = vmatmul.mubr.bf16.gmra.mrb[0].mxu0 %v1165
    %v1614 = vpop.f32.mrb[0].mxu0
    %v1615 = vadd.f32 0.0, %v1614
    %v1616 = vpop.f32.mrb[0].mxu0
    %v1617 = vpop.f32.mrb[0].mxu0
    %v1618 = vadd.f32 0.0, %v1617
    %v1619 = vpop.f32.mrb[0].mxu0
    %1620 = vmatprep.mubr.bf16.mxu0 0
    %1621 = vmatmul.mubr.bf16.gmra.mrb[0].mxu0 %v1166
    %v1622 = vpop.f32.mrb[0].mxu0
    %v1623 = vadd.f32 0.0, %v1622
    %v1624 = vpop.f32.mrb[0].mxu0
    %v1625 = vpop.f32.mrb[0].mxu0
    %v1626 = vadd.f32 0.0, %v1625
    %v1627 = vpop.f32.mrb[0].mxu0
    %1628 = vmatprep.mubr.bf16.mxu0 0
    %1629 = vmatmul.mubr.bf16.gmra.mrb[0].mxu0 %v1167
    %v1630 = vpop.f32.mrb[0].mxu0
    %v1631 = vadd.f32 0.0, %v1630
    %v1632 = vpop.f32.mrb[0].mxu0
    %v1633 = vpop.f32.mrb[0].mxu0
    %v1634 = vadd.f32 0.0, %v1633
    %v1635 = vpop.f32.mrb[0].mxu0
    %1636 = vmatprep.mubr.bf16.mxu0 0
    %1637 = vmatmul.mubr.bf16.gmra.mrb[0].mxu0 %v1168
    %v1638 = vpop.f32.mrb[0].mxu0
    %v1639 = vadd.f32 0.0, %v1638
    %v1640 = vpop.f32.mrb[0].mxu0
    %v1641 = vpop.f32.mrb[0].mxu0
    %v1642 = vadd.f32 0.0, %v1641
    %v1643 = vpop.f32.mrb[0].mxu0
    %1644 = vmatprep.mubr.bf16.mxu0 0
    %1645 = vmatmul.mubr.bf16.gmra.mrb[0].mxu0 %v1169
    %v1646 = vpop.f32.mrb[0].mxu0
    %v1647 = vadd.f32 0.0, %v1646
    %v1648 = vpop.f32.mrb[0].mxu0
    %v1649 = vpop.f32.mrb[0].mxu0
    %v1650 = vadd.f32 0.0, %v1649
    %v1651 = vpop.f32.mrb[0].mxu0
    %1652 = vmatprep.mubr.bf16.mxu0 0
    %1653 = vmatmul.mubr.bf16.gmra.mrb[0].mxu0 %v1170
    %v1654 = vpop.f32.mrb[0].mxu0
    %v1655 = vadd.f32 0.0, %v1654
    %v1656 = vpop.f32.mrb[0].mxu0
    %v1657 = vpop.f32.mrb[0].mxu0
    %v1658 = vadd.f32 0.0, %v1657
    %v1659 = vpop.f32.mrb[0].mxu0
    %1660 = vmatprep.mubr.bf16.mxu0 0
    %1661 = vmatmul.mubr.bf16.gmra.mrb[0].mxu0 %v1171
    %v1662 = vpop.f32.mrb[0].mxu0
    %v1663 = vadd.f32 0.0, %v1662
    %v1664 = vpop.f32.mrb[0].mxu0
    %v1665 = vpop.f32.mrb[0].mxu0
    %v1666 = vadd.f32 0.0, %v1665
    %v1667 = vpop.f32.mrb[0].mxu0
    %1668 = vmatprep.mubr.bf16.mxu0 0
    %1669 = vmatmul.mubr.bf16.gmra.mrb[0].mxu0 %v1172
    %v1670 = vpop.f32.mrb[0].mxu0
    %v1671 = vadd.f32 0.0, %v1670
    %v1672 = vpop.f32.mrb[0].mxu0
    %v1673 = vpop.f32.mrb[0].mxu0
    %v1674 = vadd.f32 0.0, %v1673
    %v1675 = vpop.f32.mrb[0].mxu0
    %1676 = vmatprep.mubr.bf16.mxu0 0
    %1677 = vmatmul.mubr.bf16.gmra.mrb[0].mxu0 %v1173
    %v1678 = vpop.f32.mrb[0].mxu0
    %v1679 = vadd.f32 0.0, %v1678
    %v1680 = vpop.f32.mrb[0].mxu0
    %v1681 = vpop.f32.mrb[0].mxu0
    %v1682 = vadd.f32 0.0, %v1681
    %v1683 = vpop.f32.mrb[0].mxu0
    %1684 = vmatprep.mubr.bf16.mxu0 0
    %1685 = vmatmul.mubr.bf16.gmra.mrb[0].mxu0 %v1174
    %v1686 = vpop.f32.mrb[0].mxu0
    %v1687 = vadd.f32 0.0, %v1686
    %v1688 = vpop.f32.mrb[0].mxu0
    %v1689 = vpop.f32.mrb[0].mxu0
    %v1690 = vadd.f32 0.0, %v1689
    %v1691 = vpop.f32.mrb[0].mxu0
    %1692 = vmatprep.mubr.bf16.mxu0 0
    %1693 = vmatmul.mubr.bf16.gmra.mrb[0].mxu0 %v1175
    %v1694 = vpop.f32.mrb[0].mxu0
    %v1695 = vadd.f32 0.0, %v1694
    %v1696 = vpop.f32.mrb[0].mxu0
    %v1697 = vpop.f32.mrb[0].mxu0
    %v1698 = vadd.f32 0.0, %v1697
    %v1699 = vpop.f32.mrb[0].mxu0
    %1700 = vmatprep.mubr.bf16.mxu0 0
    %1701 = vmatmul.mubr.bf16.gmra.mrb[0].mxu0 %v1176
    %v1702 = vpop.f32.mrb[0].mxu0
    %v1703 = vadd.f32 0.0, %v1702
    %v1704 = vpop.f32.mrb[0].mxu0
    %v1705 = vpop.f32.mrb[0].mxu0
    %v1706 = vadd.f32 0.0, %v1705
    %v1707 = vpop.f32.mrb[0].mxu0
    %1708 = vmatprep.mubr.bf16.mxu0 0
    %1709 = vmatmul.mubr.bf16.gmra.mrb[0].mxu0 %v1177
    %v1710 = vpop.f32.mrb[0].mxu0
    %v1711 = vadd.f32 0.0, %v1710
    %v1712 = vpop.f32.mrb[0].mxu0
    %v1713 = vpop.f32.mrb[0].mxu0
    %v1714 = vadd.f32 0.0, %v1713
    %v1715 = vpop.f32.mrb[0].mxu0
    %1716 = vmatprep.mubr.bf16.mxu0 0
    %1717 = vmatmul.mubr.bf16.gmra.mrb[0].mxu0 %v1178
    %v1718 = vpop.f32.mrb[0].mxu0
    %v1719 = vadd.f32 0.0, %v1718
    %v1720 = vpop.f32.mrb[0].mxu0
    %v1721 = vpop.f32.mrb[0].mxu0
    %v1722 = vadd.f32 0.0, %v1721
    %v1723 = vpop.f32.mrb[0].mxu0
    %1724 = vmatprep.mubr.bf16.mxu0 0
    %1725 = vmatmul.mubr.bf16.gmra.mrb[0].mxu0 %v1179
    %v1726 = vpop.f32.mrb[0].mxu0
    %v1727 = vadd.f32 0.0, %v1726
    %v1728 = vpop.f32.mrb[0].mxu0
    %v1729 = vpop.f32.mrb[0].mxu0
    %v1730 = vadd.f32 0.0, %v1729
    %v1731 = vpop.f32.mrb[0].mxu0
    %1732 = vmatprep.mubr.bf16.mxu0 0
    %1733 = vmatmul.mubr.bf16.gmra.mrb[0].mxu0 %v1180
    %v1734 = vpop.f32.mrb[0].mxu0
    %v1735 = vadd.f32 0.0, %v1734
    %v1736 = vpop.f32.mrb[0].mxu0
    %v1737 = vpop.f32.mrb[0].mxu0
    %v1738 = vadd.f32 0.0, %v1737
    %v1739 = vpop.f32.mrb[0].mxu0
    %1740 = vmatprep.mubr.bf16.mxu0 0
    %1741 = vmatmul.mubr.bf16.gmra.mrb[0].mxu0 %v1181
    %v1742 = vpop.f32.mrb[0].mxu0
    %v1743 = vadd.f32 0.0, %v1742
    %v1744 = vpop.f32.mrb[0].mxu0
    %v1745 = vpop.f32.mrb[0].mxu0
    %v1746 = vadd.f32 0.0, %v1745
    %v1747 = vpop.f32.mrb[0].mxu0
    %1748 = vmatprep.mubr.bf16.mxu0 0
    %1749 = vmatmul.mubr.bf16.gmra.mrb[0].mxu0 %v1182
    %v1750 = vpop.f32.mrb[0].mxu0
    %v1751 = vadd.f32 0.0, %v1750
    %v1752 = vpop.f32.mrb[0].mxu0
    %v1753 = vpop.f32.mrb[0].mxu0
    %v1754 = vadd.f32 0.0, %v1753
    %v1755 = vpop.f32.mrb[0].mxu0
    %1756 = vmatprep.mubr.bf16.mxu0 0
    %1757 = vmatmul.mubr.bf16.gmra.mrb[0].mxu0 %v1183
    %v1758 = vpop.f32.mrb[0].mxu0
    %v1759 = vadd.f32 0.0, %v1758
    %v1760 = vpop.f32.mrb[0].mxu0
    %v1761 = vpop.f32.mrb[0].mxu0
    %v1762 = vadd.f32 0.0, %v1761
    %v1763 = vpop.f32.mrb[0].mxu0
    %1764 = vmatprep.mubr.bf16.mxu0 0
    %1765 = vmatmul.mubr.bf16.gmra.mrb[0].mxu0 %v1184
    %v1766 = vpop.f32.mrb[0].mxu0
    %v1767 = vadd.f32 0.0, %v1766
    %v1768 = vpop.f32.mrb[0].mxu0
    %v1769 = vpop.f32.mrb[0].mxu0
    %v1770 = vadd.f32 0.0, %v1769
    %v1771 = vpop.f32.mrb[0].mxu0
    %1772 = vmatprep.mubr.bf16.mxu0 0
    %1773 = vmatmul.mubr.bf16.gmra.mrb[0].mxu0 %v1185
    %v1774 = vpop.f32.mrb[0].mxu0
    %v1775 = vadd.f32 0.0, %v1774
    %v1776 = vpop.f32.mrb[0].mxu0
    %v1777 = vpop.f32.mrb[0].mxu0
    %v1778 = vadd.f32 0.0, %v1777
    %v1779 = vpop.f32.mrb[0].mxu0
    %1780 = vmatprep.mubr.bf16.mxu0 0
    %1781 = vmatmul.mubr.bf16.gmra.mrb[0].mxu0 %v1186
    %v1782 = vpop.f32.mrb[0].mxu0
    %v1783 = vadd.f32 0.0, %v1782
    %v1784 = vpop.f32.mrb[0].mxu0
    %v1785 = vpop.f32.mrb[0].mxu0
    %v1786 = vadd.f32 0.0, %v1785
    %v1787 = vpop.f32.mrb[0].mxu0
    %1788 = vmatprep.mubr.bf16.mxu0 0
    %1789 = vmatmul.mubr.bf16.gmra.mrb[0].mxu0 %v1187
    %v1790 = vpop.f32.mrb[0].mxu0
    %v1791 = vadd.f32 0.0, %v1790
    %v1792 = vpop.f32.mrb[0].mxu0
    %v1793 = vpop.f32.mrb[0].mxu0
    %v1794 = vadd.f32 0.0, %v1793
    %v1795 = vpop.f32.mrb[0].mxu0
    %1796 = vdwg.mxu0
    %vm1797 = vcmask 261120
    %v1798 = vsel %vm1797, %v1287, -inf
    %1799 = vmax.xlane.f32.xlu0 %v1798
    %v1800 = vpop.xlane.xlu0 %1799
    %v1801 = vsel %vm1797, %v1290, -inf
    %1802 = vmax.xlane.f32.xlu0 %v1801
    %v1803 = vpop.xlane.xlu0 %1802
    %v1804 = vsel %vm1797, %v1295, -inf
    %1805 = vmax.xlane.f32.xlu0 %v1804
    %v1806 = vpop.xlane.xlu0 %1805
    %v1807 = vsel %vm1797, %v1298, -inf
    %1808 = vmax.xlane.f32.xlu0 %v1807
    %v1809 = vpop.xlane.xlu0 %1808
    %v1810 = vsel %vm1797, %v1303, -inf
    %1811 = vmax.xlane.f32.xlu0 %v1810
    %v1812 = vpop.xlane.xlu0 %1811
    %v1813 = vsel %vm1797, %v1306, -inf
    %1814 = vmax.xlane.f32.xlu0 %v1813
    %v1815 = vpop.xlane.xlu0 %1814
    %v1816 = vsel %vm1797, %v1311, -inf
    %1817 = vmax.xlane.f32.xlu0 %v1816
    %v1818 = vpop.xlane.xlu0 %1817
    %v1819 = vsel %vm1797, %v1314, -inf
    %1820 = vmax.xlane.f32.xlu0 %v1819
    %v1821 = vpop.xlane.xlu0 %1820
    %v1822 = vsel %vm1797, %v1319, -inf
    %1823 = vmax.xlane.f32.xlu0 %v1822
    %v1824 = vpop.xlane.xlu0 %1823
    %v1825 = vsel %vm1797, %v1322, -inf
    %1826 = vmax.xlane.f32.xlu0 %v1825
    %v1827 = vpop.xlane.xlu0 %1826
    %v1828 = vsel %vm1797, %v1327, -inf
    %1829 = vmax.xlane.f32.xlu0 %v1828
    %v1830 = vpop.xlane.xlu0 %1829
    %v1831 = vsel %vm1797, %v1330, -inf
    %1832 = vmax.xlane.f32.xlu0 %v1831
    %v1833 = vpop.xlane.xlu0 %1832
    %v1834 = vsel %vm1797, %v1335, -inf
    %1835 = vmax.xlane.f32.xlu0 %v1834
    %v1836 = vpop.xlane.xlu0 %1835
    %v1837 = vsel %vm1797, %v1338, -inf
    %1838 = vmax.xlane.f32.xlu0 %v1837
    %v1839 = vpop.xlane.xlu0 %1838
    %v1840 = vsel %vm1797, %v1343, -inf
    %1841 = vmax.xlane.f32.xlu0 %v1840
    %v1842 = vpop.xlane.xlu0 %1841
    %v1843 = vsel %vm1797, %v1346, -inf
    %1844 = vmax.xlane.f32.xlu0 %v1843
    %v1845 = vpop.xlane.xlu0 %1844
    %v1846 = vsel %vm1797, %v1351, -inf
    %1847 = vmax.xlane.f32.xlu0 %v1846
    %v1848 = vpop.xlane.xlu0 %1847
    %v1849 = vsel %vm1797, %v1354, -inf
    %1850 = vmax.xlane.f32.xlu0 %v1849
    %v1851 = vpop.xlane.xlu0 %1850
    %v1852 = vsel %vm1797, %v1359, -inf
    %1853 = vmax.xlane.f32.xlu0 %v1852
    %v1854 = vpop.xlane.xlu0 %1853
    %v1855 = vsel %vm1797, %v1362, -inf
    %1856 = vmax.xlane.f32.xlu0 %v1855
    %v1857 = vpop.xlane.xlu0 %1856
    %v1858 = vsel %vm1797, %v1367, -inf
    %1859 = vmax.xlane.f32.xlu0 %v1858
    %v1860 = vpop.xlane.xlu0 %1859
    %v1861 = vsel %vm1797, %v1370, -inf
    %1862 = vmax.xlane.f32.xlu0 %v1861
    %v1863 = vpop.xlane.xlu0 %1862
    %v1864 = vsel %vm1797, %v1375, -inf
    %1865 = vmax.xlane.f32.xlu0 %v1864
    %v1866 = vpop.xlane.xlu0 %1865
    %v1867 = vsel %vm1797, %v1378, -inf
    %1868 = vmax.xlane.f32.xlu0 %v1867
    %v1869 = vpop.xlane.xlu0 %1868
    %v1870 = vsel %vm1797, %v1383, -inf
    %1871 = vmax.xlane.f32.xlu0 %v1870
    %v1872 = vpop.xlane.xlu0 %1871
    %v1873 = vsel %vm1797, %v1386, -inf
    %1874 = vmax.xlane.f32.xlu0 %v1873
    %v1875 = vpop.xlane.xlu0 %1874
    %v1876 = vsel %vm1797, %v1391, -inf
    %1877 = vmax.xlane.f32.xlu0 %v1876
    %v1878 = vpop.xlane.xlu0 %1877
    %v1879 = vsel %vm1797, %v1394, -inf
    %1880 = vmax.xlane.f32.xlu0 %v1879
    %v1881 = vpop.xlane.xlu0 %1880
    %v1882 = vsel %vm1797, %v1399, -inf
    %1883 = vmax.xlane.f32.xlu0 %v1882
    %v1884 = vpop.xlane.xlu0 %1883
    %v1885 = vsel %vm1797, %v1402, -inf
    %1886 = vmax.xlane.f32.xlu0 %v1885
    %v1887 = vpop.xlane.xlu0 %1886
    %v1888 = vsel %vm1797, %v1407, -inf
    %1889 = vmax.xlane.f32.xlu0 %v1888
    %v1890 = vpop.xlane.xlu0 %1889
    %v1891 = vsel %vm1797, %v1410, -inf
    %1892 = vmax.xlane.f32.xlu0 %v1891
    %v1893 = vpop.xlane.xlu0 %1892
    %v1894 = vsel %vm1797, %v1415, -inf
    %1895 = vmax.xlane.f32.xlu0 %v1894
    %v1896 = vpop.xlane.xlu0 %1895
    %v1897 = vsel %vm1797, %v1418, -inf
    %1898 = vmax.xlane.f32.xlu0 %v1897
    %v1899 = vpop.xlane.xlu0 %1898
    %v1900 = vsel %vm1797, %v1423, -inf
    %1901 = vmax.xlane.f32.xlu0 %v1900
    %v1902 = vpop.xlane.xlu0 %1901
    %v1903 = vsel %vm1797, %v1426, -inf
    %1904 = vmax.xlane.f32.xlu0 %v1903
    %v1905 = vpop.xlane.xlu0 %1904
    %v1906 = vsel %vm1797, %v1431, -inf
    %1907 = vmax.xlane.f32.xlu0 %v1906
    %v1908 = vpop.xlane.xlu0 %1907
    %v1909 = vsel %vm1797, %v1434, -inf
    %1910 = vmax.xlane.f32.xlu0 %v1909
    %v1911 = vpop.xlane.xlu0 %1910
    %v1912 = vsel %vm1797, %v1439, -inf
    %1913 = vmax.xlane.f32.xlu0 %v1912
    %v1914 = vpop.xlane.xlu0 %1913
    %v1915 = vsel %vm1797, %v1442, -inf
    %1916 = vmax.xlane.f32.xlu0 %v1915
    %v1917 = vpop.xlane.xlu0 %1916
    %v1918 = vsel %vm1797, %v1447, -inf
    %1919 = vmax.xlane.f32.xlu0 %v1918
    %v1920 = vpop.xlane.xlu0 %1919
    %v1921 = vsel %vm1797, %v1450, -inf
    %1922 = vmax.xlane.f32.xlu0 %v1921
    %v1923 = vpop.xlane.xlu0 %1922
    %v1924 = vsel %vm1797, %v1455, -inf
    %1925 = vmax.xlane.f32.xlu0 %v1924
    %v1926 = vpop.xlane.xlu0 %1925
    %v1927 = vsel %vm1797, %v1458, -inf
    %1928 = vmax.xlane.f32.xlu0 %v1927
    %v1929 = vpop.xlane.xlu0 %1928
    %v1930 = vsel %vm1797, %v1463, -inf
    %1931 = vmax.xlane.f32.xlu0 %v1930
    %v1932 = vpop.xlane.xlu0 %1931
    %v1933 = vsel %vm1797, %v1466, -inf
    %1934 = vmax.xlane.f32.xlu0 %v1933
    %v1935 = vpop.xlane.xlu0 %1934
    %v1936 = vsel %vm1797, %v1471, -inf
    %1937 = vmax.xlane.f32.xlu0 %v1936
    %v1938 = vpop.xlane.xlu0 %1937
    %v1939 = vsel %vm1797, %v1474, -inf
    %1940 = vmax.xlane.f32.xlu0 %v1939
    %v1941 = vpop.xlane.xlu0 %1940
    %v1942 = vsel %vm1797, %v1479, -inf
    %1943 = vmax.xlane.f32.xlu0 %v1942
    %v1944 = vpop.xlane.xlu0 %1943
    %v1945 = vsel %vm1797, %v1482, -inf
    %1946 = vmax.xlane.f32.xlu0 %v1945
    %v1947 = vpop.xlane.xlu0 %1946
    %v1948 = vsel %vm1797, %v1487, -inf
    %1949 = vmax.xlane.f32.xlu0 %v1948
    %v1950 = vpop.xlane.xlu0 %1949
    %v1951 = vsel %vm1797, %v1490, -inf
    %1952 = vmax.xlane.f32.xlu0 %v1951
    %v1953 = vpop.xlane.xlu0 %1952
    %v1954 = vsel %vm1797, %v1495, -inf
    %1955 = vmax.xlane.f32.xlu0 %v1954
    %v1956 = vpop.xlane.xlu0 %1955
    %v1957 = vsel %vm1797, %v1498, -inf
    %1958 = vmax.xlane.f32.xlu0 %v1957
    %v1959 = vpop.xlane.xlu0 %1958
    %v1960 = vsel %vm1797, %v1503, -inf
    %1961 = vmax.xlane.f32.xlu0 %v1960
    %v1962 = vpop.xlane.xlu0 %1961
    %v1963 = vsel %vm1797, %v1506, -inf
    %1964 = vmax.xlane.f32.xlu0 %v1963
    %v1965 = vpop.xlane.xlu0 %1964
    %v1966 = vsel %vm1797, %v1511, -inf
    %1967 = vmax.xlane.f32.xlu0 %v1966
    %v1968 = vpop.xlane.xlu0 %1967
    %v1969 = vsel %vm1797, %v1514, -inf
    %1970 = vmax.xlane.f32.xlu0 %v1969
    %v1971 = vpop.xlane.xlu0 %1970
    %v1972 = vsel %vm1797, %v1519, -inf
    %1973 = vmax.xlane.f32.xlu0 %v1972
    %v1974 = vpop.xlane.xlu0 %1973
    %v1975 = vsel %vm1797, %v1522, -inf
    %1976 = vmax.xlane.f32.xlu0 %v1975
    %v1977 = vpop.xlane.xlu0 %1976
    %v1978 = vsel %vm1797, %v1527, -inf
    %1979 = vmax.xlane.f32.xlu0 %v1978
    %v1980 = vpop.xlane.xlu0 %1979
    %v1981 = vsel %vm1797, %v1530, -inf
    %1982 = vmax.xlane.f32.xlu0 %v1981
    %v1983 = vpop.xlane.xlu0 %1982
    %v1984 = vsel %vm1797, %v1535, -inf
    %1985 = vmax.xlane.f32.xlu0 %v1984
    %v1986 = vpop.xlane.xlu0 %1985
    %v1987 = vsel %vm1797, %v1538, -inf
    %1988 = vmax.xlane.f32.xlu0 %v1987
    %v1989 = vpop.xlane.xlu0 %1988
    %v1990 = vsel %vm1797, %v1543, -inf
    %1991 = vmax.xlane.f32.xlu0 %v1990
    %v1992 = vpop.xlane.xlu0 %1991
    %v1993 = vsel %vm1797, %v1546, -inf
    %1994 = vmax.xlane.f32.xlu0 %v1993
    %v1995 = vpop.xlane.xlu0 %1994
    %v1996 = vsel %vm1797, %v1551, -inf
    %1997 = vmax.xlane.f32.xlu0 %v1996
    %v1998 = vpop.xlane.xlu0 %1997
    %v1999 = vsel %vm1797, %v1554, -inf
    %2000 = vmax.xlane.f32.xlu0 %v1999
    %v2001 = vpop.xlane.xlu0 %2000
    %v2002 = vsel %vm1797, %v1559, -inf
    %2003 = vmax.xlane.f32.xlu0 %v2002
    %v2004 = vpop.xlane.xlu0 %2003
    %v2005 = vsel %vm1797, %v1562, -inf
    %2006 = vmax.xlane.f32.xlu0 %v2005
    %v2007 = vpop.xlane.xlu0 %2006
    %v2008 = vsel %vm1797, %v1567, -inf
    %2009 = vmax.xlane.f32.xlu0 %v2008
    %v2010 = vpop.xlane.xlu0 %2009
    %v2011 = vsel %vm1797, %v1570, -inf
    %2012 = vmax.xlane.f32.xlu0 %v2011
    %v2013 = vpop.xlane.xlu0 %2012
    %v2014 = vsel %vm1797, %v1575, -inf
    %2015 = vmax.xlane.f32.xlu0 %v2014
    %v2016 = vpop.xlane.xlu0 %2015
    %v2017 = vsel %vm1797, %v1578, -inf
    %2018 = vmax.xlane.f32.xlu0 %v2017
    %v2019 = vpop.xlane.xlu0 %2018
    %v2020 = vsel %vm1797, %v1583, -inf
    %2021 = vmax.xlane.f32.xlu0 %v2020
    %v2022 = vpop.xlane.xlu0 %2021
    %v2023 = vsel %vm1797, %v1586, -inf
    %2024 = vmax.xlane.f32.xlu0 %v2023
    %v2025 = vpop.xlane.xlu0 %2024
    %v2026 = vsel %vm1797, %v1591, -inf
    %2027 = vmax.xlane.f32.xlu0 %v2026
    %v2028 = vpop.xlane.xlu0 %2027
    %v2029 = vsel %vm1797, %v1594, -inf
    %2030 = vmax.xlane.f32.xlu0 %v2029
    %v2031 = vpop.xlane.xlu0 %2030
    %v2032 = vsel %vm1797, %v1599, -inf
    %2033 = vmax.xlane.f32.xlu0 %v2032
    %v2034 = vpop.xlane.xlu0 %2033
    %v2035 = vsel %vm1797, %v1602, -inf
    %2036 = vmax.xlane.f32.xlu0 %v2035
    %v2037 = vpop.xlane.xlu0 %2036
    %v2038 = vsel %vm1797, %v1607, -inf
    %2039 = vmax.xlane.f32.xlu0 %v2038
    %v2040 = vpop.xlane.xlu0 %2039
    %v2041 = vsel %vm1797, %v1610, -inf
    %2042 = vmax.xlane.f32.xlu0 %v2041
    %v2043 = vpop.xlane.xlu0 %2042
    %v2044 = vsel %vm1797, %v1615, -inf
    %2045 = vmax.xlane.f32.xlu0 %v2044
    %v2046 = vpop.xlane.xlu0 %2045
    %v2047 = vsel %vm1797, %v1618, -inf
    %2048 = vmax.xlane.f32.xlu0 %v2047
    %v2049 = vpop.xlane.xlu0 %2048
    %v2050 = vsel %vm1797, %v1623, -inf
    %2051 = vmax.xlane.f32.xlu0 %v2050
    %v2052 = vpop.xlane.xlu0 %2051
    %v2053 = vsel %vm1797, %v1626, -inf
    %2054 = vmax.xlane.f32.xlu0 %v2053
    %v2055 = vpop.xlane.xlu0 %2054
    %v2056 = vsel %vm1797, %v1631, -inf
    %2057 = vmax.xlane.f32.xlu0 %v2056
    %v2058 = vpop.xlane.xlu0 %2057
    %v2059 = vsel %vm1797, %v1634, -inf
    %2060 = vmax.xlane.f32.xlu0 %v2059
    %v2061 = vpop.xlane.xlu0 %2060
    %v2062 = vsel %vm1797, %v1639, -inf
    %2063 = vmax.xlane.f32.xlu0 %v2062
    %v2064 = vpop.xlane.xlu0 %2063
    %v2065 = vsel %vm1797, %v1642, -inf
    %2066 = vmax.xlane.f32.xlu0 %v2065
    %v2067 = vpop.xlane.xlu0 %2066
    %v2068 = vsel %vm1797, %v1647, -inf
    %2069 = vmax.xlane.f32.xlu0 %v2068
    %v2070 = vpop.xlane.xlu0 %2069
    %v2071 = vsel %vm1797, %v1650, -inf
    %2072 = vmax.xlane.f32.xlu0 %v2071
    %v2073 = vpop.xlane.xlu0 %2072
    %v2074 = vsel %vm1797, %v1655, -inf
    %2075 = vmax.xlane.f32.xlu0 %v2074
    %v2076 = vpop.xlane.xlu0 %2075
    %v2077 = vsel %vm1797, %v1658, -inf
    %2078 = vmax.xlane.f32.xlu0 %v2077
    %v2079 = vpop.xlane.xlu0 %2078
    %v2080 = vsel %vm1797, %v1663, -inf
    %2081 = vmax.xlane.f32.xlu0 %v2080
    %v2082 = vpop.xlane.xlu0 %2081
    %v2083 = vsel %vm1797, %v1666, -inf
    %2084 = vmax.xlane.f32.xlu0 %v2083
    %v2085 = vpop.xlane.xlu0 %2084
    %v2086 = vsel %vm1797, %v1671, -inf
    %2087 = vmax.xlane.f32.xlu0 %v2086
    %v2088 = vpop.xlane.xlu0 %2087
    %v2089 = vsel %vm1797, %v1674, -inf
    %2090 = vmax.xlane.f32.xlu0 %v2089
    %v2091 = vpop.xlane.xlu0 %2090
    %v2092 = vsel %vm1797, %v1679, -inf
    %2093 = vmax.xlane.f32.xlu0 %v2092
    %v2094 = vpop.xlane.xlu0 %2093
    %v2095 = vsel %vm1797, %v1682, -inf
    %2096 = vmax.xlane.f32.xlu0 %v2095
    %v2097 = vpop.xlane.xlu0 %2096
    %v2098 = vsel %vm1797, %v1687, -inf
    %2099 = vmax.xlane.f32.xlu0 %v2098
    %v2100 = vpop.xlane.xlu0 %2099
    %v2101 = vsel %vm1797, %v1690, -inf
    %2102 = vmax.xlane.f32.xlu0 %v2101
    %v2103 = vpop.xlane.xlu0 %2102
    %v2104 = vsel %vm1797, %v1695, -inf
    %2105 = vmax.xlane.f32.xlu0 %v2104
    %v2106 = vpop.xlane.xlu0 %2105
    %v2107 = vsel %vm1797, %v1698, -inf
    %2108 = vmax.xlane.f32.xlu0 %v2107
    %v2109 = vpop.xlane.xlu0 %2108
    %v2110 = vsel %vm1797, %v1703, -inf
    %2111 = vmax.xlane.f32.xlu0 %v2110
    %v2112 = vpop.xlane.xlu0 %2111
    %v2113 = vsel %vm1797, %v1706, -inf
    %2114 = vmax.xlane.f32.xlu0 %v2113
    %v2115 = vpop.xlane.xlu0 %2114
    %v2116 = vsel %vm1797, %v1711, -inf
    %2117 = vmax.xlane.f32.xlu0 %v2116
    %v2118 = vpop.xlane.xlu0 %2117
    %v2119 = vsel %vm1797, %v1714, -inf
    %2120 = vmax.xlane.f32.xlu0 %v2119
    %v2121 = vpop.xlane.xlu0 %2120
    %v2122 = vsel %vm1797, %v1719, -inf
    %2123 = vmax.xlane.f32.xlu0 %v2122
    %v2124 = vpop.xlane.xlu0 %2123
    %v2125 = vsel %vm1797, %v1722, -inf
    %2126 = vmax.xlane.f32.xlu0 %v2125
    %v2127 = vpop.xlane.xlu0 %2126
    %v2128 = vsel %vm1797, %v1727, -inf
    %2129 = vmax.xlane.f32.xlu0 %v2128
    %v2130 = vpop.xlane.xlu0 %2129
    %v2131 = vsel %vm1797, %v1730, -inf
    %2132 = vmax.xlane.f32.xlu0 %v2131
    %v2133 = vpop.xlane.xlu0 %2132
    %v2134 = vsel %vm1797, %v1735, -inf
    %2135 = vmax.xlane.f32.xlu0 %v2134
    %v2136 = vpop.xlane.xlu0 %2135
    %v2137 = vsel %vm1797, %v1738, -inf
    %2138 = vmax.xlane.f32.xlu0 %v2137
    %v2139 = vpop.xlane.xlu0 %2138
    %v2140 = vsel %vm1797, %v1743, -inf
    %2141 = vmax.xlane.f32.xlu0 %v2140
    %v2142 = vpop.xlane.xlu0 %2141
    %v2143 = vsel %vm1797, %v1746, -inf
    %2144 = vmax.xlane.f32.xlu0 %v2143
    %v2145 = vpop.xlane.xlu0 %2144
    %v2146 = vsel %vm1797, %v1751, -inf
    %2147 = vmax.xlane.f32.xlu0 %v2146
    %v2148 = vpop.xlane.xlu0 %2147
    %v2149 = vsel %vm1797, %v1754, -inf
    %2150 = vmax.xlane.f32.xlu0 %v2149
    %v2151 = vpop.xlane.xlu0 %2150
    %v2152 = vsel %vm1797, %v1759, -inf
    %2153 = vmax.xlane.f32.xlu0 %v2152
    %v2154 = vpop.xlane.xlu0 %2153
    %v2155 = vsel %vm1797, %v1762, -inf
    %2156 = vmax.xlane.f32.xlu0 %v2155
    %v2157 = vpop.xlane.xlu0 %2156
    %v2158 = vsel %vm1797, %v1767, -inf
    %2159 = vmax.xlane.f32.xlu0 %v2158
    %v2160 = vpop.xlane.xlu0 %2159
    %v2161 = vsel %vm1797, %v1770, -inf
    %2162 = vmax.xlane.f32.xlu0 %v2161
    %v2163 = vpop.xlane.xlu0 %2162
    %v2164 = vsel %vm1797, %v1775, -inf
    %2165 = vmax.xlane.f32.xlu0 %v2164
    %v2166 = vpop.xlane.xlu0 %2165
    %v2167 = vsel %vm1797, %v1778, -inf
    %2168 = vmax.xlane.f32.xlu0 %v2167
    %v2169 = vpop.xlane.xlu0 %2168
    %v2170 = vsel %vm1797, %v1783, -inf
    %2171 = vmax.xlane.f32.xlu0 %v2170
    %v2172 = vpop.xlane.xlu0 %2171
    %v2173 = vsel %vm1797, %v1786, -inf
    %2174 = vmax.xlane.f32.xlu0 %v2173
    %v2175 = vpop.xlane.xlu0 %2174
    %v2176 = vsel %vm1797, %v1791, -inf
    %2177 = vmax.xlane.f32.xlu0 %v2176
    %v2178 = vpop.xlane.xlu0 %2177
    %v2179 = vsel %vm1797, %v1794, -inf
    %2180 = vmax.xlane.f32.xlu0 %v2179
    %v2181 = vpop.xlane.xlu0 %2180
    %s2182 = scalar_lea.vmem %s0, 4
    %v2183 = vld [vmem:[%s2182] sm:$0x7]
    %v2184 = vlaneseq
    %v2185 = vshrl.u32 %v2184, 7
    %v2186 = vsub.s32 0, %v2185
    %v2187 = vrot.slane %v2183, %v2186
    %v2188 = vmul.f32 %v245, %v2187
    %v2189 = vmul.f32 %v250, %v2187
    %v2190 = vmul.f32 %v255, %v2187
    %v2191 = vmul.f32 %v260, %v2187
    %v2192 = vmul.f32 %v265, %v2187
    %v2193 = vmul.f32 %v270, %v2187
    %v2194 = vmul.f32 %v275, %v2187
    %v2195 = vmul.f32 %v280, %v2187
    %v2196 = vlaneseq
    %v2197 = vshrl.u32 %v2196, 7
    %v2198 = vsub.s32 1, %v2197
    %v2199 = vrot.slane %v2183, %v2198
    %v2200 = vmul.f32 %v296, %v2199
    %v2201 = vmul.f32 %v300, %v2199
    %v2202 = vmul.f32 %v304, %v2199
    %v2203 = vmul.f32 %v308, %v2199
    %v2204 = vmul.f32 %v312, %v2199
    %v2205 = vmul.f32 %v316, %v2199
    %v2206 = vmul.f32 %v320, %v2199
    %v2207 = vmul.f32 %v324, %v2199
    %v2208 = vadd.f32 %v2188, %v2200
    %v2209 = vadd.f32 %v2189, %v2201
    %v2210 = vadd.f32 %v2190, %v2202
    %v2211 = vadd.f32 %v2191, %v2203
    %v2212 = vadd.f32 %v2192, %v2204
    %v2213 = vadd.f32 %v2193, %v2205
    %v2214 = vadd.f32 %v2194, %v2206
    %v2215 = vadd.f32 %v2195, %v2207
    %v2216 = vlaneseq
    %v2217 = vshrl.u32 %v2216, 7
    %v2218 = vsub.s32 2, %v2217
    %v2219 = vrot.slane %v2183, %v2218
    %v2220 = vmul.f32 %v348, %v2219
    %v2221 = vmul.f32 %v352, %v2219
    %v2222 = vmul.f32 %v356, %v2219
    %v2223 = vmul.f32 %v360, %v2219
    %v2224 = vmul.f32 %v364, %v2219
    %v2225 = vmul.f32 %v368, %v2219
    %v2226 = vmul.f32 %v372, %v2219
    %v2227 = vmul.f32 %v376, %v2219
    %v2228 = vadd.f32 %v2208, %v2220
    %v2229 = vadd.f32 %v2209, %v2221
    %v2230 = vadd.f32 %v2210, %v2222
    %v2231 = vadd.f32 %v2211, %v2223
    %v2232 = vadd.f32 %v2212, %v2224
    %v2233 = vadd.f32 %v2213, %v2225
    %v2234 = vadd.f32 %v2214, %v2226
    %v2235 = vadd.f32 %v2215, %v2227
    %v2236 = vadd.f32 %v2228, %v401
    %v2237 = vadd.f32 %v2229, %v406
    %v2238 = vadd.f32 %v2230, %v411
    %v2239 = vadd.f32 %v2231, %v416
    %v2240 = vadd.f32 %v2232, %v421
    %v2241 = vadd.f32 %v2233, %v426
    %v2242 = vadd.f32 %v2234, %v431
    %v2243 = vadd.f32 %v2235, %v436
    %v2244 = vmax.f32 %v2236, 0.0
    %v2245 = vmax.f32 %v2237, 0.0
    %v2246 = vmax.f32 %v2238, 0.0
    %v2247 = vmax.f32 %v2239, 0.0
    %v2248 = vmax.f32 %v2240, 0.0
    %v2249 = vmax.f32 %v2241, 0.0
    %v2250 = vmax.f32 %v2242, 0.0
    %v2251 = vmax.f32 %v2243, 0.0
    %v2252 = vpack.c.bf16 %v2245, %v2244
    %v2253 = vpack.c.bf16 %v2247, %v2246
    %v2254 = vpack.c.bf16 %v2249, %v2248
    %v2255 = vpack.c.bf16 %v2251, %v2250
    %2256 = vmatprep.subr.bf16.mxu0 0
    %2257 = vmatpush1.bf16.msra.mxu0 %v2252
    %2258 = vmatprep.subr.bf16.mxu0 0
    %2259 = vmatpush1.bf16.msra.mxu0 %v2253
    %2260 = vmatprep.subr.bf16.mxu0 0
    %2261 = vmatpush1.bf16.msra.mxu0 %v2254
    %2262 = vmatprep.subr.bf16.mxu0 0
    %2263 = vmatpush1.bf16.msra.mxu0 %v2255
    %2264 = vmatprep.subr.bf16.mxu0 0
    %2265 = vmatpush1.bf16.msra.mxu0 0
    %2266 = vmatprep.subr.bf16.mxu0 0
    %2267 = vmatpush1.bf16.msra.mxu0 0
    %2268 = vmatprep.subr.bf16.mxu0 0
    %2269 = vmatpush1.bf16.msra.mxu0 0
    %2270 = vmatprep.subr.bf16.mxu0 0
    %2271 = vmatpush1.bf16.msra.mxu0 0
    %2272 = vmatprep.subr.bf16.mxu0 0
    %2273 = vmatpush1.bf16.msra.mxu0 0
    %2274 = vmatprep.subr.bf16.mxu0 0
    %2275 = vmatpush1.bf16.msra.mxu0 0
    %2276 = vmatprep.subr.bf16.mxu0 0
    %2277 = vmatpush1.bf16.msra.mxu0 0
    %2278 = vmatprep.subr.bf16.mxu0 0
    %2279 = vmatpush1.bf16.msra.mxu0 0
    %2280 = vmatprep.subr.bf16.mxu0 0
    %2281 = vmatpush1.bf16.msra.mxu0 0
    %2282 = vmatprep.subr.bf16.mxu0 0
    %2283 = vmatpush1.bf16.msra.mxu0 0
    %2284 = vmatprep.subr.bf16.mxu0 0
    %2285 = vmatpush1.bf16.msra.mxu0 0
    %2286 = vmatprep.subr.bf16.mxu0 0
    %2287 = vmatpush1.bf16.msra.mxu0 0
    %2288 = vmatprep.mubr.bf16.mxu0 0
    %2289 = vmatmul.mubr.bf16.gmra.mrb[0].mxu0 %v596
    %v2290 = vpop.f32.mrb[0].mxu0
    %v2291 = vadd.f32 %v477, %v2290
    %v2292 = vpop.f32.mrb[0].mxu0
    %v2293 = vpop.f32.mrb[0].mxu0
    %v2294 = vadd.f32 %v482, %v2293
    %v2295 = vpop.f32.mrb[0].mxu0
    %2296 = vmatprep.mubr.bf16.mxu0 0
    %2297 = vmatmul.mubr.bf16.gmra.mrb[0].mxu0 %v599
    %v2298 = vpop.f32.mrb[0].mxu0
    %v2299 = vadd.f32 %v487, %v2298
    %v2300 = vpop.f32.mrb[0].mxu0
    %v2301 = vpop.f32.mrb[0].mxu0
    %v2302 = vadd.f32 %v492, %v2301
    %v2303 = vpop.f32.mrb[0].mxu0
    %2304 = vmatprep.mubr.bf16.mxu0 0
    %2305 = vmatmul.mubr.bf16.gmra.mrb[0].mxu0 %v602
    %v2306 = vpop.f32.mrb[0].mxu0
    %v2307 = vadd.f32 %v497, %v2306
    %v2308 = vpop.f32.mrb[0].mxu0
    %v2309 = vpop.f32.mrb[0].mxu0
    %v2310 = vadd.f32 %v502, %v2309
    %v2311 = vpop.f32.mrb[0].mxu0
    %2312 = vmatprep.mubr.bf16.mxu0 0
    %2313 = vmatmul.mubr.bf16.gmra.mrb[0].mxu0 %v605
    %v2314 = vpop.f32.mrb[0].mxu0
    %v2315 = vadd.f32 %v507, %v2314
    %v2316 = vpop.f32.mrb[0].mxu0
    %v2317 = vpop.f32.mrb[0].mxu0
    %v2318 = vadd.f32 %v512, %v2317
    %v2319 = vpop.f32.mrb[0].mxu0
    %2320 = vmatprep.mubr.bf16.mxu0 0
    %2321 = vmatmul.mubr.bf16.gmra.mrb[0].mxu0 %v608
    %v2322 = vpop.f32.mrb[0].mxu0
    %v2323 = vadd.f32 %v517, %v2322
    %v2324 = vpop.f32.mrb[0].mxu0
    %v2325 = vpop.f32.mrb[0].mxu0
    %v2326 = vadd.f32 %v522, %v2325
    %v2327 = vpop.f32.mrb[0].mxu0
    %2328 = vmatprep.mubr.bf16.mxu0 0
    %2329 = vmatmul.mubr.bf16.gmra.mrb[0].mxu0 %v611
    %v2330 = vpop.f32.mrb[0].mxu0
    %v2331 = vadd.f32 %v527, %v2330
    %v2332 = vpop.f32.mrb[0].mxu0
    %v2333 = vpop.f32.mrb[0].mxu0
    %v2334 = vadd.f32 %v532, %v2333
    %v2335 = vpop.f32.mrb[0].mxu0
    %2336 = vmatprep.mubr.bf16.mxu0 0
    %2337 = vmatmul.mubr.bf16.gmra.mrb[0].mxu0 %v614
    %v2338 = vpop.f32.mrb[0].mxu0
    %v2339 = vadd.f32 %v537, %v2338
    %v2340 = vpop.f32.mrb[0].mxu0
    %v2341 = vpop.f32.mrb[0].mxu0
    %v2342 = vadd.f32 %v542, %v2341
    %v2343 = vpop.f32.mrb[0].mxu0
    %2344 = vmatprep.mubr.bf16.mxu0 0
    %2345 = vmatmul.mubr.bf16.gmra.mrb[0].mxu0 %v617
    %v2346 = vpop.f32.mrb[0].mxu0
    %v2347 = vadd.f32 %v547, %v2346
    %v2348 = vpop.f32.mrb[0].mxu0
    %v2349 = vpop.f32.mrb[0].mxu0
    %v2350 = vadd.f32 %v552, %v2349
    %v2351 = vpop.f32.mrb[0].mxu0
    %2352 = vdwg.mxu0
    %v2353 = vmax.f32 %v2291, 0.0
    %v2354 = vmax.f32 %v2294, 0.0
    %v2355 = vmax.f32 %v2299, 0.0
    %v2356 = vmax.f32 %v2302, 0.0
    %v2357 = vmax.f32 %v2307, 0.0
    %v2358 = vmax.f32 %v2310, 0.0
    %v2359 = vmax.f32 %v2315, 0.0
    %v2360 = vmax.f32 %v2318, 0.0
    %v2361 = vmax.f32 %v2323, 0.0
    %v2362 = vmax.f32 %v2326, 0.0
    %v2363 = vmax.f32 %v2331, 0.0
    %v2364 = vmax.f32 %v2334, 0.0
    %v2365 = vmax.f32 %v2339, 0.0
    %v2366 = vmax.f32 %v2342, 0.0
    %v2367 = vmax.f32 %v2347, 0.0
    %v2368 = vmax.f32 %v2350, 0.0
    %v2369 = vpack.c.bf16 %v2354, %v2353
    %v2370 = vpack.c.bf16 %v2356, %v2355
    %v2371 = vpack.c.bf16 %v2358, %v2357
    %v2372 = vpack.c.bf16 %v2360, %v2359
    %v2373 = vpack.c.bf16 %v2362, %v2361
    %v2374 = vpack.c.bf16 %v2364, %v2363
    %v2375 = vpack.c.bf16 %v2366, %v2365
    %v2376 = vpack.c.bf16 %v2368, %v2367
    %2377 = vmatprep.subr.bf16.mxu0 0
    %2378 = vmatpush1.bf16.msra.mxu0 %v2369
    %2379 = vmatprep.subr.bf16.mxu0 0
    %2380 = vmatpush1.bf16.msra.mxu0 %v2370
    %2381 = vmatprep.subr.bf16.mxu0 0
    %2382 = vmatpush1.bf16.msra.mxu0 %v2371
    %2383 = vmatprep.subr.bf16.mxu0 0
    %2384 = vmatpush1.bf16.msra.mxu0 %v2372
    %2385 = vmatprep.subr.bf16.mxu0 0
    %2386 = vmatpush1.bf16.msra.mxu0 %v2373
    %2387 = vmatprep.subr.bf16.mxu0 0
    %2388 = vmatpush1.bf16.msra.mxu0 %v2374
    %2389 = vmatprep.subr.bf16.mxu0 0
    %2390 = vmatpush1.bf16.msra.mxu0 %v2375
    %2391 = vmatprep.subr.bf16.mxu0 0
    %2392 = vmatpush1.bf16.msra.mxu0 %v2376
    %2393 = vmatprep.subr.bf16.mxu0 0
    %2394 = vmatpush1.bf16.msra.mxu0 0
    %2395 = vmatprep.subr.bf16.mxu0 0
    %2396 = vmatpush1.bf16.msra.mxu0 0
    %2397 = vmatprep.subr.bf16.mxu0 0
    %2398 = vmatpush1.bf16.msra.mxu0 0
    %2399 = vmatprep.subr.bf16.mxu0 0
    %2400 = vmatpush1.bf16.msra.mxu0 0
    %2401 = vmatprep.subr.bf16.mxu0 0
    %2402 = vmatpush1.bf16.msra.mxu0 0
    %2403 = vmatprep.subr.bf16.mxu0 0
    %2404 = vmatpush1.bf16.msra.mxu0 0
    %2405 = vmatprep.subr.bf16.mxu0 0
    %2406 = vmatpush1.bf16.msra.mxu0 0
    %2407 = vmatprep.subr.bf16.mxu0 0
    %2408 = vmatpush1.bf16.msra.mxu0 0
    %2409 = vmatprep.mubr.bf16.mxu0 0
    %2410 = vmatmul.mubr.bf16.gmra.mrb[0].mxu0 %v1124
    %v2411 = vpop.f32.mrb[0].mxu0
    %v2412 = vadd.f32 0.0, %v2411
    %v2413 = vpop.f32.mrb[0].mxu0
    %v2414 = vpop.f32.mrb[0].mxu0
    %v2415 = vadd.f32 0.0, %v2414
    %v2416 = vpop.f32.mrb[0].mxu0
    %2417 = vmatprep.mubr.bf16.mxu0 0
    %2418 = vmatmul.mubr.bf16.gmra.mrb[0].mxu0 %v1125
    %v2419 = vpop.f32.mrb[0].mxu0
    %v2420 = vadd.f32 0.0, %v2419
    %v2421 = vpop.f32.mrb[0].mxu0
    %v2422 = vpop.f32.mrb[0].mxu0
    %v2423 = vadd.f32 0.0, %v2422
    %v2424 = vpop.f32.mrb[0].mxu0
    %2425 = vmatprep.mubr.bf16.mxu0 0
    %2426 = vmatmul.mubr.bf16.gmra.mrb[0].mxu0 %v1126
    %v2427 = vpop.f32.mrb[0].mxu0
    %v2428 = vadd.f32 0.0, %v2427
    %v2429 = vpop.f32.mrb[0].mxu0
    %v2430 = vpop.f32.mrb[0].mxu0
    %v2431 = vadd.f32 0.0, %v2430
    %v2432 = vpop.f32.mrb[0].mxu0
    %2433 = vmatprep.mubr.bf16.mxu0 0
    %2434 = vmatmul.mubr.bf16.gmra.mrb[0].mxu0 %v1127
    %v2435 = vpop.f32.mrb[0].mxu0
    %v2436 = vadd.f32 0.0, %v2435
    %v2437 = vpop.f32.mrb[0].mxu0
    %v2438 = vpop.f32.mrb[0].mxu0
    %v2439 = vadd.f32 0.0, %v2438
    %v2440 = vpop.f32.mrb[0].mxu0
    %2441 = vmatprep.mubr.bf16.mxu0 0
    %2442 = vmatmul.mubr.bf16.gmra.mrb[0].mxu0 %v1128
    %v2443 = vpop.f32.mrb[0].mxu0
    %v2444 = vadd.f32 0.0, %v2443
    %v2445 = vpop.f32.mrb[0].mxu0
    %v2446 = vpop.f32.mrb[0].mxu0
    %v2447 = vadd.f32 0.0, %v2446
    %v2448 = vpop.f32.mrb[0].mxu0
    %2449 = vmatprep.mubr.bf16.mxu0 0
    %2450 = vmatmul.mubr.bf16.gmra.mrb[0].mxu0 %v1129
    %v2451 = vpop.f32.mrb[0].mxu0
    %v2452 = vadd.f32 0.0, %v2451
    %v2453 = vpop.f32.mrb[0].mxu0
    %v2454 = vpop.f32.mrb[0].mxu0
    %v2455 = vadd.f32 0.0, %v2454
    %v2456 = vpop.f32.mrb[0].mxu0
    %2457 = vmatprep.mubr.bf16.mxu0 0
    %2458 = vmatmul.mubr.bf16.gmra.mrb[0].mxu0 %v1130
    %v2459 = vpop.f32.mrb[0].mxu0
    %v2460 = vadd.f32 0.0, %v2459
    %v2461 = vpop.f32.mrb[0].mxu0
    %v2462 = vpop.f32.mrb[0].mxu0
    %v2463 = vadd.f32 0.0, %v2462
    %v2464 = vpop.f32.mrb[0].mxu0
    %2465 = vmatprep.mubr.bf16.mxu0 0
    %2466 = vmatmul.mubr.bf16.gmra.mrb[0].mxu0 %v1131
    %v2467 = vpop.f32.mrb[0].mxu0
    %v2468 = vadd.f32 0.0, %v2467
    %v2469 = vpop.f32.mrb[0].mxu0
    %v2470 = vpop.f32.mrb[0].mxu0
    %v2471 = vadd.f32 0.0, %v2470
    %v2472 = vpop.f32.mrb[0].mxu0
    %2473 = vmatprep.mubr.bf16.mxu0 0
    %2474 = vmatmul.mubr.bf16.gmra.mrb[0].mxu0 %v1132
    %v2475 = vpop.f32.mrb[0].mxu0
    %v2476 = vadd.f32 0.0, %v2475
    %v2477 = vpop.f32.mrb[0].mxu0
    %v2478 = vpop.f32.mrb[0].mxu0
    %v2479 = vadd.f32 0.0, %v2478
    %v2480 = vpop.f32.mrb[0].mxu0
    %2481 = vmatprep.mubr.bf16.mxu0 0
    %2482 = vmatmul.mubr.bf16.gmra.mrb[0].mxu0 %v1133
    %v2483 = vpop.f32.mrb[0].mxu0
    %v2484 = vadd.f32 0.0, %v2483
    %v2485 = vpop.f32.mrb[0].mxu0
    %v2486 = vpop.f32.mrb[0].mxu0
    %v2487 = vadd.f32 0.0, %v2486
    %v2488 = vpop.f32.mrb[0].mxu0
    %2489 = vmatprep.mubr.bf16.mxu0 0
    %2490 = vmatmul.mubr.bf16.gmra.mrb[0].mxu0 %v1134
    %v2491 = vpop.f32.mrb[0].mxu0
    %v2492 = vadd.f32 0.0, %v2491
    %v2493 = vpop.f32.mrb[0].mxu0
    %v2494 = vpop.f32.mrb[0].mxu0
    %v2495 = vadd.f32 0.0, %v2494
    %v2496 = vpop.f32.mrb[0].mxu0
    %2497 = vmatprep.mubr.bf16.mxu0 0
    %2498 = vmatmul.mubr.bf16.gmra.mrb[0].mxu0 %v1135
    %v2499 = vpop.f32.mrb[0].mxu0
    %v2500 = vadd.f32 0.0, %v2499
    %v2501 = vpop.f32.mrb[0].mxu0
    %v2502 = vpop.f32.mrb[0].mxu0
    %v2503 = vadd.f32 0.0, %v2502
    %v2504 = vpop.f32.mrb[0].mxu0
    %2505 = vmatprep.mubr.bf16.mxu0 0
    %2506 = vmatmul.mubr.bf16.gmra.mrb[0].mxu0 %v1136
    %v2507 = vpop.f32.mrb[0].mxu0
    %v2508 = vadd.f32 0.0, %v2507
    %v2509 = vpop.f32.mrb[0].mxu0
    %v2510 = vpop.f32.mrb[0].mxu0
    %v2511 = vadd.f32 0.0, %v2510
    %v2512 = vpop.f32.mrb[0].mxu0
    %2513 = vmatprep.mubr.bf16.mxu0 0
    %2514 = vmatmul.mubr.bf16.gmra.mrb[0].mxu0 %v1137
    %v2515 = vpop.f32.mrb[0].mxu0
    %v2516 = vadd.f32 0.0, %v2515
    %v2517 = vpop.f32.mrb[0].mxu0
    %v2518 = vpop.f32.mrb[0].mxu0
    %v2519 = vadd.f32 0.0, %v2518
    %v2520 = vpop.f32.mrb[0].mxu0
    %2521 = vmatprep.mubr.bf16.mxu0 0
    %2522 = vmatmul.mubr.bf16.gmra.mrb[0].mxu0 %v1138
    %v2523 = vpop.f32.mrb[0].mxu0
    %v2524 = vadd.f32 0.0, %v2523
    %v2525 = vpop.f32.mrb[0].mxu0
    %v2526 = vpop.f32.mrb[0].mxu0
    %v2527 = vadd.f32 0.0, %v2526
    %v2528 = vpop.f32.mrb[0].mxu0
    %2529 = vmatprep.mubr.bf16.mxu0 0
    %2530 = vmatmul.mubr.bf16.gmra.mrb[0].mxu0 %v1139
    %v2531 = vpop.f32.mrb[0].mxu0
    %v2532 = vadd.f32 0.0, %v2531
    %v2533 = vpop.f32.mrb[0].mxu0
    %v2534 = vpop.f32.mrb[0].mxu0
    %v2535 = vadd.f32 0.0, %v2534
    %v2536 = vpop.f32.mrb[0].mxu0
    %2537 = vmatprep.mubr.bf16.mxu0 0
    %2538 = vmatmul.mubr.bf16.gmra.mrb[0].mxu0 %v1140
    %v2539 = vpop.f32.mrb[0].mxu0
    %v2540 = vadd.f32 0.0, %v2539
    %v2541 = vpop.f32.mrb[0].mxu0
    %v2542 = vpop.f32.mrb[0].mxu0
    %v2543 = vadd.f32 0.0, %v2542
    %v2544 = vpop.f32.mrb[0].mxu0
    %2545 = vmatprep.mubr.bf16.mxu0 0
    %2546 = vmatmul.mubr.bf16.gmra.mrb[0].mxu0 %v1141
    %v2547 = vpop.f32.mrb[0].mxu0
    %v2548 = vadd.f32 0.0, %v2547
    %v2549 = vpop.f32.mrb[0].mxu0
    %v2550 = vpop.f32.mrb[0].mxu0
    %v2551 = vadd.f32 0.0, %v2550
    %v2552 = vpop.f32.mrb[0].mxu0
    %2553 = vmatprep.mubr.bf16.mxu0 0
    %2554 = vmatmul.mubr.bf16.gmra.mrb[0].mxu0 %v1142
    %v2555 = vpop.f32.mrb[0].mxu0
    %v2556 = vadd.f32 0.0, %v2555
    %v2557 = vpop.f32.mrb[0].mxu0
    %v2558 = vpop.f32.mrb[0].mxu0
    %v2559 = vadd.f32 0.0, %v2558
    %v2560 = vpop.f32.mrb[0].mxu0
    %2561 = vmatprep.mubr.bf16.mxu0 0
    %2562 = vmatmul.mubr.bf16.gmra.mrb[0].mxu0 %v1143
    %v2563 = vpop.f32.mrb[0].mxu0
    %v2564 = vadd.f32 0.0, %v2563
    %v2565 = vpop.f32.mrb[0].mxu0
    %v2566 = vpop.f32.mrb[0].mxu0
    %v2567 = vadd.f32 0.0, %v2566
    %v2568 = vpop.f32.mrb[0].mxu0
    %2569 = vmatprep.mubr.bf16.mxu0 0
    %2570 = vmatmul.mubr.bf16.gmra.mrb[0].mxu0 %v1144
    %v2571 = vpop.f32.mrb[0].mxu0
    %v2572 = vadd.f32 0.0, %v2571
    %v2573 = vpop.f32.mrb[0].mxu0
    %v2574 = vpop.f32.mrb[0].mxu0
    %v2575 = vadd.f32 0.0, %v2574
    %v2576 = vpop.f32.mrb[0].mxu0
    %2577 = vmatprep.mubr.bf16.mxu0 0
    %2578 = vmatmul.mubr.bf16.gmra.mrb[0].mxu0 %v1145
    %v2579 = vpop.f32.mrb[0].mxu0
    %v2580 = vadd.f32 0.0, %v2579
    %v2581 = vpop.f32.mrb[0].mxu0
    %v2582 = vpop.f32.mrb[0].mxu0
    %v2583 = vadd.f32 0.0, %v2582
    %v2584 = vpop.f32.mrb[0].mxu0
    %2585 = vmatprep.mubr.bf16.mxu0 0
    %2586 = vmatmul.mubr.bf16.gmra.mrb[0].mxu0 %v1146
    %v2587 = vpop.f32.mrb[0].mxu0
    %v2588 = vadd.f32 0.0, %v2587
    %v2589 = vpop.f32.mrb[0].mxu0
    %v2590 = vpop.f32.mrb[0].mxu0
    %v2591 = vadd.f32 0.0, %v2590
    %v2592 = vpop.f32.mrb[0].mxu0
    %2593 = vmatprep.mubr.bf16.mxu0 0
    %2594 = vmatmul.mubr.bf16.gmra.mrb[0].mxu0 %v1147
    %v2595 = vpop.f32.mrb[0].mxu0
    %v2596 = vadd.f32 0.0, %v2595
    %v2597 = vpop.f32.mrb[0].mxu0
    %v2598 = vpop.f32.mrb[0].mxu0
    %v2599 = vadd.f32 0.0, %v2598
    %v2600 = vpop.f32.mrb[0].mxu0
    %2601 = vmatprep.mubr.bf16.mxu0 0
    %2602 = vmatmul.mubr.bf16.gmra.mrb[0].mxu0 %v1148
    %v2603 = vpop.f32.mrb[0].mxu0
    %v2604 = vadd.f32 0.0, %v2603
    %v2605 = vpop.f32.mrb[0].mxu0
    %v2606 = vpop.f32.mrb[0].mxu0
    %v2607 = vadd.f32 0.0, %v2606
    %v2608 = vpop.f32.mrb[0].mxu0
    %2609 = vmatprep.mubr.bf16.mxu0 0
    %2610 = vmatmul.mubr.bf16.gmra.mrb[0].mxu0 %v1149
    %v2611 = vpop.f32.mrb[0].mxu0
    %v2612 = vadd.f32 0.0, %v2611
    %v2613 = vpop.f32.mrb[0].mxu0
    %v2614 = vpop.f32.mrb[0].mxu0
    %v2615 = vadd.f32 0.0, %v2614
    %v2616 = vpop.f32.mrb[0].mxu0
    %2617 = vmatprep.mubr.bf16.mxu0 0
    %2618 = vmatmul.mubr.bf16.gmra.mrb[0].mxu0 %v1150
    %v2619 = vpop.f32.mrb[0].mxu0
    %v2620 = vadd.f32 0.0, %v2619
    %v2621 = vpop.f32.mrb[0].mxu0
    %v2622 = vpop.f32.mrb[0].mxu0
    %v2623 = vadd.f32 0.0, %v2622
    %v2624 = vpop.f32.mrb[0].mxu0
    %2625 = vmatprep.mubr.bf16.mxu0 0
    %2626 = vmatmul.mubr.bf16.gmra.mrb[0].mxu0 %v1151
    %v2627 = vpop.f32.mrb[0].mxu0
    %v2628 = vadd.f32 0.0, %v2627
    %v2629 = vpop.f32.mrb[0].mxu0
    %v2630 = vpop.f32.mrb[0].mxu0
    %v2631 = vadd.f32 0.0, %v2630
    %v2632 = vpop.f32.mrb[0].mxu0
    %2633 = vmatprep.mubr.bf16.mxu0 0
    %2634 = vmatmul.mubr.bf16.gmra.mrb[0].mxu0 %v1152
    %v2635 = vpop.f32.mrb[0].mxu0
    %v2636 = vadd.f32 0.0, %v2635
    %v2637 = vpop.f32.mrb[0].mxu0
    %v2638 = vpop.f32.mrb[0].mxu0
    %v2639 = vadd.f32 0.0, %v2638
    %v2640 = vpop.f32.mrb[0].mxu0
    %2641 = vmatprep.mubr.bf16.mxu0 0
    %2642 = vmatmul.mubr.bf16.gmra.mrb[0].mxu0 %v1153
    %v2643 = vpop.f32.mrb[0].mxu0
    %v2644 = vadd.f32 0.0, %v2643
    %v2645 = vpop.f32.mrb[0].mxu0
    %v2646 = vpop.f32.mrb[0].mxu0
    %v2647 = vadd.f32 0.0, %v2646
    %v2648 = vpop.f32.mrb[0].mxu0
    %2649 = vmatprep.mubr.bf16.mxu0 0
    %2650 = vmatmul.mubr.bf16.gmra.mrb[0].mxu0 %v1154
    %v2651 = vpop.f32.mrb[0].mxu0
    %v2652 = vadd.f32 0.0, %v2651
    %v2653 = vpop.f32.mrb[0].mxu0
    %v2654 = vpop.f32.mrb[0].mxu0
    %v2655 = vadd.f32 0.0, %v2654
    %v2656 = vpop.f32.mrb[0].mxu0
    %2657 = vmatprep.mubr.bf16.mxu0 0
    %2658 = vmatmul.mubr.bf16.gmra.mrb[0].mxu0 %v1155
    %v2659 = vpop.f32.mrb[0].mxu0
    %v2660 = vadd.f32 0.0, %v2659
    %v2661 = vpop.f32.mrb[0].mxu0
    %v2662 = vpop.f32.mrb[0].mxu0
    %v2663 = vadd.f32 0.0, %v2662
    %v2664 = vpop.f32.mrb[0].mxu0
    %2665 = vmatprep.mubr.bf16.mxu0 0
    %2666 = vmatmul.mubr.bf16.gmra.mrb[0].mxu0 %v1156
    %v2667 = vpop.f32.mrb[0].mxu0
    %v2668 = vadd.f32 0.0, %v2667
    %v2669 = vpop.f32.mrb[0].mxu0
    %v2670 = vpop.f32.mrb[0].mxu0
    %v2671 = vadd.f32 0.0, %v2670
    %v2672 = vpop.f32.mrb[0].mxu0
    %2673 = vmatprep.mubr.bf16.mxu0 0
    %2674 = vmatmul.mubr.bf16.gmra.mrb[0].mxu0 %v1157
    %v2675 = vpop.f32.mrb[0].mxu0
    %v2676 = vadd.f32 0.0, %v2675
    %v2677 = vpop.f32.mrb[0].mxu0
    %v2678 = vpop.f32.mrb[0].mxu0
    %v2679 = vadd.f32 0.0, %v2678
    %v2680 = vpop.f32.mrb[0].mxu0
    %2681 = vmatprep.mubr.bf16.mxu0 0
    %2682 = vmatmul.mubr.bf16.gmra.mrb[0].mxu0 %v1158
    %v2683 = vpop.f32.mrb[0].mxu0
    %v2684 = vadd.f32 0.0, %v2683
    %v2685 = vpop.f32.mrb[0].mxu0
    %v2686 = vpop.f32.mrb[0].mxu0
    %v2687 = vadd.f32 0.0, %v2686
    %v2688 = vpop.f32.mrb[0].mxu0
    %2689 = vmatprep.mubr.bf16.mxu0 0
    %2690 = vmatmul.mubr.bf16.gmra.mrb[0].mxu0 %v1159
    %v2691 = vpop.f32.mrb[0].mxu0
    %v2692 = vadd.f32 0.0, %v2691
    %v2693 = vpop.f32.mrb[0].mxu0
    %v2694 = vpop.f32.mrb[0].mxu0
    %v2695 = vadd.f32 0.0, %v2694
    %v2696 = vpop.f32.mrb[0].mxu0
    %2697 = vmatprep.mubr.bf16.mxu0 0
    %2698 = vmatmul.mubr.bf16.gmra.mrb[0].mxu0 %v1160
    %v2699 = vpop.f32.mrb[0].mxu0
    %v2700 = vadd.f32 0.0, %v2699
    %v2701 = vpop.f32.mrb[0].mxu0
    %v2702 = vpop.f32.mrb[0].mxu0
    %v2703 = vadd.f32 0.0, %v2702
    %v2704 = vpop.f32.mrb[0].mxu0
    %2705 = vmatprep.mubr.bf16.mxu0 0
    %2706 = vmatmul.mubr.bf16.gmra.mrb[0].mxu0 %v1161
    %v2707 = vpop.f32.mrb[0].mxu0
    %v2708 = vadd.f32 0.0, %v2707
    %v2709 = vpop.f32.mrb[0].mxu0
    %v2710 = vpop.f32.mrb[0].mxu0
    %v2711 = vadd.f32 0.0, %v2710
    %v2712 = vpop.f32.mrb[0].mxu0
    %2713 = vmatprep.mubr.bf16.mxu0 0
    %2714 = vmatmul.mubr.bf16.gmra.mrb[0].mxu0 %v1162
    %v2715 = vpop.f32.mrb[0].mxu0
    %v2716 = vadd.f32 0.0, %v2715
    %v2717 = vpop.f32.mrb[0].mxu0
    %v2718 = vpop.f32.mrb[0].mxu0
    %v2719 = vadd.f32 0.0, %v2718
    %v2720 = vpop.f32.mrb[0].mxu0
    %2721 = vmatprep.mubr.bf16.mxu0 0
    %2722 = vmatmul.mubr.bf16.gmra.mrb[0].mxu0 %v1163
    %v2723 = vpop.f32.mrb[0].mxu0
    %v2724 = vadd.f32 0.0, %v2723
    %v2725 = vpop.f32.mrb[0].mxu0
    %v2726 = vpop.f32.mrb[0].mxu0
    %v2727 = vadd.f32 0.0, %v2726
    %v2728 = vpop.f32.mrb[0].mxu0
    %2729 = vmatprep.mubr.bf16.mxu0 0
    %2730 = vmatmul.mubr.bf16.gmra.mrb[0].mxu0 %v1164
    %v2731 = vpop.f32.mrb[0].mxu0
    %v2732 = vadd.f32 0.0, %v2731
    %v2733 = vpop.f32.mrb[0].mxu0
    %v2734 = vpop.f32.mrb[0].mxu0
    %v2735 = vadd.f32 0.0, %v2734
    %v2736 = vpop.f32.mrb[0].mxu0
    %2737 = vmatprep.mubr.bf16.mxu0 0
    %2738 = vmatmul.mubr.bf16.gmra.mrb[0].mxu0 %v1165
    %v2739 = vpop.f32.mrb[0].mxu0
    %v2740 = vadd.f32 0.0, %v2739
    %v2741 = vpop.f32.mrb[0].mxu0
    %v2742 = vpop.f32.mrb[0].mxu0
    %v2743 = vadd.f32 0.0, %v2742
    %v2744 = vpop.f32.mrb[0].mxu0
    %2745 = vmatprep.mubr.bf16.mxu0 0
    %2746 = vmatmul.mubr.bf16.gmra.mrb[0].mxu0 %v1166
    %v2747 = vpop.f32.mrb[0].mxu0
    %v2748 = vadd.f32 0.0, %v2747
    %v2749 = vpop.f32.mrb[0].mxu0
    %v2750 = vpop.f32.mrb[0].mxu0
    %v2751 = vadd.f32 0.0, %v2750
    %v2752 = vpop.f32.mrb[0].mxu0
    %2753 = vmatprep.mubr.bf16.mxu0 0
    %2754 = vmatmul.mubr.bf16.gmra.mrb[0].mxu0 %v1167
    %v2755 = vpop.f32.mrb[0].mxu0
    %v2756 = vadd.f32 0.0, %v2755
    %v2757 = vpop.f32.mrb[0].mxu0
    %v2758 = vpop.f32.mrb[0].mxu0
    %v2759 = vadd.f32 0.0, %v2758
    %v2760 = vpop.f32.mrb[0].mxu0
    %2761 = vmatprep.mubr.bf16.mxu0 0
    %2762 = vmatmul.mubr.bf16.gmra.mrb[0].mxu0 %v1168
    %v2763 = vpop.f32.mrb[0].mxu0
    %v2764 = vadd.f32 0.0, %v2763
    %v2765 = vpop.f32.mrb[0].mxu0
    %v2766 = vpop.f32.mrb[0].mxu0
    %v2767 = vadd.f32 0.0, %v2766
    %v2768 = vpop.f32.mrb[0].mxu0
    %2769 = vmatprep.mubr.bf16.mxu0 0
    %2770 = vmatmul.mubr.bf16.gmra.mrb[0].mxu0 %v1169
    %v2771 = vpop.f32.mrb[0].mxu0
    %v2772 = vadd.f32 0.0, %v2771
    %v2773 = vpop.f32.mrb[0].mxu0
    %v2774 = vpop.f32.mrb[0].mxu0
    %v2775 = vadd.f32 0.0, %v2774
    %v2776 = vpop.f32.mrb[0].mxu0
    %2777 = vmatprep.mubr.bf16.mxu0 0
    %2778 = vmatmul.mubr.bf16.gmra.mrb[0].mxu0 %v1170
    %v2779 = vpop.f32.mrb[0].mxu0
    %v2780 = vadd.f32 0.0, %v2779
    %v2781 = vpop.f32.mrb[0].mxu0
    %v2782 = vpop.f32.mrb[0].mxu0
    %v2783 = vadd.f32 0.0, %v2782
    %v2784 = vpop.f32.mrb[0].mxu0
    %2785 = vmatprep.mubr.bf16.mxu0 0
    %2786 = vmatmul.mubr.bf16.gmra.mrb[0].mxu0 %v1171
    %v2787 = vpop.f32.mrb[0].mxu0
    %v2788 = vadd.f32 0.0, %v2787
    %v2789 = vpop.f32.mrb[0].mxu0
    %v2790 = vpop.f32.mrb[0].mxu0
    %v2791 = vadd.f32 0.0, %v2790
    %v2792 = vpop.f32.mrb[0].mxu0
    %2793 = vmatprep.mubr.bf16.mxu0 0
    %2794 = vmatmul.mubr.bf16.gmra.mrb[0].mxu0 %v1172
    %v2795 = vpop.f32.mrb[0].mxu0
    %v2796 = vadd.f32 0.0, %v2795
    %v2797 = vpop.f32.mrb[0].mxu0
    %v2798 = vpop.f32.mrb[0].mxu0
    %v2799 = vadd.f32 0.0, %v2798
    %v2800 = vpop.f32.mrb[0].mxu0
    %2801 = vmatprep.mubr.bf16.mxu0 0
    %2802 = vmatmul.mubr.bf16.gmra.mrb[0].mxu0 %v1173
    %v2803 = vpop.f32.mrb[0].mxu0
    %v2804 = vadd.f32 0.0, %v2803
    %v2805 = vpop.f32.mrb[0].mxu0
    %v2806 = vpop.f32.mrb[0].mxu0
    %v2807 = vadd.f32 0.0, %v2806
    %v2808 = vpop.f32.mrb[0].mxu0
    %2809 = vmatprep.mubr.bf16.mxu0 0
    %2810 = vmatmul.mubr.bf16.gmra.mrb[0].mxu0 %v1174
    %v2811 = vpop.f32.mrb[0].mxu0
    %v2812 = vadd.f32 0.0, %v2811
    %v2813 = vpop.f32.mrb[0].mxu0
    %v2814 = vpop.f32.mrb[0].mxu0
    %v2815 = vadd.f32 0.0, %v2814
    %v2816 = vpop.f32.mrb[0].mxu0
    %2817 = vmatprep.mubr.bf16.mxu0 0
    %2818 = vmatmul.mubr.bf16.gmra.mrb[0].mxu0 %v1175
    %v2819 = vpop.f32.mrb[0].mxu0
    %v2820 = vadd.f32 0.0, %v2819
    %v2821 = vpop.f32.mrb[0].mxu0
    %v2822 = vpop.f32.mrb[0].mxu0
    %v2823 = vadd.f32 0.0, %v2822
    %v2824 = vpop.f32.mrb[0].mxu0
    %2825 = vmatprep.mubr.bf16.mxu0 0
    %2826 = vmatmul.mubr.bf16.gmra.mrb[0].mxu0 %v1176
    %v2827 = vpop.f32.mrb[0].mxu0
    %v2828 = vadd.f32 0.0, %v2827
    %v2829 = vpop.f32.mrb[0].mxu0
    %v2830 = vpop.f32.mrb[0].mxu0
    %v2831 = vadd.f32 0.0, %v2830
    %v2832 = vpop.f32.mrb[0].mxu0
    %2833 = vmatprep.mubr.bf16.mxu0 0
    %2834 = vmatmul.mubr.bf16.gmra.mrb[0].mxu0 %v1177
    %v2835 = vpop.f32.mrb[0].mxu0
    %v2836 = vadd.f32 0.0, %v2835
    %v2837 = vpop.f32.mrb[0].mxu0
    %v2838 = vpop.f32.mrb[0].mxu0
    %v2839 = vadd.f32 0.0, %v2838
    %v2840 = vpop.f32.mrb[0].mxu0
    %2841 = vmatprep.mubr.bf16.mxu0 0
    %2842 = vmatmul.mubr.bf16.gmra.mrb[0].mxu0 %v1178
    %v2843 = vpop.f32.mrb[0].mxu0
    %v2844 = vadd.f32 0.0, %v2843
    %v2845 = vpop.f32.mrb[0].mxu0
    %v2846 = vpop.f32.mrb[0].mxu0
    %v2847 = vadd.f32 0.0, %v2846
    %v2848 = vpop.f32.mrb[0].mxu0
    %2849 = vmatprep.mubr.bf16.mxu0 0
    %2850 = vmatmul.mubr.bf16.gmra.mrb[0].mxu0 %v1179
    %v2851 = vpop.f32.mrb[0].mxu0
    %v2852 = vadd.f32 0.0, %v2851
    %v2853 = vpop.f32.mrb[0].mxu0
    %v2854 = vpop.f32.mrb[0].mxu0
    %v2855 = vadd.f32 0.0, %v2854
    %v2856 = vpop.f32.mrb[0].mxu0
    %2857 = vmatprep.mubr.bf16.mxu0 0
    %2858 = vmatmul.mubr.bf16.gmra.mrb[0].mxu0 %v1180
    %v2859 = vpop.f32.mrb[0].mxu0
    %v2860 = vadd.f32 0.0, %v2859
    %v2861 = vpop.f32.mrb[0].mxu0
    %v2862 = vpop.f32.mrb[0].mxu0
    %v2863 = vadd.f32 0.0, %v2862
    %v2864 = vpop.f32.mrb[0].mxu0
    %2865 = vmatprep.mubr.bf16.mxu0 0
    %2866 = vmatmul.mubr.bf16.gmra.mrb[0].mxu0 %v1181
    %v2867 = vpop.f32.mrb[0].mxu0
    %v2868 = vadd.f32 0.0, %v2867
    %v2869 = vpop.f32.mrb[0].mxu0
    %v2870 = vpop.f32.mrb[0].mxu0
    %v2871 = vadd.f32 0.0, %v2870
    %v2872 = vpop.f32.mrb[0].mxu0
    %2873 = vmatprep.mubr.bf16.mxu0 0
    %2874 = vmatmul.mubr.bf16.gmra.mrb[0].mxu0 %v1182
    %v2875 = vpop.f32.mrb[0].mxu0
    %v2876 = vadd.f32 0.0, %v2875
    %v2877 = vpop.f32.mrb[0].mxu0
    %v2878 = vpop.f32.mrb[0].mxu0
    %v2879 = vadd.f32 0.0, %v2878
    %v2880 = vpop.f32.mrb[0].mxu0
    %2881 = vmatprep.mubr.bf16.mxu0 0
    %2882 = vmatmul.mubr.bf16.gmra.mrb[0].mxu0 %v1183
    %v2883 = vpop.f32.mrb[0].mxu0
    %v2884 = vadd.f32 0.0, %v2883
    %v2885 = vpop.f32.mrb[0].mxu0
    %v2886 = vpop.f32.mrb[0].mxu0
    %v2887 = vadd.f32 0.0, %v2886
    %v2888 = vpop.f32.mrb[0].mxu0
    %2889 = vmatprep.mubr.bf16.mxu0 0
    %2890 = vmatmul.mubr.bf16.gmra.mrb[0].mxu0 %v1184
    %v2891 = vpop.f32.mrb[0].mxu0
    %v2892 = vadd.f32 0.0, %v2891
    %v2893 = vpop.f32.mrb[0].mxu0
    %v2894 = vpop.f32.mrb[0].mxu0
    %v2895 = vadd.f32 0.0, %v2894
    %v2896 = vpop.f32.mrb[0].mxu0
    %2897 = vmatprep.mubr.bf16.mxu0 0
    %2898 = vmatmul.mubr.bf16.gmra.mrb[0].mxu0 %v1185
    %v2899 = vpop.f32.mrb[0].mxu0
    %v2900 = vadd.f32 0.0, %v2899
    %v2901 = vpop.f32.mrb[0].mxu0
    %v2902 = vpop.f32.mrb[0].mxu0
    %v2903 = vadd.f32 0.0, %v2902
    %v2904 = vpop.f32.mrb[0].mxu0
    %2905 = vmatprep.mubr.bf16.mxu0 0
    %2906 = vmatmul.mubr.bf16.gmra.mrb[0].mxu0 %v1186
    %v2907 = vpop.f32.mrb[0].mxu0
    %v2908 = vadd.f32 0.0, %v2907
    %v2909 = vpop.f32.mrb[0].mxu0
    %v2910 = vpop.f32.mrb[0].mxu0
    %v2911 = vadd.f32 0.0, %v2910
    %v2912 = vpop.f32.mrb[0].mxu0
    %2913 = vmatprep.mubr.bf16.mxu0 0
    %2914 = vmatmul.mubr.bf16.gmra.mrb[0].mxu0 %v1187
    %v2915 = vpop.f32.mrb[0].mxu0
    %v2916 = vadd.f32 0.0, %v2915
    %v2917 = vpop.f32.mrb[0].mxu0
    %v2918 = vpop.f32.mrb[0].mxu0
    %v2919 = vadd.f32 0.0, %v2918
    %v2920 = vpop.f32.mrb[0].mxu0
    %2921 = vdwg.mxu0
    %v2922 = vsel %vm1797, %v2412, -inf
    %2923 = vmax.xlane.f32.xlu0 %v2922
    %v2924 = vpop.xlane.xlu0 %2923
    %v2925 = vsel %vm1797, %v2415, -inf
    %2926 = vmax.xlane.f32.xlu0 %v2925
    %v2927 = vpop.xlane.xlu0 %2926
    %v2928 = vsel %vm1797, %v2420, -inf
    %2929 = vmax.xlane.f32.xlu0 %v2928
    %v2930 = vpop.xlane.xlu0 %2929
    %v2931 = vsel %vm1797, %v2423, -inf
    %2932 = vmax.xlane.f32.xlu0 %v2931
    %v2933 = vpop.xlane.xlu0 %2932
    %v2934 = vsel %vm1797, %v2428, -inf
    %2935 = vmax.xlane.f32.xlu0 %v2934
    %v2936 = vpop.xlane.xlu0 %2935
    %v2937 = vsel %vm1797, %v2431, -inf
    %2938 = vmax.xlane.f32.xlu0 %v2937
    %v2939 = vpop.xlane.xlu0 %2938
    %v2940 = vsel %vm1797, %v2436, -inf
    %2941 = vmax.xlane.f32.xlu0 %v2940
    %v2942 = vpop.xlane.xlu0 %2941
    %v2943 = vsel %vm1797, %v2439, -inf
    %2944 = vmax.xlane.f32.xlu0 %v2943
    %v2945 = vpop.xlane.xlu0 %2944
    %v2946 = vsel %vm1797, %v2444, -inf
    %2947 = vmax.xlane.f32.xlu0 %v2946
    %v2948 = vpop.xlane.xlu0 %2947
    %v2949 = vsel %vm1797, %v2447, -inf
    %2950 = vmax.xlane.f32.xlu0 %v2949
    %v2951 = vpop.xlane.xlu0 %2950
    %v2952 = vsel %vm1797, %v2452, -inf
    %2953 = vmax.xlane.f32.xlu0 %v2952
    %v2954 = vpop.xlane.xlu0 %2953
    %v2955 = vsel %vm1797, %v2455, -inf
    %2956 = vmax.xlane.f32.xlu0 %v2955
    %v2957 = vpop.xlane.xlu0 %2956
    %v2958 = vsel %vm1797, %v2460, -inf
    %2959 = vmax.xlane.f32.xlu0 %v2958
    %v2960 = vpop.xlane.xlu0 %2959
    %v2961 = vsel %vm1797, %v2463, -inf
    %2962 = vmax.xlane.f32.xlu0 %v2961
    %v2963 = vpop.xlane.xlu0 %2962
    %v2964 = vsel %vm1797, %v2468, -inf
    %2965 = vmax.xlane.f32.xlu0 %v2964
    %v2966 = vpop.xlane.xlu0 %2965
    %v2967 = vsel %vm1797, %v2471, -inf
    %2968 = vmax.xlane.f32.xlu0 %v2967
    %v2969 = vpop.xlane.xlu0 %2968
    %v2970 = vsel %vm1797, %v2476, -inf
    %2971 = vmax.xlane.f32.xlu0 %v2970
    %v2972 = vpop.xlane.xlu0 %2971
    %v2973 = vsel %vm1797, %v2479, -inf
    %2974 = vmax.xlane.f32.xlu0 %v2973
    %v2975 = vpop.xlane.xlu0 %2974
    %v2976 = vsel %vm1797, %v2484, -inf
    %2977 = vmax.xlane.f32.xlu0 %v2976
    %v2978 = vpop.xlane.xlu0 %2977
    %v2979 = vsel %vm1797, %v2487, -inf
    %2980 = vmax.xlane.f32.xlu0 %v2979
    %v2981 = vpop.xlane.xlu0 %2980
    %v2982 = vsel %vm1797, %v2492, -inf
    %2983 = vmax.xlane.f32.xlu0 %v2982
    %v2984 = vpop.xlane.xlu0 %2983
    %v2985 = vsel %vm1797, %v2495, -inf
    %2986 = vmax.xlane.f32.xlu0 %v2985
    %v2987 = vpop.xlane.xlu0 %2986
    %v2988 = vsel %vm1797, %v2500, -inf
    %2989 = vmax.xlane.f32.xlu0 %v2988
    %v2990 = vpop.xlane.xlu0 %2989
    %v2991 = vsel %vm1797, %v2503, -inf
    %2992 = vmax.xlane.f32.xlu0 %v2991
    %v2993 = vpop.xlane.xlu0 %2992
    %v2994 = vsel %vm1797, %v2508, -inf
    %2995 = vmax.xlane.f32.xlu0 %v2994
    %v2996 = vpop.xlane.xlu0 %2995
    %v2997 = vsel %vm1797, %v2511, -inf
    %2998 = vmax.xlane.f32.xlu0 %v2997
    %v2999 = vpop.xlane.xlu0 %2998
    %v3000 = vsel %vm1797, %v2516, -inf
    %3001 = vmax.xlane.f32.xlu0 %v3000
    %v3002 = vpop.xlane.xlu0 %3001
    %v3003 = vsel %vm1797, %v2519, -inf
    %3004 = vmax.xlane.f32.xlu0 %v3003
    %v3005 = vpop.xlane.xlu0 %3004
    %v3006 = vsel %vm1797, %v2524, -inf
    %3007 = vmax.xlane.f32.xlu0 %v3006
    %v3008 = vpop.xlane.xlu0 %3007
    %v3009 = vsel %vm1797, %v2527, -inf
    %3010 = vmax.xlane.f32.xlu0 %v3009
    %v3011 = vpop.xlane.xlu0 %3010
    %v3012 = vsel %vm1797, %v2532, -inf
    %3013 = vmax.xlane.f32.xlu0 %v3012
    %v3014 = vpop.xlane.xlu0 %3013
    %v3015 = vsel %vm1797, %v2535, -inf
    %3016 = vmax.xlane.f32.xlu0 %v3015
    %v3017 = vpop.xlane.xlu0 %3016
    %v3018 = vsel %vm1797, %v2540, -inf
    %3019 = vmax.xlane.f32.xlu0 %v3018
    %v3020 = vpop.xlane.xlu0 %3019
    %v3021 = vsel %vm1797, %v2543, -inf
    %3022 = vmax.xlane.f32.xlu0 %v3021
    %v3023 = vpop.xlane.xlu0 %3022
    %v3024 = vsel %vm1797, %v2548, -inf
    %3025 = vmax.xlane.f32.xlu0 %v3024
    %v3026 = vpop.xlane.xlu0 %3025
    %v3027 = vsel %vm1797, %v2551, -inf
    %3028 = vmax.xlane.f32.xlu0 %v3027
    %v3029 = vpop.xlane.xlu0 %3028
    %v3030 = vsel %vm1797, %v2556, -inf
    %3031 = vmax.xlane.f32.xlu0 %v3030
    %v3032 = vpop.xlane.xlu0 %3031
    %v3033 = vsel %vm1797, %v2559, -inf
    %3034 = vmax.xlane.f32.xlu0 %v3033
    %v3035 = vpop.xlane.xlu0 %3034
    %v3036 = vsel %vm1797, %v2564, -inf
    %3037 = vmax.xlane.f32.xlu0 %v3036
    %v3038 = vpop.xlane.xlu0 %3037
    %v3039 = vsel %vm1797, %v2567, -inf
    %3040 = vmax.xlane.f32.xlu0 %v3039
    %v3041 = vpop.xlane.xlu0 %3040
    %v3042 = vsel %vm1797, %v2572, -inf
    %3043 = vmax.xlane.f32.xlu0 %v3042
    %v3044 = vpop.xlane.xlu0 %3043
    %v3045 = vsel %vm1797, %v2575, -inf
    %3046 = vmax.xlane.f32.xlu0 %v3045
    %v3047 = vpop.xlane.xlu0 %3046
    %v3048 = vsel %vm1797, %v2580, -inf
    %3049 = vmax.xlane.f32.xlu0 %v3048
    %v3050 = vpop.xlane.xlu0 %3049
    %v3051 = vsel %vm1797, %v2583, -inf
    %3052 = vmax.xlane.f32.xlu0 %v3051
    %v3053 = vpop.xlane.xlu0 %3052
    %v3054 = vsel %vm1797, %v2588, -inf
    %3055 = vmax.xlane.f32.xlu0 %v3054
    %v3056 = vpop.xlane.xlu0 %3055
    %v3057 = vsel %vm1797, %v2591, -inf
    %3058 = vmax.xlane.f32.xlu0 %v3057
    %v3059 = vpop.xlane.xlu0 %3058
    %v3060 = vsel %vm1797, %v2596, -inf
    %3061 = vmax.xlane.f32.xlu0 %v3060
    %v3062 = vpop.xlane.xlu0 %3061
    %v3063 = vsel %vm1797, %v2599, -inf
    %3064 = vmax.xlane.f32.xlu0 %v3063
    %v3065 = vpop.xlane.xlu0 %3064
    %v3066 = vsel %vm1797, %v2604, -inf
    %3067 = vmax.xlane.f32.xlu0 %v3066
    %v3068 = vpop.xlane.xlu0 %3067
    %v3069 = vsel %vm1797, %v2607, -inf
    %3070 = vmax.xlane.f32.xlu0 %v3069
    %v3071 = vpop.xlane.xlu0 %3070
    %v3072 = vsel %vm1797, %v2612, -inf
    %3073 = vmax.xlane.f32.xlu0 %v3072
    %v3074 = vpop.xlane.xlu0 %3073
    %v3075 = vsel %vm1797, %v2615, -inf
    %3076 = vmax.xlane.f32.xlu0 %v3075
    %v3077 = vpop.xlane.xlu0 %3076
    %v3078 = vsel %vm1797, %v2620, -inf
    %3079 = vmax.xlane.f32.xlu0 %v3078
    %v3080 = vpop.xlane.xlu0 %3079
    %v3081 = vsel %vm1797, %v2623, -inf
    %3082 = vmax.xlane.f32.xlu0 %v3081
    %v3083 = vpop.xlane.xlu0 %3082
    %v3084 = vsel %vm1797, %v2628, -inf
    %3085 = vmax.xlane.f32.xlu0 %v3084
    %v3086 = vpop.xlane.xlu0 %3085
    %v3087 = vsel %vm1797, %v2631, -inf
    %3088 = vmax.xlane.f32.xlu0 %v3087
    %v3089 = vpop.xlane.xlu0 %3088
    %v3090 = vsel %vm1797, %v2636, -inf
    %3091 = vmax.xlane.f32.xlu0 %v3090
    %v3092 = vpop.xlane.xlu0 %3091
    %v3093 = vsel %vm1797, %v2639, -inf
    %3094 = vmax.xlane.f32.xlu0 %v3093
    %v3095 = vpop.xlane.xlu0 %3094
    %v3096 = vsel %vm1797, %v2644, -inf
    %3097 = vmax.xlane.f32.xlu0 %v3096
    %v3098 = vpop.xlane.xlu0 %3097
    %v3099 = vsel %vm1797, %v2647, -inf
    %3100 = vmax.xlane.f32.xlu0 %v3099
    %v3101 = vpop.xlane.xlu0 %3100
    %v3102 = vsel %vm1797, %v2652, -inf
    %3103 = vmax.xlane.f32.xlu0 %v3102
    %v3104 = vpop.xlane.xlu0 %3103
    %v3105 = vsel %vm1797, %v2655, -inf
    %3106 = vmax.xlane.f32.xlu0 %v3105
    %v3107 = vpop.xlane.xlu0 %3106
    %v3108 = vsel %vm1797, %v2660, -inf
    %3109 = vmax.xlane.f32.xlu0 %v3108
    %v3110 = vpop.xlane.xlu0 %3109
    %v3111 = vsel %vm1797, %v2663, -inf
    %3112 = vmax.xlane.f32.xlu0 %v3111
    %v3113 = vpop.xlane.xlu0 %3112
    %v3114 = vsel %vm1797, %v2668, -inf
    %3115 = vmax.xlane.f32.xlu0 %v3114
    %v3116 = vpop.xlane.xlu0 %3115
    %v3117 = vsel %vm1797, %v2671, -inf
    %3118 = vmax.xlane.f32.xlu0 %v3117
    %v3119 = vpop.xlane.xlu0 %3118
    %v3120 = vsel %vm1797, %v2676, -inf
    %3121 = vmax.xlane.f32.xlu0 %v3120
    %v3122 = vpop.xlane.xlu0 %3121
    %v3123 = vsel %vm1797, %v2679, -inf
    %3124 = vmax.xlane.f32.xlu0 %v3123
    %v3125 = vpop.xlane.xlu0 %3124
    %v3126 = vsel %vm1797, %v2684, -inf
    %3127 = vmax.xlane.f32.xlu0 %v3126
    %v3128 = vpop.xlane.xlu0 %3127
    %v3129 = vsel %vm1797, %v2687, -inf
    %3130 = vmax.xlane.f32.xlu0 %v3129
    %v3131 = vpop.xlane.xlu0 %3130
    %v3132 = vsel %vm1797, %v2692, -inf
    %3133 = vmax.xlane.f32.xlu0 %v3132
    %v3134 = vpop.xlane.xlu0 %3133
    %v3135 = vsel %vm1797, %v2695, -inf
    %3136 = vmax.xlane.f32.xlu0 %v3135
    %v3137 = vpop.xlane.xlu0 %3136
    %v3138 = vsel %vm1797, %v2700, -inf
    %3139 = vmax.xlane.f32.xlu0 %v3138
    %v3140 = vpop.xlane.xlu0 %3139
    %v3141 = vsel %vm1797, %v2703, -inf
    %3142 = vmax.xlane.f32.xlu0 %v3141
    %v3143 = vpop.xlane.xlu0 %3142
    %v3144 = vsel %vm1797, %v2708, -inf
    %3145 = vmax.xlane.f32.xlu0 %v3144
    %v3146 = vpop.xlane.xlu0 %3145
    %v3147 = vsel %vm1797, %v2711, -inf
    %3148 = vmax.xlane.f32.xlu0 %v3147
    %v3149 = vpop.xlane.xlu0 %3148
    %v3150 = vsel %vm1797, %v2716, -inf
    %3151 = vmax.xlane.f32.xlu0 %v3150
    %v3152 = vpop.xlane.xlu0 %3151
    %v3153 = vsel %vm1797, %v2719, -inf
    %3154 = vmax.xlane.f32.xlu0 %v3153
    %v3155 = vpop.xlane.xlu0 %3154
    %v3156 = vsel %vm1797, %v2724, -inf
    %3157 = vmax.xlane.f32.xlu0 %v3156
    %v3158 = vpop.xlane.xlu0 %3157
    %v3159 = vsel %vm1797, %v2727, -inf
    %3160 = vmax.xlane.f32.xlu0 %v3159
    %v3161 = vpop.xlane.xlu0 %3160
    %v3162 = vsel %vm1797, %v2732, -inf
    %3163 = vmax.xlane.f32.xlu0 %v3162
    %v3164 = vpop.xlane.xlu0 %3163
    %v3165 = vsel %vm1797, %v2735, -inf
    %3166 = vmax.xlane.f32.xlu0 %v3165
    %v3167 = vpop.xlane.xlu0 %3166
    %v3168 = vsel %vm1797, %v2740, -inf
    %3169 = vmax.xlane.f32.xlu0 %v3168
    %v3170 = vpop.xlane.xlu0 %3169
    %v3171 = vsel %vm1797, %v2743, -inf
    %3172 = vmax.xlane.f32.xlu0 %v3171
    %v3173 = vpop.xlane.xlu0 %3172
    %v3174 = vsel %vm1797, %v2748, -inf
    %3175 = vmax.xlane.f32.xlu0 %v3174
    %v3176 = vpop.xlane.xlu0 %3175
    %v3177 = vsel %vm1797, %v2751, -inf
    %3178 = vmax.xlane.f32.xlu0 %v3177
    %v3179 = vpop.xlane.xlu0 %3178
    %v3180 = vsel %vm1797, %v2756, -inf
    %3181 = vmax.xlane.f32.xlu0 %v3180
    %v3182 = vpop.xlane.xlu0 %3181
    %v3183 = vsel %vm1797, %v2759, -inf
    %3184 = vmax.xlane.f32.xlu0 %v3183
    %v3185 = vpop.xlane.xlu0 %3184
    %v3186 = vsel %vm1797, %v2764, -inf
    %3187 = vmax.xlane.f32.xlu0 %v3186
    %v3188 = vpop.xlane.xlu0 %3187
    %v3189 = vsel %vm1797, %v2767, -inf
    %3190 = vmax.xlane.f32.xlu0 %v3189
    %v3191 = vpop.xlane.xlu0 %3190
    %v3192 = vsel %vm1797, %v2772, -inf
    %3193 = vmax.xlane.f32.xlu0 %v3192
    %v3194 = vpop.xlane.xlu0 %3193
    %v3195 = vsel %vm1797, %v2775, -inf
    %3196 = vmax.xlane.f32.xlu0 %v3195
    %v3197 = vpop.xlane.xlu0 %3196
    %v3198 = vsel %vm1797, %v2780, -inf
    %3199 = vmax.xlane.f32.xlu0 %v3198
    %v3200 = vpop.xlane.xlu0 %3199
    %v3201 = vsel %vm1797, %v2783, -inf
    %3202 = vmax.xlane.f32.xlu0 %v3201
    %v3203 = vpop.xlane.xlu0 %3202
    %v3204 = vsel %vm1797, %v2788, -inf
    %3205 = vmax.xlane.f32.xlu0 %v3204
    %v3206 = vpop.xlane.xlu0 %3205
    %v3207 = vsel %vm1797, %v2791, -inf
    %3208 = vmax.xlane.f32.xlu0 %v3207
    %v3209 = vpop.xlane.xlu0 %3208
    %v3210 = vsel %vm1797, %v2796, -inf
    %3211 = vmax.xlane.f32.xlu0 %v3210
    %v3212 = vpop.xlane.xlu0 %3211
    %v3213 = vsel %vm1797, %v2799, -inf
    %3214 = vmax.xlane.f32.xlu0 %v3213
    %v3215 = vpop.xlane.xlu0 %3214
    %v3216 = vsel %vm1797, %v2804, -inf
    %3217 = vmax.xlane.f32.xlu0 %v3216
    %v3218 = vpop.xlane.xlu0 %3217
    %v3219 = vsel %vm1797, %v2807, -inf
    %3220 = vmax.xlane.f32.xlu0 %v3219
    %v3221 = vpop.xlane.xlu0 %3220
    %v3222 = vsel %vm1797, %v2812, -inf
    %3223 = vmax.xlane.f32.xlu0 %v3222
    %v3224 = vpop.xlane.xlu0 %3223
    %v3225 = vsel %vm1797, %v2815, -inf
    %3226 = vmax.xlane.f32.xlu0 %v3225
    %v3227 = vpop.xlane.xlu0 %3226
    %v3228 = vsel %vm1797, %v2820, -inf
    %3229 = vmax.xlane.f32.xlu0 %v3228
    %v3230 = vpop.xlane.xlu0 %3229
    %v3231 = vsel %vm1797, %v2823, -inf
    %3232 = vmax.xlane.f32.xlu0 %v3231
    %v3233 = vpop.xlane.xlu0 %3232
    %v3234 = vsel %vm1797, %v2828, -inf
    %3235 = vmax.xlane.f32.xlu0 %v3234
    %v3236 = vpop.xlane.xlu0 %3235
    %v3237 = vsel %vm1797, %v2831, -inf
    %3238 = vmax.xlane.f32.xlu0 %v3237
    %v3239 = vpop.xlane.xlu0 %3238
    %v3240 = vsel %vm1797, %v2836, -inf
    %3241 = vmax.xlane.f32.xlu0 %v3240
    %v3242 = vpop.xlane.xlu0 %3241
    %v3243 = vsel %vm1797, %v2839, -inf
    %3244 = vmax.xlane.f32.xlu0 %v3243
    %v3245 = vpop.xlane.xlu0 %3244
    %v3246 = vsel %vm1797, %v2844, -inf
    %3247 = vmax.xlane.f32.xlu0 %v3246
    %v3248 = vpop.xlane.xlu0 %3247
    %v3249 = vsel %vm1797, %v2847, -inf
    %3250 = vmax.xlane.f32.xlu0 %v3249
    %v3251 = vpop.xlane.xlu0 %3250
    %v3252 = vsel %vm1797, %v2852, -inf
    %3253 = vmax.xlane.f32.xlu0 %v3252
    %v3254 = vpop.xlane.xlu0 %3253
    %v3255 = vsel %vm1797, %v2855, -inf
    %3256 = vmax.xlane.f32.xlu0 %v3255
    %v3257 = vpop.xlane.xlu0 %3256
    %v3258 = vsel %vm1797, %v2860, -inf
    %3259 = vmax.xlane.f32.xlu0 %v3258
    %v3260 = vpop.xlane.xlu0 %3259
    %v3261 = vsel %vm1797, %v2863, -inf
    %3262 = vmax.xlane.f32.xlu0 %v3261
    %v3263 = vpop.xlane.xlu0 %3262
    %v3264 = vsel %vm1797, %v2868, -inf
    %3265 = vmax.xlane.f32.xlu0 %v3264
    %v3266 = vpop.xlane.xlu0 %3265
    %v3267 = vsel %vm1797, %v2871, -inf
    %3268 = vmax.xlane.f32.xlu0 %v3267
    %v3269 = vpop.xlane.xlu0 %3268
    %v3270 = vsel %vm1797, %v2876, -inf
    %3271 = vmax.xlane.f32.xlu0 %v3270
    %v3272 = vpop.xlane.xlu0 %3271
    %v3273 = vsel %vm1797, %v2879, -inf
    %3274 = vmax.xlane.f32.xlu0 %v3273
    %v3275 = vpop.xlane.xlu0 %3274
    %v3276 = vsel %vm1797, %v2884, -inf
    %3277 = vmax.xlane.f32.xlu0 %v3276
    %v3278 = vpop.xlane.xlu0 %3277
    %v3279 = vsel %vm1797, %v2887, -inf
    %3280 = vmax.xlane.f32.xlu0 %v3279
    %v3281 = vpop.xlane.xlu0 %3280
    %v3282 = vsel %vm1797, %v2892, -inf
    %3283 = vmax.xlane.f32.xlu0 %v3282
    %v3284 = vpop.xlane.xlu0 %3283
    %v3285 = vsel %vm1797, %v2895, -inf
    %3286 = vmax.xlane.f32.xlu0 %v3285
    %v3287 = vpop.xlane.xlu0 %3286
    %v3288 = vsel %vm1797, %v2900, -inf
    %3289 = vmax.xlane.f32.xlu0 %v3288
    %v3290 = vpop.xlane.xlu0 %3289
    %v3291 = vsel %vm1797, %v2903, -inf
    %3292 = vmax.xlane.f32.xlu0 %v3291
    %v3293 = vpop.xlane.xlu0 %3292
    %v3294 = vsel %vm1797, %v2908, -inf
    %3295 = vmax.xlane.f32.xlu0 %v3294
    %v3296 = vpop.xlane.xlu0 %3295
    %v3297 = vsel %vm1797, %v2911, -inf
    %3298 = vmax.xlane.f32.xlu0 %v3297
    %v3299 = vpop.xlane.xlu0 %3298
    %v3300 = vsel %vm1797, %v2916, -inf
    %3301 = vmax.xlane.f32.xlu0 %v3300
    %v3302 = vpop.xlane.xlu0 %3301
    %v3303 = vsel %vm1797, %v2919, -inf
    %3304 = vmax.xlane.f32.xlu0 %v3303
    %v3305 = vpop.xlane.xlu0 %3304
    %vm3306 = vcmask 7168
    %v3307 = vsel %vm3306, %v1800, %v2924
    %v3308 = vsel %vm3306, %v1803, %v2927
    %v3309 = vsel %vm3306, %v1806, %v2930
    %v3310 = vsel %vm3306, %v1809, %v2933
    %v3311 = vsel %vm3306, %v1812, %v2936
    %v3312 = vsel %vm3306, %v1815, %v2939
    %v3313 = vsel %vm3306, %v1818, %v2942
    %v3314 = vsel %vm3306, %v1821, %v2945
    %v3315 = vsel %vm3306, %v1824, %v2948
    %v3316 = vsel %vm3306, %v1827, %v2951
    %v3317 = vsel %vm3306, %v1830, %v2954
    %v3318 = vsel %vm3306, %v1833, %v2957
    %v3319 = vsel %vm3306, %v1836, %v2960
    %v3320 = vsel %vm3306, %v1839, %v2963
    %v3321 = vsel %vm3306, %v1842, %v2966
    %v3322 = vsel %vm3306, %v1845, %v2969
    %v3323 = vsel %vm3306, %v1848, %v2972
    %v3324 = vsel %vm3306, %v1851, %v2975
    %v3325 = vsel %vm3306, %v1854, %v2978
    %v3326 = vsel %vm3306, %v1857, %v2981
    %v3327 = vsel %vm3306, %v1860, %v2984
    %v3328 = vsel %vm3306, %v1863, %v2987
    %v3329 = vsel %vm3306, %v1866, %v2990
    %v3330 = vsel %vm3306, %v1869, %v2993
    %v3331 = vsel %vm3306, %v1872, %v2996
    %v3332 = vsel %vm3306, %v1875, %v2999
    %v3333 = vsel %vm3306, %v1878, %v3002
    %v3334 = vsel %vm3306, %v1881, %v3005
    %v3335 = vsel %vm3306, %v1884, %v3008
    %v3336 = vsel %vm3306, %v1887, %v3011
    %v3337 = vsel %vm3306, %v1890, %v3014
    %v3338 = vsel %vm3306, %v1893, %v3017
    %v3339 = vsel %vm3306, %v1896, %v3020
    %v3340 = vsel %vm3306, %v1899, %v3023
    %v3341 = vsel %vm3306, %v1902, %v3026
    %v3342 = vsel %vm3306, %v1905, %v3029
    %v3343 = vsel %vm3306, %v1908, %v3032
    %v3344 = vsel %vm3306, %v1911, %v3035
    %v3345 = vsel %vm3306, %v1914, %v3038
    %v3346 = vsel %vm3306, %v1917, %v3041
    %v3347 = vsel %vm3306, %v1920, %v3044
    %v3348 = vsel %vm3306, %v1923, %v3047
    %v3349 = vsel %vm3306, %v1926, %v3050
    %v3350 = vsel %vm3306, %v1929, %v3053
    %v3351 = vsel %vm3306, %v1932, %v3056
    %v3352 = vsel %vm3306, %v1935, %v3059
    %v3353 = vsel %vm3306, %v1938, %v3062
    %v3354 = vsel %vm3306, %v1941, %v3065
    %v3355 = vsel %vm3306, %v1944, %v3068
    %v3356 = vsel %vm3306, %v1947, %v3071
    %v3357 = vsel %vm3306, %v1950, %v3074
    %v3358 = vsel %vm3306, %v1953, %v3077
    %v3359 = vsel %vm3306, %v1956, %v3080
    %v3360 = vsel %vm3306, %v1959, %v3083
    %v3361 = vsel %vm3306, %v1962, %v3086
    %v3362 = vsel %vm3306, %v1965, %v3089
    %v3363 = vsel %vm3306, %v1968, %v3092
    %v3364 = vsel %vm3306, %v1971, %v3095
    %v3365 = vsel %vm3306, %v1974, %v3098
    %v3366 = vsel %vm3306, %v1977, %v3101
    %v3367 = vsel %vm3306, %v1980, %v3104
    %v3368 = vsel %vm3306, %v1983, %v3107
    %v3369 = vsel %vm3306, %v1986, %v3110
    %v3370 = vsel %vm3306, %v1989, %v3113
    %v3371 = vsel %vm3306, %v1992, %v3116
    %v3372 = vsel %vm3306, %v1995, %v3119
    %v3373 = vsel %vm3306, %v1998, %v3122
    %v3374 = vsel %vm3306, %v2001, %v3125
    %v3375 = vsel %vm3306, %v2004, %v3128
    %v3376 = vsel %vm3306, %v2007, %v3131
    %v3377 = vsel %vm3306, %v2010, %v3134
    %v3378 = vsel %vm3306, %v2013, %v3137
    %v3379 = vsel %vm3306, %v2016, %v3140
    %v3380 = vsel %vm3306, %v2019, %v3143
    %v3381 = vsel %vm3306, %v2022, %v3146
    %v3382 = vsel %vm3306, %v2025, %v3149
    %v3383 = vsel %vm3306, %v2028, %v3152
    %v3384 = vsel %vm3306, %v2031, %v3155
    %v3385 = vsel %vm3306, %v2034, %v3158
    %v3386 = vsel %vm3306, %v2037, %v3161
    %v3387 = vsel %vm3306, %v2040, %v3164
    %v3388 = vsel %vm3306, %v2043, %v3167
    %v3389 = vsel %vm3306, %v2046, %v3170
    %v3390 = vsel %vm3306, %v2049, %v3173
    %v3391 = vsel %vm3306, %v2052, %v3176
    %v3392 = vsel %vm3306, %v2055, %v3179
    %v3393 = vsel %vm3306, %v2058, %v3182
    %v3394 = vsel %vm3306, %v2061, %v3185
    %v3395 = vsel %vm3306, %v2064, %v3188
    %v3396 = vsel %vm3306, %v2067, %v3191
    %v3397 = vsel %vm3306, %v2070, %v3194
    %v3398 = vsel %vm3306, %v2073, %v3197
    %v3399 = vsel %vm3306, %v2076, %v3200
    %v3400 = vsel %vm3306, %v2079, %v3203
    %v3401 = vsel %vm3306, %v2082, %v3206
    %v3402 = vsel %vm3306, %v2085, %v3209
    %v3403 = vsel %vm3306, %v2088, %v3212
    %v3404 = vsel %vm3306, %v2091, %v3215
    %v3405 = vsel %vm3306, %v2094, %v3218
    %v3406 = vsel %vm3306, %v2097, %v3221
    %v3407 = vsel %vm3306, %v2100, %v3224
    %v3408 = vsel %vm3306, %v2103, %v3227
    %v3409 = vsel %vm3306, %v2106, %v3230
    %v3410 = vsel %vm3306, %v2109, %v3233
    %v3411 = vsel %vm3306, %v2112, %v3236
    %v3412 = vsel %vm3306, %v2115, %v3239
    %v3413 = vsel %vm3306, %v2118, %v3242
    %v3414 = vsel %vm3306, %v2121, %v3245
    %v3415 = vsel %vm3306, %v2124, %v3248
    %v3416 = vsel %vm3306, %v2127, %v3251
    %v3417 = vsel %vm3306, %v2130, %v3254
    %v3418 = vsel %vm3306, %v2133, %v3257
    %v3419 = vsel %vm3306, %v2136, %v3260
    %v3420 = vsel %vm3306, %v2139, %v3263
    %v3421 = vsel %vm3306, %v2142, %v3266
    %v3422 = vsel %vm3306, %v2145, %v3269
    %v3423 = vsel %vm3306, %v2148, %v3272
    %v3424 = vsel %vm3306, %v2151, %v3275
    %v3425 = vsel %vm3306, %v2154, %v3278
    %v3426 = vsel %vm3306, %v2157, %v3281
    %v3427 = vsel %vm3306, %v2160, %v3284
    %v3428 = vsel %vm3306, %v2163, %v3287
    %v3429 = vsel %vm3306, %v2166, %v3290
    %v3430 = vsel %vm3306, %v2169, %v3293
    %v3431 = vsel %vm3306, %v2172, %v3296
    %v3432 = vsel %vm3306, %v2175, %v3299
    %v3433 = vsel %vm3306, %v2178, %v3302
    %v3434 = vsel %vm3306, %v2181, %v3305
    %v3435 = vld [vmem:[#allocation2] sm:$0xff]
    %v3436 = vld [vmem:[#allocation2 + $0x8] sm:$0xff]
    %v3437 = vld [vmem:[#allocation2 + $0x10] sm:$0xff]
    %v3438 = vld [vmem:[#allocation2 + $0x18] sm:$0xff]
    %v3439 = vld [vmem:[#allocation2 + $0x20] sm:$0xff]
    %v3440 = vld [vmem:[#allocation2 + $0x28] sm:$0xff]
    %v3441 = vld [vmem:[#allocation2 + $0x30] sm:$0xff]
    %v3442 = vld [vmem:[#allocation2 + $0x38] sm:$0xff]
    %v3443 = vld [vmem:[#allocation2 + $0x40] sm:$0xff]
    %v3444 = vld [vmem:[#allocation2 + $0x48] sm:$0xff]
    %v3445 = vld [vmem:[#allocation2 + $0x50] sm:$0xff]
    %v3446 = vld [vmem:[#allocation2 + $0x58] sm:$0xff]
    %v3447 = vld [vmem:[#allocation2 + $0x60] sm:$0xff]
    %v3448 = vld [vmem:[#allocation2 + $0x68] sm:$0xff]
    %v3449 = vld [vmem:[#allocation2 + $0x70] sm:$0xff]
    %v3450 = vld [vmem:[#allocation2 + $0x78] sm:$0xff]
    %v3451 = vld [vmem:[#allocation2 + $0x80] sm:$0xff]
    %v3452 = vld [vmem:[#allocation2 + $0x88] sm:$0xff]
    %v3453 = vld [vmem:[#allocation2 + $0x90] sm:$0xff]
    %v3454 = vld [vmem:[#allocation2 + $0x98] sm:$0xff]
    %v3455 = vld [vmem:[#allocation2 + $0xa0] sm:$0xff]
    %v3456 = vld [vmem:[#allocation2 + $0xa8] sm:$0xff]
    %v3457 = vld [vmem:[#allocation2 + $0xb0] sm:$0xff]
    %v3458 = vld [vmem:[#allocation2 + $0xb8] sm:$0xff]
    %v3459 = vld [vmem:[#allocation2 + $0xc0] sm:$0xff]
    %v3460 = vld [vmem:[#allocation2 + $0xc8] sm:$0xff]
    %v3461 = vld [vmem:[#allocation2 + $0xd0] sm:$0xff]
    %v3462 = vld [vmem:[#allocation2 + $0xd8] sm:$0xff]
    %v3463 = vld [vmem:[#allocation2 + $0xe0] sm:$0xff]
    %v3464 = vld [vmem:[#allocation2 + $0xe8] sm:$0xff]
    %v3465 = vld [vmem:[#allocation2 + $0xf0] sm:$0xff]
    %v3466 = vld [vmem:[#allocation2 + $0xf8] sm:$0xff]
    %v3467 = vld [vmem:[#allocation2 + $0x100] sm:$0xff]
    %v3468 = vld [vmem:[#allocation2 + $0x108] sm:$0xff]
    %v3469 = vld [vmem:[#allocation2 + $0x110] sm:$0xff]
    %v3470 = vld [vmem:[#allocation2 + $0x118] sm:$0xff]
    %v3471 = vld [vmem:[#allocation2 + $0x120] sm:$0xff]
    %v3472 = vld [vmem:[#allocation2 + $0x128] sm:$0xff]
    %v3473 = vld [vmem:[#allocation2 + $0x130] sm:$0xff]
    %v3474 = vld [vmem:[#allocation2 + $0x138] sm:$0xff]
    %v3475 = vld [vmem:[#allocation2 + $0x140] sm:$0xff]
    %v3476 = vld [vmem:[#allocation2 + $0x148] sm:$0xff]
    %v3477 = vld [vmem:[#allocation2 + $0x150] sm:$0xff]
    %v3478 = vld [vmem:[#allocation2 + $0x158] sm:$0xff]
    %v3479 = vld [vmem:[#allocation2 + $0x160] sm:$0xff]
    %v3480 = vld [vmem:[#allocation2 + $0x168] sm:$0xff]
    %v3481 = vld [vmem:[#allocation2 + $0x170] sm:$0xff]
    %v3482 = vld [vmem:[#allocation2 + $0x178] sm:$0xff]
    %v3483 = vld [vmem:[#allocation2 + $0x180] sm:$0xff]
    %v3484 = vld [vmem:[#allocation2 + $0x188] sm:$0xff]
    %v3485 = vld [vmem:[#allocation2 + $0x190] sm:$0xff]
    %v3486 = vld [vmem:[#allocation2 + $0x198] sm:$0xff]
    %v3487 = vld [vmem:[#allocation2 + $0x1a0] sm:$0xff]
    %v3488 = vld [vmem:[#allocation2 + $0x1a8] sm:$0xff]
    %v3489 = vld [vmem:[#allocation2 + $0x1b0] sm:$0xff]
    %v3490 = vld [vmem:[#allocation2 + $0x1b8] sm:$0xff]
    %v3491 = vld [vmem:[#allocation2 + $0x1c0] sm:$0xff]
    %v3492 = vld [vmem:[#allocation2 + $0x1c8] sm:$0xff]
    %v3493 = vld [vmem:[#allocation2 + $0x1d0] sm:$0xff]
    %v3494 = vld [vmem:[#allocation2 + $0x1d8] sm:$0xff]
    %v3495 = vld [vmem:[#allocation2 + $0x1e0] sm:$0xff]
    %v3496 = vld [vmem:[#allocation2 + $0x1e8] sm:$0xff]
    %v3497 = vld [vmem:[#allocation2 + $0x1f0] sm:$0xff]
    %v3498 = vld [vmem:[#allocation2 + $0x1f8] sm:$0xff]
    %v3499 = vld [vmem:[#allocation2 + $0x200] sm:$0xff]
    %v3500 = vld [vmem:[#allocation2 + $0x208] sm:$0xff]
    %v3501 = vld [vmem:[#allocation2 + $0x210] sm:$0xff]
    %v3502 = vld [vmem:[#allocation2 + $0x218] sm:$0xff]
    %v3503 = vld [vmem:[#allocation2 + $0x220] sm:$0xff]
    %v3504 = vld [vmem:[#allocation2 + $0x228] sm:$0xff]
    %v3505 = vld [vmem:[#allocation2 + $0x230] sm:$0xff]
    %v3506 = vld [vmem:[#allocation2 + $0x238] sm:$0xff]
    %v3507 = vld [vmem:[#allocation2 + $0x240] sm:$0xff]
    %v3508 = vld [vmem:[#allocation2 + $0x248] sm:$0xff]
    %v3509 = vld [vmem:[#allocation2 + $0x250] sm:$0xff]
    %v3510 = vld [vmem:[#allocation2 + $0x258] sm:$0xff]
    %v3511 = vld [vmem:[#allocation2 + $0x260] sm:$0xff]
    %v3512 = vld [vmem:[#allocation2 + $0x268] sm:$0xff]
    %v3513 = vld [vmem:[#allocation2 + $0x270] sm:$0xff]
    %v3514 = vld [vmem:[#allocation2 + $0x278] sm:$0xff]
    %v3515 = vld [vmem:[#allocation2 + $0x280] sm:$0xff]
    %v3516 = vld [vmem:[#allocation2 + $0x288] sm:$0xff]
    %v3517 = vld [vmem:[#allocation2 + $0x290] sm:$0xff]
    %v3518 = vld [vmem:[#allocation2 + $0x298] sm:$0xff]
    %v3519 = vld [vmem:[#allocation2 + $0x2a0] sm:$0xff]
    %v3520 = vld [vmem:[#allocation2 + $0x2a8] sm:$0xff]
    %v3521 = vld [vmem:[#allocation2 + $0x2b0] sm:$0xff]
    %v3522 = vld [vmem:[#allocation2 + $0x2b8] sm:$0xff]
    %v3523 = vld [vmem:[#allocation2 + $0x2c0] sm:$0xff]
    %v3524 = vld [vmem:[#allocation2 + $0x2c8] sm:$0xff]
    %v3525 = vld [vmem:[#allocation2 + $0x2d0] sm:$0xff]
    %v3526 = vld [vmem:[#allocation2 + $0x2d8] sm:$0xff]
    %v3527 = vld [vmem:[#allocation2 + $0x2e0] sm:$0xff]
    %v3528 = vld [vmem:[#allocation2 + $0x2e8] sm:$0xff]
    %v3529 = vld [vmem:[#allocation2 + $0x2f0] sm:$0xff]
    %v3530 = vld [vmem:[#allocation2 + $0x2f8] sm:$0xff]
    %v3531 = vld [vmem:[#allocation2 + $0x300] sm:$0xff]
    %v3532 = vld [vmem:[#allocation2 + $0x308] sm:$0xff]
    %v3533 = vld [vmem:[#allocation2 + $0x310] sm:$0xff]
    %v3534 = vld [vmem:[#allocation2 + $0x318] sm:$0xff]
    %v3535 = vld [vmem:[#allocation2 + $0x320] sm:$0xff]
    %v3536 = vld [vmem:[#allocation2 + $0x328] sm:$0xff]
    %v3537 = vld [vmem:[#allocation2 + $0x330] sm:$0xff]
    %v3538 = vld [vmem:[#allocation2 + $0x338] sm:$0xff]
    %v3539 = vld [vmem:[#allocation2 + $0x340] sm:$0xff]
    %v3540 = vld [vmem:[#allocation2 + $0x348] sm:$0xff]
    %v3541 = vld [vmem:[#allocation2 + $0x350] sm:$0xff]
    %v3542 = vld [vmem:[#allocation2 + $0x358] sm:$0xff]
    %v3543 = vld [vmem:[#allocation2 + $0x360] sm:$0xff]
    %v3544 = vld [vmem:[#allocation2 + $0x368] sm:$0xff]
    %v3545 = vld [vmem:[#allocation2 + $0x370] sm:$0xff]
    %v3546 = vld [vmem:[#allocation2 + $0x378] sm:$0xff]
    %v3547 = vld [vmem:[#allocation2 + $0x380] sm:$0xff]
    %v3548 = vld [vmem:[#allocation2 + $0x388] sm:$0xff]
    %v3549 = vld [vmem:[#allocation2 + $0x390] sm:$0xff]
    %v3550 = vld [vmem:[#allocation2 + $0x398] sm:$0xff]
    %v3551 = vld [vmem:[#allocation2 + $0x3a0] sm:$0xff]
    %v3552 = vld [vmem:[#allocation2 + $0x3a8] sm:$0xff]
    %v3553 = vld [vmem:[#allocation2 + $0x3b0] sm:$0xff]
    %v3554 = vld [vmem:[#allocation2 + $0x3b8] sm:$0xff]
    %v3555 = vld [vmem:[#allocation2 + $0x3c0] sm:$0xff]
    %v3556 = vld [vmem:[#allocation2 + $0x3c8] sm:$0xff]
    %v3557 = vld [vmem:[#allocation2 + $0x3d0] sm:$0xff]
    %v3558 = vld [vmem:[#allocation2 + $0x3d8] sm:$0xff]
    %v3559 = vld [vmem:[#allocation2 + $0x3e0] sm:$0xff]
    %v3560 = vld [vmem:[#allocation2 + $0x3e8] sm:$0xff]
    %v3561 = vld [vmem:[#allocation2 + $0x3f0] sm:$0xff]
    %v3562 = vld [vmem:[#allocation2 + $0x3f8] sm:$0xff]
    %v3563 = vmax.f32 %v3435, %v3307
    %v3564 = vmax.f32 %v3436, %v3308
    %v3565 = vmax.f32 %v3437, %v3309
    %v3566 = vmax.f32 %v3438, %v3310
    %v3567 = vmax.f32 %v3439, %v3311
    %v3568 = vmax.f32 %v3440, %v3312
    %v3569 = vmax.f32 %v3441, %v3313
    %v3570 = vmax.f32 %v3442, %v3314
    %v3571 = vmax.f32 %v3443, %v3315
    %v3572 = vmax.f32 %v3444, %v3316
    %v3573 = vmax.f32 %v3445, %v3317
    %v3574 = vmax.f32 %v3446, %v3318
    %v3575 = vmax.f32 %v3447, %v3319
    %v3576 = vmax.f32 %v3448, %v3320
    %v3577 = vmax.f32 %v3449, %v3321
    %v3578 = vmax.f32 %v3450, %v3322
    %v3579 = vmax.f32 %v3451, %v3323
    %v3580 = vmax.f32 %v3452, %v3324
    %v3581 = vmax.f32 %v3453, %v3325
    %v3582 = vmax.f32 %v3454, %v3326
    %v3583 = vmax.f32 %v3455, %v3327
    %v3584 = vmax.f32 %v3456, %v3328
    %v3585 = vmax.f32 %v3457, %v3329
    %v3586 = vmax.f32 %v3458, %v3330
    %v3587 = vmax.f32 %v3459, %v3331
    %v3588 = vmax.f32 %v3460, %v3332
    %v3589 = vmax.f32 %v3461, %v3333
    %v3590 = vmax.f32 %v3462, %v3334
    %v3591 = vmax.f32 %v3463, %v3335
    %v3592 = vmax.f32 %v3464, %v3336
    %v3593 = vmax.f32 %v3465, %v3337
    %v3594 = vmax.f32 %v3466, %v3338
    %v3595 = vmax.f32 %v3467, %v3339
    %v3596 = vmax.f32 %v3468, %v3340
    %v3597 = vmax.f32 %v3469, %v3341
    %v3598 = vmax.f32 %v3470, %v3342
    %v3599 = vmax.f32 %v3471, %v3343
    %v3600 = vmax.f32 %v3472, %v3344
    %v3601 = vmax.f32 %v3473, %v3345
    %v3602 = vmax.f32 %v3474, %v3346
    %v3603 = vmax.f32 %v3475, %v3347
    %v3604 = vmax.f32 %v3476, %v3348
    %v3605 = vmax.f32 %v3477, %v3349
    %v3606 = vmax.f32 %v3478, %v3350
    %v3607 = vmax.f32 %v3479, %v3351
    %v3608 = vmax.f32 %v3480, %v3352
    %v3609 = vmax.f32 %v3481, %v3353
    %v3610 = vmax.f32 %v3482, %v3354
    %v3611 = vmax.f32 %v3483, %v3355
    %v3612 = vmax.f32 %v3484, %v3356
    %v3613 = vmax.f32 %v3485, %v3357
    %v3614 = vmax.f32 %v3486, %v3358
    %v3615 = vmax.f32 %v3487, %v3359
    %v3616 = vmax.f32 %v3488, %v3360
    %v3617 = vmax.f32 %v3489, %v3361
    %v3618 = vmax.f32 %v3490, %v3362
    %v3619 = vmax.f32 %v3491, %v3363
    %v3620 = vmax.f32 %v3492, %v3364
    %v3621 = vmax.f32 %v3493, %v3365
    %v3622 = vmax.f32 %v3494, %v3366
    %v3623 = vmax.f32 %v3495, %v3367
    %v3624 = vmax.f32 %v3496, %v3368
    %v3625 = vmax.f32 %v3497, %v3369
    %v3626 = vmax.f32 %v3498, %v3370
    %v3627 = vmax.f32 %v3499, %v3371
    %v3628 = vmax.f32 %v3500, %v3372
    %v3629 = vmax.f32 %v3501, %v3373
    %v3630 = vmax.f32 %v3502, %v3374
    %v3631 = vmax.f32 %v3503, %v3375
    %v3632 = vmax.f32 %v3504, %v3376
    %v3633 = vmax.f32 %v3505, %v3377
    %v3634 = vmax.f32 %v3506, %v3378
    %v3635 = vmax.f32 %v3507, %v3379
    %v3636 = vmax.f32 %v3508, %v3380
    %v3637 = vmax.f32 %v3509, %v3381
    %v3638 = vmax.f32 %v3510, %v3382
    %v3639 = vmax.f32 %v3511, %v3383
    %v3640 = vmax.f32 %v3512, %v3384
    %v3641 = vmax.f32 %v3513, %v3385
    %v3642 = vmax.f32 %v3514, %v3386
    %v3643 = vmax.f32 %v3515, %v3387
    %v3644 = vmax.f32 %v3516, %v3388
    %v3645 = vmax.f32 %v3517, %v3389
    %v3646 = vmax.f32 %v3518, %v3390
    %v3647 = vmax.f32 %v3519, %v3391
    %v3648 = vmax.f32 %v3520, %v3392
    %v3649 = vmax.f32 %v3521, %v3393
    %v3650 = vmax.f32 %v3522, %v3394
    %v3651 = vmax.f32 %v3523, %v3395
    %v3652 = vmax.f32 %v3524, %v3396
    %v3653 = vmax.f32 %v3525, %v3397
    %v3654 = vmax.f32 %v3526, %v3398
    %v3655 = vmax.f32 %v3527, %v3399
    %v3656 = vmax.f32 %v3528, %v3400
    %v3657 = vmax.f32 %v3529, %v3401
    %v3658 = vmax.f32 %v3530, %v3402
    %v3659 = vmax.f32 %v3531, %v3403
    %v3660 = vmax.f32 %v3532, %v3404
    %v3661 = vmax.f32 %v3533, %v3405
    %v3662 = vmax.f32 %v3534, %v3406
    %v3663 = vmax.f32 %v3535, %v3407
    %v3664 = vmax.f32 %v3536, %v3408
    %v3665 = vmax.f32 %v3537, %v3409
    %v3666 = vmax.f32 %v3538, %v3410
    %v3667 = vmax.f32 %v3539, %v3411
    %v3668 = vmax.f32 %v3540, %v3412
    %v3669 = vmax.f32 %v3541, %v3413
    %v3670 = vmax.f32 %v3542, %v3414
    %v3671 = vmax.f32 %v3543, %v3415
    %v3672 = vmax.f32 %v3544, %v3416
    %v3673 = vmax.f32 %v3545, %v3417
    %v3674 = vmax.f32 %v3546, %v3418
    %v3675 = vmax.f32 %v3547, %v3419
    %v3676 = vmax.f32 %v3548, %v3420
    %v3677 = vmax.f32 %v3549, %v3421
    %v3678 = vmax.f32 %v3550, %v3422
    %v3679 = vmax.f32 %v3551, %v3423
    %v3680 = vmax.f32 %v3552, %v3424
    %v3681 = vmax.f32 %v3553, %v3425
    %v3682 = vmax.f32 %v3554, %v3426
    %v3683 = vmax.f32 %v3555, %v3427
    %v3684 = vmax.f32 %v3556, %v3428
    %v3685 = vmax.f32 %v3557, %v3429
    %v3686 = vmax.f32 %v3558, %v3430
    %v3687 = vmax.f32 %v3559, %v3431
    %v3688 = vmax.f32 %v3560, %v3432
    %v3689 = vmax.f32 %v3561, %v3433
    %v3690 = vmax.f32 %v3562, %v3434
    %vm3691 = vcmask 15360
    %3692 = vst.msk [vmem:[#allocation2] sm:$0xff] %vm3691, %v3563
    %3693 = vst.msk [vmem:[#allocation2 + $0x8] sm:$0xff] %vm3691, %v3564
    %3694 = vst.msk [vmem:[#allocation2 + $0x10] sm:$0xff] %vm3691, %v3565
    %3695 = vst.msk [vmem:[#allocation2 + $0x18] sm:$0xff] %vm3691, %v3566
    %3696 = vst.msk [vmem:[#allocation2 + $0x20] sm:$0xff] %vm3691, %v3567
    %3697 = vst.msk [vmem:[#allocation2 + $0x28] sm:$0xff] %vm3691, %v3568
    %3698 = vst.msk [vmem:[#allocation2 + $0x30] sm:$0xff] %vm3691, %v3569
    %3699 = vst.msk [vmem:[#allocation2 + $0x38] sm:$0xff] %vm3691, %v3570
    %3700 = vst.msk [vmem:[#allocation2 + $0x40] sm:$0xff] %vm3691, %v3571
    %3701 = vst.msk [vmem:[#allocation2 + $0x48] sm:$0xff] %vm3691, %v3572
    %3702 = vst.msk [vmem:[#allocation2 + $0x50] sm:$0xff] %vm3691, %v3573
    %3703 = vst.msk [vmem:[#allocation2 + $0x58] sm:$0xff] %vm3691, %v3574
    %3704 = vst.msk [vmem:[#allocation2 + $0x60] sm:$0xff] %vm3691, %v3575
    %3705 = vst.msk [vmem:[#allocation2 + $0x68] sm:$0xff] %vm3691, %v3576
    %3706 = vst.msk [vmem:[#allocation2 + $0x70] sm:$0xff] %vm3691, %v3577
    %3707 = vst.msk [vmem:[#allocation2 + $0x78] sm:$0xff] %vm3691, %v3578
    %3708 = vst.msk [vmem:[#allocation2 + $0x80] sm:$0xff] %vm3691, %v3579
    %3709 = vst.msk [vmem:[#allocation2 + $0x88] sm:$0xff] %vm3691, %v3580
    %3710 = vst.msk [vmem:[#allocation2 + $0x90] sm:$0xff] %vm3691, %v3581
    %3711 = vst.msk [vmem:[#allocation2 + $0x98] sm:$0xff] %vm3691, %v3582
    %3712 = vst.msk [vmem:[#allocation2 + $0xa0] sm:$0xff] %vm3691, %v3583
    %3713 = vst.msk [vmem:[#allocation2 + $0xa8] sm:$0xff] %vm3691, %v3584
    %3714 = vst.msk [vmem:[#allocation2 + $0xb0] sm:$0xff] %vm3691, %v3585
    %3715 = vst.msk [vmem:[#allocation2 + $0xb8] sm:$0xff] %vm3691, %v3586
    %3716 = vst.msk [vmem:[#allocation2 + $0xc0] sm:$0xff] %vm3691, %v3587
    %3717 = vst.msk [vmem:[#allocation2 + $0xc8] sm:$0xff] %vm3691, %v3588
    %3718 = vst.msk [vmem:[#allocation2 + $0xd0] sm:$0xff] %vm3691, %v3589
    %3719 = vst.msk [vmem:[#allocation2 + $0xd8] sm:$0xff] %vm3691, %v3590
    %3720 = vst.msk [vmem:[#allocation2 + $0xe0] sm:$0xff] %vm3691, %v3591
    %3721 = vst.msk [vmem:[#allocation2 + $0xe8] sm:$0xff] %vm3691, %v3592
    %3722 = vst.msk [vmem:[#allocation2 + $0xf0] sm:$0xff] %vm3691, %v3593
    %3723 = vst.msk [vmem:[#allocation2 + $0xf8] sm:$0xff] %vm3691, %v3594
    %3724 = vst.msk [vmem:[#allocation2 + $0x100] sm:$0xff] %vm3691, %v3595
    %3725 = vst.msk [vmem:[#allocation2 + $0x108] sm:$0xff] %vm3691, %v3596
    %3726 = vst.msk [vmem:[#allocation2 + $0x110] sm:$0xff] %vm3691, %v3597
    %3727 = vst.msk [vmem:[#allocation2 + $0x118] sm:$0xff] %vm3691, %v3598
    %3728 = vst.msk [vmem:[#allocation2 + $0x120] sm:$0xff] %vm3691, %v3599
    %3729 = vst.msk [vmem:[#allocation2 + $0x128] sm:$0xff] %vm3691, %v3600
    %3730 = vst.msk [vmem:[#allocation2 + $0x130] sm:$0xff] %vm3691, %v3601
    %3731 = vst.msk [vmem:[#allocation2 + $0x138] sm:$0xff] %vm3691, %v3602
    %3732 = vst.msk [vmem:[#allocation2 + $0x140] sm:$0xff] %vm3691, %v3603
    %3733 = vst.msk [vmem:[#allocation2 + $0x148] sm:$0xff] %vm3691, %v3604
    %3734 = vst.msk [vmem:[#allocation2 + $0x150] sm:$0xff] %vm3691, %v3605
    %3735 = vst.msk [vmem:[#allocation2 + $0x158] sm:$0xff] %vm3691, %v3606
    %3736 = vst.msk [vmem:[#allocation2 + $0x160] sm:$0xff] %vm3691, %v3607
    %3737 = vst.msk [vmem:[#allocation2 + $0x168] sm:$0xff] %vm3691, %v3608
    %3738 = vst.msk [vmem:[#allocation2 + $0x170] sm:$0xff] %vm3691, %v3609
    %3739 = vst.msk [vmem:[#allocation2 + $0x178] sm:$0xff] %vm3691, %v3610
    %3740 = vst.msk [vmem:[#allocation2 + $0x180] sm:$0xff] %vm3691, %v3611
    %3741 = vst.msk [vmem:[#allocation2 + $0x188] sm:$0xff] %vm3691, %v3612
    %3742 = vst.msk [vmem:[#allocation2 + $0x190] sm:$0xff] %vm3691, %v3613
    %3743 = vst.msk [vmem:[#allocation2 + $0x198] sm:$0xff] %vm3691, %v3614
    %3744 = vst.msk [vmem:[#allocation2 + $0x1a0] sm:$0xff] %vm3691, %v3615
    %3745 = vst.msk [vmem:[#allocation2 + $0x1a8] sm:$0xff] %vm3691, %v3616
    %3746 = vst.msk [vmem:[#allocation2 + $0x1b0] sm:$0xff] %vm3691, %v3617
    %3747 = vst.msk [vmem:[#allocation2 + $0x1b8] sm:$0xff] %vm3691, %v3618
    %3748 = vst.msk [vmem:[#allocation2 + $0x1c0] sm:$0xff] %vm3691, %v3619
    %3749 = vst.msk [vmem:[#allocation2 + $0x1c8] sm:$0xff] %vm3691, %v3620
    %3750 = vst.msk [vmem:[#allocation2 + $0x1d0] sm:$0xff] %vm3691, %v3621
    %3751 = vst.msk [vmem:[#allocation2 + $0x1d8] sm:$0xff] %vm3691, %v3622
    %3752 = vst.msk [vmem:[#allocation2 + $0x1e0] sm:$0xff] %vm3691, %v3623
    %3753 = vst.msk [vmem:[#allocation2 + $0x1e8] sm:$0xff] %vm3691, %v3624
    %3754 = vst.msk [vmem:[#allocation2 + $0x1f0] sm:$0xff] %vm3691, %v3625
    %3755 = vst.msk [vmem:[#allocation2 + $0x1f8] sm:$0xff] %vm3691, %v3626
    %3756 = vst.msk [vmem:[#allocation2 + $0x200] sm:$0xff] %vm3691, %v3627
    %3757 = vst.msk [vmem:[#allocation2 + $0x208] sm:$0xff] %vm3691, %v3628
    %3758 = vst.msk [vmem:[#allocation2 + $0x210] sm:$0xff] %vm3691, %v3629
    %3759 = vst.msk [vmem:[#allocation2 + $0x218] sm:$0xff] %vm3691, %v3630
    %3760 = vst.msk [vmem:[#allocation2 + $0x220] sm:$0xff] %vm3691, %v3631
    %3761 = vst.msk [vmem:[#allocation2 + $0x228] sm:$0xff] %vm3691, %v3632
    %3762 = vst.msk [vmem:[#allocation2 + $0x230] sm:$0xff] %vm3691, %v3633
    %3763 = vst.msk [vmem:[#allocation2 + $0x238] sm:$0xff] %vm3691, %v3634
    %3764 = vst.msk [vmem:[#allocation2 + $0x240] sm:$0xff] %vm3691, %v3635
    %3765 = vst.msk [vmem:[#allocation2 + $0x248] sm:$0xff] %vm3691, %v3636
    %3766 = vst.msk [vmem:[#allocation2 + $0x250] sm:$0xff] %vm3691, %v3637
    %3767 = vst.msk [vmem:[#allocation2 + $0x258] sm:$0xff] %vm3691, %v3638
    %3768 = vst.msk [vmem:[#allocation2 + $0x260] sm:$0xff] %vm3691, %v3639
    %3769 = vst.msk [vmem:[#allocation2 + $0x268] sm:$0xff] %vm3691, %v3640
    %3770 = vst.msk [vmem:[#allocation2 + $0x270] sm:$0xff] %vm3691, %v3641
    %3771 = vst.msk [vmem:[#allocation2 + $0x278] sm:$0xff] %vm3691, %v3642
    %3772 = vst.msk [vmem:[#allocation2 + $0x280] sm:$0xff] %vm3691, %v3643
    %3773 = vst.msk [vmem:[#allocation2 + $0x288] sm:$0xff] %vm3691, %v3644
    %3774 = vst.msk [vmem:[#allocation2 + $0x290] sm:$0xff] %vm3691, %v3645
    %3775 = vst.msk [vmem:[#allocation2 + $0x298] sm:$0xff] %vm3691, %v3646
    %3776 = vst.msk [vmem:[#allocation2 + $0x2a0] sm:$0xff] %vm3691, %v3647
    %3777 = vst.msk [vmem:[#allocation2 + $0x2a8] sm:$0xff] %vm3691, %v3648
    %3778 = vst.msk [vmem:[#allocation2 + $0x2b0] sm:$0xff] %vm3691, %v3649
    %3779 = vst.msk [vmem:[#allocation2 + $0x2b8] sm:$0xff] %vm3691, %v3650
    %3780 = vst.msk [vmem:[#allocation2 + $0x2c0] sm:$0xff] %vm3691, %v3651
    %3781 = vst.msk [vmem:[#allocation2 + $0x2c8] sm:$0xff] %vm3691, %v3652
    %3782 = vst.msk [vmem:[#allocation2 + $0x2d0] sm:$0xff] %vm3691, %v3653
    %3783 = vst.msk [vmem:[#allocation2 + $0x2d8] sm:$0xff] %vm3691, %v3654
    %3784 = vst.msk [vmem:[#allocation2 + $0x2e0] sm:$0xff] %vm3691, %v3655
    %3785 = vst.msk [vmem:[#allocation2 + $0x2e8] sm:$0xff] %vm3691, %v3656
    %3786 = vst.msk [vmem:[#allocation2 + $0x2f0] sm:$0xff] %vm3691, %v3657
    %3787 = vst.msk [vmem:[#allocation2 + $0x2f8] sm:$0xff] %vm3691, %v3658
    %3788 = vst.msk [vmem:[#allocation2 + $0x300] sm:$0xff] %vm3691, %v3659
    %3789 = vst.msk [vmem:[#allocation2 + $0x308] sm:$0xff] %vm3691, %v3660
    %3790 = vst.msk [vmem:[#allocation2 + $0x310] sm:$0xff] %vm3691, %v3661
    %3791 = vst.msk [vmem:[#allocation2 + $0x318] sm:$0xff] %vm3691, %v3662
    %3792 = vst.msk [vmem:[#allocation2 + $0x320] sm:$0xff] %vm3691, %v3663
    %3793 = vst.msk [vmem:[#allocation2 + $0x328] sm:$0xff] %vm3691, %v3664
    %3794 = vst.msk [vmem:[#allocation2 + $0x330] sm:$0xff] %vm3691, %v3665
    %3795 = vst.msk [vmem:[#allocation2 + $0x338] sm:$0xff] %vm3691, %v3666
    %3796 = vst.msk [vmem:[#allocation2 + $0x340] sm:$0xff] %vm3691, %v3667
    %3797 = vst.msk [vmem:[#allocation2 + $0x348] sm:$0xff] %vm3691, %v3668
    %3798 = vst.msk [vmem:[#allocation2 + $0x350] sm:$0xff] %vm3691, %v3669
    %3799 = vst.msk [vmem:[#allocation2 + $0x358] sm:$0xff] %vm3691, %v3670
    %3800 = vst.msk [vmem:[#allocation2 + $0x360] sm:$0xff] %vm3691, %v3671
    %3801 = vst.msk [vmem:[#allocation2 + $0x368] sm:$0xff] %vm3691, %v3672
    %3802 = vst.msk [vmem:[#allocation2 + $0x370] sm:$0xff] %vm3691, %v3673
    %3803 = vst.msk [vmem:[#allocation2 + $0x378] sm:$0xff] %vm3691, %v3674
    %3804 = vst.msk [vmem:[#allocation2 + $0x380] sm:$0xff] %vm3691, %v3675
    %3805 = vst.msk [vmem:[#allocation2 + $0x388] sm:$0xff] %vm3691, %v3676
    %3806 = vst.msk [vmem:[#allocation2 + $0x390] sm:$0xff] %vm3691, %v3677
    %3807 = vst.msk [vmem:[#allocation2 + $0x398] sm:$0xff] %vm3691, %v3678
    %3808 = vst.msk [vmem:[#allocation2 + $0x3a0] sm:$0xff] %vm3691, %v3679
    %3809 = vst.msk [vmem:[#allocation2 + $0x3a8] sm:$0xff] %vm3691, %v3680
    %3810 = vst.msk [vmem:[#allocation2 + $0x3b0] sm:$0xff] %vm3691, %v3681
    %3811 = vst.msk [vmem:[#allocation2 + $0x3b8] sm:$0xff] %vm3691, %v3682
    %3812 = vst.msk [vmem:[#allocation2 + $0x3c0] sm:$0xff] %vm3691, %v3683
    %3813 = vst.msk [vmem:[#allocation2 + $0x3c8] sm:$0xff] %vm3691, %v3684
    %3814 = vst.msk [vmem:[#allocation2 + $0x3d0] sm:$0xff] %vm3691, %v3685
    %3815 = vst.msk [vmem:[#allocation2 + $0x3d8] sm:$0xff] %vm3691, %v3686
    %3816 = vst.msk [vmem:[#allocation2 + $0x3e0] sm:$0xff] %vm3691, %v3687
    %3817 = vst.msk [vmem:[#allocation2 + $0x3e8] sm:$0xff] %vm3691, %v3688
    %3818 = vst.msk [vmem:[#allocation2 + $0x3f0] sm:$0xff] %vm3691, %v3689
    %3819 = vst.msk [vmem:[#allocation2 + $0x3f8] sm:$0xff] %vm3691, %v3690
    // Predicated region
    $region70: #{stn3d_forward.1} parent=1 // pred_check
      %p3820 = pneg %p76
    $region71: #{stn3d_forward.1} parent=1 // pred_check_branch
      %3822 = sbr.rel (%p3820) target = $region73
    $region72: #{stn3d_forward.1} parent=1 // pred_region
      %v3823 = vld [vmem:[#allocation2] sm:$0xff]
      %v3824 = vld [vmem:[#allocation2 + $0x8] sm:$0xff]
      %v3825 = vld [vmem:[#allocation2 + $0x10] sm:$0xff]
      %v3826 = vld [vmem:[#allocation2 + $0x18] sm:$0xff]
      %v3827 = vld [vmem:[#allocation2 + $0x20] sm:$0xff]
      %v3828 = vld [vmem:[#allocation2 + $0x28] sm:$0xff]
      %v3829 = vld [vmem:[#allocation2 + $0x30] sm:$0xff]
      %v3830 = vld [vmem:[#allocation2 + $0x38] sm:$0xff]
      %v3831 = vld [vmem:[#allocation2 + $0x40] sm:$0xff]
      %v3832 = vld [vmem:[#allocation2 + $0x48] sm:$0xff]
      %v3833 = vld [vmem:[#allocation2 + $0x50] sm:$0xff]
      %v3834 = vld [vmem:[#allocation2 + $0x58] sm:$0xff]
      %v3835 = vld [vmem:[#allocation2 + $0x60] sm:$0xff]
      %v3836 = vld [vmem:[#allocation2 + $0x68] sm:$0xff]
      %v3837 = vld [vmem:[#allocation2 + $0x70] sm:$0xff]
      %v3838 = vld [vmem:[#allocation2 + $0x78] sm:$0xff]
      %v3839 = vld [vmem:[#allocation2 + $0x80] sm:$0xff]
      %v3840 = vld [vmem:[#allocation2 + $0x88] sm:$0xff]
      %v3841 = vld [vmem:[#allocation2 + $0x90] sm:$0xff]
      %v3842 = vld [vmem:[#allocation2 + $0x98] sm:$0xff]
      %v3843 = vld [vmem:[#allocation2 + $0xa0] sm:$0xff]
      %v3844 = vld [vmem:[#allocation2 + $0xa8] sm:$0xff]
      %v3845 = vld [vmem:[#allocation2 + $0xb0] sm:$0xff]
      %v3846 = vld [vmem:[#allocation2 + $0xb8] sm:$0xff]
      %v3847 = vld [vmem:[#allocation2 + $0xc0] sm:$0xff]
      %v3848 = vld [vmem:[#allocation2 + $0xc8] sm:$0xff]
      %v3849 = vld [vmem:[#allocation2 + $0xd0] sm:$0xff]
      %v3850 = vld [vmem:[#allocation2 + $0xd8] sm:$0xff]
      %v3851 = vld [vmem:[#allocation2 + $0xe0] sm:$0xff]
      %v3852 = vld [vmem:[#allocation2 + $0xe8] sm:$0xff]
      %v3853 = vld [vmem:[#allocation2 + $0xf0] sm:$0xff]
      %v3854 = vld [vmem:[#allocation2 + $0xf8] sm:$0xff]
      %v3855 = vld [vmem:[#allocation2 + $0x100] sm:$0xff]
      %v3856 = vld [vmem:[#allocation2 + $0x108] sm:$0xff]
      %v3857 = vld [vmem:[#allocation2 + $0x110] sm:$0xff]
      %v3858 = vld [vmem:[#allocation2 + $0x118] sm:$0xff]
      %v3859 = vld [vmem:[#allocation2 + $0x120] sm:$0xff]
      %v3860 = vld [vmem:[#allocation2 + $0x128] sm:$0xff]
      %v3861 = vld [vmem:[#allocation2 + $0x130] sm:$0xff]
      %v3862 = vld [vmem:[#allocation2 + $0x138] sm:$0xff]
      %v3863 = vld [vmem:[#allocation2 + $0x140] sm:$0xff]
      %v3864 = vld [vmem:[#allocation2 + $0x148] sm:$0xff]
      %v3865 = vld [vmem:[#allocation2 + $0x150] sm:$0xff]
      %v3866 = vld [vmem:[#allocation2 + $0x158] sm:$0xff]
      %v3867 = vld [vmem:[#allocation2 + $0x160] sm:$0xff]
      %v3868 = vld [vmem:[#allocation2 + $0x168] sm:$0xff]
      %v3869 = vld [vmem:[#allocation2 + $0x170] sm:$0xff]
      %v3870 = vld [vmem:[#allocation2 + $0x178] sm:$0xff]
      %v3871 = vld [vmem:[#allocation2 + $0x180] sm:$0xff]
      %v3872 = vld [vmem:[#allocation2 + $0x188] sm:$0xff]
      %v3873 = vld [vmem:[#allocation2 + $0x190] sm:$0xff]
      %v3874 = vld [vmem:[#allocation2 + $0x198] sm:$0xff]
      %v3875 = vld [vmem:[#allocation2 + $0x1a0] sm:$0xff]
      %v3876 = vld [vmem:[#allocation2 + $0x1a8] sm:$0xff]
      %v3877 = vld [vmem:[#allocation2 + $0x1b0] sm:$0xff]
      %v3878 = vld [vmem:[#allocation2 + $0x1b8] sm:$0xff]
      %v3879 = vld [vmem:[#allocation2 + $0x1c0] sm:$0xff]
      %v3880 = vld [vmem:[#allocation2 + $0x1c8] sm:$0xff]
      %v3881 = vld [vmem:[#allocation2 + $0x1d0] sm:$0xff]
      %v3882 = vld [vmem:[#allocation2 + $0x1d8] sm:$0xff]
      %v3883 = vld [vmem:[#allocation2 + $0x1e0] sm:$0xff]
      %v3884 = vld [vmem:[#allocation2 + $0x1e8] sm:$0xff]
      %v3885 = vld [vmem:[#allocation2 + $0x1f0] sm:$0xff]
      %v3886 = vld [vmem:[#allocation2 + $0x1f8] sm:$0xff]
      %v3887 = vld [vmem:[#allocation2 + $0x200] sm:$0xff]
      %v3888 = vld [vmem:[#allocation2 + $0x208] sm:$0xff]
      %v3889 = vld [vmem:[#allocation2 + $0x210] sm:$0xff]
      %v3890 = vld [vmem:[#allocation2 + $0x218] sm:$0xff]
      %v3891 = vld [vmem:[#allocation2 + $0x220] sm:$0xff]
      %v3892 = vld [vmem:[#allocation2 + $0x228] sm:$0xff]
      %v3893 = vld [vmem:[#allocation2 + $0x230] sm:$0xff]
      %v3894 = vld [vmem:[#allocation2 + $0x238] sm:$0xff]
      %v3895 = vld [vmem:[#allocation2 + $0x240] sm:$0xff]
      %v3896 = vld [vmem:[#allocation2 + $0x248] sm:$0xff]
      %v3897 = vld [vmem:[#allocation2 + $0x250] sm:$0xff]
      %v3898 = vld [vmem:[#allocation2 + $0x258] sm:$0xff]
      %v3899 = vld [vmem:[#allocation2 + $0x260] sm:$0xff]
      %v3900 = vld [vmem:[#allocation2 + $0x268] sm:$0xff]
      %v3901 = vld [vmem:[#allocation2 + $0x270] sm:$0xff]
      %v3902 = vld [vmem:[#allocation2 + $0x278] sm:$0xff]
      %v3903 = vld [vmem:[#allocation2 + $0x280] sm:$0xff]
      %v3904 = vld [vmem:[#allocation2 + $0x288] sm:$0xff]
      %v3905 = vld [vmem:[#allocation2 + $0x290] sm:$0xff]
      %v3906 = vld [vmem:[#allocation2 + $0x298] sm:$0xff]
      %v3907 = vld [vmem:[#allocation2 + $0x2a0] sm:$0xff]
      %v3908 = vld [vmem:[#allocation2 + $0x2a8] sm:$0xff]
      %v3909 = vld [vmem:[#allocation2 + $0x2b0] sm:$0xff]
      %v3910 = vld [vmem:[#allocation2 + $0x2b8] sm:$0xff]
      %v3911 = vld [vmem:[#allocation2 + $0x2c0] sm:$0xff]
      %v3912 = vld [vmem:[#allocation2 + $0x2c8] sm:$0xff]
      %v3913 = vld [vmem:[#allocation2 + $0x2d0] sm:$0xff]
      %v3914 = vld [vmem:[#allocation2 + $0x2d8] sm:$0xff]
      %v3915 = vld [vmem:[#allocation2 + $0x2e0] sm:$0xff]
      %v3916 = vld [vmem:[#allocation2 + $0x2e8] sm:$0xff]
      %v3917 = vld [vmem:[#allocation2 + $0x2f0] sm:$0xff]
      %v3918 = vld [vmem:[#allocation2 + $0x2f8] sm:$0xff]
      %v3919 = vld [vmem:[#allocation2 + $0x300] sm:$0xff]
      %v3920 = vld [vmem:[#allocation2 + $0x308] sm:$0xff]
      %v3921 = vld [vmem:[#allocation2 + $0x310] sm:$0xff]
      %v3922 = vld [vmem:[#allocation2 + $0x318] sm:$0xff]
      %v3923 = vld [vmem:[#allocation2 + $0x320] sm:$0xff]
      %v3924 = vld [vmem:[#allocation2 + $0x328] sm:$0xff]
      %v3925 = vld [vmem:[#allocation2 + $0x330] sm:$0xff]
      %v3926 = vld [vmem:[#allocation2 + $0x338] sm:$0xff]
      %v3927 = vld [vmem:[#allocation2 + $0x340] sm:$0xff]
      %v3928 = vld [vmem:[#allocation2 + $0x348] sm:$0xff]
      %v3929 = vld [vmem:[#allocation2 + $0x350] sm:$0xff]
      %v3930 = vld [vmem:[#allocation2 + $0x358] sm:$0xff]
      %v3931 = vld [vmem:[#allocation2 + $0x360] sm:$0xff]
      %v3932 = vld [vmem:[#allocation2 + $0x368] sm:$0xff]
      %v3933 = vld [vmem:[#allocation2 + $0x370] sm:$0xff]
      %v3934 = vld [vmem:[#allocation2 + $0x378] sm:$0xff]
      %v3935 = vld [vmem:[#allocation2 + $0x380] sm:$0xff]
      %v3936 = vld [vmem:[#allocation2 + $0x388] sm:$0xff]
      %v3937 = vld [vmem:[#allocation2 + $0x390] sm:$0xff]
      %v3938 = vld [vmem:[#allocation2 + $0x398] sm:$0xff]
      %v3939 = vld [vmem:[#allocation2 + $0x3a0] sm:$0xff]
      %v3940 = vld [vmem:[#allocation2 + $0x3a8] sm:$0xff]
      %v3941 = vld [vmem:[#allocation2 + $0x3b0] sm:$0xff]
      %v3942 = vld [vmem:[#allocation2 + $0x3b8] sm:$0xff]
      %v3943 = vld [vmem:[#allocation2 + $0x3c0] sm:$0xff]
      %v3944 = vld [vmem:[#allocation2 + $0x3c8] sm:$0xff]
      %v3945 = vld [vmem:[#allocation2 + $0x3d0] sm:$0xff]
      %v3946 = vld [vmem:[#allocation2 + $0x3d8] sm:$0xff]
      %v3947 = vld [vmem:[#allocation2 + $0x3e0] sm:$0xff]
      %v3948 = vld [vmem:[#allocation2 + $0x3e8] sm:$0xff]
      %v3949 = vld [vmem:[#allocation2 + $0x3f0] sm:$0xff]
      %v3950 = vld [vmem:[#allocation2 + $0x3f8] sm:$0xff]
      %v3951 = vld [vmem:[%s6] sm:$0xff]
      %v3952 = vld [vmem:[%s6 + $0x8] sm:$0xff]
      %v3953 = vld [vmem:[%s6 + $0x10] sm:$0xff]
      %v3954 = vld [vmem:[%s6 + $0x18] sm:$0xff]
      %v3955 = vld [vmem:[%s6 + $0x20] sm:$0xff]
      %v3956 = vld [vmem:[%s6 + $0x28] sm:$0xff]
      %v3957 = vld [vmem:[%s6 + $0x30] sm:$0xff]
      %v3958 = vld [vmem:[%s6 + $0x38] sm:$0xff]
      %v3959 = vld [vmem:[%s6 + $0x40] sm:$0xff]
      %v3960 = vld [vmem:[%s6 + $0x48] sm:$0xff]
      %v3961 = vld [vmem:[%s6 + $0x50] sm:$0xff]
      %v3962 = vld [vmem:[%s6 + $0x58] sm:$0xff]
      %v3963 = vld [vmem:[%s6 + $0x60] sm:$0xff]
      %v3964 = vld [vmem:[%s6 + $0x68] sm:$0xff]
      %v3965 = vld [vmem:[%s6 + $0x70] sm:$0xff]
      %v3966 = vld [vmem:[%s6 + $0x78] sm:$0xff]
      %v3967 = vld [vmem:[%s6 + $0x80] sm:$0xff]
      %v3968 = vld [vmem:[%s6 + $0x88] sm:$0xff]
      %v3969 = vld [vmem:[%s6 + $0x90] sm:$0xff]
      %v3970 = vld [vmem:[%s6 + $0x98] sm:$0xff]
      %v3971 = vld [vmem:[%s6 + $0xa0] sm:$0xff]
      %v3972 = vld [vmem:[%s6 + $0xa8] sm:$0xff]
      %v3973 = vld [vmem:[%s6 + $0xb0] sm:$0xff]
      %v3974 = vld [vmem:[%s6 + $0xb8] sm:$0xff]
      %v3975 = vld [vmem:[%s6 + $0xc0] sm:$0xff]
      %v3976 = vld [vmem:[%s6 + $0xc8] sm:$0xff]
      %v3977 = vld [vmem:[%s6 + $0xd0] sm:$0xff]
      %v3978 = vld [vmem:[%s6 + $0xd8] sm:$0xff]
      %v3979 = vld [vmem:[%s6 + $0xe0] sm:$0xff]
      %v3980 = vld [vmem:[%s6 + $0xe8] sm:$0xff]
      %v3981 = vld [vmem:[%s6 + $0xf0] sm:$0xff]
      %v3982 = vld [vmem:[%s6 + $0xf8] sm:$0xff]
      %v3983 = vld [vmem:[%s6 + $0x100] sm:$0xff]
      %v3984 = vld [vmem:[%s6 + $0x108] sm:$0xff]
      %v3985 = vld [vmem:[%s6 + $0x110] sm:$0xff]
      %v3986 = vld [vmem:[%s6 + $0x118] sm:$0xff]
      %v3987 = vld [vmem:[%s6 + $0x120] sm:$0xff]
      %v3988 = vld [vmem:[%s6 + $0x128] sm:$0xff]
      %v3989 = vld [vmem:[%s6 + $0x130] sm:$0xff]
      %v3990 = vld [vmem:[%s6 + $0x138] sm:$0xff]
      %v3991 = vld [vmem:[%s6 + $0x140] sm:$0xff]
      %v3992 = vld [vmem:[%s6 + $0x148] sm:$0xff]
      %v3993 = vld [vmem:[%s6 + $0x150] sm:$0xff]
      %v3994 = vld [vmem:[%s6 + $0x158] sm:$0xff]
      %v3995 = vld [vmem:[%s6 + $0x160] sm:$0xff]
      %v3996 = vld [vmem:[%s6 + $0x168] sm:$0xff]
      %v3997 = vld [vmem:[%s6 + $0x170] sm:$0xff]
      %v3998 = vld [vmem:[%s6 + $0x178] sm:$0xff]
      %v3999 = vld [vmem:[%s6 + $0x180] sm:$0xff]
      %v4000 = vld [vmem:[%s6 + $0x188] sm:$0xff]
      %v4001 = vld [vmem:[%s6 + $0x190] sm:$0xff]
      %v4002 = vld [vmem:[%s6 + $0x198] sm:$0xff]
      %v4003 = vld [vmem:[%s6 + $0x1a0] sm:$0xff]
      %v4004 = vld [vmem:[%s6 + $0x1a8] sm:$0xff]
      %v4005 = vld [vmem:[%s6 + $0x1b0] sm:$0xff]
      %v4006 = vld [vmem:[%s6 + $0x1b8] sm:$0xff]
      %v4007 = vld [vmem:[%s6 + $0x1c0] sm:$0xff]
      %v4008 = vld [vmem:[%s6 + $0x1c8] sm:$0xff]
      %v4009 = vld [vmem:[%s6 + $0x1d0] sm:$0xff]
      %v4010 = vld [vmem:[%s6 + $0x1d8] sm:$0xff]
      %v4011 = vld [vmem:[%s6 + $0x1e0] sm:$0xff]
      %v4012 = vld [vmem:[%s6 + $0x1e8] sm:$0xff]
      %v4013 = vld [vmem:[%s6 + $0x1f0] sm:$0xff]
      %v4014 = vld [vmem:[%s6 + $0x1f8] sm:$0xff]
      %v4015 = vld [vmem:[%s6 + $0x200] sm:$0xff]
      %v4016 = vld [vmem:[%s6 + $0x208] sm:$0xff]
      %v4017 = vld [vmem:[%s6 + $0x210] sm:$0xff]
      %v4018 = vld [vmem:[%s6 + $0x218] sm:$0xff]
      %v4019 = vld [vmem:[%s6 + $0x220] sm:$0xff]
      %v4020 = vld [vmem:[%s6 + $0x228] sm:$0xff]
      %v4021 = vld [vmem:[%s6 + $0x230] sm:$0xff]
      %v4022 = vld [vmem:[%s6 + $0x238] sm:$0xff]
      %v4023 = vld [vmem:[%s6 + $0x240] sm:$0xff]
      %v4024 = vld [vmem:[%s6 + $0x248] sm:$0xff]
      %v4025 = vld [vmem:[%s6 + $0x250] sm:$0xff]
      %v4026 = vld [vmem:[%s6 + $0x258] sm:$0xff]
      %v4027 = vld [vmem:[%s6 + $0x260] sm:$0xff]
      %v4028 = vld [vmem:[%s6 + $0x268] sm:$0xff]
      %v4029 = vld [vmem:[%s6 + $0x270] sm:$0xff]
      %v4030 = vld [vmem:[%s6 + $0x278] sm:$0xff]
      %v4031 = vld [vmem:[%s6 + $0x280] sm:$0xff]
      %v4032 = vld [vmem:[%s6 + $0x288] sm:$0xff]
      %v4033 = vld [vmem:[%s6 + $0x290] sm:$0xff]
      %v4034 = vld [vmem:[%s6 + $0x298] sm:$0xff]
      %v4035 = vld [vmem:[%s6 + $0x2a0] sm:$0xff]
      %v4036 = vld [vmem:[%s6 + $0x2a8] sm:$0xff]
      %v4037 = vld [vmem:[%s6 + $0x2b0] sm:$0xff]
      %v4038 = vld [vmem:[%s6 + $0x2b8] sm:$0xff]
      %v4039 = vld [vmem:[%s6 + $0x2c0] sm:$0xff]
      %v4040 = vld [vmem:[%s6 + $0x2c8] sm:$0xff]
      %v4041 = vld [vmem:[%s6 + $0x2d0] sm:$0xff]
      %v4042 = vld [vmem:[%s6 + $0x2d8] sm:$0xff]
      %v4043 = vld [vmem:[%s6 + $0x2e0] sm:$0xff]
      %v4044 = vld [vmem:[%s6 + $0x2e8] sm:$0xff]
      %v4045 = vld [vmem:[%s6 + $0x2f0] sm:$0xff]
      %v4046 = vld [vmem:[%s6 + $0x2f8] sm:$0xff]
      %v4047 = vld [vmem:[%s6 + $0x300] sm:$0xff]
      %v4048 = vld [vmem:[%s6 + $0x308] sm:$0xff]
      %v4049 = vld [vmem:[%s6 + $0x310] sm:$0xff]
      %v4050 = vld [vmem:[%s6 + $0x318] sm:$0xff]
      %v4051 = vld [vmem:[%s6 + $0x320] sm:$0xff]
      %v4052 = vld [vmem:[%s6 + $0x328] sm:$0xff]
      %v4053 = vld [vmem:[%s6 + $0x330] sm:$0xff]
      %v4054 = vld [vmem:[%s6 + $0x338] sm:$0xff]
      %v4055 = vld [vmem:[%s6 + $0x340] sm:$0xff]
      %v4056 = vld [vmem:[%s6 + $0x348] sm:$0xff]
      %v4057 = vld [vmem:[%s6 + $0x350] sm:$0xff]
      %v4058 = vld [vmem:[%s6 + $0x358] sm:$0xff]
      %v4059 = vld [vmem:[%s6 + $0x360] sm:$0xff]
      %v4060 = vld [vmem:[%s6 + $0x368] sm:$0xff]
      %v4061 = vld [vmem:[%s6 + $0x370] sm:$0xff]
      %v4062 = vld [vmem:[%s6 + $0x378] sm:$0xff]
      %v4063 = vld [vmem:[%s6 + $0x380] sm:$0xff]
      %v4064 = vld [vmem:[%s6 + $0x388] sm:$0xff]
      %v4065 = vld [vmem:[%s6 + $0x390] sm:$0xff]
      %v4066 = vld [vmem:[%s6 + $0x398] sm:$0xff]
      %v4067 = vld [vmem:[%s6 + $0x3a0] sm:$0xff]
      %v4068 = vld [vmem:[%s6 + $0x3a8] sm:$0xff]
      %v4069 = vld [vmem:[%s6 + $0x3b0] sm:$0xff]
      %v4070 = vld [vmem:[%s6 + $0x3b8] sm:$0xff]
      %v4071 = vld [vmem:[%s6 + $0x3c0] sm:$0xff]
      %v4072 = vld [vmem:[%s6 + $0x3c8] sm:$0xff]
      %v4073 = vld [vmem:[%s6 + $0x3d0] sm:$0xff]
      %v4074 = vld [vmem:[%s6 + $0x3d8] sm:$0xff]
      %v4075 = vld [vmem:[%s6 + $0x3e0] sm:$0xff]
      %v4076 = vld [vmem:[%s6 + $0x3e8] sm:$0xff]
      %v4077 = vld [vmem:[%s6 + $0x3f0] sm:$0xff]
      %v4078 = vld [vmem:[%s6 + $0x3f8] sm:$0xff]
      %4080 = vset.pattern.permute.xlu0 0
      %4081 = vperm.xlu0 %4080, %v3951
      %v4082 = vpop.permute.xlu0 %4081
      %4085 = vset.pattern.permute.xlu0 0
      %4086 = vperm.xlu0 %4085, %v3952
      %v4087 = vpop.permute.xlu0 %4086
      %4090 = vset.pattern.permute.xlu0 0
      %4091 = vperm.xlu0 %4090, %v3953
      %v4092 = vpop.permute.xlu0 %4091
      %4095 = vset.pattern.permute.xlu0 0
      %4096 = vperm.xlu0 %4095, %v3954
      %v4097 = vpop.permute.xlu0 %4096
      %4100 = vset.pattern.permute.xlu0 0
      %4101 = vperm.xlu0 %4100, %v3955
      %v4102 = vpop.permute.xlu0 %4101
      %4105 = vset.pattern.permute.xlu0 0
      %4106 = vperm.xlu0 %4105, %v3956
      %v4107 = vpop.permute.xlu0 %4106
      %4110 = vset.pattern.permute.xlu0 0
      %4111 = vperm.xlu0 %4110, %v3957
      %v4112 = vpop.permute.xlu0 %4111
      %4115 = vset.pattern.permute.xlu0 0
      %4116 = vperm.xlu0 %4115, %v3958
      %v4117 = vpop.permute.xlu0 %4116
      %4120 = vset.pattern.permute.xlu0 0
      %4121 = vperm.xlu0 %4120, %v3959
      %v4122 = vpop.permute.xlu0 %4121
      %4125 = vset.pattern.permute.xlu0 0
      %4126 = vperm.xlu0 %4125, %v3960
      %v4127 = vpop.permute.xlu0 %4126
      %4130 = vset.pattern.permute.xlu0 0
      %4131 = vperm.xlu0 %4130, %v3961
      %v4132 = vpop.permute.xlu0 %4131
      %4135 = vset.pattern.permute.xlu0 0
      %4136 = vperm.xlu0 %4135, %v3962
      %v4137 = vpop.permute.xlu0 %4136
      %4140 = vset.pattern.permute.xlu0 0
      %4141 = vperm.xlu0 %4140, %v3963
      %v4142 = vpop.permute.xlu0 %4141
      %4145 = vset.pattern.permute.xlu0 0
      %4146 = vperm.xlu0 %4145, %v3964
      %v4147 = vpop.permute.xlu0 %4146
      %4150 = vset.pattern.permute.xlu0 0
      %4151 = vperm.xlu0 %4150, %v3965
      %v4152 = vpop.permute.xlu0 %4151
      %4155 = vset.pattern.permute.xlu0 0
      %4156 = vperm.xlu0 %4155, %v3966
      %v4157 = vpop.permute.xlu0 %4156
      %4160 = vset.pattern.permute.xlu0 0
      %4161 = vperm.xlu0 %4160, %v3967
      %v4162 = vpop.permute.xlu0 %4161
      %4165 = vset.pattern.permute.xlu0 0
      %4166 = vperm.xlu0 %4165, %v3968
      %v4167 = vpop.permute.xlu0 %4166
      %4170 = vset.pattern.permute.xlu0 0
      %4171 = vperm.xlu0 %4170, %v3969
      %v4172 = vpop.permute.xlu0 %4171
      %4175 = vset.pattern.permute.xlu0 0
      %4176 = vperm.xlu0 %4175, %v3970
      %v4177 = vpop.permute.xlu0 %4176
      %4180 = vset.pattern.permute.xlu0 0
      %4181 = vperm.xlu0 %4180, %v3971
      %v4182 = vpop.permute.xlu0 %4181
      %4185 = vset.pattern.permute.xlu0 0
      %4186 = vperm.xlu0 %4185, %v3972
      %v4187 = vpop.permute.xlu0 %4186
      %4190 = vset.pattern.permute.xlu0 0
      %4191 = vperm.xlu0 %4190, %v3973
      %v4192 = vpop.permute.xlu0 %4191
      %4195 = vset.pattern.permute.xlu0 0
      %4196 = vperm.xlu0 %4195, %v3974
      %v4197 = vpop.permute.xlu0 %4196
      %4200 = vset.pattern.permute.xlu0 0
      %4201 = vperm.xlu0 %4200, %v3975
      %v4202 = vpop.permute.xlu0 %4201
      %4205 = vset.pattern.permute.xlu0 0
      %4206 = vperm.xlu0 %4205, %v3976
      %v4207 = vpop.permute.xlu0 %4206
      %4210 = vset.pattern.permute.xlu0 0
      %4211 = vperm.xlu0 %4210, %v3977
      %v4212 = vpop.permute.xlu0 %4211
      %4215 = vset.pattern.permute.xlu0 0
      %4216 = vperm.xlu0 %4215, %v3978
      %v4217 = vpop.permute.xlu0 %4216
      %4220 = vset.pattern.permute.xlu0 0
      %4221 = vperm.xlu0 %4220, %v3979
      %v4222 = vpop.permute.xlu0 %4221
      %4225 = vset.pattern.permute.xlu0 0
      %4226 = vperm.xlu0 %4225, %v3980
      %v4227 = vpop.permute.xlu0 %4226
      %4230 = vset.pattern.permute.xlu0 0
      %4231 = vperm.xlu0 %4230, %v3981
      %v4232 = vpop.permute.xlu0 %4231
      %4235 = vset.pattern.permute.xlu0 0
      %4236 = vperm.xlu0 %4235, %v3982
      %v4237 = vpop.permute.xlu0 %4236
      %4240 = vset.pattern.permute.xlu0 0
      %4241 = vperm.xlu0 %4240, %v3983
      %v4242 = vpop.permute.xlu0 %4241
      %4245 = vset.pattern.permute.xlu0 0
      %4246 = vperm.xlu0 %4245, %v3984
      %v4247 = vpop.permute.xlu0 %4246
      %4250 = vset.pattern.permute.xlu0 0
      %4251 = vperm.xlu0 %4250, %v3985
      %v4252 = vpop.permute.xlu0 %4251
      %4255 = vset.pattern.permute.xlu0 0
      %4256 = vperm.xlu0 %4255, %v3986
      %v4257 = vpop.permute.xlu0 %4256
      %4260 = vset.pattern.permute.xlu0 0
      %4261 = vperm.xlu0 %4260, %v3987
      %v4262 = vpop.permute.xlu0 %4261
      %4265 = vset.pattern.permute.xlu0 0
      %4266 = vperm.xlu0 %4265, %v3988
      %v4267 = vpop.permute.xlu0 %4266
      %4270 = vset.pattern.permute.xlu0 0
      %4271 = vperm.xlu0 %4270, %v3989
      %v4272 = vpop.permute.xlu0 %4271
      %4275 = vset.pattern.permute.xlu0 0
      %4276 = vperm.xlu0 %4275, %v3990
      %v4277 = vpop.permute.xlu0 %4276
      %4280 = vset.pattern.permute.xlu0 0
      %4281 = vperm.xlu0 %4280, %v3991
      %v4282 = vpop.permute.xlu0 %4281
      %4285 = vset.pattern.permute.xlu0 0
      %4286 = vperm.xlu0 %4285, %v3992
      %v4287 = vpop.permute.xlu0 %4286
      %4290 = vset.pattern.permute.xlu0 0
      %4291 = vperm.xlu0 %4290, %v3993
      %v4292 = vpop.permute.xlu0 %4291
      %4295 = vset.pattern.permute.xlu0 0
      %4296 = vperm.xlu0 %4295, %v3994
      %v4297 = vpop.permute.xlu0 %4296
      %4300 = vset.pattern.permute.xlu0 0
      %4301 = vperm.xlu0 %4300, %v3995
      %v4302 = vpop.permute.xlu0 %4301
      %4305 = vset.pattern.permute.xlu0 0
      %4306 = vperm.xlu0 %4305, %v3996
      %v4307 = vpop.permute.xlu0 %4306
      %4310 = vset.pattern.permute.xlu0 0
      %4311 = vperm.xlu0 %4310, %v3997
      %v4312 = vpop.permute.xlu0 %4311
      %4315 = vset.pattern.permute.xlu0 0
      %4316 = vperm.xlu0 %4315, %v3998
      %v4317 = vpop.permute.xlu0 %4316
      %4320 = vset.pattern.permute.xlu0 0
      %4321 = vperm.xlu0 %4320, %v3999
      %v4322 = vpop.permute.xlu0 %4321
      %4325 = vset.pattern.permute.xlu0 0
      %4326 = vperm.xlu0 %4325, %v4000
      %v4327 = vpop.permute.xlu0 %4326
      %4330 = vset.pattern.permute.xlu0 0
      %4331 = vperm.xlu0 %4330, %v4001
      %v4332 = vpop.permute.xlu0 %4331
      %4335 = vset.pattern.permute.xlu0 0
      %4336 = vperm.xlu0 %4335, %v4002
      %v4337 = vpop.permute.xlu0 %4336
      %4340 = vset.pattern.permute.xlu0 0
      %4341 = vperm.xlu0 %4340, %v4003
      %v4342 = vpop.permute.xlu0 %4341
      %4345 = vset.pattern.permute.xlu0 0
      %4346 = vperm.xlu0 %4345, %v4004
      %v4347 = vpop.permute.xlu0 %4346
      %4350 = vset.pattern.permute.xlu0 0
      %4351 = vperm.xlu0 %4350, %v4005
      %v4352 = vpop.permute.xlu0 %4351
      %4355 = vset.pattern.permute.xlu0 0
      %4356 = vperm.xlu0 %4355, %v4006
      %v4357 = vpop.permute.xlu0 %4356
      %4360 = vset.pattern.permute.xlu0 0
      %4361 = vperm.xlu0 %4360, %v4007
      %v4362 = vpop.permute.xlu0 %4361
      %4365 = vset.pattern.permute.xlu0 0
      %4366 = vperm.xlu0 %4365, %v4008
      %v4367 = vpop.permute.xlu0 %4366
      %4370 = vset.pattern.permute.xlu0 0
      %4371 = vperm.xlu0 %4370, %v4009
      %v4372 = vpop.permute.xlu0 %4371
      %4375 = vset.pattern.permute.xlu0 0
      %4376 = vperm.xlu0 %4375, %v4010
      %v4377 = vpop.permute.xlu0 %4376
      %4380 = vset.pattern.permute.xlu0 0
      %4381 = vperm.xlu0 %4380, %v4011
      %v4382 = vpop.permute.xlu0 %4381
      %4385 = vset.pattern.permute.xlu0 0
      %4386 = vperm.xlu0 %4385, %v4012
      %v4387 = vpop.permute.xlu0 %4386
      %4390 = vset.pattern.permute.xlu0 0
      %4391 = vperm.xlu0 %4390, %v4013
      %v4392 = vpop.permute.xlu0 %4391
      %4395 = vset.pattern.permute.xlu0 0
      %4396 = vperm.xlu0 %4395, %v4014
      %v4397 = vpop.permute.xlu0 %4396
      %4400 = vset.pattern.permute.xlu0 0
      %4401 = vperm.xlu0 %4400, %v4015
      %v4402 = vpop.permute.xlu0 %4401
      %4405 = vset.pattern.permute.xlu0 0
      %4406 = vperm.xlu0 %4405, %v4016
      %v4407 = vpop.permute.xlu0 %4406
      %4410 = vset.pattern.permute.xlu0 0
      %4411 = vperm.xlu0 %4410, %v4017
      %v4412 = vpop.permute.xlu0 %4411
      %4415 = vset.pattern.permute.xlu0 0
      %4416 = vperm.xlu0 %4415, %v4018
      %v4417 = vpop.permute.xlu0 %4416
      %4420 = vset.pattern.permute.xlu0 0
      %4421 = vperm.xlu0 %4420, %v4019
      %v4422 = vpop.permute.xlu0 %4421
      %4425 = vset.pattern.permute.xlu0 0
      %4426 = vperm.xlu0 %4425, %v4020
      %v4427 = vpop.permute.xlu0 %4426
      %4430 = vset.pattern.permute.xlu0 0
      %4431 = vperm.xlu0 %4430, %v4021
      %v4432 = vpop.permute.xlu0 %4431
      %4435 = vset.pattern.permute.xlu0 0
      %4436 = vperm.xlu0 %4435, %v4022
      %v4437 = vpop.permute.xlu0 %4436
      %4440 = vset.pattern.permute.xlu0 0
      %4441 = vperm.xlu0 %4440, %v4023
      %v4442 = vpop.permute.xlu0 %4441
      %4445 = vset.pattern.permute.xlu0 0
      %4446 = vperm.xlu0 %4445, %v4024
      %v4447 = vpop.permute.xlu0 %4446
      %4450 = vset.pattern.permute.xlu0 0
      %4451 = vperm.xlu0 %4450, %v4025
      %v4452 = vpop.permute.xlu0 %4451
      %4455 = vset.pattern.permute.xlu0 0
      %4456 = vperm.xlu0 %4455, %v4026
      %v4457 = vpop.permute.xlu0 %4456
      %4460 = vset.pattern.permute.xlu0 0
      %4461 = vperm.xlu0 %4460, %v4027
      %v4462 = vpop.permute.xlu0 %4461
      %4465 = vset.pattern.permute.xlu0 0
      %4466 = vperm.xlu0 %4465, %v4028
      %v4467 = vpop.permute.xlu0 %4466
      %4470 = vset.pattern.permute.xlu0 0
      %4471 = vperm.xlu0 %4470, %v4029
      %v4472 = vpop.permute.xlu0 %4471
      %4475 = vset.pattern.permute.xlu0 0
      %4476 = vperm.xlu0 %4475, %v4030
      %v4477 = vpop.permute.xlu0 %4476
      %4480 = vset.pattern.permute.xlu0 0
      %4481 = vperm.xlu0 %4480, %v4031
      %v4482 = vpop.permute.xlu0 %4481
      %4485 = vset.pattern.permute.xlu0 0
      %4486 = vperm.xlu0 %4485, %v4032
      %v4487 = vpop.permute.xlu0 %4486
      %4490 = vset.pattern.permute.xlu0 0
      %4491 = vperm.xlu0 %4490, %v4033
      %v4492 = vpop.permute.xlu0 %4491
      %4495 = vset.pattern.permute.xlu0 0
      %4496 = vperm.xlu0 %4495, %v4034
      %v4497 = vpop.permute.xlu0 %4496
      %4500 = vset.pattern.permute.xlu0 0
      %4501 = vperm.xlu0 %4500, %v4035
      %v4502 = vpop.permute.xlu0 %4501
      %4505 = vset.pattern.permute.xlu0 0
      %4506 = vperm.xlu0 %4505, %v4036
      %v4507 = vpop.permute.xlu0 %4506
      %4510 = vset.pattern.permute.xlu0 0
      %4511 = vperm.xlu0 %4510, %v4037
      %v4512 = vpop.permute.xlu0 %4511
      %4515 = vset.pattern.permute.xlu0 0
      %4516 = vperm.xlu0 %4515, %v4038
      %v4517 = vpop.permute.xlu0 %4516
      %4520 = vset.pattern.permute.xlu0 0
      %4521 = vperm.xlu0 %4520, %v4039
      %v4522 = vpop.permute.xlu0 %4521
      %4525 = vset.pattern.permute.xlu0 0
      %4526 = vperm.xlu0 %4525, %v4040
      %v4527 = vpop.permute.xlu0 %4526
      %4530 = vset.pattern.permute.xlu0 0
      %4531 = vperm.xlu0 %4530, %v4041
      %v4532 = vpop.permute.xlu0 %4531
      %4535 = vset.pattern.permute.xlu0 0
      %4536 = vperm.xlu0 %4535, %v4042
      %v4537 = vpop.permute.xlu0 %4536
      %4540 = vset.pattern.permute.xlu0 0
      %4541 = vperm.xlu0 %4540, %v4043
      %v4542 = vpop.permute.xlu0 %4541
      %4545 = vset.pattern.permute.xlu0 0
      %4546 = vperm.xlu0 %4545, %v4044
      %v4547 = vpop.permute.xlu0 %4546
      %4550 = vset.pattern.permute.xlu0 0
      %4551 = vperm.xlu0 %4550, %v4045
      %v4552 = vpop.permute.xlu0 %4551
      %4555 = vset.pattern.permute.xlu0 0
      %4556 = vperm.xlu0 %4555, %v4046
      %v4557 = vpop.permute.xlu0 %4556
      %4560 = vset.pattern.permute.xlu0 0
      %4561 = vperm.xlu0 %4560, %v4047
      %v4562 = vpop.permute.xlu0 %4561
      %4565 = vset.pattern.permute.xlu0 0
      %4566 = vperm.xlu0 %4565, %v4048
      %v4567 = vpop.permute.xlu0 %4566
      %4570 = vset.pattern.permute.xlu0 0
      %4571 = vperm.xlu0 %4570, %v4049
      %v4572 = vpop.permute.xlu0 %4571
      %4575 = vset.pattern.permute.xlu0 0
      %4576 = vperm.xlu0 %4575, %v4050
      %v4577 = vpop.permute.xlu0 %4576
      %4580 = vset.pattern.permute.xlu0 0
      %4581 = vperm.xlu0 %4580, %v4051
      %v4582 = vpop.permute.xlu0 %4581
      %4585 = vset.pattern.permute.xlu0 0
      %4586 = vperm.xlu0 %4585, %v4052
      %v4587 = vpop.permute.xlu0 %4586
      %4590 = vset.pattern.permute.xlu0 0
      %4591 = vperm.xlu0 %4590, %v4053
      %v4592 = vpop.permute.xlu0 %4591
      %4595 = vset.pattern.permute.xlu0 0
      %4596 = vperm.xlu0 %4595, %v4054
      %v4597 = vpop.permute.xlu0 %4596
      %4600 = vset.pattern.permute.xlu0 0
      %4601 = vperm.xlu0 %4600, %v4055
      %v4602 = vpop.permute.xlu0 %4601
      %4605 = vset.pattern.permute.xlu0 0
      %4606 = vperm.xlu0 %4605, %v4056
      %v4607 = vpop.permute.xlu0 %4606
      %4610 = vset.pattern.permute.xlu0 0
      %4611 = vperm.xlu0 %4610, %v4057
      %v4612 = vpop.permute.xlu0 %4611
      %4615 = vset.pattern.permute.xlu0 0
      %4616 = vperm.xlu0 %4615, %v4058
      %v4617 = vpop.permute.xlu0 %4616
      %4620 = vset.pattern.permute.xlu0 0
      %4621 = vperm.xlu0 %4620, %v4059
      %v4622 = vpop.permute.xlu0 %4621
      %4625 = vset.pattern.permute.xlu0 0
      %4626 = vperm.xlu0 %4625, %v4060
      %v4627 = vpop.permute.xlu0 %4626
      %4630 = vset.pattern.permute.xlu0 0
      %4631 = vperm.xlu0 %4630, %v4061
      %v4632 = vpop.permute.xlu0 %4631
      %4635 = vset.pattern.permute.xlu0 0
      %4636 = vperm.xlu0 %4635, %v4062
      %v4637 = vpop.permute.xlu0 %4636
      %4640 = vset.pattern.permute.xlu0 0
      %4641 = vperm.xlu0 %4640, %v4063
      %v4642 = vpop.permute.xlu0 %4641
      %4645 = vset.pattern.permute.xlu0 0
      %4646 = vperm.xlu0 %4645, %v4064
      %v4647 = vpop.permute.xlu0 %4646
      %4650 = vset.pattern.permute.xlu0 0
      %4651 = vperm.xlu0 %4650, %v4065
      %v4652 = vpop.permute.xlu0 %4651
      %4655 = vset.pattern.permute.xlu0 0
      %4656 = vperm.xlu0 %4655, %v4066
      %v4657 = vpop.permute.xlu0 %4656
      %4660 = vset.pattern.permute.xlu0 0
      %4661 = vperm.xlu0 %4660, %v4067
      %v4662 = vpop.permute.xlu0 %4661
      %4665 = vset.pattern.permute.xlu0 0
      %4666 = vperm.xlu0 %4665, %v4068
      %v4667 = vpop.permute.xlu0 %4666
      %4670 = vset.pattern.permute.xlu0 0
      %4671 = vperm.xlu0 %4670, %v4069
      %v4672 = vpop.permute.xlu0 %4671
      %4675 = vset.pattern.permute.xlu0 0
      %4676 = vperm.xlu0 %4675, %v4070
      %v4677 = vpop.permute.xlu0 %4676
      %4680 = vset.pattern.permute.xlu0 0
      %4681 = vperm.xlu0 %4680, %v4071
      %v4682 = vpop.permute.xlu0 %4681
      %4685 = vset.pattern.permute.xlu0 0
      %4686 = vperm.xlu0 %4685, %v4072
      %v4687 = vpop.permute.xlu0 %4686
      %4690 = vset.pattern.permute.xlu0 0
      %4691 = vperm.xlu0 %4690, %v4073
      %v4692 = vpop.permute.xlu0 %4691
      %4695 = vset.pattern.permute.xlu0 0
      %4696 = vperm.xlu0 %4695, %v4074
      %v4697 = vpop.permute.xlu0 %4696
      %4700 = vset.pattern.permute.xlu0 0
      %4701 = vperm.xlu0 %4700, %v4075
      %v4702 = vpop.permute.xlu0 %4701
      %4705 = vset.pattern.permute.xlu0 0
      %4706 = vperm.xlu0 %4705, %v4076
      %v4707 = vpop.permute.xlu0 %4706
      %4710 = vset.pattern.permute.xlu0 0
      %4711 = vperm.xlu0 %4710, %v4077
      %v4712 = vpop.permute.xlu0 %4711
      %4715 = vset.pattern.permute.xlu0 0
      %4716 = vperm.xlu0 %4715, %v4078
      %v4717 = vpop.permute.xlu0 %4716
      %v4719 = vadd.f32 %v3823, %v4082
      %v4720 = vadd.f32 %v3824, %v4087
      %v4721 = vadd.f32 %v3825, %v4092
      %v4722 = vadd.f32 %v3826, %v4097
      %v4723 = vadd.f32 %v3827, %v4102
      %v4724 = vadd.f32 %v3828, %v4107
      %v4725 = vadd.f32 %v3829, %v4112
      %v4726 = vadd.f32 %v3830, %v4117
      %v4727 = vadd.f32 %v3831, %v4122
      %v4728 = vadd.f32 %v3832, %v4127
      %v4729 = vadd.f32 %v3833, %v4132
      %v4730 = vadd.f32 %v3834, %v4137
      %v4731 = vadd.f32 %v3835, %v4142
      %v4732 = vadd.f32 %v3836, %v4147
      %v4733 = vadd.f32 %v3837, %v4152
      %v4734 = vadd.f32 %v3838, %v4157
      %v4735 = vadd.f32 %v3839, %v4162
      %v4736 = vadd.f32 %v3840, %v4167
      %v4737 = vadd.f32 %v3841, %v4172
      %v4738 = vadd.f32 %v3842, %v4177
      %v4739 = vadd.f32 %v3843, %v4182
      %v4740 = vadd.f32 %v3844, %v4187
      %v4741 = vadd.f32 %v3845, %v4192
      %v4742 = vadd.f32 %v3846, %v4197
      %v4743 = vadd.f32 %v3847, %v4202
      %v4744 = vadd.f32 %v3848, %v4207
      %v4745 = vadd.f32 %v3849, %v4212
      %v4746 = vadd.f32 %v3850, %v4217
      %v4747 = vadd.f32 %v3851, %v4222
      %v4748 = vadd.f32 %v3852, %v4227
      %v4749 = vadd.f32 %v3853, %v4232
      %v4750 = vadd.f32 %v3854, %v4237
      %v4751 = vadd.f32 %v3855, %v4242
      %v4752 = vadd.f32 %v3856, %v4247
      %v4753 = vadd.f32 %v3857, %v4252
      %v4754 = vadd.f32 %v3858, %v4257
      %v4755 = vadd.f32 %v3859, %v4262
      %v4756 = vadd.f32 %v3860, %v4267
      %v4757 = vadd.f32 %v3861, %v4272
      %v4758 = vadd.f32 %v3862, %v4277
      %v4759 = vadd.f32 %v3863, %v4282
      %v4760 = vadd.f32 %v3864, %v4287
      %v4761 = vadd.f32 %v3865, %v4292
      %v4762 = vadd.f32 %v3866, %v4297
      %v4763 = vadd.f32 %v3867, %v4302
      %v4764 = vadd.f32 %v3868, %v4307
      %v4765 = vadd.f32 %v3869, %v4312
      %v4766 = vadd.f32 %v3870, %v4317
      %v4767 = vadd.f32 %v3871, %v4322
      %v4768 = vadd.f32 %v3872, %v4327
      %v4769 = vadd.f32 %v3873, %v4332
      %v4770 = vadd.f32 %v3874, %v4337
      %v4771 = vadd.f32 %v3875, %v4342
      %v4772 = vadd.f32 %v3876, %v4347
      %v4773 = vadd.f32 %v3877, %v4352
      %v4774 = vadd.f32 %v3878, %v4357
      %v4775 = vadd.f32 %v3879, %v4362
      %v4776 = vadd.f32 %v3880, %v4367
      %v4777 = vadd.f32 %v3881, %v4372
      %v4778 = vadd.f32 %v3882, %v4377
      %v4779 = vadd.f32 %v3883, %v4382
      %v4780 = vadd.f32 %v3884, %v4387
      %v4781 = vadd.f32 %v3885, %v4392
      %v4782 = vadd.f32 %v3886, %v4397
      %v4783 = vadd.f32 %v3887, %v4402
      %v4784 = vadd.f32 %v3888, %v4407
      %v4785 = vadd.f32 %v3889, %v4412
      %v4786 = vadd.f32 %v3890, %v4417
      %v4787 = vadd.f32 %v3891, %v4422
      %v4788 = vadd.f32 %v3892, %v4427
      %v4789 = vadd.f32 %v3893, %v4432
      %v4790 = vadd.f32 %v3894, %v4437
      %v4791 = vadd.f32 %v3895, %v4442
      %v4792 = vadd.f32 %v3896, %v4447
      %v4793 = vadd.f32 %v3897, %v4452
      %v4794 = vadd.f32 %v3898, %v4457
      %v4795 = vadd.f32 %v3899, %v4462
      %v4796 = vadd.f32 %v3900, %v4467
      %v4797 = vadd.f32 %v3901, %v4472
      %v4798 = vadd.f32 %v3902, %v4477
      %v4799 = vadd.f32 %v3903, %v4482
      %v4800 = vadd.f32 %v3904, %v4487
      %v4801 = vadd.f32 %v3905, %v4492
      %v4802 = vadd.f32 %v3906, %v4497
      %v4803 = vadd.f32 %v3907, %v4502
      %v4804 = vadd.f32 %v3908, %v4507
      %v4805 = vadd.f32 %v3909, %v4512
      %v4806 = vadd.f32 %v3910, %v4517
      %v4807 = vadd.f32 %v3911, %v4522
      %v4808 = vadd.f32 %v3912, %v4527
      %v4809 = vadd.f32 %v3913, %v4532
      %v4810 = vadd.f32 %v3914, %v4537
      %v4811 = vadd.f32 %v3915, %v4542
      %v4812 = vadd.f32 %v3916, %v4547
      %v4813 = vadd.f32 %v3917, %v4552
      %v4814 = vadd.f32 %v3918, %v4557
      %v4815 = vadd.f32 %v3919, %v4562
      %v4816 = vadd.f32 %v3920, %v4567
      %v4817 = vadd.f32 %v3921, %v4572
      %v4818 = vadd.f32 %v3922, %v4577
      %v4819 = vadd.f32 %v3923, %v4582
      %v4820 = vadd.f32 %v3924, %v4587
      %v4821 = vadd.f32 %v3925, %v4592
      %v4822 = vadd.f32 %v3926, %v4597
      %v4823 = vadd.f32 %v3927, %v4602
      %v4824 = vadd.f32 %v3928, %v4607
      %v4825 = vadd.f32 %v3929, %v4612
      %v4826 = vadd.f32 %v3930, %v4617
      %v4827 = vadd.f32 %v3931, %v4622
      %v4828 = vadd.f32 %v3932, %v4627
      %v4829 = vadd.f32 %v3933, %v4632
      %v4830 = vadd.f32 %v3934, %v4637
      %v4831 = vadd.f32 %v3935, %v4642
      %v4832 = vadd.f32 %v3936, %v4647
      %v4833 = vadd.f32 %v3937, %v4652
      %v4834 = vadd.f32 %v3938, %v4657
      %v4835 = vadd.f32 %v3939, %v4662
      %v4836 = vadd.f32 %v3940, %v4667
      %v4837 = vadd.f32 %v3941, %v4672
      %v4838 = vadd.f32 %v3942, %v4677
      %v4839 = vadd.f32 %v3943, %v4682
      %v4840 = vadd.f32 %v3944, %v4687
      %v4841 = vadd.f32 %v3945, %v4692
      %v4842 = vadd.f32 %v3946, %v4697
      %v4843 = vadd.f32 %v3947, %v4702
      %v4844 = vadd.f32 %v3948, %v4707
      %v4845 = vadd.f32 %v3949, %v4712
      %v4846 = vadd.f32 %v3950, %v4717
      %v4847 = vmax.f32 %v4719, 0.0
      %v4848 = vmax.f32 %v4720, 0.0
      %v4849 = vmax.f32 %v4721, 0.0
      %v4850 = vmax.f32 %v4722, 0.0
      %v4851 = vmax.f32 %v4723, 0.0
      %v4852 = vmax.f32 %v4724, 0.0
      %v4853 = vmax.f32 %v4725, 0.0
      %v4854 = vmax.f32 %v4726, 0.0
      %v4855 = vmax.f32 %v4727, 0.0
      %v4856 = vmax.f32 %v4728, 0.0
      %v4857 = vmax.f32 %v4729, 0.0
      %v4858 = vmax.f32 %v4730, 0.0
      %v4859 = vmax.f32 %v4731, 0.0
      %v4860 = vmax.f32 %v4732, 0.0
      %v4861 = vmax.f32 %v4733, 0.0
      %v4862 = vmax.f32 %v4734, 0.0
      %v4863 = vmax.f32 %v4735, 0.0
      %v4864 = vmax.f32 %v4736, 0.0
      %v4865 = vmax.f32 %v4737, 0.0
      %v4866 = vmax.f32 %v4738, 0.0
      %v4867 = vmax.f32 %v4739, 0.0
      %v4868 = vmax.f32 %v4740, 0.0
      %v4869 = vmax.f32 %v4741, 0.0
      %v4870 = vmax.f32 %v4742, 0.0
      %v4871 = vmax.f32 %v4743, 0.0
      %v4872 = vmax.f32 %v4744, 0.0
      %v4873 = vmax.f32 %v4745, 0.0
      %v4874 = vmax.f32 %v4746, 0.0
      %v4875 = vmax.f32 %v4747, 0.0
      %v4876 = vmax.f32 %v4748, 0.0
      %v4877 = vmax.f32 %v4749, 0.0
      %v4878 = vmax.f32 %v4750, 0.0
      %v4879 = vmax.f32 %v4751, 0.0
      %v4880 = vmax.f32 %v4752, 0.0
      %v4881 = vmax.f32 %v4753, 0.0
      %v4882 = vmax.f32 %v4754, 0.0
      %v4883 = vmax.f32 %v4755, 0.0
      %v4884 = vmax.f32 %v4756, 0.0
      %v4885 = vmax.f32 %v4757, 0.0
      %v4886 = vmax.f32 %v4758, 0.0
      %v4887 = vmax.f32 %v4759, 0.0
      %v4888 = vmax.f32 %v4760, 0.0
      %v4889 = vmax.f32 %v4761, 0.0
      %v4890 = vmax.f32 %v4762, 0.0
      %v4891 = vmax.f32 %v4763, 0.0
      %v4892 = vmax.f32 %v4764, 0.0
      %v4893 = vmax.f32 %v4765, 0.0
      %v4894 = vmax.f32 %v4766, 0.0
      %v4895 = vmax.f32 %v4767, 0.0
      %v4896 = vmax.f32 %v4768, 0.0
      %v4897 = vmax.f32 %v4769, 0.0
      %v4898 = vmax.f32 %v4770, 0.0
      %v4899 = vmax.f32 %v4771, 0.0
      %v4900 = vmax.f32 %v4772, 0.0
      %v4901 = vmax.f32 %v4773, 0.0
      %v4902 = vmax.f32 %v4774, 0.0
      %v4903 = vmax.f32 %v4775, 0.0
      %v4904 = vmax.f32 %v4776, 0.0
      %v4905 = vmax.f32 %v4777, 0.0
      %v4906 = vmax.f32 %v4778, 0.0
      %v4907 = vmax.f32 %v4779, 0.0
      %v4908 = vmax.f32 %v4780, 0.0
      %v4909 = vmax.f32 %v4781, 0.0
      %v4910 = vmax.f32 %v4782, 0.0
      %v4911 = vmax.f32 %v4783, 0.0
      %v4912 = vmax.f32 %v4784, 0.0
      %v4913 = vmax.f32 %v4785, 0.0
      %v4914 = vmax.f32 %v4786, 0.0
      %v4915 = vmax.f32 %v4787, 0.0
      %v4916 = vmax.f32 %v4788, 0.0
      %v4917 = vmax.f32 %v4789, 0.0
      %v4918 = vmax.f32 %v4790, 0.0
      %v4919 = vmax.f32 %v4791, 0.0
      %v4920 = vmax.f32 %v4792, 0.0
      %v4921 = vmax.f32 %v4793, 0.0
      %v4922 = vmax.f32 %v4794, 0.0
      %v4923 = vmax.f32 %v4795, 0.0
      %v4924 = vmax.f32 %v4796, 0.0
      %v4925 = vmax.f32 %v4797, 0.0
      %v4926 = vmax.f32 %v4798, 0.0
      %v4927 = vmax.f32 %v4799, 0.0
      %v4928 = vmax.f32 %v4800, 0.0
      %v4929 = vmax.f32 %v4801, 0.0
      %v4930 = vmax.f32 %v4802, 0.0
      %v4931 = vmax.f32 %v4803, 0.0
      %v4932 = vmax.f32 %v4804, 0.0
      %v4933 = vmax.f32 %v4805, 0.0
      %v4934 = vmax.f32 %v4806, 0.0
      %v4935 = vmax.f32 %v4807, 0.0
      %v4936 = vmax.f32 %v4808, 0.0
      %v4937 = vmax.f32 %v4809, 0.0
      %v4938 = vmax.f32 %v4810, 0.0
      %v4939 = vmax.f32 %v4811, 0.0
      %v4940 = vmax.f32 %v4812, 0.0
      %v4941 = vmax.f32 %v4813, 0.0
      %v4942 = vmax.f32 %v4814, 0.0
      %v4943 = vmax.f32 %v4815, 0.0
      %v4944 = vmax.f32 %v4816, 0.0
      %v4945 = vmax.f32 %v4817, 0.0
      %v4946 = vmax.f32 %v4818, 0.0
      %v4947 = vmax.f32 %v4819, 0.0
      %v4948 = vmax.f32 %v4820, 0.0
      %v4949 = vmax.f32 %v4821, 0.0
      %v4950 = vmax.f32 %v4822, 0.0
      %v4951 = vmax.f32 %v4823, 0.0
      %v4952 = vmax.f32 %v4824, 0.0
      %v4953 = vmax.f32 %v4825, 0.0
      %v4954 = vmax.f32 %v4826, 0.0
      %v4955 = vmax.f32 %v4827, 0.0
      %v4956 = vmax.f32 %v4828, 0.0
      %v4957 = vmax.f32 %v4829, 0.0
      %v4958 = vmax.f32 %v4830, 0.0
      %v4959 = vmax.f32 %v4831, 0.0
      %v4960 = vmax.f32 %v4832, 0.0
      %v4961 = vmax.f32 %v4833, 0.0
      %v4962 = vmax.f32 %v4834, 0.0
      %v4963 = vmax.f32 %v4835, 0.0
      %v4964 = vmax.f32 %v4836, 0.0
      %v4965 = vmax.f32 %v4837, 0.0
      %v4966 = vmax.f32 %v4838, 0.0
      %v4967 = vmax.f32 %v4839, 0.0
      %v4968 = vmax.f32 %v4840, 0.0
      %v4969 = vmax.f32 %v4841, 0.0
      %v4970 = vmax.f32 %v4842, 0.0
      %v4971 = vmax.f32 %v4843, 0.0
      %v4972 = vmax.f32 %v4844, 0.0
      %v4973 = vmax.f32 %v4845, 0.0
      %v4974 = vmax.f32 %v4846, 0.0
      %v4975 = vld [vmem:[%s7] sm:$0xff]
      %v4976 = vld [vmem:[%s7 + $0x8] sm:$0xff]
      %v4977 = vld [vmem:[%s7 + $0x10] sm:$0xff]
      %v4978 = vld [vmem:[%s7 + $0x18] sm:$0xff]
      %v4979 = vld [vmem:[%s7 + $0x20] sm:$0xff]
      %v4980 = vld [vmem:[%s7 + $0x28] sm:$0xff]
      %v4981 = vld [vmem:[%s7 + $0x30] sm:$0xff]
      %v4982 = vld [vmem:[%s7 + $0x38] sm:$0xff]
      %v4983 = vld [vmem:[%s7 + $0x40] sm:$0xff]
      %v4984 = vld [vmem:[%s7 + $0x48] sm:$0xff]
      %v4985 = vld [vmem:[%s7 + $0x50] sm:$0xff]
      %v4986 = vld [vmem:[%s7 + $0x58] sm:$0xff]
      %v4987 = vld [vmem:[%s7 + $0x60] sm:$0xff]
      %v4988 = vld [vmem:[%s7 + $0x68] sm:$0xff]
      %v4989 = vld [vmem:[%s7 + $0x70] sm:$0xff]
      %v4990 = vld [vmem:[%s7 + $0x78] sm:$0xff]
      %v4991 = vld [vmem:[%s7 + $0x80] sm:$0xff]
      %v4992 = vld [vmem:[%s7 + $0x88] sm:$0xff]
      %v4993 = vld [vmem:[%s7 + $0x90] sm:$0xff]
      %v4994 = vld [vmem:[%s7 + $0x98] sm:$0xff]
      %v4995 = vld [vmem:[%s7 + $0xa0] sm:$0xff]
      %v4996 = vld [vmem:[%s7 + $0xa8] sm:$0xff]
      %v4997 = vld [vmem:[%s7 + $0xb0] sm:$0xff]
      %v4998 = vld [vmem:[%s7 + $0xb8] sm:$0xff]
      %v4999 = vld [vmem:[%s7 + $0xc0] sm:$0xff]
      %v5000 = vld [vmem:[%s7 + $0xc8] sm:$0xff]
      %v5001 = vld [vmem:[%s7 + $0xd0] sm:$0xff]
      %v5002 = vld [vmem:[%s7 + $0xd8] sm:$0xff]
      %v5003 = vld [vmem:[%s7 + $0xe0] sm:$0xff]
      %v5004 = vld [vmem:[%s7 + $0xe8] sm:$0xff]
      %v5005 = vld [vmem:[%s7 + $0xf0] sm:$0xff]
      %v5006 = vld [vmem:[%s7 + $0xf8] sm:$0xff]
      %v5007 = vld [vmem:[%s7 + $0x100] sm:$0xff]
      %v5008 = vld [vmem:[%s7 + $0x108] sm:$0xff]
      %v5009 = vld [vmem:[%s7 + $0x110] sm:$0xff]
      %v5010 = vld [vmem:[%s7 + $0x118] sm:$0xff]
      %v5011 = vld [vmem:[%s7 + $0x120] sm:$0xff]
      %v5012 = vld [vmem:[%s7 + $0x128] sm:$0xff]
      %v5013 = vld [vmem:[%s7 + $0x130] sm:$0xff]
      %v5014 = vld [vmem:[%s7 + $0x138] sm:$0xff]
      %v5015 = vld [vmem:[%s7 + $0x140] sm:$0xff]
      %v5016 = vld [vmem:[%s7 + $0x148] sm:$0xff]
      %v5017 = vld [vmem:[%s7 + $0x150] sm:$0xff]
      %v5018 = vld [vmem:[%s7 + $0x158] sm:$0xff]
      %v5019 = vld [vmem:[%s7 + $0x160] sm:$0xff]
      %v5020 = vld [vmem:[%s7 + $0x168] sm:$0xff]
      %v5021 = vld [vmem:[%s7 + $0x170] sm:$0xff]
      %v5022 = vld [vmem:[%s7 + $0x178] sm:$0xff]
      %v5023 = vld [vmem:[%s7 + $0x180] sm:$0xff]
      %v5024 = vld [vmem:[%s7 + $0x188] sm:$0xff]
      %v5025 = vld [vmem:[%s7 + $0x190] sm:$0xff]
      %v5026 = vld [vmem:[%s7 + $0x198] sm:$0xff]
      %v5027 = vld [vmem:[%s7 + $0x1a0] sm:$0xff]
      %v5028 = vld [vmem:[%s7 + $0x1a8] sm:$0xff]
      %v5029 = vld [vmem:[%s7 + $0x1b0] sm:$0xff]
      %v5030 = vld [vmem:[%s7 + $0x1b8] sm:$0xff]
      %v5031 = vld [vmem:[%s7 + $0x1c0] sm:$0xff]
      %v5032 = vld [vmem:[%s7 + $0x1c8] sm:$0xff]
      %v5033 = vld [vmem:[%s7 + $0x1d0] sm:$0xff]
      %v5034 = vld [vmem:[%s7 + $0x1d8] sm:$0xff]
      %v5035 = vld [vmem:[%s7 + $0x1e0] sm:$0xff]
      %v5036 = vld [vmem:[%s7 + $0x1e8] sm:$0xff]
      %v5037 = vld [vmem:[%s7 + $0x1f0] sm:$0xff]
      %v5038 = vld [vmem:[%s7 + $0x1f8] sm:$0xff]
      %v5039 = vld [vmem:[%s7 + $0x200] sm:$0xff]
      %v5040 = vld [vmem:[%s7 + $0x208] sm:$0xff]
      %v5041 = vld [vmem:[%s7 + $0x210] sm:$0xff]
      %v5042 = vld [vmem:[%s7 + $0x218] sm:$0xff]
      %v5043 = vld [vmem:[%s7 + $0x220] sm:$0xff]
      %v5044 = vld [vmem:[%s7 + $0x228] sm:$0xff]
      %v5045 = vld [vmem:[%s7 + $0x230] sm:$0xff]
      %v5046 = vld [vmem:[%s7 + $0x238] sm:$0xff]
      %v5047 = vld [vmem:[%s7 + $0x240] sm:$0xff]
      %v5048 = vld [vmem:[%s7 + $0x248] sm:$0xff]
      %v5049 = vld [vmem:[%s7 + $0x250] sm:$0xff]
      %v5050 = vld [vmem:[%s7 + $0x258] sm:$0xff]
      %v5051 = vld [vmem:[%s7 + $0x260] sm:$0xff]
      %v5052 = vld [vmem:[%s7 + $0x268] sm:$0xff]
      %v5053 = vld [vmem:[%s7 + $0x270] sm:$0xff]
      %v5054 = vld [vmem:[%s7 + $0x278] sm:$0xff]
      %v5055 = vld [vmem:[%s7 + $0x280] sm:$0xff]
      %v5056 = vld [vmem:[%s7 + $0x288] sm:$0xff]
      %v5057 = vld [vmem:[%s7 + $0x290] sm:$0xff]
      %v5058 = vld [vmem:[%s7 + $0x298] sm:$0xff]
      %v5059 = vld [vmem:[%s7 + $0x2a0] sm:$0xff]
      %v5060 = vld [vmem:[%s7 + $0x2a8] sm:$0xff]
      %v5061 = vld [vmem:[%s7 + $0x2b0] sm:$0xff]
      %v5062 = vld [vmem:[%s7 + $0x2b8] sm:$0xff]
      %v5063 = vld [vmem:[%s7 + $0x2c0] sm:$0xff]
      %v5064 = vld [vmem:[%s7 + $0x2c8] sm:$0xff]
      %v5065 = vld [vmem:[%s7 + $0x2d0] sm:$0xff]
      %v5066 = vld [vmem:[%s7 + $0x2d8] sm:$0xff]
      %v5067 = vld [vmem:[%s7 + $0x2e0] sm:$0xff]
      %v5068 = vld [vmem:[%s7 + $0x2e8] sm:$0xff]
      %v5069 = vld [vmem:[%s7 + $0x2f0] sm:$0xff]
      %v5070 = vld [vmem:[%s7 + $0x2f8] sm:$0xff]
      %v5071 = vld [vmem:[%s7 + $0x300] sm:$0xff]
      %v5072 = vld [vmem:[%s7 + $0x308] sm:$0xff]
      %v5073 = vld [vmem:[%s7 + $0x310] sm:$0xff]
      %v5074 = vld [vmem:[%s7 + $0x318] sm:$0xff]
      %v5075 = vld [vmem:[%s7 + $0x320] sm:$0xff]
      %v5076 = vld [vmem:[%s7 + $0x328] sm:$0xff]
      %v5077 = vld [vmem:[%s7 + $0x330] sm:$0xff]
      %v5078 = vld [vmem:[%s7 + $0x338] sm:$0xff]
      %v5079 = vld [vmem:[%s7 + $0x340] sm:$0xff]
      %v5080 = vld [vmem:[%s7 + $0x348] sm:$0xff]
      %v5081 = vld [vmem:[%s7 + $0x350] sm:$0xff]
      %v5082 = vld [vmem:[%s7 + $0x358] sm:$0xff]
      %v5083 = vld [vmem:[%s7 + $0x360] sm:$0xff]
      %v5084 = vld [vmem:[%s7 + $0x368] sm:$0xff]
      %v5085 = vld [vmem:[%s7 + $0x370] sm:$0xff]
      %v5086 = vld [vmem:[%s7 + $0x378] sm:$0xff]
      %v5087 = vld [vmem:[%s7 + $0x380] sm:$0xff]
      %v5088 = vld [vmem:[%s7 + $0x388] sm:$0xff]
      %v5089 = vld [vmem:[%s7 + $0x390] sm:$0xff]
      %v5090 = vld [vmem:[%s7 + $0x398] sm:$0xff]
      %v5091 = vld [vmem:[%s7 + $0x3a0] sm:$0xff]
      %v5092 = vld [vmem:[%s7 + $0x3a8] sm:$0xff]
      %v5093 = vld [vmem:[%s7 + $0x3b0] sm:$0xff]
      %v5094 = vld [vmem:[%s7 + $0x3b8] sm:$0xff]
      %v5095 = vld [vmem:[%s7 + $0x3c0] sm:$0xff]
      %v5096 = vld [vmem:[%s7 + $0x3c8] sm:$0xff]
      %v5097 = vld [vmem:[%s7 + $0x3d0] sm:$0xff]
      %v5098 = vld [vmem:[%s7 + $0x3d8] sm:$0xff]
      %v5099 = vld [vmem:[%s7 + $0x3e0] sm:$0xff]
      %v5100 = vld [vmem:[%s7 + $0x3e8] sm:$0xff]
      %v5101 = vld [vmem:[%s7 + $0x3f0] sm:$0xff]
      %v5102 = vld [vmem:[%s7 + $0x3f8] sm:$0xff]
      %v5103 = vld [vmem:[%s7 + $0x400] sm:$0xff]
      %v5104 = vld [vmem:[%s7 + $0x408] sm:$0xff]
      %v5105 = vld [vmem:[%s7 + $0x410] sm:$0xff]
      %v5106 = vld [vmem:[%s7 + $0x418] sm:$0xff]
      %v5107 = vld [vmem:[%s7 + $0x420] sm:$0xff]
      %v5108 = vld [vmem:[%s7 + $0x428] sm:$0xff]
      %v5109 = vld [vmem:[%s7 + $0x430] sm:$0xff]
      %v5110 = vld [vmem:[%s7 + $0x438] sm:$0xff]
      %v5111 = vld [vmem:[%s7 + $0x440] sm:$0xff]
      %v5112 = vld [vmem:[%s7 + $0x448] sm:$0xff]
      %v5113 = vld [vmem:[%s7 + $0x450] sm:$0xff]
      %v5114 = vld [vmem:[%s7 + $0x458] sm:$0xff]
      %v5115 = vld [vmem:[%s7 + $0x460] sm:$0xff]
      %v5116 = vld [vmem:[%s7 + $0x468] sm:$0xff]
      %v5117 = vld [vmem:[%s7 + $0x470] sm:$0xff]
      %v5118 = vld [vmem:[%s7 + $0x478] sm:$0xff]
      %v5119 = vld [vmem:[%s7 + $0x480] sm:$0xff]
      %v5120 = vld [vmem:[%s7 + $0x488] sm:$0xff]
      %v5121 = vld [vmem:[%s7 + $0x490] sm:$0xff]
      %v5122 = vld [vmem:[%s7 + $0x498] sm:$0xff]
      %v5123 = vld [vmem:[%s7 + $0x4a0] sm:$0xff]
      %v5124 = vld [vmem:[%s7 + $0x4a8] sm:$0xff]
      %v5125 = vld [vmem:[%s7 + $0x4b0] sm:$0xff]
      %v5126 = vld [vmem:[%s7 + $0x4b8] sm:$0xff]
      %v5127 = vld [vmem:[%s7 + $0x4c0] sm:$0xff]
      %v5128 = vld [vmem:[%s7 + $0x4c8] sm:$0xff]
      %v5129 = vld [vmem:[%s7 + $0x4d0] sm:$0xff]
      %v5130 = vld [vmem:[%s7 + $0x4d8] sm:$0xff]
      %v5131 = vld [vmem:[%s7 + $0x4e0] sm:$0xff]
      %v5132 = vld [vmem:[%s7 + $0x4e8] sm:$0xff]
      %v5133 = vld [vmem:[%s7 + $0x4f0] sm:$0xff]
      %v5134 = vld [vmem:[%s7 + $0x4f8] sm:$0xff]
      %v5135 = vld [vmem:[%s7 + $0x500] sm:$0xff]
      %v5136 = vld [vmem:[%s7 + $0x508] sm:$0xff]
      %v5137 = vld [vmem:[%s7 + $0x510] sm:$0xff]
      %v5138 = vld [vmem:[%s7 + $0x518] sm:$0xff]
      %v5139 = vld [vmem:[%s7 + $0x520] sm:$0xff]
      %v5140 = vld [vmem:[%s7 + $0x528] sm:$0xff]
      %v5141 = vld [vmem:[%s7 + $0x530] sm:$0xff]
      %v5142 = vld [vmem:[%s7 + $0x538] sm:$0xff]
      %v5143 = vld [vmem:[%s7 + $0x540] sm:$0xff]
      %v5144 = vld [vmem:[%s7 + $0x548] sm:$0xff]
      %v5145 = vld [vmem:[%s7 + $0x550] sm:$0xff]
      %v5146 = vld [vmem:[%s7 + $0x558] sm:$0xff]
      %v5147 = vld [vmem:[%s7 + $0x560] sm:$0xff]
      %v5148 = vld [vmem:[%s7 + $0x568] sm:$0xff]
      %v5149 = vld [vmem:[%s7 + $0x570] sm:$0xff]
      %v5150 = vld [vmem:[%s7 + $0x578] sm:$0xff]
      %v5151 = vld [vmem:[%s7 + $0x580] sm:$0xff]
      %v5152 = vld [vmem:[%s7 + $0x588] sm:$0xff]
      %v5153 = vld [vmem:[%s7 + $0x590] sm:$0xff]
      %v5154 = vld [vmem:[%s7 + $0x598] sm:$0xff]
      %v5155 = vld [vmem:[%s7 + $0x5a0] sm:$0xff]
      %v5156 = vld [vmem:[%s7 + $0x5a8] sm:$0xff]
      %v5157 = vld [vmem:[%s7 + $0x5b0] sm:$0xff]
      %v5158 = vld [vmem:[%s7 + $0x5b8] sm:$0xff]
      %v5159 = vld [vmem:[%s7 + $0x5c0] sm:$0xff]
      %v5160 = vld [vmem:[%s7 + $0x5c8] sm:$0xff]
      %v5161 = vld [vmem:[%s7 + $0x5d0] sm:$0xff]
      %v5162 = vld [vmem:[%s7 + $0x5d8] sm:$0xff]
      %v5163 = vld [vmem:[%s7 + $0x5e0] sm:$0xff]
      %v5164 = vld [vmem:[%s7 + $0x5e8] sm:$0xff]
      %v5165 = vld [vmem:[%s7 + $0x5f0] sm:$0xff]
      %v5166 = vld [vmem:[%s7 + $0x5f8] sm:$0xff]
      %v5167 = vld [vmem:[%s7 + $0x600] sm:$0xff]
      %v5168 = vld [vmem:[%s7 + $0x608] sm:$0xff]
      %v5169 = vld [vmem:[%s7 + $0x610] sm:$0xff]
      %v5170 = vld [vmem:[%s7 + $0x618] sm:$0xff]
      %v5171 = vld [vmem:[%s7 + $0x620] sm:$0xff]
      %v5172 = vld [vmem:[%s7 + $0x628] sm:$0xff]
      %v5173 = vld [vmem:[%s7 + $0x630] sm:$0xff]
      %v5174 = vld [vmem:[%s7 + $0x638] sm:$0xff]
      %v5175 = vld [vmem:[%s7 + $0x640] sm:$0xff]
      %v5176 = vld [vmem:[%s7 + $0x648] sm:$0xff]
      %v5177 = vld [vmem:[%s7 + $0x650] sm:$0xff]
      %v5178 = vld [vmem:[%s7 + $0x658] sm:$0xff]
      %v5179 = vld [vmem:[%s7 + $0x660] sm:$0xff]
      %v5180 = vld [vmem:[%s7 + $0x668] sm:$0xff]
      %v5181 = vld [vmem:[%s7 + $0x670] sm:$0xff]
      %v5182 = vld [vmem:[%s7 + $0x678] sm:$0xff]
      %v5183 = vld [vmem:[%s7 + $0x680] sm:$0xff]
      %v5184 = vld [vmem:[%s7 + $0x688] sm:$0xff]
      %v5185 = vld [vmem:[%s7 + $0x690] sm:$0xff]
      %v5186 = vld [vmem:[%s7 + $0x698] sm:$0xff]
      %v5187 = vld [vmem:[%s7 + $0x6a0] sm:$0xff]
      %v5188 = vld [vmem:[%s7 + $0x6a8] sm:$0xff]
      %v5189 = vld [vmem:[%s7 + $0x6b0] sm:$0xff]
      %v5190 = vld [vmem:[%s7 + $0x6b8] sm:$0xff]
      %v5191 = vld [vmem:[%s7 + $0x6c0] sm:$0xff]
      %v5192 = vld [vmem:[%s7 + $0x6c8] sm:$0xff]
      %v5193 = vld [vmem:[%s7 + $0x6d0] sm:$0xff]
      %v5194 = vld [vmem:[%s7 + $0x6d8] sm:$0xff]
      %v5195 = vld [vmem:[%s7 + $0x6e0] sm:$0xff]
      %v5196 = vld [vmem:[%s7 + $0x6e8] sm:$0xff]
      %v5197 = vld [vmem:[%s7 + $0x6f0] sm:$0xff]
      %v5198 = vld [vmem:[%s7 + $0x6f8] sm:$0xff]
      %v5199 = vld [vmem:[%s7 + $0x700] sm:$0xff]
      %v5200 = vld [vmem:[%s7 + $0x708] sm:$0xff]
      %v5201 = vld [vmem:[%s7 + $0x710] sm:$0xff]
      %v5202 = vld [vmem:[%s7 + $0x718] sm:$0xff]
      %v5203 = vld [vmem:[%s7 + $0x720] sm:$0xff]
      %v5204 = vld [vmem:[%s7 + $0x728] sm:$0xff]
      %v5205 = vld [vmem:[%s7 + $0x730] sm:$0xff]
      %v5206 = vld [vmem:[%s7 + $0x738] sm:$0xff]
      %v5207 = vld [vmem:[%s7 + $0x740] sm:$0xff]
      %v5208 = vld [vmem:[%s7 + $0x748] sm:$0xff]
      %v5209 = vld [vmem:[%s7 + $0x750] sm:$0xff]
      %v5210 = vld [vmem:[%s7 + $0x758] sm:$0xff]
      %v5211 = vld [vmem:[%s7 + $0x760] sm:$0xff]
      %v5212 = vld [vmem:[%s7 + $0x768] sm:$0xff]
      %v5213 = vld [vmem:[%s7 + $0x770] sm:$0xff]
      %v5214 = vld [vmem:[%s7 + $0x778] sm:$0xff]
      %v5215 = vld [vmem:[%s7 + $0x780] sm:$0xff]
      %v5216 = vld [vmem:[%s7 + $0x788] sm:$0xff]
      %v5217 = vld [vmem:[%s7 + $0x790] sm:$0xff]
      %v5218 = vld [vmem:[%s7 + $0x798] sm:$0xff]
      %v5219 = vld [vmem:[%s7 + $0x7a0] sm:$0xff]
      %v5220 = vld [vmem:[%s7 + $0x7a8] sm:$0xff]
      %v5221 = vld [vmem:[%s7 + $0x7b0] sm:$0xff]
      %v5222 = vld [vmem:[%s7 + $0x7b8] sm:$0xff]
      %v5223 = vld [vmem:[%s7 + $0x7c0] sm:$0xff]
      %v5224 = vld [vmem:[%s7 + $0x7c8] sm:$0xff]
      %v5225 = vld [vmem:[%s7 + $0x7d0] sm:$0xff]
      %v5226 = vld [vmem:[%s7 + $0x7d8] sm:$0xff]
      %v5227 = vld [vmem:[%s7 + $0x7e0] sm:$0xff]
      %v5228 = vld [vmem:[%s7 + $0x7e8] sm:$0xff]
      %v5229 = vld [vmem:[%s7 + $0x7f0] sm:$0xff]
      %v5230 = vld [vmem:[%s7 + $0x7f8] sm:$0xff]
      %v5231 = vpack.c.bf16 %v4848, %v4847
      %v5232 = vpack.c.bf16 %v4850, %v4849
      %v5233 = vpack.c.bf16 %v4852, %v4851
      %v5234 = vpack.c.bf16 %v4854, %v4853
      %v5235 = vpack.c.bf16 %v4856, %v4855
      %v5236 = vpack.c.bf16 %v4858, %v4857
      %v5237 = vpack.c.bf16 %v4860, %v4859
      %v5238 = vpack.c.bf16 %v4862, %v4861
      %v5239 = vpack.c.bf16 %v4864, %v4863
      %v5240 = vpack.c.bf16 %v4866, %v4865
      %v5241 = vpack.c.bf16 %v4868, %v4867
      %v5242 = vpack.c.bf16 %v4870, %v4869
      %v5243 = vpack.c.bf16 %v4872, %v4871
      %v5244 = vpack.c.bf16 %v4874, %v4873
      %v5245 = vpack.c.bf16 %v4876, %v4875
      %v5246 = vpack.c.bf16 %v4878, %v4877
      %v5247 = vpack.c.bf16 %v4880, %v4879
      %v5248 = vpack.c.bf16 %v4882, %v4881
      %v5249 = vpack.c.bf16 %v4884, %v4883
      %v5250 = vpack.c.bf16 %v4886, %v4885
      %v5251 = vpack.c.bf16 %v4888, %v4887
      %v5252 = vpack.c.bf16 %v4890, %v4889
      %v5253 = vpack.c.bf16 %v4892, %v4891
      %v5254 = vpack.c.bf16 %v4894, %v4893
      %v5255 = vpack.c.bf16 %v4896, %v4895
      %v5256 = vpack.c.bf16 %v4898, %v4897
      %v5257 = vpack.c.bf16 %v4900, %v4899
      %v5258 = vpack.c.bf16 %v4902, %v4901
      %v5259 = vpack.c.bf16 %v4904, %v4903
      %v5260 = vpack.c.bf16 %v4906, %v4905
      %v5261 = vpack.c.bf16 %v4908, %v4907
      %v5262 = vpack.c.bf16 %v4910, %v4909
      %v5263 = vpack.c.bf16 %v4912, %v4911
      %v5264 = vpack.c.bf16 %v4914, %v4913
      %v5265 = vpack.c.bf16 %v4916, %v4915
      %v5266 = vpack.c.bf16 %v4918, %v4917
      %v5267 = vpack.c.bf16 %v4920, %v4919
      %v5268 = vpack.c.bf16 %v4922, %v4921
      %v5269 = vpack.c.bf16 %v4924, %v4923
      %v5270 = vpack.c.bf16 %v4926, %v4925
      %v5271 = vpack.c.bf16 %v4928, %v4927
      %v5272 = vpack.c.bf16 %v4930, %v4929
      %v5273 = vpack.c.bf16 %v4932, %v4931
      %v5274 = vpack.c.bf16 %v4934, %v4933
      %v5275 = vpack.c.bf16 %v4936, %v4935
      %v5276 = vpack.c.bf16 %v4938, %v4937
      %v5277 = vpack.c.bf16 %v4940, %v4939
      %v5278 = vpack.c.bf16 %v4942, %v4941
      %v5279 = vpack.c.bf16 %v4944, %v4943
      %v5280 = vpack.c.bf16 %v4946, %v4945
      %v5281 = vpack.c.bf16 %v4948, %v4947
      %v5282 = vpack.c.bf16 %v4950, %v4949
      %v5283 = vpack.c.bf16 %v4952, %v4951
      %v5284 = vpack.c.bf16 %v4954, %v4953
      %v5285 = vpack.c.bf16 %v4956, %v4955
      %v5286 = vpack.c.bf16 %v4958, %v4957
      %v5287 = vpack.c.bf16 %v4960, %v4959
      %v5288 = vpack.c.bf16 %v4962, %v4961
      %v5289 = vpack.c.bf16 %v4964, %v4963
      %v5290 = vpack.c.bf16 %v4966, %v4965
      %v5291 = vpack.c.bf16 %v4968, %v4967
      %v5292 = vpack.c.bf16 %v4970, %v4969
      %v5293 = vpack.c.bf16 %v4972, %v4971
      %v5294 = vpack.c.bf16 %v4974, %v4973
      %v5295 = vld [vmem:[%s8] sm:$0xff]
      %v5296 = vld [vmem:[%s8 + $0x8] sm:$0xff]
      %v5297 = vld [vmem:[%s8 + $0x10] sm:$0xff]
      %v5298 = vld [vmem:[%s8 + $0x18] sm:$0xff]
      %v5299 = vld [vmem:[%s8 + $0x20] sm:$0xff]
      %v5300 = vld [vmem:[%s8 + $0x28] sm:$0xff]
      %v5301 = vld [vmem:[%s8 + $0x30] sm:$0xff]
      %v5302 = vld [vmem:[%s8 + $0x38] sm:$0xff]
      %v5303 = vld [vmem:[%s8 + $0x40] sm:$0xff]
      %v5304 = vld [vmem:[%s8 + $0x48] sm:$0xff]
      %v5305 = vld [vmem:[%s8 + $0x50] sm:$0xff]
      %v5306 = vld [vmem:[%s8 + $0x58] sm:$0xff]
      %v5307 = vld [vmem:[%s8 + $0x60] sm:$0xff]
      %v5308 = vld [vmem:[%s8 + $0x68] sm:$0xff]
      %v5309 = vld [vmem:[%s8 + $0x70] sm:$0xff]
      %v5310 = vld [vmem:[%s8 + $0x78] sm:$0xff]
      %v5311 = vld [vmem:[%s8 + $0x80] sm:$0xff]
      %v5312 = vld [vmem:[%s8 + $0x88] sm:$0xff]
      %v5313 = vld [vmem:[%s8 + $0x90] sm:$0xff]
      %v5314 = vld [vmem:[%s8 + $0x98] sm:$0xff]
      %v5315 = vld [vmem:[%s8 + $0xa0] sm:$0xff]
      %v5316 = vld [vmem:[%s8 + $0xa8] sm:$0xff]
      %v5317 = vld [vmem:[%s8 + $0xb0] sm:$0xff]
      %v5318 = vld [vmem:[%s8 + $0xb8] sm:$0xff]
      %v5319 = vld [vmem:[%s8 + $0xc0] sm:$0xff]
      %v5320 = vld [vmem:[%s8 + $0xc8] sm:$0xff]
      %v5321 = vld [vmem:[%s8 + $0xd0] sm:$0xff]
      %v5322 = vld [vmem:[%s8 + $0xd8] sm:$0xff]
      %v5323 = vld [vmem:[%s8 + $0xe0] sm:$0xff]
      %v5324 = vld [vmem:[%s8 + $0xe8] sm:$0xff]
      %v5325 = vld [vmem:[%s8 + $0xf0] sm:$0xff]
      %v5326 = vld [vmem:[%s8 + $0xf8] sm:$0xff]
      %v5327 = vld [vmem:[%s8 + $0x100] sm:$0xff]
      %v5328 = vld [vmem:[%s8 + $0x108] sm:$0xff]
      %v5329 = vld [vmem:[%s8 + $0x110] sm:$0xff]
      %v5330 = vld [vmem:[%s8 + $0x118] sm:$0xff]
      %v5331 = vld [vmem:[%s8 + $0x120] sm:$0xff]
      %v5332 = vld [vmem:[%s8 + $0x128] sm:$0xff]
      %v5333 = vld [vmem:[%s8 + $0x130] sm:$0xff]
      %v5334 = vld [vmem:[%s8 + $0x138] sm:$0xff]
      %v5335 = vld [vmem:[%s8 + $0x140] sm:$0xff]
      %v5336 = vld [vmem:[%s8 + $0x148] sm:$0xff]
      %v5337 = vld [vmem:[%s8 + $0x150] sm:$0xff]
      %v5338 = vld [vmem:[%s8 + $0x158] sm:$0xff]
      %v5339 = vld [vmem:[%s8 + $0x160] sm:$0xff]
      %v5340 = vld [vmem:[%s8 + $0x168] sm:$0xff]
      %v5341 = vld [vmem:[%s8 + $0x170] sm:$0xff]
      %v5342 = vld [vmem:[%s8 + $0x178] sm:$0xff]
      %v5343 = vld [vmem:[%s8 + $0x180] sm:$0xff]
      %v5344 = vld [vmem:[%s8 + $0x188] sm:$0xff]
      %v5345 = vld [vmem:[%s8 + $0x190] sm:$0xff]
      %v5346 = vld [vmem:[%s8 + $0x198] sm:$0xff]
      %v5347 = vld [vmem:[%s8 + $0x1a0] sm:$0xff]
      %v5348 = vld [vmem:[%s8 + $0x1a8] sm:$0xff]
      %v5349 = vld [vmem:[%s8 + $0x1b0] sm:$0xff]
      %v5350 = vld [vmem:[%s8 + $0x1b8] sm:$0xff]
      %v5351 = vld [vmem:[%s8 + $0x1c0] sm:$0xff]
      %v5352 = vld [vmem:[%s8 + $0x1c8] sm:$0xff]
      %v5353 = vld [vmem:[%s8 + $0x1d0] sm:$0xff]
      %v5354 = vld [vmem:[%s8 + $0x1d8] sm:$0xff]
      %v5355 = vld [vmem:[%s8 + $0x1e0] sm:$0xff]
      %v5356 = vld [vmem:[%s8 + $0x1e8] sm:$0xff]
      %v5357 = vld [vmem:[%s8 + $0x1f0] sm:$0xff]
      %v5358 = vld [vmem:[%s8 + $0x1f8] sm:$0xff]
      %5360 = vset.pattern.permute.xlu0 0
      %5361 = vperm.xlu0 %5360, %v5295
      %v5362 = vpop.permute.xlu0 %5361
      %5365 = vset.pattern.permute.xlu0 0
      %5366 = vperm.xlu0 %5365, %v5296
      %v5367 = vpop.permute.xlu0 %5366
      %5370 = vset.pattern.permute.xlu0 0
      %5371 = vperm.xlu0 %5370, %v5297
      %v5372 = vpop.permute.xlu0 %5371
      %5375 = vset.pattern.permute.xlu0 0
      %5376 = vperm.xlu0 %5375, %v5298
      %v5377 = vpop.permute.xlu0 %5376
      %5380 = vset.pattern.permute.xlu0 0
      %5381 = vperm.xlu0 %5380, %v5299
      %v5382 = vpop.permute.xlu0 %5381
      %5385 = vset.pattern.permute.xlu0 0
      %5386 = vperm.xlu0 %5385, %v5300
      %v5387 = vpop.permute.xlu0 %5386
      %5390 = vset.pattern.permute.xlu0 0
      %5391 = vperm.xlu0 %5390, %v5301
      %v5392 = vpop.permute.xlu0 %5391
      %5395 = vset.pattern.permute.xlu0 0
      %5396 = vperm.xlu0 %5395, %v5302
      %v5397 = vpop.permute.xlu0 %5396
      %5400 = vset.pattern.permute.xlu0 0
      %5401 = vperm.xlu0 %5400, %v5303
      %v5402 = vpop.permute.xlu0 %5401
      %5405 = vset.pattern.permute.xlu0 0
      %5406 = vperm.xlu0 %5405, %v5304
      %v5407 = vpop.permute.xlu0 %5406
      %5410 = vset.pattern.permute.xlu0 0
      %5411 = vperm.xlu0 %5410, %v5305
      %v5412 = vpop.permute.xlu0 %5411
      %5415 = vset.pattern.permute.xlu0 0
      %5416 = vperm.xlu0 %5415, %v5306
      %v5417 = vpop.permute.xlu0 %5416
      %5420 = vset.pattern.permute.xlu0 0
      %5421 = vperm.xlu0 %5420, %v5307
      %v5422 = vpop.permute.xlu0 %5421
      %5425 = vset.pattern.permute.xlu0 0
      %5426 = vperm.xlu0 %5425, %v5308
      %v5427 = vpop.permute.xlu0 %5426
      %5430 = vset.pattern.permute.xlu0 0
      %5431 = vperm.xlu0 %5430, %v5309
      %v5432 = vpop.permute.xlu0 %5431
      %5435 = vset.pattern.permute.xlu0 0
      %5436 = vperm.xlu0 %5435, %v5310
      %v5437 = vpop.permute.xlu0 %5436
      %5440 = vset.pattern.permute.xlu0 0
      %5441 = vperm.xlu0 %5440, %v5311
      %v5442 = vpop.permute.xlu0 %5441
      %5445 = vset.pattern.permute.xlu0 0
      %5446 = vperm.xlu0 %5445, %v5312
      %v5447 = vpop.permute.xlu0 %5446
      %5450 = vset.pattern.permute.xlu0 0
      %5451 = vperm.xlu0 %5450, %v5313
      %v5452 = vpop.permute.xlu0 %5451
      %5455 = vset.pattern.permute.xlu0 0
      %5456 = vperm.xlu0 %5455, %v5314
      %v5457 = vpop.permute.xlu0 %5456
      %5460 = vset.pattern.permute.xlu0 0
      %5461 = vperm.xlu0 %5460, %v5315
      %v5462 = vpop.permute.xlu0 %5461
      %5465 = vset.pattern.permute.xlu0 0
      %5466 = vperm.xlu0 %5465, %v5316
      %v5467 = vpop.permute.xlu0 %5466
      %5470 = vset.pattern.permute.xlu0 0
      %5471 = vperm.xlu0 %5470, %v5317
      %v5472 = vpop.permute.xlu0 %5471
      %5475 = vset.pattern.permute.xlu0 0
      %5476 = vperm.xlu0 %5475, %v5318
      %v5477 = vpop.permute.xlu0 %5476
      %5480 = vset.pattern.permute.xlu0 0
      %5481 = vperm.xlu0 %5480, %v5319
      %v5482 = vpop.permute.xlu0 %5481
      %5485 = vset.pattern.permute.xlu0 0
      %5486 = vperm.xlu0 %5485, %v5320
      %v5487 = vpop.permute.xlu0 %5486
      %5490 = vset.pattern.permute.xlu0 0
      %5491 = vperm.xlu0 %5490, %v5321
      %v5492 = vpop.permute.xlu0 %5491
      %5495 = vset.pattern.permute.xlu0 0
      %5496 = vperm.xlu0 %5495, %v5322
      %v5497 = vpop.permute.xlu0 %5496
      %5500 = vset.pattern.permute.xlu0 0
      %5501 = vperm.xlu0 %5500, %v5323
      %v5502 = vpop.permute.xlu0 %5501
      %5505 = vset.pattern.permute.xlu0 0
      %5506 = vperm.xlu0 %5505, %v5324
      %v5507 = vpop.permute.xlu0 %5506
      %5510 = vset.pattern.permute.xlu0 0
      %5511 = vperm.xlu0 %5510, %v5325
      %v5512 = vpop.permute.xlu0 %5511
      %5515 = vset.pattern.permute.xlu0 0
      %5516 = vperm.xlu0 %5515, %v5326
      %v5517 = vpop.permute.xlu0 %5516
      %5520 = vset.pattern.permute.xlu0 0
      %5521 = vperm.xlu0 %5520, %v5327
      %v5522 = vpop.permute.xlu0 %5521
      %5525 = vset.pattern.permute.xlu0 0
      %5526 = vperm.xlu0 %5525, %v5328
      %v5527 = vpop.permute.xlu0 %5526
      %5530 = vset.pattern.permute.xlu0 0
      %5531 = vperm.xlu0 %5530, %v5329
      %v5532 = vpop.permute.xlu0 %5531
      %5535 = vset.pattern.permute.xlu0 0
      %5536 = vperm.xlu0 %5535, %v5330
      %v5537 = vpop.permute.xlu0 %5536
      %5540 = vset.pattern.permute.xlu0 0
      %5541 = vperm.xlu0 %5540, %v5331
      %v5542 = vpop.permute.xlu0 %5541
      %5545 = vset.pattern.permute.xlu0 0
      %5546 = vperm.xlu0 %5545, %v5332
      %v5547 = vpop.permute.xlu0 %5546
      %5550 = vset.pattern.permute.xlu0 0
      %5551 = vperm.xlu0 %5550, %v5333
      %v5552 = vpop.permute.xlu0 %5551
      %5555 = vset.pattern.permute.xlu0 0
      %5556 = vperm.xlu0 %5555, %v5334
      %v5557 = vpop.permute.xlu0 %5556
      %5560 = vset.pattern.permute.xlu0 0
      %5561 = vperm.xlu0 %5560, %v5335
      %v5562 = vpop.permute.xlu0 %5561
      %5565 = vset.pattern.permute.xlu0 0
      %5566 = vperm.xlu0 %5565, %v5336
      %v5567 = vpop.permute.xlu0 %5566
      %5570 = vset.pattern.permute.xlu0 0
      %5571 = vperm.xlu0 %5570, %v5337
      %v5572 = vpop.permute.xlu0 %5571
      %5575 = vset.pattern.permute.xlu0 0
      %5576 = vperm.xlu0 %5575, %v5338
      %v5577 = vpop.permute.xlu0 %5576
      %5580 = vset.pattern.permute.xlu0 0
      %5581 = vperm.xlu0 %5580, %v5339
      %v5582 = vpop.permute.xlu0 %5581
      %5585 = vset.pattern.permute.xlu0 0
      %5586 = vperm.xlu0 %5585, %v5340
      %v5587 = vpop.permute.xlu0 %5586
      %5590 = vset.pattern.permute.xlu0 0
      %5591 = vperm.xlu0 %5590, %v5341
      %v5592 = vpop.permute.xlu0 %5591
      %5595 = vset.pattern.permute.xlu0 0
      %5596 = vperm.xlu0 %5595, %v5342
      %v5597 = vpop.permute.xlu0 %5596
      %5600 = vset.pattern.permute.xlu0 0
      %5601 = vperm.xlu0 %5600, %v5343
      %v5602 = vpop.permute.xlu0 %5601
      %5605 = vset.pattern.permute.xlu0 0
      %5606 = vperm.xlu0 %5605, %v5344
      %v5607 = vpop.permute.xlu0 %5606
      %5610 = vset.pattern.permute.xlu0 0
      %5611 = vperm.xlu0 %5610, %v5345
      %v5612 = vpop.permute.xlu0 %5611
      %5615 = vset.pattern.permute.xlu0 0
      %5616 = vperm.xlu0 %5615, %v5346
      %v5617 = vpop.permute.xlu0 %5616
      %5620 = vset.pattern.permute.xlu0 0
      %5621 = vperm.xlu0 %5620, %v5347
      %v5622 = vpop.permute.xlu0 %5621
      %5625 = vset.pattern.permute.xlu0 0
      %5626 = vperm.xlu0 %5625, %v5348
      %v5627 = vpop.permute.xlu0 %5626
      %5630 = vset.pattern.permute.xlu0 0
      %5631 = vperm.xlu0 %5630, %v5349
      %v5632 = vpop.permute.xlu0 %5631
      %5635 = vset.pattern.permute.xlu0 0
      %5636 = vperm.xlu0 %5635, %v5350
      %v5637 = vpop.permute.xlu0 %5636
      %5640 = vset.pattern.permute.xlu0 0
      %5641 = vperm.xlu0 %5640, %v5351
      %v5642 = vpop.permute.xlu0 %5641
      %5645 = vset.pattern.permute.xlu0 0
      %5646 = vperm.xlu0 %5645, %v5352
      %v5647 = vpop.permute.xlu0 %5646
      %5650 = vset.pattern.permute.xlu0 0
      %5651 = vperm.xlu0 %5650, %v5353
      %v5652 = vpop.permute.xlu0 %5651
      %5655 = vset.pattern.permute.xlu0 0
      %5656 = vperm.xlu0 %5655, %v5354
      %v5657 = vpop.permute.xlu0 %5656
      %5660 = vset.pattern.permute.xlu0 0
      %5661 = vperm.xlu0 %5660, %v5355
      %v5662 = vpop.permute.xlu0 %5661
      %5665 = vset.pattern.permute.xlu0 0
      %5666 = vperm.xlu0 %5665, %v5356
      %v5667 = vpop.permute.xlu0 %5666
      %5670 = vset.pattern.permute.xlu0 0
      %5671 = vperm.xlu0 %5670, %v5357
      %v5672 = vpop.permute.xlu0 %5671
      %5675 = vset.pattern.permute.xlu0 0
      %5676 = vperm.xlu0 %5675, %v5358
      %v5677 = vpop.permute.xlu0 %5676
      %v5935 = vunpack.c.l.b16 %v4975
      %v5936 = vunpack.c.h.b16 %v4975
      %v5937 = vunpack.c.l.b16 %v4976
      %v5938 = vunpack.c.h.b16 %v4976
      %v5939 = vunpack.c.l.b16 %v4977
      %v5940 = vunpack.c.h.b16 %v4977
      %v5941 = vunpack.c.l.b16 %v4978
      %v5942 = vunpack.c.h.b16 %v4978
      %v5943 = vunpack.c.l.b16 %v4979
      %v5944 = vunpack.c.h.b16 %v4979
      %v5945 = vunpack.c.l.b16 %v4980
      %v5946 = vunpack.c.h.b16 %v4980
      %v5947 = vunpack.c.l.b16 %v4981
      %v5948 = vunpack.c.h.b16 %v4981
      %v5949 = vunpack.c.l.b16 %v4982
      %v5950 = vunpack.c.h.b16 %v4982
      %v5951 = vunpack.c.l.b16 %v4983
      %v5952 = vunpack.c.h.b16 %v4983
      %v5953 = vunpack.c.l.b16 %v4984
      %v5954 = vunpack.c.h.b16 %v4984
      %v5955 = vunpack.c.l.b16 %v4985
      %v5956 = vunpack.c.h.b16 %v4985
      %v5957 = vunpack.c.l.b16 %v4986
      %v5958 = vunpack.c.h.b16 %v4986
      %v5959 = vunpack.c.l.b16 %v4987
      %v5960 = vunpack.c.h.b16 %v4987
      %v5961 = vunpack.c.l.b16 %v4988
      %v5962 = vunpack.c.h.b16 %v4988
      %v5963 = vunpack.c.l.b16 %v4989
      %v5964 = vunpack.c.h.b16 %v4989
      %v5965 = vunpack.c.l.b16 %v4990
      %v5966 = vunpack.c.h.b16 %v4990
      %v5967 = vunpack.c.l.b16 %v4991
      %v5968 = vunpack.c.h.b16 %v4991
      %v5969 = vunpack.c.l.b16 %v4992
      %v5970 = vunpack.c.h.b16 %v4992
      %v5971 = vunpack.c.l.b16 %v4993
      %v5972 = vunpack.c.h.b16 %v4993
      %v5973 = vunpack.c.l.b16 %v4994
      %v5974 = vunpack.c.h.b16 %v4994
      %v5975 = vunpack.c.l.b16 %v4995
      %v5976 = vunpack.c.h.b16 %v4995
      %v5977 = vunpack.c.l.b16 %v4996
      %v5978 = vunpack.c.h.b16 %v4996
      %v5979 = vunpack.c.l.b16 %v4997
      %v5980 = vunpack.c.h.b16 %v4997
      %v5981 = vunpack.c.l.b16 %v4998
      %v5982 = vunpack.c.h.b16 %v4998
      %v5983 = vunpack.c.l.b16 %v4999
      %v5984 = vunpack.c.h.b16 %v4999
      %v5985 = vunpack.c.l.b16 %v5000
      %v5986 = vunpack.c.h.b16 %v5000
      %v5987 = vunpack.c.l.b16 %v5001
      %v5988 = vunpack.c.h.b16 %v5001
      %v5989 = vunpack.c.l.b16 %v5002
      %v5990 = vunpack.c.h.b16 %v5002
      %v5991 = vunpack.c.l.b16 %v5003
      %v5992 = vunpack.c.h.b16 %v5003
      %v5993 = vunpack.c.l.b16 %v5004
      %v5994 = vunpack.c.h.b16 %v5004
      %v5995 = vunpack.c.l.b16 %v5005
      %v5996 = vunpack.c.h.b16 %v5005
      %v5997 = vunpack.c.l.b16 %v5006
      %v5998 = vunpack.c.h.b16 %v5006
      %v5999 = vunpack.c.l.b16 %v5007
      %v6000 = vunpack.c.h.b16 %v5007
      %v6001 = vunpack.c.l.b16 %v5008
      %v6002 = vunpack.c.h.b16 %v5008
      %v6003 = vunpack.c.l.b16 %v5009
      %v6004 = vunpack.c.h.b16 %v5009
      %v6005 = vunpack.c.l.b16 %v5010
      %v6006 = vunpack.c.h.b16 %v5010
      %v6007 = vunpack.c.l.b16 %v5011
      %v6008 = vunpack.c.h.b16 %v5011
      %v6009 = vunpack.c.l.b16 %v5012
      %v6010 = vunpack.c.h.b16 %v5012
      %v6011 = vunpack.c.l.b16 %v5013
      %v6012 = vunpack.c.h.b16 %v5013
      %v6013 = vunpack.c.l.b16 %v5014
      %v6014 = vunpack.c.h.b16 %v5014
      %v6015 = vunpack.c.l.b16 %v5015
      %v6016 = vunpack.c.h.b16 %v5015
      %v6017 = vunpack.c.l.b16 %v5016
      %v6018 = vunpack.c.h.b16 %v5016
      %v6019 = vunpack.c.l.b16 %v5017
      %v6020 = vunpack.c.h.b16 %v5017
      %v6021 = vunpack.c.l.b16 %v5018
      %v6022 = vunpack.c.h.b16 %v5018
      %v6023 = vunpack.c.l.b16 %v5019
      %v6024 = vunpack.c.h.b16 %v5019
      %v6025 = vunpack.c.l.b16 %v5020
      %v6026 = vunpack.c.h.b16 %v5020
      %v6027 = vunpack.c.l.b16 %v5021
      %v6028 = vunpack.c.h.b16 %v5021
      %v6029 = vunpack.c.l.b16 %v5022
      %v6030 = vunpack.c.h.b16 %v5022
      %v6031 = vunpack.c.l.b16 %v5023
      %v6032 = vunpack.c.h.b16 %v5023
      %v6033 = vunpack.c.l.b16 %v5024
      %v6034 = vunpack.c.h.b16 %v5024
      %v6035 = vunpack.c.l.b16 %v5025
      %v6036 = vunpack.c.h.b16 %v5025
      %v6037 = vunpack.c.l.b16 %v5026
      %v6038 = vunpack.c.h.b16 %v5026
      %v6039 = vunpack.c.l.b16 %v5027
      %v6040 = vunpack.c.h.b16 %v5027
      %v6041 = vunpack.c.l.b16 %v5028
      %v6042 = vunpack.c.h.b16 %v5028
      %v6043 = vunpack.c.l.b16 %v5029
      %v6044 = vunpack.c.h.b16 %v5029
      %v6045 = vunpack.c.l.b16 %v5030
      %v6046 = vunpack.c.h.b16 %v5030
      %v6047 = vunpack.c.l.b16 %v5031
      %v6048 = vunpack.c.h.b16 %v5031
      %v6049 = vunpack.c.l.b16 %v5032
      %v6050 = vunpack.c.h.b16 %v5032
      %v6051 = vunpack.c.l.b16 %v5033
      %v6052 = vunpack.c.h.b16 %v5033
      %v6053 = vunpack.c.l.b16 %v5034
      %v6054 = vunpack.c.h.b16 %v5034
      %v6055 = vunpack.c.l.b16 %v5035
      %v6056 = vunpack.c.h.b16 %v5035
      %v6057 = vunpack.c.l.b16 %v5036
      %v6058 = vunpack.c.h.b16 %v5036
      %v6059 = vunpack.c.l.b16 %v5037
      %v6060 = vunpack.c.h.b16 %v5037
      %v6061 = vunpack.c.l.b16 %v5038
      %v6062 = vunpack.c.h.b16 %v5038
      %v6063 = vunpack.c.l.b16 %v5039
      %v6064 = vunpack.c.h.b16 %v5039
      %v6065 = vunpack.c.l.b16 %v5040
      %v6066 = vunpack.c.h.b16 %v5040
      %v6067 = vunpack.c.l.b16 %v5041
      %v6068 = vunpack.c.h.b16 %v5041
      %v6069 = vunpack.c.l.b16 %v5042
      %v6070 = vunpack.c.h.b16 %v5042
      %v6071 = vunpack.c.l.b16 %v5043
      %v6072 = vunpack.c.h.b16 %v5043
      %v6073 = vunpack.c.l.b16 %v5044
      %v6074 = vunpack.c.h.b16 %v5044
      %v6075 = vunpack.c.l.b16 %v5045
      %v6076 = vunpack.c.h.b16 %v5045
      %v6077 = vunpack.c.l.b16 %v5046
      %v6078 = vunpack.c.h.b16 %v5046
      %v6079 = vunpack.c.l.b16 %v5047
      %v6080 = vunpack.c.h.b16 %v5047
      %v6081 = vunpack.c.l.b16 %v5048
      %v6082 = vunpack.c.h.b16 %v5048
      %v6083 = vunpack.c.l.b16 %v5049
      %v6084 = vunpack.c.h.b16 %v5049
      %v6085 = vunpack.c.l.b16 %v5050
      %v6086 = vunpack.c.h.b16 %v5050
      %v6087 = vunpack.c.l.b16 %v5051
      %v6088 = vunpack.c.h.b16 %v5051
      %v6089 = vunpack.c.l.b16 %v5052
      %v6090 = vunpack.c.h.b16 %v5052
      %v6091 = vunpack.c.l.b16 %v5053
      %v6092 = vunpack.c.h.b16 %v5053
      %v6093 = vunpack.c.l.b16 %v5054
      %v6094 = vunpack.c.h.b16 %v5054
      %v6095 = vunpack.c.l.b16 %v5055
      %v6096 = vunpack.c.h.b16 %v5055
      %v6097 = vunpack.c.l.b16 %v5056
      %v6098 = vunpack.c.h.b16 %v5056
      %v6099 = vunpack.c.l.b16 %v5057
      %v6100 = vunpack.c.h.b16 %v5057
      %v6101 = vunpack.c.l.b16 %v5058
      %v6102 = vunpack.c.h.b16 %v5058
      %v6103 = vunpack.c.l.b16 %v5059
      %v6104 = vunpack.c.h.b16 %v5059
      %v6105 = vunpack.c.l.b16 %v5060
      %v6106 = vunpack.c.h.b16 %v5060
      %v6107 = vunpack.c.l.b16 %v5061
      %v6108 = vunpack.c.h.b16 %v5061
      %v6109 = vunpack.c.l.b16 %v5062
      %v6110 = vunpack.c.h.b16 %v5062
      %v6111 = vunpack.c.l.b16 %v5063
      %v6112 = vunpack.c.h.b16 %v5063
      %v6113 = vunpack.c.l.b16 %v5064
      %v6114 = vunpack.c.h.b16 %v5064
      %v6115 = vunpack.c.l.b16 %v5065
      %v6116 = vunpack.c.h.b16 %v5065
      %v6117 = vunpack.c.l.b16 %v5066
      %v6118 = vunpack.c.h.b16 %v5066
      %v6119 = vunpack.c.l.b16 %v5067
      %v6120 = vunpack.c.h.b16 %v5067
      %v6121 = vunpack.c.l.b16 %v5068
      %v6122 = vunpack.c.h.b16 %v5068
      %v6123 = vunpack.c.l.b16 %v5069
      %v6124 = vunpack.c.h.b16 %v5069
      %v6125 = vunpack.c.l.b16 %v5070
      %v6126 = vunpack.c.h.b16 %v5070
      %v6127 = vunpack.c.l.b16 %v5071
      %v6128 = vunpack.c.h.b16 %v5071
      %v6129 = vunpack.c.l.b16 %v5072
      %v6130 = vunpack.c.h.b16 %v5072
      %v6131 = vunpack.c.l.b16 %v5073
      %v6132 = vunpack.c.h.b16 %v5073
      %v6133 = vunpack.c.l.b16 %v5074
      %v6134 = vunpack.c.h.b16 %v5074
      %v6135 = vunpack.c.l.b16 %v5075
      %v6136 = vunpack.c.h.b16 %v5075
      %v6137 = vunpack.c.l.b16 %v5076
      %v6138 = vunpack.c.h.b16 %v5076
      %v6139 = vunpack.c.l.b16 %v5077
      %v6140 = vunpack.c.h.b16 %v5077
      %v6141 = vunpack.c.l.b16 %v5078
      %v6142 = vunpack.c.h.b16 %v5078
      %v6143 = vunpack.c.l.b16 %v5079
      %v6144 = vunpack.c.h.b16 %v5079
      %v6145 = vunpack.c.l.b16 %v5080
      %v6146 = vunpack.c.h.b16 %v5080
      %v6147 = vunpack.c.l.b16 %v5081
      %v6148 = vunpack.c.h.b16 %v5081
      %v6149 = vunpack.c.l.b16 %v5082
      %v6150 = vunpack.c.h.b16 %v5082
      %v6151 = vunpack.c.l.b16 %v5083
      %v6152 = vunpack.c.h.b16 %v5083
      %v6153 = vunpack.c.l.b16 %v5084
      %v6154 = vunpack.c.h.b16 %v5084
      %v6155 = vunpack.c.l.b16 %v5085
      %v6156 = vunpack.c.h.b16 %v5085
      %v6157 = vunpack.c.l.b16 %v5086
      %v6158 = vunpack.c.h.b16 %v5086
      %v6159 = vunpack.c.l.b16 %v5087
      %v6160 = vunpack.c.h.b16 %v5087
      %v6161 = vunpack.c.l.b16 %v5088
      %v6162 = vunpack.c.h.b16 %v5088
      %v6163 = vunpack.c.l.b16 %v5089
      %v6164 = vunpack.c.h.b16 %v5089
      %v6165 = vunpack.c.l.b16 %v5090
      %v6166 = vunpack.c.h.b16 %v5090
      %v6167 = vunpack.c.l.b16 %v5091
      %v6168 = vunpack.c.h.b16 %v5091
      %v6169 = vunpack.c.l.b16 %v5092
      %v6170 = vunpack.c.h.b16 %v5092
      %v6171 = vunpack.c.l.b16 %v5093
      %v6172 = vunpack.c.h.b16 %v5093
      %v6173 = vunpack.c.l.b16 %v5094
      %v6174 = vunpack.c.h.b16 %v5094
      %v6175 = vunpack.c.l.b16 %v5095
      %v6176 = vunpack.c.h.b16 %v5095
      %v6177 = vunpack.c.l.b16 %v5096
      %v6178 = vunpack.c.h.b16 %v5096
      %v6179 = vunpack.c.l.b16 %v5097
      %v6180 = vunpack.c.h.b16 %v5097
      %v6181 = vunpack.c.l.b16 %v5098
      %v6182 = vunpack.c.h.b16 %v5098
      %v6183 = vunpack.c.l.b16 %v5099
      %v6184 = vunpack.c.h.b16 %v5099
      %v6185 = vunpack.c.l.b16 %v5100
      %v6186 = vunpack.c.h.b16 %v5100
      %v6187 = vunpack.c.l.b16 %v5101
      %v6188 = vunpack.c.h.b16 %v5101
      %v6189 = vunpack.c.l.b16 %v5102
      %v6190 = vunpack.c.h.b16 %v5102
      %v6191 = vunpack.c.l.b16 %v5103
      %v6192 = vunpack.c.h.b16 %v5103
      %v6193 = vunpack.c.l.b16 %v5104
      %v6194 = vunpack.c.h.b16 %v5104
      %v6195 = vunpack.c.l.b16 %v5105
      %v6196 = vunpack.c.h.b16 %v5105
      %v6197 = vunpack.c.l.b16 %v5106
      %v6198 = vunpack.c.h.b16 %v5106
      %v6199 = vunpack.c.l.b16 %v5107
      %v6200 = vunpack.c.h.b16 %v5107
      %v6201 = vunpack.c.l.b16 %v5108
      %v6202 = vunpack.c.h.b16 %v5108
      %v6203 = vunpack.c.l.b16 %v5109
      %v6204 = vunpack.c.h.b16 %v5109
      %v6205 = vunpack.c.l.b16 %v5110
      %v6206 = vunpack.c.h.b16 %v5110
      %v6207 = vunpack.c.l.b16 %v5111
      %v6208 = vunpack.c.h.b16 %v5111
      %v6209 = vunpack.c.l.b16 %v5112
      %v6210 = vunpack.c.h.b16 %v5112
      %v6211 = vunpack.c.l.b16 %v5113
      %v6212 = vunpack.c.h.b16 %v5113
      %v6213 = vunpack.c.l.b16 %v5114
      %v6214 = vunpack.c.h.b16 %v5114
      %v6215 = vunpack.c.l.b16 %v5115
      %v6216 = vunpack.c.h.b16 %v5115
      %v6217 = vunpack.c.l.b16 %v5116
      %v6218 = vunpack.c.h.b16 %v5116
      %v6219 = vunpack.c.l.b16 %v5117
      %v6220 = vunpack.c.h.b16 %v5117
      %v6221 = vunpack.c.l.b16 %v5118
      %v6222 = vunpack.c.h.b16 %v5118
      %v6223 = vunpack.c.l.b16 %v5119
      %v6224 = vunpack.c.h.b16 %v5119
      %v6225 = vunpack.c.l.b16 %v5120
      %v6226 = vunpack.c.h.b16 %v5120
      %v6227 = vunpack.c.l.b16 %v5121
      %v6228 = vunpack.c.h.b16 %v5121
      %v6229 = vunpack.c.l.b16 %v5122
      %v6230 = vunpack.c.h.b16 %v5122
      %v6231 = vunpack.c.l.b16 %v5123
      %v6232 = vunpack.c.h.b16 %v5123
      %v6233 = vunpack.c.l.b16 %v5124
      %v6234 = vunpack.c.h.b16 %v5124
      %v6235 = vunpack.c.l.b16 %v5125
      %v6236 = vunpack.c.h.b16 %v5125
      %v6237 = vunpack.c.l.b16 %v5126
      %v6238 = vunpack.c.h.b16 %v5126
      %v6239 = vunpack.c.l.b16 %v5127
      %v6240 = vunpack.c.h.b16 %v5127
      %v6241 = vunpack.c.l.b16 %v5128
      %v6242 = vunpack.c.h.b16 %v5128
      %v6243 = vunpack.c.l.b16 %v5129
      %v6244 = vunpack.c.h.b16 %v5129
      %v6245 = vunpack.c.l.b16 %v5130
      %v6246 = vunpack.c.h.b16 %v5130
      %v6247 = vunpack.c.l.b16 %v5131
      %v6248 = vunpack.c.h.b16 %v5131
      %v6249 = vunpack.c.l.b16 %v5132
      %v6250 = vunpack.c.h.b16 %v5132
      %v6251 = vunpack.c.l.b16 %v5133
      %v6252 = vunpack.c.h.b16 %v5133
      %v6253 = vunpack.c.l.b16 %v5134
      %v6254 = vunpack.c.h.b16 %v5134
      %v6255 = vunpack.c.l.b16 %v5135
      %v6256 = vunpack.c.h.b16 %v5135
      %v6257 = vunpack.c.l.b16 %v5136
      %v6258 = vunpack.c.h.b16 %v5136
      %v6259 = vunpack.c.l.b16 %v5137
      %v6260 = vunpack.c.h.b16 %v5137
      %v6261 = vunpack.c.l.b16 %v5138
      %v6262 = vunpack.c.h.b16 %v5138
      %v6263 = vunpack.c.l.b16 %v5139
      %v6264 = vunpack.c.h.b16 %v5139
      %v6265 = vunpack.c.l.b16 %v5140
      %v6266 = vunpack.c.h.b16 %v5140
      %v6267 = vunpack.c.l.b16 %v5141
      %v6268 = vunpack.c.h.b16 %v5141
      %v6269 = vunpack.c.l.b16 %v5142
      %v6270 = vunpack.c.h.b16 %v5142
      %v6271 = vunpack.c.l.b16 %v5143
      %v6272 = vunpack.c.h.b16 %v5143
      %v6273 = vunpack.c.l.b16 %v5144
      %v6274 = vunpack.c.h.b16 %v5144
      %v6275 = vunpack.c.l.b16 %v5145
      %v6276 = vunpack.c.h.b16 %v5145
      %v6277 = vunpack.c.l.b16 %v5146
      %v6278 = vunpack.c.h.b16 %v5146
      %v6279 = vunpack.c.l.b16 %v5147
      %v6280 = vunpack.c.h.b16 %v5147
      %v6281 = vunpack.c.l.b16 %v5148
      %v6282 = vunpack.c.h.b16 %v5148
      %v6283 = vunpack.c.l.b16 %v5149
      %v6284 = vunpack.c.h.b16 %v5149
      %v6285 = vunpack.c.l.b16 %v5150
      %v6286 = vunpack.c.h.b16 %v5150
      %v6287 = vunpack.c.l.b16 %v5151
      %v6288 = vunpack.c.h.b16 %v5151
      %v6289 = vunpack.c.l.b16 %v5152
      %v6290 = vunpack.c.h.b16 %v5152
      %v6291 = vunpack.c.l.b16 %v5153
      %v6292 = vunpack.c.h.b16 %v5153
      %v6293 = vunpack.c.l.b16 %v5154
      %v6294 = vunpack.c.h.b16 %v5154
      %v6295 = vunpack.c.l.b16 %v5155
      %v6296 = vunpack.c.h.b16 %v5155
      %v6297 = vunpack.c.l.b16 %v5156
      %v6298 = vunpack.c.h.b16 %v5156
      %v6299 = vunpack.c.l.b16 %v5157
      %v6300 = vunpack.c.h.b16 %v5157
      %v6301 = vunpack.c.l.b16 %v5158
      %v6302 = vunpack.c.h.b16 %v5158
      %v6303 = vunpack.c.l.b16 %v5159
      %v6304 = vunpack.c.h.b16 %v5159
      %v6305 = vunpack.c.l.b16 %v5160
      %v6306 = vunpack.c.h.b16 %v5160
      %v6307 = vunpack.c.l.b16 %v5161
      %v6308 = vunpack.c.h.b16 %v5161
      %v6309 = vunpack.c.l.b16 %v5162
      %v6310 = vunpack.c.h.b16 %v5162
      %v6311 = vunpack.c.l.b16 %v5163
      %v6312 = vunpack.c.h.b16 %v5163
      %v6313 = vunpack.c.l.b16 %v5164
      %v6314 = vunpack.c.h.b16 %v5164
      %v6315 = vunpack.c.l.b16 %v5165
      %v6316 = vunpack.c.h.b16 %v5165
      %v6317 = vunpack.c.l.b16 %v5166
      %v6318 = vunpack.c.h.b16 %v5166
      %v6319 = vunpack.c.l.b16 %v5167
      %v6320 = vunpack.c.h.b16 %v5167
      %v6321 = vunpack.c.l.b16 %v5168
      %v6322 = vunpack.c.h.b16 %v5168
      %v6323 = vunpack.c.l.b16 %v5169
      %v6324 = vunpack.c.h.b16 %v5169
      %v6325 = vunpack.c.l.b16 %v5170
      %v6326 = vunpack.c.h.b16 %v5170
      %v6327 = vunpack.c.l.b16 %v5171
      %v6328 = vunpack.c.h.b16 %v5171
      %v6329 = vunpack.c.l.b16 %v5172
      %v6330 = vunpack.c.h.b16 %v5172
      %v6331 = vunpack.c.l.b16 %v5173
      %v6332 = vunpack.c.h.b16 %v5173
      %v6333 = vunpack.c.l.b16 %v5174
      %v6334 = vunpack.c.h.b16 %v5174
      %v6335 = vunpack.c.l.b16 %v5175
      %v6336 = vunpack.c.h.b16 %v5175
      %v6337 = vunpack.c.l.b16 %v5176
      %v6338 = vunpack.c.h.b16 %v5176
      %v6339 = vunpack.c.l.b16 %v5177
      %v6340 = vunpack.c.h.b16 %v5177
      %v6341 = vunpack.c.l.b16 %v5178
      %v6342 = vunpack.c.h.b16 %v5178
      %v6343 = vunpack.c.l.b16 %v5179
      %v6344 = vunpack.c.h.b16 %v5179
      %v6345 = vunpack.c.l.b16 %v5180
      %v6346 = vunpack.c.h.b16 %v5180
      %v6347 = vunpack.c.l.b16 %v5181
      %v6348 = vunpack.c.h.b16 %v5181
      %v6349 = vunpack.c.l.b16 %v5182
      %v6350 = vunpack.c.h.b16 %v5182
      %v6351 = vunpack.c.l.b16 %v5183
      %v6352 = vunpack.c.h.b16 %v5183
      %v6353 = vunpack.c.l.b16 %v5184
      %v6354 = vunpack.c.h.b16 %v5184
      %v6355 = vunpack.c.l.b16 %v5185
      %v6356 = vunpack.c.h.b16 %v5185
      %v6357 = vunpack.c.l.b16 %v5186
      %v6358 = vunpack.c.h.b16 %v5186
      %v6359 = vunpack.c.l.b16 %v5187
      %v6360 = vunpack.c.h.b16 %v5187
      %v6361 = vunpack.c.l.b16 %v5188
      %v6362 = vunpack.c.h.b16 %v5188
      %v6363 = vunpack.c.l.b16 %v5189
      %v6364 = vunpack.c.h.b16 %v5189
      %v6365 = vunpack.c.l.b16 %v5190
      %v6366 = vunpack.c.h.b16 %v5190
      %v6367 = vunpack.c.l.b16 %v5191
      %v6368 = vunpack.c.h.b16 %v5191
      %v6369 = vunpack.c.l.b16 %v5192
      %v6370 = vunpack.c.h.b16 %v5192
      %v6371 = vunpack.c.l.b16 %v5193
      %v6372 = vunpack.c.h.b16 %v5193
      %v6373 = vunpack.c.l.b16 %v5194
      %v6374 = vunpack.c.h.b16 %v5194
      %v6375 = vunpack.c.l.b16 %v5195
      %v6376 = vunpack.c.h.b16 %v5195
      %v6377 = vunpack.c.l.b16 %v5196
      %v6378 = vunpack.c.h.b16 %v5196
      %v6379 = vunpack.c.l.b16 %v5197
      %v6380 = vunpack.c.h.b16 %v5197
      %v6381 = vunpack.c.l.b16 %v5198
      %v6382 = vunpack.c.h.b16 %v5198
      %v6383 = vunpack.c.l.b16 %v5199
      %v6384 = vunpack.c.h.b16 %v5199
      %v6385 = vunpack.c.l.b16 %v5200
      %v6386 = vunpack.c.h.b16 %v5200
      %v6387 = vunpack.c.l.b16 %v5201
      %v6388 = vunpack.c.h.b16 %v5201
      %v6389 = vunpack.c.l.b16 %v5202
      %v6390 = vunpack.c.h.b16 %v5202
      %v6391 = vunpack.c.l.b16 %v5203
      %v6392 = vunpack.c.h.b16 %v5203
      %v6393 = vunpack.c.l.b16 %v5204
      %v6394 = vunpack.c.h.b16 %v5204
      %v6395 = vunpack.c.l.b16 %v5205
      %v6396 = vunpack.c.h.b16 %v5205
      %v6397 = vunpack.c.l.b16 %v5206
      %v6398 = vunpack.c.h.b16 %v5206
      %v6399 = vunpack.c.l.b16 %v5207
      %v6400 = vunpack.c.h.b16 %v5207
      %v6401 = vunpack.c.l.b16 %v5208
      %v6402 = vunpack.c.h.b16 %v5208
      %v6403 = vunpack.c.l.b16 %v5209
      %v6404 = vunpack.c.h.b16 %v5209
      %v6405 = vunpack.c.l.b16 %v5210
      %v6406 = vunpack.c.h.b16 %v5210
      %v6407 = vunpack.c.l.b16 %v5211
      %v6408 = vunpack.c.h.b16 %v5211
      %v6409 = vunpack.c.l.b16 %v5212
      %v6410 = vunpack.c.h.b16 %v5212
      %v6411 = vunpack.c.l.b16 %v5213
      %v6412 = vunpack.c.h.b16 %v5213
      %v6413 = vunpack.c.l.b16 %v5214
      %v6414 = vunpack.c.h.b16 %v5214
      %v6415 = vunpack.c.l.b16 %v5215
      %v6416 = vunpack.c.h.b16 %v5215
      %v6417 = vunpack.c.l.b16 %v5216
      %v6418 = vunpack.c.h.b16 %v5216
      %v6419 = vunpack.c.l.b16 %v5217
      %v6420 = vunpack.c.h.b16 %v5217
      %v6421 = vunpack.c.l.b16 %v5218
      %v6422 = vunpack.c.h.b16 %v5218
      %v6423 = vunpack.c.l.b16 %v5219
      %v6424 = vunpack.c.h.b16 %v5219
      %v6425 = vunpack.c.l.b16 %v5220
      %v6426 = vunpack.c.h.b16 %v5220
      %v6427 = vunpack.c.l.b16 %v5221
      %v6428 = vunpack.c.h.b16 %v5221
      %v6429 = vunpack.c.l.b16 %v5222
      %v6430 = vunpack.c.h.b16 %v5222
      %v6431 = vunpack.c.l.b16 %v5223
      %v6432 = vunpack.c.h.b16 %v5223
      %v6433 = vunpack.c.l.b16 %v5224
      %v6434 = vunpack.c.h.b16 %v5224
      %v6435 = vunpack.c.l.b16 %v5225
      %v6436 = vunpack.c.h.b16 %v5225
      %v6437 = vunpack.c.l.b16 %v5226
      %v6438 = vunpack.c.h.b16 %v5226
      %v6439 = vunpack.c.l.b16 %v5227
      %v6440 = vunpack.c.h.b16 %v5227
      %v6441 = vunpack.c.l.b16 %v5228
      %v6442 = vunpack.c.h.b16 %v5228
      %v6443 = vunpack.c.l.b16 %v5229
      %v6444 = vunpack.c.h.b16 %v5229
      %v6445 = vunpack.c.l.b16 %v5230
      %v6446 = vunpack.c.h.b16 %v5230
      %v6447 = vpack.c.b16 %v5943, %v5935
      %v6448 = vpack.c.b16 %v5944, %v5936
      %v6449 = vpack.c.b16 %v5945, %v5937
      %v6450 = vpack.c.b16 %v5946, %v5938
      %v6451 = vpack.c.b16 %v5947, %v5939
      %v6452 = vpack.c.b16 %v5948, %v5940
      %v6453 = vpack.c.b16 %v5949, %v5941
      %v6454 = vpack.c.b16 %v5950, %v5942
      %v6455 = vpack.c.b16 %v5959, %v5951
      %v6456 = vpack.c.b16 %v5960, %v5952
      %v6457 = vpack.c.b16 %v5961, %v5953
      %v6458 = vpack.c.b16 %v5962, %v5954
      %v6459 = vpack.c.b16 %v5963, %v5955
      %v6460 = vpack.c.b16 %v5964, %v5956
      %v6461 = vpack.c.b16 %v5965, %v5957
      %v6462 = vpack.c.b16 %v5966, %v5958
      %v6463 = vpack.c.b16 %v5975, %v5967
      %v6464 = vpack.c.b16 %v5976, %v5968
      %v6465 = vpack.c.b16 %v5977, %v5969
      %v6466 = vpack.c.b16 %v5978, %v5970
      %v6467 = vpack.c.b16 %v5979, %v5971
      %v6468 = vpack.c.b16 %v5980, %v5972
      %v6469 = vpack.c.b16 %v5981, %v5973
      %v6470 = vpack.c.b16 %v5982, %v5974
      %v6471 = vpack.c.b16 %v5991, %v5983
      %v6472 = vpack.c.b16 %v5992, %v5984
      %v6473 = vpack.c.b16 %v5993, %v5985
      %v6474 = vpack.c.b16 %v5994, %v5986
      %v6475 = vpack.c.b16 %v5995, %v5987
      %v6476 = vpack.c.b16 %v5996, %v5988
      %v6477 = vpack.c.b16 %v5997, %v5989
      %v6478 = vpack.c.b16 %v5998, %v5990
      %v6479 = vpack.c.b16 %v6007, %v5999
      %v6480 = vpack.c.b16 %v6008, %v6000
      %v6481 = vpack.c.b16 %v6009, %v6001
      %v6482 = vpack.c.b16 %v6010, %v6002
      %v6483 = vpack.c.b16 %v6011, %v6003
      %v6484 = vpack.c.b16 %v6012, %v6004
      %v6485 = vpack.c.b16 %v6013, %v6005
      %v6486 = vpack.c.b16 %v6014, %v6006
      %v6487 = vpack.c.b16 %v6023, %v6015
      %v6488 = vpack.c.b16 %v6024, %v6016
      %v6489 = vpack.c.b16 %v6025, %v6017
      %v6490 = vpack.c.b16 %v6026, %v6018
      %v6491 = vpack.c.b16 %v6027, %v6019
      %v6492 = vpack.c.b16 %v6028, %v6020
      %v6493 = vpack.c.b16 %v6029, %v6021
      %v6494 = vpack.c.b16 %v6030, %v6022
      %v6495 = vpack.c.b16 %v6039, %v6031
      %v6496 = vpack.c.b16 %v6040, %v6032
      %v6497 = vpack.c.b16 %v6041, %v6033
      %v6498 = vpack.c.b16 %v6042, %v6034
      %v6499 = vpack.c.b16 %v6043, %v6035
      %v6500 = vpack.c.b16 %v6044, %v6036
      %v6501 = vpack.c.b16 %v6045, %v6037
      %v6502 = vpack.c.b16 %v6046, %v6038
      %v6503 = vpack.c.b16 %v6055, %v6047
      %v6504 = vpack.c.b16 %v6056, %v6048
      %v6505 = vpack.c.b16 %v6057, %v6049
      %v6506 = vpack.c.b16 %v6058, %v6050
      %v6507 = vpack.c.b16 %v6059, %v6051
      %v6508 = vpack.c.b16 %v6060, %v6052
      %v6509 = vpack.c.b16 %v6061, %v6053
      %v6510 = vpack.c.b16 %v6062, %v6054
      %v6511 = vpack.c.b16 %v6071, %v6063
      %v6512 = vpack.c.b16 %v6072, %v6064
      %v6513 = vpack.c.b16 %v6073, %v6065
      %v6514 = vpack.c.b16 %v6074, %v6066
      %v6515 = vpack.c.b16 %v6075, %v6067
      %v6516 = vpack.c.b16 %v6076, %v6068
      %v6517 = vpack.c.b16 %v6077, %v6069
      %v6518 = vpack.c.b16 %v6078, %v6070
      %v6519 = vpack.c.b16 %v6087, %v6079
      %v6520 = vpack.c.b16 %v6088, %v6080
      %v6521 = vpack.c.b16 %v6089, %v6081
      %v6522 = vpack.c.b16 %v6090, %v6082
      %v6523 = vpack.c.b16 %v6091, %v6083
      %v6524 = vpack.c.b16 %v6092, %v6084
      %v6525 = vpack.c.b16 %v6093, %v6085
      %v6526 = vpack.c.b16 %v6094, %v6086
      %v6527 = vpack.c.b16 %v6103, %v6095
      %v6528 = vpack.c.b16 %v6104, %v6096
      %v6529 = vpack.c.b16 %v6105, %v6097
      %v6530 = vpack.c.b16 %v6106, %v6098
      %v6531 = vpack.c.b16 %v6107, %v6099
      %v6532 = vpack.c.b16 %v6108, %v6100
      %v6533 = vpack.c.b16 %v6109, %v6101
      %v6534 = vpack.c.b16 %v6110, %v6102
      %v6535 = vpack.c.b16 %v6119, %v6111
      %v6536 = vpack.c.b16 %v6120, %v6112
      %v6537 = vpack.c.b16 %v6121, %v6113
      %v6538 = vpack.c.b16 %v6122, %v6114
      %v6539 = vpack.c.b16 %v6123, %v6115
      %v6540 = vpack.c.b16 %v6124, %v6116
      %v6541 = vpack.c.b16 %v6125, %v6117
      %v6542 = vpack.c.b16 %v6126, %v6118
      %v6543 = vpack.c.b16 %v6135, %v6127
      %v6544 = vpack.c.b16 %v6136, %v6128
      %v6545 = vpack.c.b16 %v6137, %v6129
      %v6546 = vpack.c.b16 %v6138, %v6130
      %v6547 = vpack.c.b16 %v6139, %v6131
      %v6548 = vpack.c.b16 %v6140, %v6132
      %v6549 = vpack.c.b16 %v6141, %v6133
      %v6550 = vpack.c.b16 %v6142, %v6134
      %v6551 = vpack.c.b16 %v6151, %v6143
      %v6552 = vpack.c.b16 %v6152, %v6144
      %v6553 = vpack.c.b16 %v6153, %v6145
      %v6554 = vpack.c.b16 %v6154, %v6146
      %v6555 = vpack.c.b16 %v6155, %v6147
      %v6556 = vpack.c.b16 %v6156, %v6148
      %v6557 = vpack.c.b16 %v6157, %v6149
      %v6558 = vpack.c.b16 %v6158, %v6150
      %v6559 = vpack.c.b16 %v6167, %v6159
      %v6560 = vpack.c.b16 %v6168, %v6160
      %v6561 = vpack.c.b16 %v6169, %v6161
      %v6562 = vpack.c.b16 %v6170, %v6162
      %v6563 = vpack.c.b16 %v6171, %v6163
      %v6564 = vpack.c.b16 %v6172, %v6164
      %v6565 = vpack.c.b16 %v6173, %v6165
      %v6566 = vpack.c.b16 %v6174, %v6166
      %v6567 = vpack.c.b16 %v6183, %v6175
      %v6568 = vpack.c.b16 %v6184, %v6176
      %v6569 = vpack.c.b16 %v6185, %v6177
      %v6570 = vpack.c.b16 %v6186, %v6178
      %v6571 = vpack.c.b16 %v6187, %v6179
      %v6572 = vpack.c.b16 %v6188, %v6180
      %v6573 = vpack.c.b16 %v6189, %v6181
      %v6574 = vpack.c.b16 %v6190, %v6182
      %v6575 = vpack.c.b16 %v6199, %v6191
      %v6576 = vpack.c.b16 %v6200, %v6192
      %v6577 = vpack.c.b16 %v6201, %v6193
      %v6578 = vpack.c.b16 %v6202, %v6194
      %v6579 = vpack.c.b16 %v6203, %v6195
      %v6580 = vpack.c.b16 %v6204, %v6196
      %v6581 = vpack.c.b16 %v6205, %v6197
      %v6582 = vpack.c.b16 %v6206, %v6198
      %v6583 = vpack.c.b16 %v6215, %v6207
      %v6584 = vpack.c.b16 %v6216, %v6208
      %v6585 = vpack.c.b16 %v6217, %v6209
      %v6586 = vpack.c.b16 %v6218, %v6210
      %v6587 = vpack.c.b16 %v6219, %v6211
      %v6588 = vpack.c.b16 %v6220, %v6212
      %v6589 = vpack.c.b16 %v6221, %v6213
      %v6590 = vpack.c.b16 %v6222, %v6214
      %v6591 = vpack.c.b16 %v6231, %v6223
      %v6592 = vpack.c.b16 %v6232, %v6224
      %v6593 = vpack.c.b16 %v6233, %v6225
      %v6594 = vpack.c.b16 %v6234, %v6226
      %v6595 = vpack.c.b16 %v6235, %v6227
      %v6596 = vpack.c.b16 %v6236, %v6228
      %v6597 = vpack.c.b16 %v6237, %v6229
      %v6598 = vpack.c.b16 %v6238, %v6230
      %v6599 = vpack.c.b16 %v6247, %v6239
      %v6600 = vpack.c.b16 %v6248, %v6240
      %v6601 = vpack.c.b16 %v6249, %v6241
      %v6602 = vpack.c.b16 %v6250, %v6242
      %v6603 = vpack.c.b16 %v6251, %v6243
      %v6604 = vpack.c.b16 %v6252, %v6244
      %v6605 = vpack.c.b16 %v6253, %v6245
      %v6606 = vpack.c.b16 %v6254, %v6246
      %v6607 = vpack.c.b16 %v6263, %v6255
      %v6608 = vpack.c.b16 %v6264, %v6256
      %v6609 = vpack.c.b16 %v6265, %v6257
      %v6610 = vpack.c.b16 %v6266, %v6258
      %v6611 = vpack.c.b16 %v6267, %v6259
      %v6612 = vpack.c.b16 %v6268, %v6260
      %v6613 = vpack.c.b16 %v6269, %v6261
      %v6614 = vpack.c.b16 %v6270, %v6262
      %v6615 = vpack.c.b16 %v6279, %v6271
      %v6616 = vpack.c.b16 %v6280, %v6272
      %v6617 = vpack.c.b16 %v6281, %v6273
      %v6618 = vpack.c.b16 %v6282, %v6274
      %v6619 = vpack.c.b16 %v6283, %v6275
      %v6620 = vpack.c.b16 %v6284, %v6276
      %v6621 = vpack.c.b16 %v6285, %v6277
      %v6622 = vpack.c.b16 %v6286, %v6278
      %v6623 = vpack.c.b16 %v6295, %v6287
      %v6624 = vpack.c.b16 %v6296, %v6288
      %v6625 = vpack.c.b16 %v6297, %v6289
      %v6626 = vpack.c.b16 %v6298, %v6290
      %v6627 = vpack.c.b16 %v6299, %v6291
      %v6628 = vpack.c.b16 %v6300, %v6292
      %v6629 = vpack.c.b16 %v6301, %v6293
      %v6630 = vpack.c.b16 %v6302, %v6294
      %v6631 = vpack.c.b16 %v6311, %v6303
      %v6632 = vpack.c.b16 %v6312, %v6304
      %v6633 = vpack.c.b16 %v6313, %v6305
      %v6634 = vpack.c.b16 %v6314, %v6306
      %v6635 = vpack.c.b16 %v6315, %v6307
      %v6636 = vpack.c.b16 %v6316, %v6308
      %v6637 = vpack.c.b16 %v6317, %v6309
      %v6638 = vpack.c.b16 %v6318, %v6310
      %v6639 = vpack.c.b16 %v6327, %v6319
      %v6640 = vpack.c.b16 %v6328, %v6320
      %v6641 = vpack.c.b16 %v6329, %v6321
      %v6642 = vpack.c.b16 %v6330, %v6322
      %v6643 = vpack.c.b16 %v6331, %v6323
      %v6644 = vpack.c.b16 %v6332, %v6324
      %v6645 = vpack.c.b16 %v6333, %v6325
      %v6646 = vpack.c.b16 %v6334, %v6326
      %v6647 = vpack.c.b16 %v6343, %v6335
      %v6648 = vpack.c.b16 %v6344, %v6336
      %v6649 = vpack.c.b16 %v6345, %v6337
      %v6650 = vpack.c.b16 %v6346, %v6338
      %v6651 = vpack.c.b16 %v6347, %v6339
      %v6652 = vpack.c.b16 %v6348, %v6340
      %v6653 = vpack.c.b16 %v6349, %v6341
      %v6654 = vpack.c.b16 %v6350, %v6342
      %v6655 = vpack.c.b16 %v6359, %v6351
      %v6656 = vpack.c.b16 %v6360, %v6352
      %v6657 = vpack.c.b16 %v6361, %v6353
      %v6658 = vpack.c.b16 %v6362, %v6354
      %v6659 = vpack.c.b16 %v6363, %v6355
      %v6660 = vpack.c.b16 %v6364, %v6356
      %v6661 = vpack.c.b16 %v6365, %v6357
      %v6662 = vpack.c.b16 %v6366, %v6358
      %v6663 = vpack.c.b16 %v6375, %v6367
      %v6664 = vpack.c.b16 %v6376, %v6368
      %v6665 = vpack.c.b16 %v6377, %v6369
      %v6666 = vpack.c.b16 %v6378, %v6370
      %v6667 = vpack.c.b16 %v6379, %v6371
      %v6668 = vpack.c.b16 %v6380, %v6372
      %v6669 = vpack.c.b16 %v6381, %v6373
      %v6670 = vpack.c.b16 %v6382, %v6374
      %v6671 = vpack.c.b16 %v6391, %v6383
      %v6672 = vpack.c.b16 %v6392, %v6384
      %v6673 = vpack.c.b16 %v6393, %v6385
      %v6674 = vpack.c.b16 %v6394, %v6386
      %v6675 = vpack.c.b16 %v6395, %v6387
      %v6676 = vpack.c.b16 %v6396, %v6388
      %v6677 = vpack.c.b16 %v6397, %v6389
      %v6678 = vpack.c.b16 %v6398, %v6390
      %v6679 = vpack.c.b16 %v6407, %v6399
      %v6680 = vpack.c.b16 %v6408, %v6400
      %v6681 = vpack.c.b16 %v6409, %v6401
      %v6682 = vpack.c.b16 %v6410, %v6402
      %v6683 = vpack.c.b16 %v6411, %v6403
      %v6684 = vpack.c.b16 %v6412, %v6404
      %v6685 = vpack.c.b16 %v6413, %v6405
      %v6686 = vpack.c.b16 %v6414, %v6406
      %v6687 = vpack.c.b16 %v6423, %v6415
      %v6688 = vpack.c.b16 %v6424, %v6416
      %v6689 = vpack.c.b16 %v6425, %v6417
      %v6690 = vpack.c.b16 %v6426, %v6418
      %v6691 = vpack.c.b16 %v6427, %v6419
      %v6692 = vpack.c.b16 %v6428, %v6420
      %v6693 = vpack.c.b16 %v6429, %v6421
      %v6694 = vpack.c.b16 %v6430, %v6422
      %v6695 = vpack.c.b16 %v6439, %v6431
      %v6696 = vpack.c.b16 %v6440, %v6432
      %v6697 = vpack.c.b16 %v6441, %v6433
      %v6698 = vpack.c.b16 %v6442, %v6434
      %v6699 = vpack.c.b16 %v6443, %v6435
      %v6700 = vpack.c.b16 %v6444, %v6436
      %v6701 = vpack.c.b16 %v6445, %v6437
      %v6702 = vpack.c.b16 %v6446, %v6438
      %6959 = vmatprep.subr.bf16.mxu0 0
      %6960 = vmatpush1.bf16.msra.mxu0 %v5231
      %6961 = vmatprep.subr.bf16.mxu0 0
      %6962 = vmatpush1.bf16.msra.mxu0 %v5232
      %6963 = vmatprep.subr.bf16.mxu0 0
      %6964 = vmatpush1.bf16.msra.mxu0 %v5233
      %6965 = vmatprep.subr.bf16.mxu0 0
      %6966 = vmatpush1.bf16.msra.mxu0 %v5234
      %6967 = vmatprep.subr.bf16.mxu0 0
      %6968 = vmatpush1.bf16.msra.mxu0 %v5235
      %6969 = vmatprep.subr.bf16.mxu0 0
      %6970 = vmatpush1.bf16.msra.mxu0 %v5236
      %6971 = vmatprep.subr.bf16.mxu0 0
      %6972 = vmatpush1.bf16.msra.mxu0 %v5237
      %6973 = vmatprep.subr.bf16.mxu0 0
      %6974 = vmatpush1.bf16.msra.mxu0 %v5238
      %6975 = vmatprep.subr.bf16.mxu0 0
      %6976 = vmatpush1.bf16.msra.mxu0 %v5239
      %6977 = vmatprep.subr.bf16.mxu0 0
      %6978 = vmatpush1.bf16.msra.mxu0 %v5240
      %6979 = vmatprep.subr.bf16.mxu0 0
      %6980 = vmatpush1.bf16.msra.mxu0 %v5241
      %6981 = vmatprep.subr.bf16.mxu0 0
      %6982 = vmatpush1.bf16.msra.mxu0 %v5242
      %6983 = vmatprep.subr.bf16.mxu0 0
      %6984 = vmatpush1.bf16.msra.mxu0 %v5243
      %6985 = vmatprep.subr.bf16.mxu0 0
      %6986 = vmatpush1.bf16.msra.mxu0 %v5244
      %6987 = vmatprep.subr.bf16.mxu0 0
      %6988 = vmatpush1.bf16.msra.mxu0 %v5245
      %6989 = vmatprep.subr.bf16.mxu0 0
      %6990 = vmatpush1.bf16.msra.mxu0 %v5246
      %6991 = vmatprep.mubr.bf16.mxu0 %v6448
      %6992 = vmatmul.mubr.bf16.gmra.mrb[0].mxu0 %v6447
      %v6993 = vpop.f32.mrb[0].mxu0
      %v6994 = vadd.f32 %v5362, %v6993
      %v6995 = vpop.f32.mrb[0].mxu0
      %v6996 = vpop.f32.mrb[0].mxu0
      %v6997 = vadd.f32 %v5367, %v6996
      %v6998 = vpop.f32.mrb[0].mxu0
      %6999 = vmatprep.mubr.bf16.mxu0 %v6456
      %7000 = vmatmul.mubr.bf16.gmra.mrb[0].mxu0 %v6455
      %v7001 = vpop.f32.mrb[0].mxu0
      %v7002 = vadd.f32 %v5372, %v7001
      %v7003 = vpop.f32.mrb[0].mxu0
      %v7004 = vpop.f32.mrb[0].mxu0
      %v7005 = vadd.f32 %v5377, %v7004
      %v7006 = vpop.f32.mrb[0].mxu0
      %7007 = vmatprep.mubr.bf16.mxu0 %v6464
      %7008 = vmatmul.mubr.bf16.gmra.mrb[0].mxu0 %v6463
      %v7009 = vpop.f32.mrb[0].mxu0
      %v7010 = vadd.f32 %v5382, %v7009
      %v7011 = vpop.f32.mrb[0].mxu0
      %v7012 = vpop.f32.mrb[0].mxu0
      %v7013 = vadd.f32 %v5387, %v7012
      %v7014 = vpop.f32.mrb[0].mxu0
      %7015 = vmatprep.mubr.bf16.mxu0 %v6472
      %7016 = vmatmul.mubr.bf16.gmra.mrb[0].mxu0 %v6471
      %v7017 = vpop.f32.mrb[0].mxu0
      %v7018 = vadd.f32 %v5392, %v7017
      %v7019 = vpop.f32.mrb[0].mxu0
      %v7020 = vpop.f32.mrb[0].mxu0
      %v7021 = vadd.f32 %v5397, %v7020
      %v7022 = vpop.f32.mrb[0].mxu0
      %7023 = vmatprep.mubr.bf16.mxu0 %v6480
      %7024 = vmatmul.mubr.bf16.gmra.mrb[0].mxu0 %v6479
      %v7025 = vpop.f32.mrb[0].mxu0
      %v7026 = vadd.f32 %v5402, %v7025
      %v7027 = vpop.f32.mrb[0].mxu0
      %v7028 = vpop.f32.mrb[0].mxu0
      %v7029 = vadd.f32 %v5407, %v7028
      %v7030 = vpop.f32.mrb[0].mxu0
      %7031 = vmatprep.mubr.bf16.mxu0 %v6488
      %7032 = vmatmul.mubr.bf16.gmra.mrb[0].mxu0 %v6487
      %v7033 = vpop.f32.mrb[0].mxu0
      %v7034 = vadd.f32 %v5412, %v7033
      %v7035 = vpop.f32.mrb[0].mxu0
      %v7036 = vpop.f32.mrb[0].mxu0
      %v7037 = vadd.f32 %v5417, %v7036
      %v7038 = vpop.f32.mrb[0].mxu0
      %7039 = vmatprep.mubr.bf16.mxu0 %v6496
      %7040 = vmatmul.mubr.bf16.gmra.mrb[0].mxu0 %v6495
      %v7041 = vpop.f32.mrb[0].mxu0
      %v7042 = vadd.f32 %v5422, %v7041
      %v7043 = vpop.f32.mrb[0].mxu0
      %v7044 = vpop.f32.mrb[0].mxu0
      %v7045 = vadd.f32 %v5427, %v7044
      %v7046 = vpop.f32.mrb[0].mxu0
      %7047 = vmatprep.mubr.bf16.mxu0 %v6504
      %7048 = vmatmul.mubr.bf16.gmra.mrb[0].mxu0 %v6503
      %v7049 = vpop.f32.mrb[0].mxu0
      %v7050 = vadd.f32 %v5432, %v7049
      %v7051 = vpop.f32.mrb[0].mxu0
      %v7052 = vpop.f32.mrb[0].mxu0
      %v7053 = vadd.f32 %v5437, %v7052
      %v7054 = vpop.f32.mrb[0].mxu0
      %7055 = vmatprep.mubr.bf16.mxu0 %v6512
      %7056 = vmatmul.mubr.bf16.gmra.mrb[0].mxu0 %v6511
      %v7057 = vpop.f32.mrb[0].mxu0
      %v7058 = vadd.f32 %v5442, %v7057
      %v7059 = vpop.f32.mrb[0].mxu0
      %v7060 = vpop.f32.mrb[0].mxu0
      %v7061 = vadd.f32 %v5447, %v7060
      %v7062 = vpop.f32.mrb[0].mxu0
      %7063 = vmatprep.mubr.bf16.mxu0 %v6520
      %7064 = vmatmul.mubr.bf16.gmra.mrb[0].mxu0 %v6519
      %v7065 = vpop.f32.mrb[0].mxu0
      %v7066 = vadd.f32 %v5452, %v7065
      %v7067 = vpop.f32.mrb[0].mxu0
      %v7068 = vpop.f32.mrb[0].mxu0
      %v7069 = vadd.f32 %v5457, %v7068
      %v7070 = vpop.f32.mrb[0].mxu0
      %7071 = vmatprep.mubr.bf16.mxu0 %v6528
      %7072 = vmatmul.mubr.bf16.gmra.mrb[0].mxu0 %v6527
      %v7073 = vpop.f32.mrb[0].mxu0
      %v7074 = vadd.f32 %v5462, %v7073
      %v7075 = vpop.f32.mrb[0].mxu0
      %v7076 = vpop.f32.mrb[0].mxu0
      %v7077 = vadd.f32 %v5467, %v7076
      %v7078 = vpop.f32.mrb[0].mxu0
      %7079 = vmatprep.mubr.bf16.mxu0 %v6536
      %7080 = vmatmul.mubr.bf16.gmra.mrb[0].mxu0 %v6535
      %v7081 = vpop.f32.mrb[0].mxu0
      %v7082 = vadd.f32 %v5472, %v7081
      %v7083 = vpop.f32.mrb[0].mxu0
      %v7084 = vpop.f32.mrb[0].mxu0
      %v7085 = vadd.f32 %v5477, %v7084
      %v7086 = vpop.f32.mrb[0].mxu0
      %7087 = vmatprep.mubr.bf16.mxu0 %v6544
      %7088 = vmatmul.mubr.bf16.gmra.mrb[0].mxu0 %v6543
      %v7089 = vpop.f32.mrb[0].mxu0
      %v7090 = vadd.f32 %v5482, %v7089
      %v7091 = vpop.f32.mrb[0].mxu0
      %v7092 = vpop.f32.mrb[0].mxu0
      %v7093 = vadd.f32 %v5487, %v7092
      %v7094 = vpop.f32.mrb[0].mxu0
      %7095 = vmatprep.mubr.bf16.mxu0 %v6552
      %7096 = vmatmul.mubr.bf16.gmra.mrb[0].mxu0 %v6551
      %v7097 = vpop.f32.mrb[0].mxu0
      %v7098 = vadd.f32 %v5492, %v7097
      %v7099 = vpop.f32.mrb[0].mxu0
      %v7100 = vpop.f32.mrb[0].mxu0
      %v7101 = vadd.f32 %v5497, %v7100
      %v7102 = vpop.f32.mrb[0].mxu0
      %7103 = vmatprep.mubr.bf16.mxu0 %v6560
      %7104 = vmatmul.mubr.bf16.gmra.mrb[0].mxu0 %v6559
      %v7105 = vpop.f32.mrb[0].mxu0
      %v7106 = vadd.f32 %v5502, %v7105
      %v7107 = vpop.f32.mrb[0].mxu0
      %v7108 = vpop.f32.mrb[0].mxu0
      %v7109 = vadd.f32 %v5507, %v7108
      %v7110 = vpop.f32.mrb[0].mxu0
      %7111 = vmatprep.mubr.bf16.mxu0 %v6568
      %7112 = vmatmul.mubr.bf16.gmra.mrb[0].mxu0 %v6567
      %v7113 = vpop.f32.mrb[0].mxu0
      %v7114 = vadd.f32 %v5512, %v7113
      %v7115 = vpop.f32.mrb[0].mxu0
      %v7116 = vpop.f32.mrb[0].mxu0
      %v7117 = vadd.f32 %v5517, %v7116
      %v7118 = vpop.f32.mrb[0].mxu0
      %7119 = vmatprep.mubr.bf16.mxu0 %v6576
      %7120 = vmatmul.mubr.bf16.gmra.mrb[0].mxu0 %v6575
      %v7121 = vpop.f32.mrb[0].mxu0
      %v7122 = vadd.f32 %v5522, %v7121
      %v7123 = vpop.f32.mrb[0].mxu0
      %v7124 = vpop.f32.mrb[0].mxu0
      %v7125 = vadd.f32 %v5527, %v7124
      %v7126 = vpop.f32.mrb[0].mxu0
      %7127 = vmatprep.mubr.bf16.mxu0 %v6584
      %7128 = vmatmul.mubr.bf16.gmra.mrb[0].mxu0 %v6583
      %v7129 = vpop.f32.mrb[0].mxu0
      %v7130 = vadd.f32 %v5532, %v7129
      %v7131 = vpop.f32.mrb[0].mxu0
      %v7132 = vpop.f32.mrb[0].mxu0
      %v7133 = vadd.f32 %v5537, %v7132
      %v7134 = vpop.f32.mrb[0].mxu0
      %7135 = vmatprep.mubr.bf16.mxu0 %v6592
      %7136 = vmatmul.mubr.bf16.gmra.mrb[0].mxu0 %v6591
      %v7137 = vpop.f32.mrb[0].mxu0
      %v7138 = vadd.f32 %v5542, %v7137
      %v7139 = vpop.f32.mrb[0].mxu0
      %v7140 = vpop.f32.mrb[0].mxu0
      %v7141 = vadd.f32 %v5547, %v7140
      %v7142 = vpop.f32.mrb[0].mxu0
      %7143 = vmatprep.mubr.bf16.mxu0 %v6600
      %7144 = vmatmul.mubr.bf16.gmra.mrb[0].mxu0 %v6599
      %v7145 = vpop.f32.mrb[0].mxu0
      %v7146 = vadd.f32 %v5552, %v7145
      %v7147 = vpop.f32.mrb[0].mxu0
      %v7148 = vpop.f32.mrb[0].mxu0
      %v7149 = vadd.f32 %v5557, %v7148
      %v7150 = vpop.f32.mrb[0].mxu0
      %7151 = vmatprep.mubr.bf16.mxu0 %v6608
      %7152 = vmatmul.mubr.bf16.gmra.mrb[0].mxu0 %v6607
      %v7153 = vpop.f32.mrb[0].mxu0
      %v7154 = vadd.f32 %v5562, %v7153
      %v7155 = vpop.f32.mrb[0].mxu0
      %v7156 = vpop.f32.mrb[0].mxu0
      %v7157 = vadd.f32 %v5567, %v7156
      %v7158 = vpop.f32.mrb[0].mxu0
      %7159 = vmatprep.mubr.bf16.mxu0 %v6616
      %7160 = vmatmul.mubr.bf16.gmra.mrb[0].mxu0 %v6615
      %v7161 = vpop.f32.mrb[0].mxu0
      %v7162 = vadd.f32 %v5572, %v7161
      %v7163 = vpop.f32.mrb[0].mxu0
      %v7164 = vpop.f32.mrb[0].mxu0
      %v7165 = vadd.f32 %v5577, %v7164
      %v7166 = vpop.f32.mrb[0].mxu0
      %7167 = vmatprep.mubr.bf16.mxu0 %v6624
      %7168 = vmatmul.mubr.bf16.gmra.mrb[0].mxu0 %v6623
      %v7169 = vpop.f32.mrb[0].mxu0
      %v7170 = vadd.f32 %v5582, %v7169
      %v7171 = vpop.f32.mrb[0].mxu0
      %v7172 = vpop.f32.mrb[0].mxu0
      %v7173 = vadd.f32 %v5587, %v7172
      %v7174 = vpop.f32.mrb[0].mxu0
      %7175 = vmatprep.mubr.bf16.mxu0 %v6632
      %7176 = vmatmul.mubr.bf16.gmra.mrb[0].mxu0 %v6631
      %v7177 = vpop.f32.mrb[0].mxu0
      %v7178 = vadd.f32 %v5592, %v7177
      %v7179 = vpop.f32.mrb[0].mxu0
      %v7180 = vpop.f32.mrb[0].mxu0
      %v7181 = vadd.f32 %v5597, %v7180
      %v7182 = vpop.f32.mrb[0].mxu0
      %7183 = vmatprep.mubr.bf16.mxu0 %v6640
      %7184 = vmatmul.mubr.bf16.gmra.mrb[0].mxu0 %v6639
      %v7185 = vpop.f32.mrb[0].mxu0
      %v7186 = vadd.f32 %v5602, %v7185
      %v7187 = vpop.f32.mrb[0].mxu0
      %v7188 = vpop.f32.mrb[0].mxu0
      %v7189 = vadd.f32 %v5607, %v7188
      %v7190 = vpop.f32.mrb[0].mxu0
      %7191 = vmatprep.mubr.bf16.mxu0 %v6648
      %7192 = vmatmul.mubr.bf16.gmra.mrb[0].mxu0 %v6647
      %v7193 = vpop.f32.mrb[0].mxu0
      %v7194 = vadd.f32 %v5612, %v7193
      %v7195 = vpop.f32.mrb[0].mxu0
      %v7196 = vpop.f32.mrb[0].mxu0
      %v7197 = vadd.f32 %v5617, %v7196
      %v7198 = vpop.f32.mrb[0].mxu0
      %7199 = vmatprep.mubr.bf16.mxu0 %v6656
      %7200 = vmatmul.mubr.bf16.gmra.mrb[0].mxu0 %v6655
      %v7201 = vpop.f32.mrb[0].mxu0
      %v7202 = vadd.f32 %v5622, %v7201
      %v7203 = vpop.f32.mrb[0].mxu0
      %v7204 = vpop.f32.mrb[0].mxu0
      %v7205 = vadd.f32 %v5627, %v7204
      %v7206 = vpop.f32.mrb[0].mxu0
      %7207 = vmatprep.mubr.bf16.mxu0 %v6664
      %7208 = vmatmul.mubr.bf16.gmra.mrb[0].mxu0 %v6663
      %v7209 = vpop.f32.mrb[0].mxu0
      %v7210 = vadd.f32 %v5632, %v7209
      %v7211 = vpop.f32.mrb[0].mxu0
      %v7212 = vpop.f32.mrb[0].mxu0
      %v7213 = vadd.f32 %v5637, %v7212
      %v7214 = vpop.f32.mrb[0].mxu0
      %7215 = vmatprep.mubr.bf16.mxu0 %v6672
      %7216 = vmatmul.mubr.bf16.gmra.mrb[0].mxu0 %v6671
      %v7217 = vpop.f32.mrb[0].mxu0
      %v7218 = vadd.f32 %v5642, %v7217
      %v7219 = vpop.f32.mrb[0].mxu0
      %v7220 = vpop.f32.mrb[0].mxu0
      %v7221 = vadd.f32 %v5647, %v7220
      %v7222 = vpop.f32.mrb[0].mxu0
      %7223 = vmatprep.mubr.bf16.mxu0 %v6680
      %7224 = vmatmul.mubr.bf16.gmra.mrb[0].mxu0 %v6679
      %v7225 = vpop.f32.mrb[0].mxu0
      %v7226 = vadd.f32 %v5652, %v7225
      %v7227 = vpop.f32.mrb[0].mxu0
      %v7228 = vpop.f32.mrb[0].mxu0
      %v7229 = vadd.f32 %v5657, %v7228
      %v7230 = vpop.f32.mrb[0].mxu0
      %7231 = vmatprep.mubr.bf16.mxu0 %v6688
      %7232 = vmatmul.mubr.bf16.gmra.mrb[0].mxu0 %v6687
      %v7233 = vpop.f32.mrb[0].mxu0
      %v7234 = vadd.f32 %v5662, %v7233
      %v7235 = vpop.f32.mrb[0].mxu0
      %v7236 = vpop.f32.mrb[0].mxu0
      %v7237 = vadd.f32 %v5667, %v7236
      %v7238 = vpop.f32.mrb[0].mxu0
      %7239 = vmatprep.mubr.bf16.mxu0 %v6696
      %7240 = vmatmul.mubr.bf16.gmra.mrb[0].mxu0 %v6695
      %v7241 = vpop.f32.mrb[0].mxu0
      %v7242 = vadd.f32 %v5672, %v7241
      %v7243 = vpop.f32.mrb[0].mxu0
      %v7244 = vpop.f32.mrb[0].mxu0
      %v7245 = vadd.f32 %v5677, %v7244
      %v7246 = vpop.f32.mrb[0].mxu0
      %7247 = vdwg.mxu0
      %7248 = vmatprep.subr.bf16.mxu0 0
      %7249 = vmatpush1.bf16.msra.mxu0 %v5247
      %7250 = vmatprep.subr.bf16.mxu0 0
      %7251 = vmatpush1.bf16.msra.mxu0 %v5248
      %7252 = vmatprep.subr.bf16.mxu0 0
      %7253 = vmatpush1.bf16.msra.mxu0 %v5249
      %7254 = vmatprep.subr.bf16.mxu0 0
      %7255 = vmatpush1.bf16.msra.mxu0 %v5250
      %7256 = vmatprep.subr.bf16.mxu0 0
      %7257 = vmatpush1.bf16.msra.mxu0 %v5251
      %7258 = vmatprep.subr.bf16.mxu0 0
      %7259 = vmatpush1.bf16.msra.mxu0 %v5252
      %7260 = vmatprep.subr.bf16.mxu0 0
      %7261 = vmatpush1.bf16.msra.mxu0 %v5253
      %7262 = vmatprep.subr.bf16.mxu0 0
      %7263 = vmatpush1.bf16.msra.mxu0 %v5254
      %7264 = vmatprep.subr.bf16.mxu0 0
      %7265 = vmatpush1.bf16.msra.mxu0 %v5255
      %7266 = vmatprep.subr.bf16.mxu0 0
      %7267 = vmatpush1.bf16.msra.mxu0 %v5256
      %7268 = vmatprep.subr.bf16.mxu0 0
      %7269 = vmatpush1.bf16.msra.mxu0 %v5257
      %7270 = vmatprep.subr.bf16.mxu0 0
      %7271 = vmatpush1.bf16.msra.mxu0 %v5258
      %7272 = vmatprep.subr.bf16.mxu0 0
      %7273 = vmatpush1.bf16.msra.mxu0 %v5259
      %7274 = vmatprep.subr.bf16.mxu0 0
      %7275 = vmatpush1.bf16.msra.mxu0 %v5260
      %7276 = vmatprep.subr.bf16.mxu0 0
      %7277 = vmatpush1.bf16.msra.mxu0 %v5261
      %7278 = vmatprep.subr.bf16.mxu0 0
      %7279 = vmatpush1.bf16.msra.mxu0 %v5262
      %7280 = vmatprep.mubr.bf16.mxu0 %v6450
      %7281 = vmatmul.mubr.bf16.gmra.mrb[0].mxu0 %v6449
      %v7282 = vpop.f32.mrb[0].mxu0
      %v7283 = vadd.f32 %v6994, %v7282
      %v7284 = vpop.f32.mrb[0].mxu0
      %v7285 = vpop.f32.mrb[0].mxu0
      %v7286 = vadd.f32 %v6997, %v7285
      %v7287 = vpop.f32.mrb[0].mxu0
      %7288 = vmatprep.mubr.bf16.mxu0 %v6458
      %7289 = vmatmul.mubr.bf16.gmra.mrb[0].mxu0 %v6457
      %v7290 = vpop.f32.mrb[0].mxu0
      %v7291 = vadd.f32 %v7002, %v7290
      %v7292 = vpop.f32.mrb[0].mxu0
      %v7293 = vpop.f32.mrb[0].mxu0
      %v7294 = vadd.f32 %v7005, %v7293
      %v7295 = vpop.f32.mrb[0].mxu0
      %7296 = vmatprep.mubr.bf16.mxu0 %v6466
      %7297 = vmatmul.mubr.bf16.gmra.mrb[0].mxu0 %v6465
      %v7298 = vpop.f32.mrb[0].mxu0
      %v7299 = vadd.f32 %v7010, %v7298
      %v7300 = vpop.f32.mrb[0].mxu0
      %v7301 = vpop.f32.mrb[0].mxu0
      %v7302 = vadd.f32 %v7013, %v7301
      %v7303 = vpop.f32.mrb[0].mxu0
      %7304 = vmatprep.mubr.bf16.mxu0 %v6474
      %7305 = vmatmul.mubr.bf16.gmra.mrb[0].mxu0 %v6473
      %v7306 = vpop.f32.mrb[0].mxu0
      %v7307 = vadd.f32 %v7018, %v7306
      %v7308 = vpop.f32.mrb[0].mxu0
      %v7309 = vpop.f32.mrb[0].mxu0
      %v7310 = vadd.f32 %v7021, %v7309
      %v7311 = vpop.f32.mrb[0].mxu0
      %7312 = vmatprep.mubr.bf16.mxu0 %v6482
      %7313 = vmatmul.mubr.bf16.gmra.mrb[0].mxu0 %v6481
      %v7314 = vpop.f32.mrb[0].mxu0
      %v7315 = vadd.f32 %v7026, %v7314
      %v7316 = vpop.f32.mrb[0].mxu0
      %v7317 = vpop.f32.mrb[0].mxu0
      %v7318 = vadd.f32 %v7029, %v7317
      %v7319 = vpop.f32.mrb[0].mxu0
      %7320 = vmatprep.mubr.bf16.mxu0 %v6490
      %7321 = vmatmul.mubr.bf16.gmra.mrb[0].mxu0 %v6489
      %v7322 = vpop.f32.mrb[0].mxu0
      %v7323 = vadd.f32 %v7034, %v7322
      %v7324 = vpop.f32.mrb[0].mxu0
      %v7325 = vpop.f32.mrb[0].mxu0
      %v7326 = vadd.f32 %v7037, %v7325
      %v7327 = vpop.f32.mrb[0].mxu0
      %7328 = vmatprep.mubr.bf16.mxu0 %v6498
      %7329 = vmatmul.mubr.bf16.gmra.mrb[0].mxu0 %v6497
      %v7330 = vpop.f32.mrb[0].mxu0
      %v7331 = vadd.f32 %v7042, %v7330
      %v7332 = vpop.f32.mrb[0].mxu0
      %v7333 = vpop.f32.mrb[0].mxu0
      %v7334 = vadd.f32 %v7045, %v7333
      %v7335 = vpop.f32.mrb[0].mxu0
      %7336 = vmatprep.mubr.bf16.mxu0 %v6506
      %7337 = vmatmul.mubr.bf16.gmra.mrb[0].mxu0 %v6505
      %v7338 = vpop.f32.mrb[0].mxu0
      %v7339 = vadd.f32 %v7050, %v7338
      %v7340 = vpop.f32.mrb[0].mxu0
      %v7341 = vpop.f32.mrb[0].mxu0
      %v7342 = vadd.f32 %v7053, %v7341
      %v7343 = vpop.f32.mrb[0].mxu0
      %7344 = vmatprep.mubr.bf16.mxu0 %v6514
      %7345 = vmatmul.mubr.bf16.gmra.mrb[0].mxu0 %v6513
      %v7346 = vpop.f32.mrb[0].mxu0
      %v7347 = vadd.f32 %v7058, %v7346
      %v7348 = vpop.f32.mrb[0].mxu0
      %v7349 = vpop.f32.mrb[0].mxu0
      %v7350 = vadd.f32 %v7061, %v7349
      %v7351 = vpop.f32.mrb[0].mxu0
      %7352 = vmatprep.mubr.bf16.mxu0 %v6522
      %7353 = vmatmul.mubr.bf16.gmra.mrb[0].mxu0 %v6521
      %v7354 = vpop.f32.mrb[0].mxu0
      %v7355 = vadd.f32 %v7066, %v7354
      %v7356 = vpop.f32.mrb[0].mxu0
      %v7357 = vpop.f32.mrb[0].mxu0
      %v7358 = vadd.f32 %v7069, %v7357
      %v7359 = vpop.f32.mrb[0].mxu0
      %7360 = vmatprep.mubr.bf16.mxu0 %v6530
      %7361 = vmatmul.mubr.bf16.gmra.mrb[0].mxu0 %v6529
      %v7362 = vpop.f32.mrb[0].mxu0
      %v7363 = vadd.f32 %v7074, %v7362
      %v7364 = vpop.f32.mrb[0].mxu0
      %v7365 = vpop.f32.mrb[0].mxu0
      %v7366 = vadd.f32 %v7077, %v7365
      %v7367 = vpop.f32.mrb[0].mxu0
      %7368 = vmatprep.mubr.bf16.mxu0 %v6538
      %7369 = vmatmul.mubr.bf16.gmra.mrb[0].mxu0 %v6537
      %v7370 = vpop.f32.mrb[0].mxu0
      %v7371 = vadd.f32 %v7082, %v7370
      %v7372 = vpop.f32.mrb[0].mxu0
      %v7373 = vpop.f32.mrb[0].mxu0
      %v7374 = vadd.f32 %v7085, %v7373
      %v7375 = vpop.f32.mrb[0].mxu0
      %7376 = vmatprep.mubr.bf16.mxu0 %v6546
      %7377 = vmatmul.mubr.bf16.gmra.mrb[0].mxu0 %v6545
      %v7378 = vpop.f32.mrb[0].mxu0
      %v7379 = vadd.f32 %v7090, %v7378
      %v7380 = vpop.f32.mrb[0].mxu0
      %v7381 = vpop.f32.mrb[0].mxu0
      %v7382 = vadd.f32 %v7093, %v7381
      %v7383 = vpop.f32.mrb[0].mxu0
      %7384 = vmatprep.mubr.bf16.mxu0 %v6554
      %7385 = vmatmul.mubr.bf16.gmra.mrb[0].mxu0 %v6553
      %v7386 = vpop.f32.mrb[0].mxu0
      %v7387 = vadd.f32 %v7098, %v7386
      %v7388 = vpop.f32.mrb[0].mxu0
      %v7389 = vpop.f32.mrb[0].mxu0
      %v7390 = vadd.f32 %v7101, %v7389
      %v7391 = vpop.f32.mrb[0].mxu0
      %7392 = vmatprep.mubr.bf16.mxu0 %v6562
      %7393 = vmatmul.mubr.bf16.gmra.mrb[0].mxu0 %v6561
      %v7394 = vpop.f32.mrb[0].mxu0
      %v7395 = vadd.f32 %v7106, %v7394
      %v7396 = vpop.f32.mrb[0].mxu0
      %v7397 = vpop.f32.mrb[0].mxu0
      %v7398 = vadd.f32 %v7109, %v7397
      %v7399 = vpop.f32.mrb[0].mxu0
      %7400 = vmatprep.mubr.bf16.mxu0 %v6570
      %7401 = vmatmul.mubr.bf16.gmra.mrb[0].mxu0 %v6569
      %v7402 = vpop.f32.mrb[0].mxu0
      %v7403 = vadd.f32 %v7114, %v7402
      %v7404 = vpop.f32.mrb[0].mxu0
      %v7405 = vpop.f32.mrb[0].mxu0
      %v7406 = vadd.f32 %v7117, %v7405
      %v7407 = vpop.f32.mrb[0].mxu0
      %7408 = vmatprep.mubr.bf16.mxu0 %v6578
      %7409 = vmatmul.mubr.bf16.gmra.mrb[0].mxu0 %v6577
      %v7410 = vpop.f32.mrb[0].mxu0
      %v7411 = vadd.f32 %v7122, %v7410
      %v7412 = vpop.f32.mrb[0].mxu0
      %v7413 = vpop.f32.mrb[0].mxu0
      %v7414 = vadd.f32 %v7125, %v7413
      %v7415 = vpop.f32.mrb[0].mxu0
      %7416 = vmatprep.mubr.bf16.mxu0 %v6586
      %7417 = vmatmul.mubr.bf16.gmra.mrb[0].mxu0 %v6585
      %v7418 = vpop.f32.mrb[0].mxu0
      %v7419 = vadd.f32 %v7130, %v7418
      %v7420 = vpop.f32.mrb[0].mxu0
      %v7421 = vpop.f32.mrb[0].mxu0
      %v7422 = vadd.f32 %v7133, %v7421
      %v7423 = vpop.f32.mrb[0].mxu0
      %7424 = vmatprep.mubr.bf16.mxu0 %v6594
      %7425 = vmatmul.mubr.bf16.gmra.mrb[0].mxu0 %v6593
      %v7426 = vpop.f32.mrb[0].mxu0
      %v7427 = vadd.f32 %v7138, %v7426
      %v7428 = vpop.f32.mrb[0].mxu0
      %v7429 = vpop.f32.mrb[0].mxu0
      %v7430 = vadd.f32 %v7141, %v7429
      %v7431 = vpop.f32.mrb[0].mxu0
      %7432 = vmatprep.mubr.bf16.mxu0 %v6602
      %7433 = vmatmul.mubr.bf16.gmra.mrb[0].mxu0 %v6601
      %v7434 = vpop.f32.mrb[0].mxu0
      %v7435 = vadd.f32 %v7146, %v7434
      %v7436 = vpop.f32.mrb[0].mxu0
      %v7437 = vpop.f32.mrb[0].mxu0
      %v7438 = vadd.f32 %v7149, %v7437
      %v7439 = vpop.f32.mrb[0].mxu0
      %7440 = vmatprep.mubr.bf16.mxu0 %v6610
      %7441 = vmatmul.mubr.bf16.gmra.mrb[0].mxu0 %v6609
      %v7442 = vpop.f32.mrb[0].mxu0
      %v7443 = vadd.f32 %v7154, %v7442
      %v7444 = vpop.f32.mrb[0].mxu0
      %v7445 = vpop.f32.mrb[0].mxu0
      %v7446 = vadd.f32 %v7157, %v7445
      %v7447 = vpop.f32.mrb[0].mxu0
      %7448 = vmatprep.mubr.bf16.mxu0 %v6618
      %7449 = vmatmul.mubr.bf16.gmra.mrb[0].mxu0 %v6617
      %v7450 = vpop.f32.mrb[0].mxu0
      %v7451 = vadd.f32 %v7162, %v7450
      %v7452 = vpop.f32.mrb[0].mxu0
      %v7453 = vpop.f32.mrb[0].mxu0
      %v7454 = vadd.f32 %v7165, %v7453
      %v7455 = vpop.f32.mrb[0].mxu0
      %7456 = vmatprep.mubr.bf16.mxu0 %v6626
      %7457 = vmatmul.mubr.bf16.gmra.mrb[0].mxu0 %v6625
      %v7458 = vpop.f32.mrb[0].mxu0
      %v7459 = vadd.f32 %v7170, %v7458
      %v7460 = vpop.f32.mrb[0].mxu0
      %v7461 = vpop.f32.mrb[0].mxu0
      %v7462 = vadd.f32 %v7173, %v7461
      %v7463 = vpop.f32.mrb[0].mxu0
      %7464 = vmatprep.mubr.bf16.mxu0 %v6634
      %7465 = vmatmul.mubr.bf16.gmra.mrb[0].mxu0 %v6633
      %v7466 = vpop.f32.mrb[0].mxu0
      %v7467 = vadd.f32 %v7178, %v7466
      %v7468 = vpop.f32.mrb[0].mxu0
      %v7469 = vpop.f32.mrb[0].mxu0
      %v7470 = vadd.f32 %v7181, %v7469
      %v7471 = vpop.f32.mrb[0].mxu0
      %7472 = vmatprep.mubr.bf16.mxu0 %v6642
      %7473 = vmatmul.mubr.bf16.gmra.mrb[0].mxu0 %v6641
      %v7474 = vpop.f32.mrb[0].mxu0
      %v7475 = vadd.f32 %v7186, %v7474
      %v7476 = vpop.f32.mrb[0].mxu0
      %v7477 = vpop.f32.mrb[0].mxu0
      %v7478 = vadd.f32 %v7189, %v7477
      %v7479 = vpop.f32.mrb[0].mxu0
      %7480 = vmatprep.mubr.bf16.mxu0 %v6650
      %7481 = vmatmul.mubr.bf16.gmra.mrb[0].mxu0 %v6649
      %v7482 = vpop.f32.mrb[0].mxu0
      %v7483 = vadd.f32 %v7194, %v7482
      %v7484 = vpop.f32.mrb[0].mxu0
      %v7485 = vpop.f32.mrb[0].mxu0
      %v7486 = vadd.f32 %v7197, %v7485
      %v7487 = vpop.f32.mrb[0].mxu0
      %7488 = vmatprep.mubr.bf16.mxu0 %v6658
      %7489 = vmatmul.mubr.bf16.gmra.mrb[0].mxu0 %v6657
      %v7490 = vpop.f32.mrb[0].mxu0
      %v7491 = vadd.f32 %v7202, %v7490
      %v7492 = vpop.f32.mrb[0].mxu0
      %v7493 = vpop.f32.mrb[0].mxu0
      %v7494 = vadd.f32 %v7205, %v7493
      %v7495 = vpop.f32.mrb[0].mxu0
      %7496 = vmatprep.mubr.bf16.mxu0 %v6666
      %7497 = vmatmul.mubr.bf16.gmra.mrb[0].mxu0 %v6665
      %v7498 = vpop.f32.mrb[0].mxu0
      %v7499 = vadd.f32 %v7210, %v7498
      %v7500 = vpop.f32.mrb[0].mxu0
      %v7501 = vpop.f32.mrb[0].mxu0
      %v7502 = vadd.f32 %v7213, %v7501
      %v7503 = vpop.f32.mrb[0].mxu0
      %7504 = vmatprep.mubr.bf16.mxu0 %v6674
      %7505 = vmatmul.mubr.bf16.gmra.mrb[0].mxu0 %v6673
      %v7506 = vpop.f32.mrb[0].mxu0
      %v7507 = vadd.f32 %v7218, %v7506
      %v7508 = vpop.f32.mrb[0].mxu0
      %v7509 = vpop.f32.mrb[0].mxu0
      %v7510 = vadd.f32 %v7221, %v7509
      %v7511 = vpop.f32.mrb[0].mxu0
      %7512 = vmatprep.mubr.bf16.mxu0 %v6682
      %7513 = vmatmul.mubr.bf16.gmra.mrb[0].mxu0 %v6681
      %v7514 = vpop.f32.mrb[0].mxu0
      %v7515 = vadd.f32 %v7226, %v7514
      %v7516 = vpop.f32.mrb[0].mxu0
      %v7517 = vpop.f32.mrb[0].mxu0
      %v7518 = vadd.f32 %v7229, %v7517
      %v7519 = vpop.f32.mrb[0].mxu0
      %7520 = vmatprep.mubr.bf16.mxu0 %v6690
      %7521 = vmatmul.mubr.bf16.gmra.mrb[0].mxu0 %v6689
      %v7522 = vpop.f32.mrb[0].mxu0
      %v7523 = vadd.f32 %v7234, %v7522
      %v7524 = vpop.f32.mrb[0].mxu0
      %v7525 = vpop.f32.mrb[0].mxu0
      %v7526 = vadd.f32 %v7237, %v7525
      %v7527 = vpop.f32.mrb[0].mxu0
      %7528 = vmatprep.mubr.bf16.mxu0 %v6698
      %7529 = vmatmul.mubr.bf16.gmra.mrb[0].mxu0 %v6697
      %v7530 = vpop.f32.mrb[0].mxu0
      %v7531 = vadd.f32 %v7242, %v7530
      %v7532 = vpop.f32.mrb[0].mxu0
      %v7533 = vpop.f32.mrb[0].mxu0
      %v7534 = vadd.f32 %v7245, %v7533
      %v7535 = vpop.f32.mrb[0].mxu0
      %7536 = vdwg.mxu0
      %7537 = vmatprep.subr.bf16.mxu0 0
      %7538 = vmatpush1.bf16.msra.mxu0 %v5263
      %7539 = vmatprep.subr.bf16.mxu0 0
      %7540 = vmatpush1.bf16.msra.mxu0 %v5264
      %7541 = vmatprep.subr.bf16.mxu0 0
      %7542 = vmatpush1.bf16.msra.mxu0 %v5265
      %7543 = vmatprep.subr.bf16.mxu0 0
      %7544 = vmatpush1.bf16.msra.mxu0 %v5266
      %7545 = vmatprep.subr.bf16.mxu0 0
      %7546 = vmatpush1.bf16.msra.mxu0 %v5267
      %7547 = vmatprep.subr.bf16.mxu0 0
      %7548 = vmatpush1.bf16.msra.mxu0 %v5268
      %7549 = vmatprep.subr.bf16.mxu0 0
      %7550 = vmatpush1.bf16.msra.mxu0 %v5269
      %7551 = vmatprep.subr.bf16.mxu0 0
      %7552 = vmatpush1.bf16.msra.mxu0 %v5270
      %7553 = vmatprep.subr.bf16.mxu0 0
      %7554 = vmatpush1.bf16.msra.mxu0 %v5271
      %7555 = vmatprep.subr.bf16.mxu0 0
      %7556 = vmatpush1.bf16.msra.mxu0 %v5272
      %7557 = vmatprep.subr.bf16.mxu0 0
      %7558 = vmatpush1.bf16.msra.mxu0 %v5273
      %7559 = vmatprep.subr.bf16.mxu0 0
      %7560 = vmatpush1.bf16.msra.mxu0 %v5274
      %7561 = vmatprep.subr.bf16.mxu0 0
      %7562 = vmatpush1.bf16.msra.mxu0 %v5275
      %7563 = vmatprep.subr.bf16.mxu0 0
      %7564 = vmatpush1.bf16.msra.mxu0 %v5276
      %7565 = vmatprep.subr.bf16.mxu0 0
      %7566 = vmatpush1.bf16.msra.mxu0 %v5277
      %7567 = vmatprep.subr.bf16.mxu0 0
      %7568 = vmatpush1.bf16.msra.mxu0 %v5278
      %7569 = vmatprep.mubr.bf16.mxu0 %v6452
      %7570 = vmatmul.mubr.bf16.gmra.mrb[0].mxu0 %v6451
      %v7571 = vpop.f32.mrb[0].mxu0
      %v7572 = vadd.f32 %v7283, %v7571
      %v7573 = vpop.f32.mrb[0].mxu0
      %v7574 = vpop.f32.mrb[0].mxu0
      %v7575 = vadd.f32 %v7286, %v7574
      %v7576 = vpop.f32.mrb[0].mxu0
      %7577 = vmatprep.mubr.bf16.mxu0 %v6460
      %7578 = vmatmul.mubr.bf16.gmra.mrb[0].mxu0 %v6459
      %v7579 = vpop.f32.mrb[0].mxu0
      %v7580 = vadd.f32 %v7291, %v7579
      %v7581 = vpop.f32.mrb[0].mxu0
      %v7582 = vpop.f32.mrb[0].mxu0
      %v7583 = vadd.f32 %v7294, %v7582
      %v7584 = vpop.f32.mrb[0].mxu0
      %7585 = vmatprep.mubr.bf16.mxu0 %v6468
      %7586 = vmatmul.mubr.bf16.gmra.mrb[0].mxu0 %v6467
      %v7587 = vpop.f32.mrb[0].mxu0
      %v7588 = vadd.f32 %v7299, %v7587
      %v7589 = vpop.f32.mrb[0].mxu0
      %v7590 = vpop.f32.mrb[0].mxu0
      %v7591 = vadd.f32 %v7302, %v7590
      %v7592 = vpop.f32.mrb[0].mxu0
      %7593 = vmatprep.mubr.bf16.mxu0 %v6476
      %7594 = vmatmul.mubr.bf16.gmra.mrb[0].mxu0 %v6475
      %v7595 = vpop.f32.mrb[0].mxu0
      %v7596 = vadd.f32 %v7307, %v7595
      %v7597 = vpop.f32.mrb[0].mxu0
      %v7598 = vpop.f32.mrb[0].mxu0
      %v7599 = vadd.f32 %v7310, %v7598
      %v7600 = vpop.f32.mrb[0].mxu0
      %7601 = vmatprep.mubr.bf16.mxu0 %v6484
      %7602 = vmatmul.mubr.bf16.gmra.mrb[0].mxu0 %v6483
      %v7603 = vpop.f32.mrb[0].mxu0
      %v7604 = vadd.f32 %v7315, %v7603
      %v7605 = vpop.f32.mrb[0].mxu0
      %v7606 = vpop.f32.mrb[0].mxu0
      %v7607 = vadd.f32 %v7318, %v7606
      %v7608 = vpop.f32.mrb[0].mxu0
      %7609 = vmatprep.mubr.bf16.mxu0 %v6492
      %7610 = vmatmul.mubr.bf16.gmra.mrb[0].mxu0 %v6491
      %v7611 = vpop.f32.mrb[0].mxu0
      %v7612 = vadd.f32 %v7323, %v7611
      %v7613 = vpop.f32.mrb[0].mxu0
      %v7614 = vpop.f32.mrb[0].mxu0
      %v7615 = vadd.f32 %v7326, %v7614
      %v7616 = vpop.f32.mrb[0].mxu0
      %7617 = vmatprep.mubr.bf16.mxu0 %v6500
      %7618 = vmatmul.mubr.bf16.gmra.mrb[0].mxu0 %v6499
      %v7619 = vpop.f32.mrb[0].mxu0
      %v7620 = vadd.f32 %v7331, %v7619
      %v7621 = vpop.f32.mrb[0].mxu0
      %v7622 = vpop.f32.mrb[0].mxu0
      %v7623 = vadd.f32 %v7334, %v7622
      %v7624 = vpop.f32.mrb[0].mxu0
      %7625 = vmatprep.mubr.bf16.mxu0 %v6508
      %7626 = vmatmul.mubr.bf16.gmra.mrb[0].mxu0 %v6507
      %v7627 = vpop.f32.mrb[0].mxu0
      %v7628 = vadd.f32 %v7339, %v7627
      %v7629 = vpop.f32.mrb[0].mxu0
      %v7630 = vpop.f32.mrb[0].mxu0
      %v7631 = vadd.f32 %v7342, %v7630
      %v7632 = vpop.f32.mrb[0].mxu0
      %7633 = vmatprep.mubr.bf16.mxu0 %v6516
      %7634 = vmatmul.mubr.bf16.gmra.mrb[0].mxu0 %v6515
      %v7635 = vpop.f32.mrb[0].mxu0
      %v7636 = vadd.f32 %v7347, %v7635
      %v7637 = vpop.f32.mrb[0].mxu0
      %v7638 = vpop.f32.mrb[0].mxu0
      %v7639 = vadd.f32 %v7350, %v7638
      %v7640 = vpop.f32.mrb[0].mxu0
      %7641 = vmatprep.mubr.bf16.mxu0 %v6524
      %7642 = vmatmul.mubr.bf16.gmra.mrb[0].mxu0 %v6523
      %v7643 = vpop.f32.mrb[0].mxu0
      %v7644 = vadd.f32 %v7355, %v7643
      %v7645 = vpop.f32.mrb[0].mxu0
      %v7646 = vpop.f32.mrb[0].mxu0
      %v7647 = vadd.f32 %v7358, %v7646
      %v7648 = vpop.f32.mrb[0].mxu0
      %7649 = vmatprep.mubr.bf16.mxu0 %v6532
      %7650 = vmatmul.mubr.bf16.gmra.mrb[0].mxu0 %v6531
      %v7651 = vpop.f32.mrb[0].mxu0
      %v7652 = vadd.f32 %v7363, %v7651
      %v7653 = vpop.f32.mrb[0].mxu0
      %v7654 = vpop.f32.mrb[0].mxu0
      %v7655 = vadd.f32 %v7366, %v7654
      %v7656 = vpop.f32.mrb[0].mxu0
      %7657 = vmatprep.mubr.bf16.mxu0 %v6540
      %7658 = vmatmul.mubr.bf16.gmra.mrb[0].mxu0 %v6539
      %v7659 = vpop.f32.mrb[0].mxu0
      %v7660 = vadd.f32 %v7371, %v7659
      %v7661 = vpop.f32.mrb[0].mxu0
      %v7662 = vpop.f32.mrb[0].mxu0
      %v7663 = vadd.f32 %v7374, %v7662
      %v7664 = vpop.f32.mrb[0].mxu0
      %7665 = vmatprep.mubr.bf16.mxu0 %v6548
      %7666 = vmatmul.mubr.bf16.gmra.mrb[0].mxu0 %v6547
      %v7667 = vpop.f32.mrb[0].mxu0
      %v7668 = vadd.f32 %v7379, %v7667
      %v7669 = vpop.f32.mrb[0].mxu0
      %v7670 = vpop.f32.mrb[0].mxu0
      %v7671 = vadd.f32 %v7382, %v7670
      %v7672 = vpop.f32.mrb[0].mxu0
      %7673 = vmatprep.mubr.bf16.mxu0 %v6556
      %7674 = vmatmul.mubr.bf16.gmra.mrb[0].mxu0 %v6555
      %v7675 = vpop.f32.mrb[0].mxu0
      %v7676 = vadd.f32 %v7387, %v7675
      %v7677 = vpop.f32.mrb[0].mxu0
      %v7678 = vpop.f32.mrb[0].mxu0
      %v7679 = vadd.f32 %v7390, %v7678
      %v7680 = vpop.f32.mrb[0].mxu0
      %7681 = vmatprep.mubr.bf16.mxu0 %v6564
      %7682 = vmatmul.mubr.bf16.gmra.mrb[0].mxu0 %v6563
      %v7683 = vpop.f32.mrb[0].mxu0
      %v7684 = vadd.f32 %v7395, %v7683
      %v7685 = vpop.f32.mrb[0].mxu0
      %v7686 = vpop.f32.mrb[0].mxu0
      %v7687 = vadd.f32 %v7398, %v7686
      %v7688 = vpop.f32.mrb[0].mxu0
      %7689 = vmatprep.mubr.bf16.mxu0 %v6572
      %7690 = vmatmul.mubr.bf16.gmra.mrb[0].mxu0 %v6571
      %v7691 = vpop.f32.mrb[0].mxu0
      %v7692 = vadd.f32 %v7403, %v7691
      %v7693 = vpop.f32.mrb[0].mxu0
      %v7694 = vpop.f32.mrb[0].mxu0
      %v7695 = vadd.f32 %v7406, %v7694
      %v7696 = vpop.f32.mrb[0].mxu0
      %7697 = vmatprep.mubr.bf16.mxu0 %v6580
      %7698 = vmatmul.mubr.bf16.gmra.mrb[0].mxu0 %v6579
      %v7699 = vpop.f32.mrb[0].mxu0
      %v7700 = vadd.f32 %v7411, %v7699
      %v7701 = vpop.f32.mrb[0].mxu0
      %v7702 = vpop.f32.mrb[0].mxu0
      %v7703 = vadd.f32 %v7414, %v7702
      %v7704 = vpop.f32.mrb[0].mxu0
      %7705 = vmatprep.mubr.bf16.mxu0 %v6588
      %7706 = vmatmul.mubr.bf16.gmra.mrb[0].mxu0 %v6587
      %v7707 = vpop.f32.mrb[0].mxu0
      %v7708 = vadd.f32 %v7419, %v7707
      %v7709 = vpop.f32.mrb[0].mxu0
      %v7710 = vpop.f32.mrb[0].mxu0
      %v7711 = vadd.f32 %v7422, %v7710
      %v7712 = vpop.f32.mrb[0].mxu0
      %7713 = vmatprep.mubr.bf16.mxu0 %v6596
      %7714 = vmatmul.mubr.bf16.gmra.mrb[0].mxu0 %v6595
      %v7715 = vpop.f32.mrb[0].mxu0
      %v7716 = vadd.f32 %v7427, %v7715
      %v7717 = vpop.f32.mrb[0].mxu0
      %v7718 = vpop.f32.mrb[0].mxu0
      %v7719 = vadd.f32 %v7430, %v7718
      %v7720 = vpop.f32.mrb[0].mxu0
      %7721 = vmatprep.mubr.bf16.mxu0 %v6604
      %7722 = vmatmul.mubr.bf16.gmra.mrb[0].mxu0 %v6603
      %v7723 = vpop.f32.mrb[0].mxu0
      %v7724 = vadd.f32 %v7435, %v7723
      %v7725 = vpop.f32.mrb[0].mxu0
      %v7726 = vpop.f32.mrb[0].mxu0
      %v7727 = vadd.f32 %v7438, %v7726
      %v7728 = vpop.f32.mrb[0].mxu0
      %7729 = vmatprep.mubr.bf16.mxu0 %v6612
      %7730 = vmatmul.mubr.bf16.gmra.mrb[0].mxu0 %v6611
      %v7731 = vpop.f32.mrb[0].mxu0
      %v7732 = vadd.f32 %v7443, %v7731
      %v7733 = vpop.f32.mrb[0].mxu0
      %v7734 = vpop.f32.mrb[0].mxu0
      %v7735 = vadd.f32 %v7446, %v7734
      %v7736 = vpop.f32.mrb[0].mxu0
      %7737 = vmatprep.mubr.bf16.mxu0 %v6620
      %7738 = vmatmul.mubr.bf16.gmra.mrb[0].mxu0 %v6619
      %v7739 = vpop.f32.mrb[0].mxu0
      %v7740 = vadd.f32 %v7451, %v7739
      %v7741 = vpop.f32.mrb[0].mxu0
      %v7742 = vpop.f32.mrb[0].mxu0
      %v7743 = vadd.f32 %v7454, %v7742
      %v7744 = vpop.f32.mrb[0].mxu0
      %7745 = vmatprep.mubr.bf16.mxu0 %v6628
      %7746 = vmatmul.mubr.bf16.gmra.mrb[0].mxu0 %v6627
      %v7747 = vpop.f32.mrb[0].mxu0
      %v7748 = vadd.f32 %v7459, %v7747
      %v7749 = vpop.f32.mrb[0].mxu0
      %v7750 = vpop.f32.mrb[0].mxu0
      %v7751 = vadd.f32 %v7462, %v7750
      %v7752 = vpop.f32.mrb[0].mxu0
      %7753 = vmatprep.mubr.bf16.mxu0 %v6636
      %7754 = vmatmul.mubr.bf16.gmra.mrb[0].mxu0 %v6635
      %v7755 = vpop.f32.mrb[0].mxu0
      %v7756 = vadd.f32 %v7467, %v7755
      %v7757 = vpop.f32.mrb[0].mxu0
      %v7758 = vpop.f32.mrb[0].mxu0
      %v7759 = vadd.f32 %v7470, %v7758
      %v7760 = vpop.f32.mrb[0].mxu0
      %7761 = vmatprep.mubr.bf16.mxu0 %v6644
      %7762 = vmatmul.mubr.bf16.gmra.mrb[0].mxu0 %v6643
      %v7763 = vpop.f32.mrb[0].mxu0
      %v7764 = vadd.f32 %v7475, %v7763
      %v7765 = vpop.f32.mrb[0].mxu0
      %v7766 = vpop.f32.mrb[0].mxu0
      %v7767 = vadd.f32 %v7478, %v7766
      %v7768 = vpop.f32.mrb[0].mxu0
      %7769 = vmatprep.mubr.bf16.mxu0 %v6652
      %7770 = vmatmul.mubr.bf16.gmra.mrb[0].mxu0 %v6651
      %v7771 = vpop.f32.mrb[0].mxu0
      %v7772 = vadd.f32 %v7483, %v7771
      %v7773 = vpop.f32.mrb[0].mxu0
      %v7774 = vpop.f32.mrb[0].mxu0
      %v7775 = vadd.f32 %v7486, %v7774
      %v7776 = vpop.f32.mrb[0].mxu0
      %7777 = vmatprep.mubr.bf16.mxu0 %v6660
      %7778 = vmatmul.mubr.bf16.gmra.mrb[0].mxu0 %v6659
      %v7779 = vpop.f32.mrb[0].mxu0
      %v7780 = vadd.f32 %v7491, %v7779
      %v7781 = vpop.f32.mrb[0].mxu0
      %v7782 = vpop.f32.mrb[0].mxu0
      %v7783 = vadd.f32 %v7494, %v7782
      %v7784 = vpop.f32.mrb[0].mxu0
      %7785 = vmatprep.mubr.bf16.mxu0 %v6668
      %7786 = vmatmul.mubr.bf16.gmra.mrb[0].mxu0 %v6667
      %v7787 = vpop.f32.mrb[0].mxu0
      %v7788 = vadd.f32 %v7499, %v7787
      %v7789 = vpop.f32.mrb[0].mxu0
      %v7790 = vpop.f32.mrb[0].mxu0
      %v7791 = vadd.f32 %v7502, %v7790
      %v7792 = vpop.f32.mrb[0].mxu0
      %7793 = vmatprep.mubr.bf16.mxu0 %v6676
      %7794 = vmatmul.mubr.bf16.gmra.mrb[0].mxu0 %v6675
      %v7795 = vpop.f32.mrb[0].mxu0
      %v7796 = vadd.f32 %v7507, %v7795
      %v7797 = vpop.f32.mrb[0].mxu0
      %v7798 = vpop.f32.mrb[0].mxu0
      %v7799 = vadd.f32 %v7510, %v7798
      %v7800 = vpop.f32.mrb[0].mxu0
      %7801 = vmatprep.mubr.bf16.mxu0 %v6684
      %7802 = vmatmul.mubr.bf16.gmra.mrb[0].mxu0 %v6683
      %v7803 = vpop.f32.mrb[0].mxu0
      %v7804 = vadd.f32 %v7515, %v7803
      %v7805 = vpop.f32.mrb[0].mxu0
      %v7806 = vpop.f32.mrb[0].mxu0
      %v7807 = vadd.f32 %v7518, %v7806
      %v7808 = vpop.f32.mrb[0].mxu0
      %7809 = vmatprep.mubr.bf16.mxu0 %v6692
      %7810 = vmatmul.mubr.bf16.gmra.mrb[0].mxu0 %v6691
      %v7811 = vpop.f32.mrb[0].mxu0
      %v7812 = vadd.f32 %v7523, %v7811
      %v7813 = vpop.f32.mrb[0].mxu0
      %v7814 = vpop.f32.mrb[0].mxu0
      %v7815 = vadd.f32 %v7526, %v7814
      %v7816 = vpop.f32.mrb[0].mxu0
      %7817 = vmatprep.mubr.bf16.mxu0 %v6700
      %7818 = vmatmul.mubr.bf16.gmra.mrb[0].mxu0 %v6699
      %v7819 = vpop.f32.mrb[0].mxu0
      %v7820 = vadd.f32 %v7531, %v7819
      %v7821 = vpop.f32.mrb[0].mxu0
      %v7822 = vpop.f32.mrb[0].mxu0
      %v7823 = vadd.f32 %v7534, %v7822
      %v7824 = vpop.f32.mrb[0].mxu0
      %7825 = vdwg.mxu0
      %7826 = vmatprep.subr.bf16.mxu0 0
      %7827 = vmatpush1.bf16.msra.mxu0 %v5279
      %7828 = vmatprep.subr.bf16.mxu0 0
      %7829 = vmatpush1.bf16.msra.mxu0 %v5280
      %7830 = vmatprep.subr.bf16.mxu0 0
      %7831 = vmatpush1.bf16.msra.mxu0 %v5281
      %7832 = vmatprep.subr.bf16.mxu0 0
      %7833 = vmatpush1.bf16.msra.mxu0 %v5282
      %7834 = vmatprep.subr.bf16.mxu0 0
      %7835 = vmatpush1.bf16.msra.mxu0 %v5283
      %7836 = vmatprep.subr.bf16.mxu0 0
      %7837 = vmatpush1.bf16.msra.mxu0 %v5284
      %7838 = vmatprep.subr.bf16.mxu0 0
      %7839 = vmatpush1.bf16.msra.mxu0 %v5285
      %7840 = vmatprep.subr.bf16.mxu0 0
      %7841 = vmatpush1.bf16.msra.mxu0 %v5286
      %7842 = vmatprep.subr.bf16.mxu0 0
      %7843 = vmatpush1.bf16.msra.mxu0 %v5287
      %7844 = vmatprep.subr.bf16.mxu0 0
      %7845 = vmatpush1.bf16.msra.mxu0 %v5288
      %7846 = vmatprep.subr.bf16.mxu0 0
      %7847 = vmatpush1.bf16.msra.mxu0 %v5289
      %7848 = vmatprep.subr.bf16.mxu0 0
      %7849 = vmatpush1.bf16.msra.mxu0 %v5290
      %7850 = vmatprep.subr.bf16.mxu0 0
      %7851 = vmatpush1.bf16.msra.mxu0 %v5291
      %7852 = vmatprep.subr.bf16.mxu0 0
      %7853 = vmatpush1.bf16.msra.mxu0 %v5292
      %7854 = vmatprep.subr.bf16.mxu0 0
      %7855 = vmatpush1.bf16.msra.mxu0 %v5293
      %7856 = vmatprep.subr.bf16.mxu0 0
      %7857 = vmatpush1.bf16.msra.mxu0 %v5294
      %7858 = vmatprep.mubr.bf16.mxu0 %v6454
      %7859 = vmatmul.mubr.bf16.gmra.mrb[0].mxu0 %v6453
      %v7860 = vpop.f32.mrb[0].mxu0
      %v7861 = vadd.f32 %v7572, %v7860
      %v7862 = vpop.f32.mrb[0].mxu0
      %v7863 = vpop.f32.mrb[0].mxu0
      %v7864 = vadd.f32 %v7575, %v7863
      %v7865 = vpop.f32.mrb[0].mxu0
      %7866 = vmatprep.mubr.bf16.mxu0 %v6462
      %7867 = vmatmul.mubr.bf16.gmra.mrb[0].mxu0 %v6461
      %v7868 = vpop.f32.mrb[0].mxu0
      %v7869 = vadd.f32 %v7580, %v7868
      %v7870 = vpop.f32.mrb[0].mxu0
      %v7871 = vpop.f32.mrb[0].mxu0
      %v7872 = vadd.f32 %v7583, %v7871
      %v7873 = vpop.f32.mrb[0].mxu0
      %7874 = vmatprep.mubr.bf16.mxu0 %v6470
      %7875 = vmatmul.mubr.bf16.gmra.mrb[0].mxu0 %v6469
      %v7876 = vpop.f32.mrb[0].mxu0
      %v7877 = vadd.f32 %v7588, %v7876
      %v7878 = vpop.f32.mrb[0].mxu0
      %v7879 = vpop.f32.mrb[0].mxu0
      %v7880 = vadd.f32 %v7591, %v7879
      %v7881 = vpop.f32.mrb[0].mxu0
      %7882 = vmatprep.mubr.bf16.mxu0 %v6478
      %7883 = vmatmul.mubr.bf16.gmra.mrb[0].mxu0 %v6477
      %v7884 = vpop.f32.mrb[0].mxu0
      %v7885 = vadd.f32 %v7596, %v7884
      %v7886 = vpop.f32.mrb[0].mxu0
      %v7887 = vpop.f32.mrb[0].mxu0
      %v7888 = vadd.f32 %v7599, %v7887
      %v7889 = vpop.f32.mrb[0].mxu0
      %7890 = vmatprep.mubr.bf16.mxu0 %v6486
      %7891 = vmatmul.mubr.bf16.gmra.mrb[0].mxu0 %v6485
      %v7892 = vpop.f32.mrb[0].mxu0
      %v7893 = vadd.f32 %v7604, %v7892
      %v7894 = vpop.f32.mrb[0].mxu0
      %v7895 = vpop.f32.mrb[0].mxu0
      %v7896 = vadd.f32 %v7607, %v7895
      %v7897 = vpop.f32.mrb[0].mxu0
      %7898 = vmatprep.mubr.bf16.mxu0 %v6494
      %7899 = vmatmul.mubr.bf16.gmra.mrb[0].mxu0 %v6493
      %v7900 = vpop.f32.mrb[0].mxu0
      %v7901 = vadd.f32 %v7612, %v7900
      %v7902 = vpop.f32.mrb[0].mxu0
      %v7903 = vpop.f32.mrb[0].mxu0
      %v7904 = vadd.f32 %v7615, %v7903
      %v7905 = vpop.f32.mrb[0].mxu0
      %7906 = vmatprep.mubr.bf16.mxu0 %v6502
      %7907 = vmatmul.mubr.bf16.gmra.mrb[0].mxu0 %v6501
      %v7908 = vpop.f32.mrb[0].mxu0
      %v7909 = vadd.f32 %v7620, %v7908
      %v7910 = vpop.f32.mrb[0].mxu0
      %v7911 = vpop.f32.mrb[0].mxu0
      %v7912 = vadd.f32 %v7623, %v7911
      %v7913 = vpop.f32.mrb[0].mxu0
      %7914 = vmatprep.mubr.bf16.mxu0 %v6510
      %7915 = vmatmul.mubr.bf16.gmra.mrb[0].mxu0 %v6509
      %v7916 = vpop.f32.mrb[0].mxu0
      %v7917 = vadd.f32 %v7628, %v7916
      %v7918 = vpop.f32.mrb[0].mxu0
      %v7919 = vpop.f32.mrb[0].mxu0
      %v7920 = vadd.f32 %v7631, %v7919
      %v7921 = vpop.f32.mrb[0].mxu0
      %7922 = vmatprep.mubr.bf16.mxu0 %v6518
      %7923 = vmatmul.mubr.bf16.gmra.mrb[0].mxu0 %v6517
      %v7924 = vpop.f32.mrb[0].mxu0
      %v7925 = vadd.f32 %v7636, %v7924
      %v7926 = vpop.f32.mrb[0].mxu0
      %v7927 = vpop.f32.mrb[0].mxu0
      %v7928 = vadd.f32 %v7639, %v7927
      %v7929 = vpop.f32.mrb[0].mxu0
      %7930 = vmatprep.mubr.bf16.mxu0 %v6526
      %7931 = vmatmul.mubr.bf16.gmra.mrb[0].mxu0 %v6525
      %v7932 = vpop.f32.mrb[0].mxu0
      %v7933 = vadd.f32 %v7644, %v7932
      %v7934 = vpop.f32.mrb[0].mxu0
      %v7935 = vpop.f32.mrb[0].mxu0
      %v7936 = vadd.f32 %v7647, %v7935
      %v7937 = vpop.f32.mrb[0].mxu0
      %7938 = vmatprep.mubr.bf16.mxu0 %v6534
      %7939 = vmatmul.mubr.bf16.gmra.mrb[0].mxu0 %v6533
      %v7940 = vpop.f32.mrb[0].mxu0
      %v7941 = vadd.f32 %v7652, %v7940
      %v7942 = vpop.f32.mrb[0].mxu0
      %v7943 = vpop.f32.mrb[0].mxu0
      %v7944 = vadd.f32 %v7655, %v7943
      %v7945 = vpop.f32.mrb[0].mxu0
      %7946 = vmatprep.mubr.bf16.mxu0 %v6542
      %7947 = vmatmul.mubr.bf16.gmra.mrb[0].mxu0 %v6541
      %v7948 = vpop.f32.mrb[0].mxu0
      %v7949 = vadd.f32 %v7660, %v7948
      %v7950 = vpop.f32.mrb[0].mxu0
      %v7951 = vpop.f32.mrb[0].mxu0
      %v7952 = vadd.f32 %v7663, %v7951
      %v7953 = vpop.f32.mrb[0].mxu0
      %7954 = vmatprep.mubr.bf16.mxu0 %v6550
      %7955 = vmatmul.mubr.bf16.gmra.mrb[0].mxu0 %v6549
      %v7956 = vpop.f32.mrb[0].mxu0
      %v7957 = vadd.f32 %v7668, %v7956
      %v7958 = vpop.f32.mrb[0].mxu0
      %v7959 = vpop.f32.mrb[0].mxu0
      %v7960 = vadd.f32 %v7671, %v7959
      %v7961 = vpop.f32.mrb[0].mxu0
      %7962 = vmatprep.mubr.bf16.mxu0 %v6558
      %7963 = vmatmul.mubr.bf16.gmra.mrb[0].mxu0 %v6557
      %v7964 = vpop.f32.mrb[0].mxu0
      %v7965 = vadd.f32 %v7676, %v7964
      %v7966 = vpop.f32.mrb[0].mxu0
      %v7967 = vpop.f32.mrb[0].mxu0
      %v7968 = vadd.f32 %v7679, %v7967
      %v7969 = vpop.f32.mrb[0].mxu0
      %7970 = vmatprep.mubr.bf16.mxu0 %v6566
      %7971 = vmatmul.mubr.bf16.gmra.mrb[0].mxu0 %v6565
      %v7972 = vpop.f32.mrb[0].mxu0
      %v7973 = vadd.f32 %v7684, %v7972
      %v7974 = vpop.f32.mrb[0].mxu0
      %v7975 = vpop.f32.mrb[0].mxu0
      %v7976 = vadd.f32 %v7687, %v7975
      %v7977 = vpop.f32.mrb[0].mxu0
      %7978 = vmatprep.mubr.bf16.mxu0 %v6574
      %7979 = vmatmul.mubr.bf16.gmra.mrb[0].mxu0 %v6573
      %v7980 = vpop.f32.mrb[0].mxu0
      %v7981 = vadd.f32 %v7692, %v7980
      %v7982 = vpop.f32.mrb[0].mxu0
      %v7983 = vpop.f32.mrb[0].mxu0
      %v7984 = vadd.f32 %v7695, %v7983
      %v7985 = vpop.f32.mrb[0].mxu0
      %7986 = vmatprep.mubr.bf16.mxu0 %v6582
      %7987 = vmatmul.mubr.bf16.gmra.mrb[0].mxu0 %v6581
      %v7988 = vpop.f32.mrb[0].mxu0
      %v7989 = vadd.f32 %v7700, %v7988
      %v7990 = vpop.f32.mrb[0].mxu0
      %v7991 = vpop.f32.mrb[0].mxu0
      %v7992 = vadd.f32 %v7703, %v7991
      %v7993 = vpop.f32.mrb[0].mxu0
      %7994 = vmatprep.mubr.bf16.mxu0 %v6590
      %7995 = vmatmul.mubr.bf16.gmra.mrb[0].mxu0 %v6589
      %v7996 = vpop.f32.mrb[0].mxu0
      %v7997 = vadd.f32 %v7708, %v7996
      %v7998 = vpop.f32.mrb[0].mxu0
      %v7999 = vpop.f32.mrb[0].mxu0
      %v8000 = vadd.f32 %v7711, %v7999
      %v8001 = vpop.f32.mrb[0].mxu0
      %8002 = vmatprep.mubr.bf16.mxu0 %v6598
      %8003 = vmatmul.mubr.bf16.gmra.mrb[0].mxu0 %v6597
      %v8004 = vpop.f32.mrb[0].mxu0
      %v8005 = vadd.f32 %v7716, %v8004
      %v8006 = vpop.f32.mrb[0].mxu0
      %v8007 = vpop.f32.mrb[0].mxu0
      %v8008 = vadd.f32 %v7719, %v8007
      %v8009 = vpop.f32.mrb[0].mxu0
      %8010 = vmatprep.mubr.bf16.mxu0 %v6606
      %8011 = vmatmul.mubr.bf16.gmra.mrb[0].mxu0 %v6605
      %v8012 = vpop.f32.mrb[0].mxu0
      %v8013 = vadd.f32 %v7724, %v8012
      %v8014 = vpop.f32.mrb[0].mxu0
      %v8015 = vpop.f32.mrb[0].mxu0
      %v8016 = vadd.f32 %v7727, %v8015
      %v8017 = vpop.f32.mrb[0].mxu0
      %8018 = vmatprep.mubr.bf16.mxu0 %v6614
      %8019 = vmatmul.mubr.bf16.gmra.mrb[0].mxu0 %v6613
      %v8020 = vpop.f32.mrb[0].mxu0
      %v8021 = vadd.f32 %v7732, %v8020
      %v8022 = vpop.f32.mrb[0].mxu0
      %v8023 = vpop.f32.mrb[0].mxu0
      %v8024 = vadd.f32 %v7735, %v8023
      %v8025 = vpop.f32.mrb[0].mxu0
      %8026 = vmatprep.mubr.bf16.mxu0 %v6622
      %8027 = vmatmul.mubr.bf16.gmra.mrb[0].mxu0 %v6621
      %v8028 = vpop.f32.mrb[0].mxu0
      %v8029 = vadd.f32 %v7740, %v8028
      %v8030 = vpop.f32.mrb[0].mxu0
      %v8031 = vpop.f32.mrb[0].mxu0
      %v8032 = vadd.f32 %v7743, %v8031
      %v8033 = vpop.f32.mrb[0].mxu0
      %8034 = vmatprep.mubr.bf16.mxu0 %v6630
      %8035 = vmatmul.mubr.bf16.gmra.mrb[0].mxu0 %v6629
      %v8036 = vpop.f32.mrb[0].mxu0
      %v8037 = vadd.f32 %v7748, %v8036
      %v8038 = vpop.f32.mrb[0].mxu0
      %v8039 = vpop.f32.mrb[0].mxu0
      %v8040 = vadd.f32 %v7751, %v8039
      %v8041 = vpop.f32.mrb[0].mxu0
      %8042 = vmatprep.mubr.bf16.mxu0 %v6638
      %8043 = vmatmul.mubr.bf16.gmra.mrb[0].mxu0 %v6637
      %v8044 = vpop.f32.mrb[0].mxu0
      %v8045 = vadd.f32 %v7756, %v8044
      %v8046 = vpop.f32.mrb[0].mxu0
      %v8047 = vpop.f32.mrb[0].mxu0
      %v8048 = vadd.f32 %v7759, %v8047
      %v8049 = vpop.f32.mrb[0].mxu0
      %8050 = vmatprep.mubr.bf16.mxu0 %v6646
      %8051 = vmatmul.mubr.bf16.gmra.mrb[0].mxu0 %v6645
      %v8052 = vpop.f32.mrb[0].mxu0
      %v8053 = vadd.f32 %v7764, %v8052
      %v8054 = vpop.f32.mrb[0].mxu0
      %v8055 = vpop.f32.mrb[0].mxu0
      %v8056 = vadd.f32 %v7767, %v8055
      %v8057 = vpop.f32.mrb[0].mxu0
      %8058 = vmatprep.mubr.bf16.mxu0 %v6654
      %8059 = vmatmul.mubr.bf16.gmra.mrb[0].mxu0 %v6653
      %v8060 = vpop.f32.mrb[0].mxu0
      %v8061 = vadd.f32 %v7772, %v8060
      %v8062 = vpop.f32.mrb[0].mxu0
      %v8063 = vpop.f32.mrb[0].mxu0
      %v8064 = vadd.f32 %v7775, %v8063
      %v8065 = vpop.f32.mrb[0].mxu0
      %8066 = vmatprep.mubr.bf16.mxu0 %v6662
      %8067 = vmatmul.mubr.bf16.gmra.mrb[0].mxu0 %v6661
      %v8068 = vpop.f32.mrb[0].mxu0
      %v8069 = vadd.f32 %v7780, %v8068
      %v8070 = vpop.f32.mrb[0].mxu0
      %v8071 = vpop.f32.mrb[0].mxu0
      %v8072 = vadd.f32 %v7783, %v8071
      %v8073 = vpop.f32.mrb[0].mxu0
      %8074 = vmatprep.mubr.bf16.mxu0 %v6670
      %8075 = vmatmul.mubr.bf16.gmra.mrb[0].mxu0 %v6669
      %v8076 = vpop.f32.mrb[0].mxu0
      %v8077 = vadd.f32 %v7788, %v8076
      %v8078 = vpop.f32.mrb[0].mxu0
      %v8079 = vpop.f32.mrb[0].mxu0
      %v8080 = vadd.f32 %v7791, %v8079
      %v8081 = vpop.f32.mrb[0].mxu0
      %8082 = vmatprep.mubr.bf16.mxu0 %v6678
      %8083 = vmatmul.mubr.bf16.gmra.mrb[0].mxu0 %v6677
      %v8084 = vpop.f32.mrb[0].mxu0
      %v8085 = vadd.f32 %v7796, %v8084
      %v8086 = vpop.f32.mrb[0].mxu0
      %v8087 = vpop.f32.mrb[0].mxu0
      %v8088 = vadd.f32 %v7799, %v8087
      %v8089 = vpop.f32.mrb[0].mxu0
      %8090 = vmatprep.mubr.bf16.mxu0 %v6686
      %8091 = vmatmul.mubr.bf16.gmra.mrb[0].mxu0 %v6685
      %v8092 = vpop.f32.mrb[0].mxu0
      %v8093 = vadd.f32 %v7804, %v8092
      %v8094 = vpop.f32.mrb[0].mxu0
      %v8095 = vpop.f32.mrb[0].mxu0
      %v8096 = vadd.f32 %v7807, %v8095
      %v8097 = vpop.f32.mrb[0].mxu0
      %8098 = vmatprep.mubr.bf16.mxu0 %v6694
      %8099 = vmatmul.mubr.bf16.gmra.mrb[0].mxu0 %v6693
      %v8100 = vpop.f32.mrb[0].mxu0
      %v8101 = vadd.f32 %v7812, %v8100
      %v8102 = vpop.f32.mrb[0].mxu0
      %v8103 = vpop.f32.mrb[0].mxu0
      %v8104 = vadd.f32 %v7815, %v8103
      %v8105 = vpop.f32.mrb[0].mxu0
      %8106 = vmatprep.mubr.bf16.mxu0 %v6702
      %8107 = vmatmul.mubr.bf16.gmra.mrb[0].mxu0 %v6701
      %v8108 = vpop.f32.mrb[0].mxu0
      %v8109 = vadd.f32 %v7820, %v8108
      %v8110 = vpop.f32.mrb[0].mxu0
      %v8111 = vpop.f32.mrb[0].mxu0
      %v8112 = vadd.f32 %v7823, %v8111
      %v8113 = vpop.f32.mrb[0].mxu0
      %8114 = vdwg.mxu0
      %v8115 = vmax.f32 %v7861, 0.0
      %v8116 = vmax.f32 %v7864, 0.0
      %v8117 = vmax.f32 %v7869, 0.0
      %v8118 = vmax.f32 %v7872, 0.0
      %v8119 = vmax.f32 %v7877, 0.0
      %v8120 = vmax.f32 %v7880, 0.0
      %v8121 = vmax.f32 %v7885, 0.0
      %v8122 = vmax.f32 %v7888, 0.0
      %v8123 = vmax.f32 %v7893, 0.0
      %v8124 = vmax.f32 %v7896, 0.0
      %v8125 = vmax.f32 %v7901, 0.0
      %v8126 = vmax.f32 %v7904, 0.0
      %v8127 = vmax.f32 %v7909, 0.0
      %v8128 = vmax.f32 %v7912, 0.0
      %v8129 = vmax.f32 %v7917, 0.0
      %v8130 = vmax.f32 %v7920, 0.0
      %v8131 = vmax.f32 %v7925, 0.0
      %v8132 = vmax.f32 %v7928, 0.0
      %v8133 = vmax.f32 %v7933, 0.0
      %v8134 = vmax.f32 %v7936, 0.0
      %v8135 = vmax.f32 %v7941, 0.0
      %v8136 = vmax.f32 %v7944, 0.0
      %v8137 = vmax.f32 %v7949, 0.0
      %v8138 = vmax.f32 %v7952, 0.0
      %v8139 = vmax.f32 %v7957, 0.0
      %v8140 = vmax.f32 %v7960, 0.0
      %v8141 = vmax.f32 %v7965, 0.0
      %v8142 = vmax.f32 %v7968, 0.0
      %v8143 = vmax.f32 %v7973, 0.0
      %v8144 = vmax.f32 %v7976, 0.0
      %v8145 = vmax.f32 %v7981, 0.0
      %v8146 = vmax.f32 %v7984, 0.0
      %v8147 = vmax.f32 %v7989, 0.0
      %v8148 = vmax.f32 %v7992, 0.0
      %v8149 = vmax.f32 %v7997, 0.0
      %v8150 = vmax.f32 %v8000, 0.0
      %v8151 = vmax.f32 %v8005, 0.0
      %v8152 = vmax.f32 %v8008, 0.0
      %v8153 = vmax.f32 %v8013, 0.0
      %v8154 = vmax.f32 %v8016, 0.0
      %v8155 = vmax.f32 %v8021, 0.0
      %v8156 = vmax.f32 %v8024, 0.0
      %v8157 = vmax.f32 %v8029, 0.0
      %v8158 = vmax.f32 %v8032, 0.0
      %v8159 = vmax.f32 %v8037, 0.0
      %v8160 = vmax.f32 %v8040, 0.0
      %v8161 = vmax.f32 %v8045, 0.0
      %v8162 = vmax.f32 %v8048, 0.0
      %v8163 = vmax.f32 %v8053, 0.0
      %v8164 = vmax.f32 %v8056, 0.0
      %v8165 = vmax.f32 %v8061, 0.0
      %v8166 = vmax.f32 %v8064, 0.0
      %v8167 = vmax.f32 %v8069, 0.0
      %v8168 = vmax.f32 %v8072, 0.0
      %v8169 = vmax.f32 %v8077, 0.0
      %v8170 = vmax.f32 %v8080, 0.0
      %v8171 = vmax.f32 %v8085, 0.0
      %v8172 = vmax.f32 %v8088, 0.0
      %v8173 = vmax.f32 %v8093, 0.0
      %v8174 = vmax.f32 %v8096, 0.0
      %v8175 = vmax.f32 %v8101, 0.0
      %v8176 = vmax.f32 %v8104, 0.0
      %v8177 = vmax.f32 %v8109, 0.0
      %v8178 = vmax.f32 %v8112, 0.0
      %v8179 = vld [vmem:[#allocation5] sm:$0xff]
      %v8180 = vld [vmem:[#allocation5 + $0x8] sm:$0xff]
      %v8181 = vld [vmem:[#allocation5 + $0x10] sm:$0xff]
      %v8182 = vld [vmem:[#allocation5 + $0x18] sm:$0xff]
      %v8183 = vld [vmem:[#allocation5 + $0x20] sm:$0xff]
      %v8184 = vld [vmem:[#allocation5 + $0x28] sm:$0xff]
      %v8185 = vld [vmem:[#allocation5 + $0x30] sm:$0xff]
      %v8186 = vld [vmem:[#allocation5 + $0x38] sm:$0xff]
      %v8187 = vld [vmem:[#allocation5 + $0x40] sm:$0xff]
      %v8188 = vld [vmem:[#allocation5 + $0x48] sm:$0xff]
      %v8189 = vld [vmem:[#allocation5 + $0x50] sm:$0xff]
      %v8190 = vld [vmem:[#allocation5 + $0x58] sm:$0xff]
      %v8191 = vld [vmem:[#allocation5 + $0x60] sm:$0xff]
      %v8192 = vld [vmem:[#allocation5 + $0x68] sm:$0xff]
      %v8193 = vld [vmem:[#allocation5 + $0x70] sm:$0xff]
      %v8194 = vld [vmem:[#allocation5 + $0x78] sm:$0xff]
      %v8195 = vld [vmem:[#allocation5 + $0x80] sm:$0xff]
      %v8196 = vld [vmem:[#allocation5 + $0x88] sm:$0xff]
      %v8197 = vld [vmem:[#allocation5 + $0x90] sm:$0xff]
      %v8198 = vld [vmem:[#allocation5 + $0x98] sm:$0xff]
      %v8199 = vld [vmem:[#allocation5 + $0xa0] sm:$0xff]
      %v8200 = vld [vmem:[#allocation5 + $0xa8] sm:$0xff]
      %v8201 = vld [vmem:[#allocation5 + $0xb0] sm:$0xff]
      %v8202 = vld [vmem:[#allocation5 + $0xb8] sm:$0xff]
      %v8203 = vld [vmem:[#allocation5 + $0xc0] sm:$0xff]
      %v8204 = vld [vmem:[#allocation5 + $0xc8] sm:$0xff]
      %v8205 = vld [vmem:[#allocation5 + $0xd0] sm:$0xff]
      %v8206 = vld [vmem:[#allocation5 + $0xd8] sm:$0xff]
      %v8207 = vld [vmem:[#allocation5 + $0xe0] sm:$0xff]
      %v8208 = vld [vmem:[#allocation5 + $0xe8] sm:$0xff]
      %v8209 = vld [vmem:[#allocation5 + $0xf0] sm:$0xff]
      %v8210 = vld [vmem:[#allocation5 + $0xf8] sm:$0xff]
      %v8211 = vld [vmem:[#allocation5 + $0x100] sm:$0xff]
      %v8212 = vld [vmem:[#allocation5 + $0x108] sm:$0xff]
      %v8213 = vld [vmem:[#allocation5 + $0x110] sm:$0xff]
      %v8214 = vld [vmem:[#allocation5 + $0x118] sm:$0xff]
      %v8215 = vld [vmem:[#allocation5 + $0x120] sm:$0xff]
      %v8216 = vld [vmem:[#allocation5 + $0x128] sm:$0xff]
      %v8217 = vld [vmem:[#allocation5 + $0x130] sm:$0xff]
      %v8218 = vld [vmem:[#allocation5 + $0x138] sm:$0xff]
      %v8219 = vld [vmem:[#allocation5 + $0x140] sm:$0xff]
      %v8220 = vld [vmem:[#allocation5 + $0x148] sm:$0xff]
      %v8221 = vld [vmem:[#allocation5 + $0x150] sm:$0xff]
      %v8222 = vld [vmem:[#allocation5 + $0x158] sm:$0xff]
      %v8223 = vld [vmem:[#allocation5 + $0x160] sm:$0xff]
      %v8224 = vld [vmem:[#allocation5 + $0x168] sm:$0xff]
      %v8225 = vld [vmem:[#allocation5 + $0x170] sm:$0xff]
      %v8226 = vld [vmem:[#allocation5 + $0x178] sm:$0xff]
      %v8227 = vld [vmem:[#allocation5 + $0x180] sm:$0xff]
      %v8228 = vld [vmem:[#allocation5 + $0x188] sm:$0xff]
      %v8229 = vld [vmem:[#allocation5 + $0x190] sm:$0xff]
      %v8230 = vld [vmem:[#allocation5 + $0x198] sm:$0xff]
      %v8231 = vld [vmem:[#allocation5 + $0x1a0] sm:$0xff]
      %v8232 = vld [vmem:[#allocation5 + $0x1a8] sm:$0xff]
      %v8233 = vld [vmem:[#allocation5 + $0x1b0] sm:$0xff]
      %v8234 = vld [vmem:[#allocation5 + $0x1b8] sm:$0xff]
      %v8235 = vld [vmem:[#allocation5 + $0x1c0] sm:$0xff]
      %v8236 = vld [vmem:[#allocation5 + $0x1c8] sm:$0xff]
      %v8237 = vld [vmem:[#allocation5 + $0x1d0] sm:$0xff]
      %v8238 = vld [vmem:[#allocation5 + $0x1d8] sm:$0xff]
      %v8239 = vld [vmem:[#allocation5 + $0x1e0] sm:$0xff]
      %v8240 = vld [vmem:[#allocation5 + $0x1e8] sm:$0xff]
      %v8241 = vld [vmem:[#allocation5 + $0x1f0] sm:$0xff]
      %v8242 = vld [vmem:[#allocation5 + $0x1f8] sm:$0xff]
      %v8243 = vpack.c.bf16 %v8116, %v8115
      %v8244 = vpack.c.bf16 %v8118, %v8117
      %v8245 = vpack.c.bf16 %v8120, %v8119
      %v8246 = vpack.c.bf16 %v8122, %v8121
      %v8247 = vpack.c.bf16 %v8124, %v8123
      %v8248 = vpack.c.bf16 %v8126, %v8125
      %v8249 = vpack.c.bf16 %v8128, %v8127
      %v8250 = vpack.c.bf16 %v8130, %v8129
      %v8251 = vpack.c.bf16 %v8132, %v8131
      %v8252 = vpack.c.bf16 %v8134, %v8133
      %v8253 = vpack.c.bf16 %v8136, %v8135
      %v8254 = vpack.c.bf16 %v8138, %v8137
      %v8255 = vpack.c.bf16 %v8140, %v8139
      %v8256 = vpack.c.bf16 %v8142, %v8141
      %v8257 = vpack.c.bf16 %v8144, %v8143
      %v8258 = vpack.c.bf16 %v8146, %v8145
      %v8259 = vpack.c.bf16 %v8148, %v8147
      %v8260 = vpack.c.bf16 %v8150, %v8149
      %v8261 = vpack.c.bf16 %v8152, %v8151
      %v8262 = vpack.c.bf16 %v8154, %v8153
      %v8263 = vpack.c.bf16 %v8156, %v8155
      %v8264 = vpack.c.bf16 %v8158, %v8157
      %v8265 = vpack.c.bf16 %v8160, %v8159
      %v8266 = vpack.c.bf16 %v8162, %v8161
      %v8267 = vpack.c.bf16 %v8164, %v8163
      %v8268 = vpack.c.bf16 %v8166, %v8165
      %v8269 = vpack.c.bf16 %v8168, %v8167
      %v8270 = vpack.c.bf16 %v8170, %v8169
      %v8271 = vpack.c.bf16 %v8172, %v8171
      %v8272 = vpack.c.bf16 %v8174, %v8173
      %v8273 = vpack.c.bf16 %v8176, %v8175
      %v8274 = vpack.c.bf16 %v8178, %v8177
      %v8275 = vld [vmem:[%s10] sm:$0xff]
      %v8276 = vld [vmem:[%s10 + $0x8] sm:$0xff]
      %v8277 = vld [vmem:[%s10 + $0x10] sm:$0xff]
      %v8278 = vld [vmem:[%s10 + $0x18] sm:$0xff]
      %v8279 = vld [vmem:[%s10 + $0x20] sm:$0xff]
      %v8280 = vld [vmem:[%s10 + $0x28] sm:$0xff]
      %v8281 = vld [vmem:[%s10 + $0x30] sm:$0xff]
      %v8282 = vld [vmem:[%s10 + $0x38] sm:$0xff]
      %v8283 = vld [vmem:[%s10 + $0x40] sm:$0xff]
      %v8284 = vld [vmem:[%s10 + $0x48] sm:$0xff]
      %v8285 = vld [vmem:[%s10 + $0x50] sm:$0xff]
      %v8286 = vld [vmem:[%s10 + $0x58] sm:$0xff]
      %v8287 = vld [vmem:[%s10 + $0x60] sm:$0xff]
      %v8288 = vld [vmem:[%s10 + $0x68] sm:$0xff]
      %v8289 = vld [vmem:[%s10 + $0x70] sm:$0xff]
      %v8290 = vld [vmem:[%s10 + $0x78] sm:$0xff]
      %v8291 = vld [vmem:[%s10 + $0x80] sm:$0xff]
      %v8292 = vld [vmem:[%s10 + $0x88] sm:$0xff]
      %v8293 = vld [vmem:[%s10 + $0x90] sm:$0xff]
      %v8294 = vld [vmem:[%s10 + $0x98] sm:$0xff]
      %v8295 = vld [vmem:[%s10 + $0xa0] sm:$0xff]
      %v8296 = vld [vmem:[%s10 + $0xa8] sm:$0xff]
      %v8297 = vld [vmem:[%s10 + $0xb0] sm:$0xff]
      %v8298 = vld [vmem:[%s10 + $0xb8] sm:$0xff]
      %v8299 = vld [vmem:[%s10 + $0xc0] sm:$0xff]
      %v8300 = vld [vmem:[%s10 + $0xc8] sm:$0xff]
      %v8301 = vld [vmem:[%s10 + $0xd0] sm:$0xff]
      %v8302 = vld [vmem:[%s10 + $0xd8] sm:$0xff]
      %v8303 = vld [vmem:[%s10 + $0xe0] sm:$0xff]
      %v8304 = vld [vmem:[%s10 + $0xe8] sm:$0xff]
      %v8305 = vld [vmem:[%s10 + $0xf0] sm:$0xff]
      %v8306 = vld [vmem:[%s10 + $0xf8] sm:$0xff]
      %8308 = vset.pattern.permute.xlu0 0
      %8309 = vperm.xlu0 %8308, %v8275
      %v8310 = vpop.permute.xlu0 %8309
      %8313 = vset.pattern.permute.xlu0 0
      %8314 = vperm.xlu0 %8313, %v8276
      %v8315 = vpop.permute.xlu0 %8314
      %8318 = vset.pattern.permute.xlu0 0
      %8319 = vperm.xlu0 %8318, %v8277
      %v8320 = vpop.permute.xlu0 %8319
      %8323 = vset.pattern.permute.xlu0 0
      %8324 = vperm.xlu0 %8323, %v8278
      %v8325 = vpop.permute.xlu0 %8324
      %8328 = vset.pattern.permute.xlu0 0
      %8329 = vperm.xlu0 %8328, %v8279
      %v8330 = vpop.permute.xlu0 %8329
      %8333 = vset.pattern.permute.xlu0 0
      %8334 = vperm.xlu0 %8333, %v8280
      %v8335 = vpop.permute.xlu0 %8334
      %8338 = vset.pattern.permute.xlu0 0
      %8339 = vperm.xlu0 %8338, %v8281
      %v8340 = vpop.permute.xlu0 %8339
      %8343 = vset.pattern.permute.xlu0 0
      %8344 = vperm.xlu0 %8343, %v8282
      %v8345 = vpop.permute.xlu0 %8344
      %8348 = vset.pattern.permute.xlu0 0
      %8349 = vperm.xlu0 %8348, %v8283
      %v8350 = vpop.permute.xlu0 %8349
      %8353 = vset.pattern.permute.xlu0 0
      %8354 = vperm.xlu0 %8353, %v8284
      %v8355 = vpop.permute.xlu0 %8354
      %8358 = vset.pattern.permute.xlu0 0
      %8359 = vperm.xlu0 %8358, %v8285
      %v8360 = vpop.permute.xlu0 %8359
      %8363 = vset.pattern.permute.xlu0 0
      %8364 = vperm.xlu0 %8363, %v8286
      %v8365 = vpop.permute.xlu0 %8364
      %8368 = vset.pattern.permute.xlu0 0
      %8369 = vperm.xlu0 %8368, %v8287
      %v8370 = vpop.permute.xlu0 %8369
      %8373 = vset.pattern.permute.xlu0 0
      %8374 = vperm.xlu0 %8373, %v8288
      %v8375 = vpop.permute.xlu0 %8374
      %8378 = vset.pattern.permute.xlu0 0
      %8379 = vperm.xlu0 %8378, %v8289
      %v8380 = vpop.permute.xlu0 %8379
      %8383 = vset.pattern.permute.xlu0 0
      %8384 = vperm.xlu0 %8383, %v8290
      %v8385 = vpop.permute.xlu0 %8384
      %8388 = vset.pattern.permute.xlu0 0
      %8389 = vperm.xlu0 %8388, %v8291
      %v8390 = vpop.permute.xlu0 %8389
      %8393 = vset.pattern.permute.xlu0 0
      %8394 = vperm.xlu0 %8393, %v8292
      %v8395 = vpop.permute.xlu0 %8394
      %8398 = vset.pattern.permute.xlu0 0
      %8399 = vperm.xlu0 %8398, %v8293
      %v8400 = vpop.permute.xlu0 %8399
      %8403 = vset.pattern.permute.xlu0 0
      %8404 = vperm.xlu0 %8403, %v8294
      %v8405 = vpop.permute.xlu0 %8404
      %8408 = vset.pattern.permute.xlu0 0
      %8409 = vperm.xlu0 %8408, %v8295
      %v8410 = vpop.permute.xlu0 %8409
      %8413 = vset.pattern.permute.xlu0 0
      %8414 = vperm.xlu0 %8413, %v8296
      %v8415 = vpop.permute.xlu0 %8414
      %8418 = vset.pattern.permute.xlu0 0
      %8419 = vperm.xlu0 %8418, %v8297
      %v8420 = vpop.permute.xlu0 %8419
      %8423 = vset.pattern.permute.xlu0 0
      %8424 = vperm.xlu0 %8423, %v8298
      %v8425 = vpop.permute.xlu0 %8424
      %8428 = vset.pattern.permute.xlu0 0
      %8429 = vperm.xlu0 %8428, %v8299
      %v8430 = vpop.permute.xlu0 %8429
      %8433 = vset.pattern.permute.xlu0 0
      %8434 = vperm.xlu0 %8433, %v8300
      %v8435 = vpop.permute.xlu0 %8434
      %8438 = vset.pattern.permute.xlu0 0
      %8439 = vperm.xlu0 %8438, %v8301
      %v8440 = vpop.permute.xlu0 %8439
      %8443 = vset.pattern.permute.xlu0 0
      %8444 = vperm.xlu0 %8443, %v8302
      %v8445 = vpop.permute.xlu0 %8444
      %8448 = vset.pattern.permute.xlu0 0
      %8449 = vperm.xlu0 %8448, %v8303
      %v8450 = vpop.permute.xlu0 %8449
      %8453 = vset.pattern.permute.xlu0 0
      %8454 = vperm.xlu0 %8453, %v8304
      %v8455 = vpop.permute.xlu0 %8454
      %8458 = vset.pattern.permute.xlu0 0
      %8459 = vperm.xlu0 %8458, %v8305
      %v8460 = vpop.permute.xlu0 %8459
      %8463 = vset.pattern.permute.xlu0 0
      %8464 = vperm.xlu0 %8463, %v8306
      %v8465 = vpop.permute.xlu0 %8464
      %v8531 = vunpack.c.l.b16 %v8179
      %v8532 = vunpack.c.h.b16 %v8179
      %v8533 = vunpack.c.l.b16 %v8180
      %v8534 = vunpack.c.h.b16 %v8180
      %v8535 = vunpack.c.l.b16 %v8181
      %v8536 = vunpack.c.h.b16 %v8181
      %v8537 = vunpack.c.l.b16 %v8182
      %v8538 = vunpack.c.h.b16 %v8182
      %v8539 = vunpack.c.l.b16 %v8183
      %v8540 = vunpack.c.h.b16 %v8183
      %v8541 = vunpack.c.l.b16 %v8184
      %v8542 = vunpack.c.h.b16 %v8184
      %v8543 = vunpack.c.l.b16 %v8185
      %v8544 = vunpack.c.h.b16 %v8185
      %v8545 = vunpack.c.l.b16 %v8186
      %v8546 = vunpack.c.h.b16 %v8186
      %v8547 = vunpack.c.l.b16 %v8187
      %v8548 = vunpack.c.h.b16 %v8187
      %v8549 = vunpack.c.l.b16 %v8188
      %v8550 = vunpack.c.h.b16 %v8188
      %v8551 = vunpack.c.l.b16 %v8189
      %v8552 = vunpack.c.h.b16 %v8189
      %v8553 = vunpack.c.l.b16 %v8190
      %v8554 = vunpack.c.h.b16 %v8190
      %v8555 = vunpack.c.l.b16 %v8191
      %v8556 = vunpack.c.h.b16 %v8191
      %v8557 = vunpack.c.l.b16 %v8192
      %v8558 = vunpack.c.h.b16 %v8192
      %v8559 = vunpack.c.l.b16 %v8193
      %v8560 = vunpack.c.h.b16 %v8193
      %v8561 = vunpack.c.l.b16 %v8194
      %v8562 = vunpack.c.h.b16 %v8194
      %v8563 = vunpack.c.l.b16 %v8195
      %v8564 = vunpack.c.h.b16 %v8195
      %v8565 = vunpack.c.l.b16 %v8196
      %v8566 = vunpack.c.h.b16 %v8196
      %v8567 = vunpack.c.l.b16 %v8197
      %v8568 = vunpack.c.h.b16 %v8197
      %v8569 = vunpack.c.l.b16 %v8198
      %v8570 = vunpack.c.h.b16 %v8198
      %v8571 = vunpack.c.l.b16 %v8199
      %v8572 = vunpack.c.h.b16 %v8199
      %v8573 = vunpack.c.l.b16 %v8200
      %v8574 = vunpack.c.h.b16 %v8200
      %v8575 = vunpack.c.l.b16 %v8201
      %v8576 = vunpack.c.h.b16 %v8201
      %v8577 = vunpack.c.l.b16 %v8202
      %v8578 = vunpack.c.h.b16 %v8202
      %v8579 = vunpack.c.l.b16 %v8203
      %v8580 = vunpack.c.h.b16 %v8203
      %v8581 = vunpack.c.l.b16 %v8204
      %v8582 = vunpack.c.h.b16 %v8204
      %v8583 = vunpack.c.l.b16 %v8205
      %v8584 = vunpack.c.h.b16 %v8205
      %v8585 = vunpack.c.l.b16 %v8206
      %v8586 = vunpack.c.h.b16 %v8206
      %v8587 = vunpack.c.l.b16 %v8207
      %v8588 = vunpack.c.h.b16 %v8207
      %v8589 = vunpack.c.l.b16 %v8208
      %v8590 = vunpack.c.h.b16 %v8208
      %v8591 = vunpack.c.l.b16 %v8209
      %v8592 = vunpack.c.h.b16 %v8209
      %v8593 = vunpack.c.l.b16 %v8210
      %v8594 = vunpack.c.h.b16 %v8210
      %v8595 = vunpack.c.l.b16 %v8211
      %v8596 = vunpack.c.h.b16 %v8211
      %v8597 = vunpack.c.l.b16 %v8212
      %v8598 = vunpack.c.h.b16 %v8212
      %v8599 = vunpack.c.l.b16 %v8213
      %v8600 = vunpack.c.h.b16 %v8213
      %v8601 = vunpack.c.l.b16 %v8214
      %v8602 = vunpack.c.h.b16 %v8214
      %v8603 = vunpack.c.l.b16 %v8215
      %v8604 = vunpack.c.h.b16 %v8215
      %v8605 = vunpack.c.l.b16 %v8216
      %v8606 = vunpack.c.h.b16 %v8216
      %v8607 = vunpack.c.l.b16 %v8217
      %v8608 = vunpack.c.h.b16 %v8217
      %v8609 = vunpack.c.l.b16 %v8218
      %v8610 = vunpack.c.h.b16 %v8218
      %v8611 = vunpack.c.l.b16 %v8219
      %v8612 = vunpack.c.h.b16 %v8219
      %v8613 = vunpack.c.l.b16 %v8220
      %v8614 = vunpack.c.h.b16 %v8220
      %v8615 = vunpack.c.l.b16 %v8221
      %v8616 = vunpack.c.h.b16 %v8221
      %v8617 = vunpack.c.l.b16 %v8222
      %v8618 = vunpack.c.h.b16 %v8222
      %v8619 = vunpack.c.l.b16 %v8223
      %v8620 = vunpack.c.h.b16 %v8223
      %v8621 = vunpack.c.l.b16 %v8224
      %v8622 = vunpack.c.h.b16 %v8224
      %v8623 = vunpack.c.l.b16 %v8225
      %v8624 = vunpack.c.h.b16 %v8225
      %v8625 = vunpack.c.l.b16 %v8226
      %v8626 = vunpack.c.h.b16 %v8226
      %v8627 = vunpack.c.l.b16 %v8227
      %v8628 = vunpack.c.h.b16 %v8227
      %v8629 = vunpack.c.l.b16 %v8228
      %v8630 = vunpack.c.h.b16 %v8228
      %v8631 = vunpack.c.l.b16 %v8229
      %v8632 = vunpack.c.h.b16 %v8229
      %v8633 = vunpack.c.l.b16 %v8230
      %v8634 = vunpack.c.h.b16 %v8230
      %v8635 = vunpack.c.l.b16 %v8231
      %v8636 = vunpack.c.h.b16 %v8231
      %v8637 = vunpack.c.l.b16 %v8232
      %v8638 = vunpack.c.h.b16 %v8232
      %v8639 = vunpack.c.l.b16 %v8233
      %v8640 = vunpack.c.h.b16 %v8233
      %v8641 = vunpack.c.l.b16 %v8234
      %v8642 = vunpack.c.h.b16 %v8234
      %v8643 = vunpack.c.l.b16 %v8235
      %v8644 = vunpack.c.h.b16 %v8235
      %v8645 = vunpack.c.l.b16 %v8236
      %v8646 = vunpack.c.h.b16 %v8236
      %v8647 = vunpack.c.l.b16 %v8237
      %v8648 = vunpack.c.h.b16 %v8237
      %v8649 = vunpack.c.l.b16 %v8238
      %v8650 = vunpack.c.h.b16 %v8238
      %v8651 = vunpack.c.l.b16 %v8239
      %v8652 = vunpack.c.h.b16 %v8239
      %v8653 = vunpack.c.l.b16 %v8240
      %v8654 = vunpack.c.h.b16 %v8240
      %v8655 = vunpack.c.l.b16 %v8241
      %v8656 = vunpack.c.h.b16 %v8241
      %v8657 = vunpack.c.l.b16 %v8242
      %v8658 = vunpack.c.h.b16 %v8242
      %v8659 = vpack.c.b16 %v8535, %v8531
      %v8660 = vpack.c.b16 %v8536, %v8532
      %v8661 = vpack.c.b16 %v8537, %v8533
      %v8662 = vpack.c.b16 %v8538, %v8534
      %v8663 = vpack.c.b16 %v8543, %v8539
      %v8664 = vpack.c.b16 %v8544, %v8540
      %v8665 = vpack.c.b16 %v8545, %v8541
      %v8666 = vpack.c.b16 %v8546, %v8542
      %v8667 = vpack.c.b16 %v8551, %v8547
      %v8668 = vpack.c.b16 %v8552, %v8548
      %v8669 = vpack.c.b16 %v8553, %v8549
      %v8670 = vpack.c.b16 %v8554, %v8550
      %v8671 = vpack.c.b16 %v8559, %v8555
      %v8672 = vpack.c.b16 %v8560, %v8556
      %v8673 = vpack.c.b16 %v8561, %v8557
      %v8674 = vpack.c.b16 %v8562, %v8558
      %v8675 = vpack.c.b16 %v8567, %v8563
      %v8676 = vpack.c.b16 %v8568, %v8564
      %v8677 = vpack.c.b16 %v8569, %v8565
      %v8678 = vpack.c.b16 %v8570, %v8566
      %v8679 = vpack.c.b16 %v8575, %v8571
      %v8680 = vpack.c.b16 %v8576, %v8572
      %v8681 = vpack.c.b16 %v8577, %v8573
      %v8682 = vpack.c.b16 %v8578, %v8574
      %v8683 = vpack.c.b16 %v8583, %v8579
      %v8684 = vpack.c.b16 %v8584, %v8580
      %v8685 = vpack.c.b16 %v8585, %v8581
      %v8686 = vpack.c.b16 %v8586, %v8582
      %v8687 = vpack.c.b16 %v8591, %v8587
      %v8688 = vpack.c.b16 %v8592, %v8588
      %v8689 = vpack.c.b16 %v8593, %v8589
      %v8690 = vpack.c.b16 %v8594, %v8590
      %v8691 = vpack.c.b16 %v8599, %v8595
      %v8692 = vpack.c.b16 %v8600, %v8596
      %v8693 = vpack.c.b16 %v8601, %v8597
      %v8694 = vpack.c.b16 %v8602, %v8598
      %v8695 = vpack.c.b16 %v8607, %v8603
      %v8696 = vpack.c.b16 %v8608, %v8604
      %v8697 = vpack.c.b16 %v8609, %v8605
      %v8698 = vpack.c.b16 %v8610, %v8606
      %v8699 = vpack.c.b16 %v8615, %v8611
      %v8700 = vpack.c.b16 %v8616, %v8612
      %v8701 = vpack.c.b16 %v8617, %v8613
      %v8702 = vpack.c.b16 %v8618, %v8614
      %v8703 = vpack.c.b16 %v8623, %v8619
      %v8704 = vpack.c.b16 %v8624, %v8620
      %v8705 = vpack.c.b16 %v8625, %v8621
      %v8706 = vpack.c.b16 %v8626, %v8622
      %v8707 = vpack.c.b16 %v8631, %v8627
      %v8708 = vpack.c.b16 %v8632, %v8628
      %v8709 = vpack.c.b16 %v8633, %v8629
      %v8710 = vpack.c.b16 %v8634, %v8630
      %v8711 = vpack.c.b16 %v8639, %v8635
      %v8712 = vpack.c.b16 %v8640, %v8636
      %v8713 = vpack.c.b16 %v8641, %v8637
      %v8714 = vpack.c.b16 %v8642, %v8638
      %v8715 = vpack.c.b16 %v8647, %v8643
      %v8716 = vpack.c.b16 %v8648, %v8644
      %v8717 = vpack.c.b16 %v8649, %v8645
      %v8718 = vpack.c.b16 %v8650, %v8646
      %v8719 = vpack.c.b16 %v8655, %v8651
      %v8720 = vpack.c.b16 %v8656, %v8652
      %v8721 = vpack.c.b16 %v8657, %v8653
      %v8722 = vpack.c.b16 %v8658, %v8654
      %8787 = vmatprep.subr.bf16.mxu0 0
      %8788 = vmatpush1.bf16.msra.mxu0 %v8243
      %8789 = vmatprep.subr.bf16.mxu0 0
      %8790 = vmatpush1.bf16.msra.mxu0 %v8244
      %8791 = vmatprep.subr.bf16.mxu0 0
      %8792 = vmatpush1.bf16.msra.mxu0 %v8245
      %8793 = vmatprep.subr.bf16.mxu0 0
      %8794 = vmatpush1.bf16.msra.mxu0 %v8246
      %8795 = vmatprep.subr.bf16.mxu0 0
      %8796 = vmatpush1.bf16.msra.mxu0 %v8247
      %8797 = vmatprep.subr.bf16.mxu0 0
      %8798 = vmatpush1.bf16.msra.mxu0 %v8248
      %8799 = vmatprep.subr.bf16.mxu0 0
      %8800 = vmatpush1.bf16.msra.mxu0 %v8249
      %8801 = vmatprep.subr.bf16.mxu0 0
      %8802 = vmatpush1.bf16.msra.mxu0 %v8250
      %8803 = vmatprep.subr.bf16.mxu0 0
      %8804 = vmatpush1.bf16.msra.mxu0 %v8251
      %8805 = vmatprep.subr.bf16.mxu0 0
      %8806 = vmatpush1.bf16.msra.mxu0 %v8252
      %8807 = vmatprep.subr.bf16.mxu0 0
      %8808 = vmatpush1.bf16.msra.mxu0 %v8253
      %8809 = vmatprep.subr.bf16.mxu0 0
      %8810 = vmatpush1.bf16.msra.mxu0 %v8254
      %8811 = vmatprep.subr.bf16.mxu0 0
      %8812 = vmatpush1.bf16.msra.mxu0 %v8255
      %8813 = vmatprep.subr.bf16.mxu0 0
      %8814 = vmatpush1.bf16.msra.mxu0 %v8256
      %8815 = vmatprep.subr.bf16.mxu0 0
      %8816 = vmatpush1.bf16.msra.mxu0 %v8257
      %8817 = vmatprep.subr.bf16.mxu0 0
      %8818 = vmatpush1.bf16.msra.mxu0 %v8258
      %8819 = vmatprep.mubr.bf16.mxu0 %v8660
      %8820 = vmatmul.mubr.bf16.gmra.mrb[0].mxu0 %v8659
      %v8821 = vpop.f32.mrb[0].mxu0
      %v8822 = vadd.f32 %v8310, %v8821
      %v8823 = vpop.f32.mrb[0].mxu0
      %v8824 = vpop.f32.mrb[0].mxu0
      %v8825 = vadd.f32 %v8315, %v8824
      %v8826 = vpop.f32.mrb[0].mxu0
      %8827 = vmatprep.mubr.bf16.mxu0 %v8664
      %8828 = vmatmul.mubr.bf16.gmra.mrb[0].mxu0 %v8663
      %v8829 = vpop.f32.mrb[0].mxu0
      %v8830 = vadd.f32 %v8320, %v8829
      %v8831 = vpop.f32.mrb[0].mxu0
      %v8832 = vpop.f32.mrb[0].mxu0
      %v8833 = vadd.f32 %v8325, %v8832
      %v8834 = vpop.f32.mrb[0].mxu0
      %8835 = vmatprep.mubr.bf16.mxu0 %v8668
      %8836 = vmatmul.mubr.bf16.gmra.mrb[0].mxu0 %v8667
      %v8837 = vpop.f32.mrb[0].mxu0
      %v8838 = vadd.f32 %v8330, %v8837
      %v8839 = vpop.f32.mrb[0].mxu0
      %v8840 = vpop.f32.mrb[0].mxu0
      %v8841 = vadd.f32 %v8335, %v8840
      %v8842 = vpop.f32.mrb[0].mxu0
      %8843 = vmatprep.mubr.bf16.mxu0 %v8672
      %8844 = vmatmul.mubr.bf16.gmra.mrb[0].mxu0 %v8671
      %v8845 = vpop.f32.mrb[0].mxu0
      %v8846 = vadd.f32 %v8340, %v8845
      %v8847 = vpop.f32.mrb[0].mxu0
      %v8848 = vpop.f32.mrb[0].mxu0
      %v8849 = vadd.f32 %v8345, %v8848
      %v8850 = vpop.f32.mrb[0].mxu0
      %8851 = vmatprep.mubr.bf16.mxu0 %v8676
      %8852 = vmatmul.mubr.bf16.gmra.mrb[0].mxu0 %v8675
      %v8853 = vpop.f32.mrb[0].mxu0
      %v8854 = vadd.f32 %v8350, %v8853
      %v8855 = vpop.f32.mrb[0].mxu0
      %v8856 = vpop.f32.mrb[0].mxu0
      %v8857 = vadd.f32 %v8355, %v8856
      %v8858 = vpop.f32.mrb[0].mxu0
      %8859 = vmatprep.mubr.bf16.mxu0 %v8680
      %8860 = vmatmul.mubr.bf16.gmra.mrb[0].mxu0 %v8679
      %v8861 = vpop.f32.mrb[0].mxu0
      %v8862 = vadd.f32 %v8360, %v8861
      %v8863 = vpop.f32.mrb[0].mxu0
      %v8864 = vpop.f32.mrb[0].mxu0
      %v8865 = vadd.f32 %v8365, %v8864
      %v8866 = vpop.f32.mrb[0].mxu0
      %8867 = vmatprep.mubr.bf16.mxu0 %v8684
      %8868 = vmatmul.mubr.bf16.gmra.mrb[0].mxu0 %v8683
      %v8869 = vpop.f32.mrb[0].mxu0
      %v8870 = vadd.f32 %v8370, %v8869
      %v8871 = vpop.f32.mrb[0].mxu0
      %v8872 = vpop.f32.mrb[0].mxu0
      %v8873 = vadd.f32 %v8375, %v8872
      %v8874 = vpop.f32.mrb[0].mxu0
      %8875 = vmatprep.mubr.bf16.mxu0 %v8688
      %8876 = vmatmul.mubr.bf16.gmra.mrb[0].mxu0 %v8687
      %v8877 = vpop.f32.mrb[0].mxu0
      %v8878 = vadd.f32 %v8380, %v8877
      %v8879 = vpop.f32.mrb[0].mxu0
      %v8880 = vpop.f32.mrb[0].mxu0
      %v8881 = vadd.f32 %v8385, %v8880
      %v8882 = vpop.f32.mrb[0].mxu0
      %8883 = vmatprep.mubr.bf16.mxu0 %v8692
      %8884 = vmatmul.mubr.bf16.gmra.mrb[0].mxu0 %v8691
      %v8885 = vpop.f32.mrb[0].mxu0
      %v8886 = vadd.f32 %v8390, %v8885
      %v8887 = vpop.f32.mrb[0].mxu0
      %v8888 = vpop.f32.mrb[0].mxu0
      %v8889 = vadd.f32 %v8395, %v8888
      %v8890 = vpop.f32.mrb[0].mxu0
      %8891 = vmatprep.mubr.bf16.mxu0 %v8696
      %8892 = vmatmul.mubr.bf16.gmra.mrb[0].mxu0 %v8695
      %v8893 = vpop.f32.mrb[0].mxu0
      %v8894 = vadd.f32 %v8400, %v8893
      %v8895 = vpop.f32.mrb[0].mxu0
      %v8896 = vpop.f32.mrb[0].mxu0
      %v8897 = vadd.f32 %v8405, %v8896
      %v8898 = vpop.f32.mrb[0].mxu0
      %8899 = vmatprep.mubr.bf16.mxu0 %v8700
      %8900 = vmatmul.mubr.bf16.gmra.mrb[0].mxu0 %v8699
      %v8901 = vpop.f32.mrb[0].mxu0
      %v8902 = vadd.f32 %v8410, %v8901
      %v8903 = vpop.f32.mrb[0].mxu0
      %v8904 = vpop.f32.mrb[0].mxu0
      %v8905 = vadd.f32 %v8415, %v8904
      %v8906 = vpop.f32.mrb[0].mxu0
      %8907 = vmatprep.mubr.bf16.mxu0 %v8704
      %8908 = vmatmul.mubr.bf16.gmra.mrb[0].mxu0 %v8703
      %v8909 = vpop.f32.mrb[0].mxu0
      %v8910 = vadd.f32 %v8420, %v8909
      %v8911 = vpop.f32.mrb[0].mxu0
      %v8912 = vpop.f32.mrb[0].mxu0
      %v8913 = vadd.f32 %v8425, %v8912
      %v8914 = vpop.f32.mrb[0].mxu0
      %8915 = vmatprep.mubr.bf16.mxu0 %v8708
      %8916 = vmatmul.mubr.bf16.gmra.mrb[0].mxu0 %v8707
      %v8917 = vpop.f32.mrb[0].mxu0
      %v8918 = vadd.f32 %v8430, %v8917
      %v8919 = vpop.f32.mrb[0].mxu0
      %v8920 = vpop.f32.mrb[0].mxu0
      %v8921 = vadd.f32 %v8435, %v8920
      %v8922 = vpop.f32.mrb[0].mxu0
      %8923 = vmatprep.mubr.bf16.mxu0 %v8712
      %8924 = vmatmul.mubr.bf16.gmra.mrb[0].mxu0 %v8711
      %v8925 = vpop.f32.mrb[0].mxu0
      %v8926 = vadd.f32 %v8440, %v8925
      %v8927 = vpop.f32.mrb[0].mxu0
      %v8928 = vpop.f32.mrb[0].mxu0
      %v8929 = vadd.f32 %v8445, %v8928
      %v8930 = vpop.f32.mrb[0].mxu0
      %8931 = vmatprep.mubr.bf16.mxu0 %v8716
      %8932 = vmatmul.mubr.bf16.gmra.mrb[0].mxu0 %v8715
      %v8933 = vpop.f32.mrb[0].mxu0
      %v8934 = vadd.f32 %v8450, %v8933
      %v8935 = vpop.f32.mrb[0].mxu0
      %v8936 = vpop.f32.mrb[0].mxu0
      %v8937 = vadd.f32 %v8455, %v8936
      %v8938 = vpop.f32.mrb[0].mxu0
      %8939 = vmatprep.mubr.bf16.mxu0 %v8720
      %8940 = vmatmul.mubr.bf16.gmra.mrb[0].mxu0 %v8719
      %v8941 = vpop.f32.mrb[0].mxu0
      %v8942 = vadd.f32 %v8460, %v8941
      %v8943 = vpop.f32.mrb[0].mxu0
      %v8944 = vpop.f32.mrb[0].mxu0
      %v8945 = vadd.f32 %v8465, %v8944
      %v8946 = vpop.f32.mrb[0].mxu0
      %8947 = vdwg.mxu0
      %8948 = vmatprep.subr.bf16.mxu0 0
      %8949 = vmatpush1.bf16.msra.mxu0 %v8259
      %8950 = vmatprep.subr.bf16.mxu0 0
      %8951 = vmatpush1.bf16.msra.mxu0 %v8260
      %8952 = vmatprep.subr.bf16.mxu0 0
      %8953 = vmatpush1.bf16.msra.mxu0 %v8261
      %8954 = vmatprep.subr.bf16.mxu0 0
      %8955 = vmatpush1.bf16.msra.mxu0 %v8262
      %8956 = vmatprep.subr.bf16.mxu0 0
      %8957 = vmatpush1.bf16.msra.mxu0 %v8263
      %8958 = vmatprep.subr.bf16.mxu0 0
      %8959 = vmatpush1.bf16.msra.mxu0 %v8264
      %8960 = vmatprep.subr.bf16.mxu0 0
      %8961 = vmatpush1.bf16.msra.mxu0 %v8265
      %8962 = vmatprep.subr.bf16.mxu0 0
      %8963 = vmatpush1.bf16.msra.mxu0 %v8266
      %8964 = vmatprep.subr.bf16.mxu0 0
      %8965 = vmatpush1.bf16.msra.mxu0 %v8267
      %8966 = vmatprep.subr.bf16.mxu0 0
      %8967 = vmatpush1.bf16.msra.mxu0 %v8268
      %8968 = vmatprep.subr.bf16.mxu0 0
      %8969 = vmatpush1.bf16.msra.mxu0 %v8269
      %8970 = vmatprep.subr.bf16.mxu0 0
      %8971 = vmatpush1.bf16.msra.mxu0 %v8270
      %8972 = vmatprep.subr.bf16.mxu0 0
      %8973 = vmatpush1.bf16.msra.mxu0 %v8271
      %8974 = vmatprep.subr.bf16.mxu0 0
      %8975 = vmatpush1.bf16.msra.mxu0 %v8272
      %8976 = vmatprep.subr.bf16.mxu0 0
      %8977 = vmatpush1.bf16.msra.mxu0 %v8273
      %8978 = vmatprep.subr.bf16.mxu0 0
      %8979 = vmatpush1.bf16.msra.mxu0 %v8274
      %8980 = vmatprep.mubr.bf16.mxu0 %v8662
      %8981 = vmatmul.mubr.bf16.gmra.mrb[0].mxu0 %v8661
      %v8982 = vpop.f32.mrb[0].mxu0
      %v8983 = vadd.f32 %v8822, %v8982
      %v8984 = vpop.f32.mrb[0].mxu0
      %v8985 = vpop.f32.mrb[0].mxu0
      %v8986 = vadd.f32 %v8825, %v8985
      %v8987 = vpop.f32.mrb[0].mxu0
      %8988 = vmatprep.mubr.bf16.mxu0 %v8666
      %8989 = vmatmul.mubr.bf16.gmra.mrb[0].mxu0 %v8665
      %v8990 = vpop.f32.mrb[0].mxu0
      %v8991 = vadd.f32 %v8830, %v8990
      %v8992 = vpop.f32.mrb[0].mxu0
      %v8993 = vpop.f32.mrb[0].mxu0
      %v8994 = vadd.f32 %v8833, %v8993
      %v8995 = vpop.f32.mrb[0].mxu0
      %8996 = vmatprep.mubr.bf16.mxu0 %v8670
      %8997 = vmatmul.mubr.bf16.gmra.mrb[0].mxu0 %v8669
      %v8998 = vpop.f32.mrb[0].mxu0
      %v8999 = vadd.f32 %v8838, %v8998
      %v9000 = vpop.f32.mrb[0].mxu0
      %v9001 = vpop.f32.mrb[0].mxu0
      %v9002 = vadd.f32 %v8841, %v9001
      %v9003 = vpop.f32.mrb[0].mxu0
      %9004 = vmatprep.mubr.bf16.mxu0 %v8674
      %9005 = vmatmul.mubr.bf16.gmra.mrb[0].mxu0 %v8673
      %v9006 = vpop.f32.mrb[0].mxu0
      %v9007 = vadd.f32 %v8846, %v9006
      %v9008 = vpop.f32.mrb[0].mxu0
      %v9009 = vpop.f32.mrb[0].mxu0
      %v9010 = vadd.f32 %v8849, %v9009
      %v9011 = vpop.f32.mrb[0].mxu0
      %9012 = vmatprep.mubr.bf16.mxu0 %v8678
      %9013 = vmatmul.mubr.bf16.gmra.mrb[0].mxu0 %v8677
      %v9014 = vpop.f32.mrb[0].mxu0
      %v9015 = vadd.f32 %v8854, %v9014
      %v9016 = vpop.f32.mrb[0].mxu0
      %v9017 = vpop.f32.mrb[0].mxu0
      %v9018 = vadd.f32 %v8857, %v9017
      %v9019 = vpop.f32.mrb[0].mxu0
      %9020 = vmatprep.mubr.bf16.mxu0 %v8682
      %9021 = vmatmul.mubr.bf16.gmra.mrb[0].mxu0 %v8681
      %v9022 = vpop.f32.mrb[0].mxu0
      %v9023 = vadd.f32 %v8862, %v9022
      %v9024 = vpop.f32.mrb[0].mxu0
      %v9025 = vpop.f32.mrb[0].mxu0
      %v9026 = vadd.f32 %v8865, %v9025
      %v9027 = vpop.f32.mrb[0].mxu0
      %9028 = vmatprep.mubr.bf16.mxu0 %v8686
      %9029 = vmatmul.mubr.bf16.gmra.mrb[0].mxu0 %v8685
      %v9030 = vpop.f32.mrb[0].mxu0
      %v9031 = vadd.f32 %v8870, %v9030
      %v9032 = vpop.f32.mrb[0].mxu0
      %v9033 = vpop.f32.mrb[0].mxu0
      %v9034 = vadd.f32 %v8873, %v9033
      %v9035 = vpop.f32.mrb[0].mxu0
      %9036 = vmatprep.mubr.bf16.mxu0 %v8690
      %9037 = vmatmul.mubr.bf16.gmra.mrb[0].mxu0 %v8689
      %v9038 = vpop.f32.mrb[0].mxu0
      %v9039 = vadd.f32 %v8878, %v9038
      %v9040 = vpop.f32.mrb[0].mxu0
      %v9041 = vpop.f32.mrb[0].mxu0
      %v9042 = vadd.f32 %v8881, %v9041
      %v9043 = vpop.f32.mrb[0].mxu0
      %9044 = vmatprep.mubr.bf16.mxu0 %v8694
      %9045 = vmatmul.mubr.bf16.gmra.mrb[0].mxu0 %v8693
      %v9046 = vpop.f32.mrb[0].mxu0
      %v9047 = vadd.f32 %v8886, %v9046
      %v9048 = vpop.f32.mrb[0].mxu0
      %v9049 = vpop.f32.mrb[0].mxu0
      %v9050 = vadd.f32 %v8889, %v9049
      %v9051 = vpop.f32.mrb[0].mxu0
      %9052 = vmatprep.mubr.bf16.mxu0 %v8698
      %9053 = vmatmul.mubr.bf16.gmra.mrb[0].mxu0 %v8697
      %v9054 = vpop.f32.mrb[0].mxu0
      %v9055 = vadd.f32 %v8894, %v9054
      %v9056 = vpop.f32.mrb[0].mxu0
      %v9057 = vpop.f32.mrb[0].mxu0
      %v9058 = vadd.f32 %v8897, %v9057
      %v9059 = vpop.f32.mrb[0].mxu0
      %9060 = vmatprep.mubr.bf16.mxu0 %v8702
      %9061 = vmatmul.mubr.bf16.gmra.mrb[0].mxu0 %v8701
      %v9062 = vpop.f32.mrb[0].mxu0
      %v9063 = vadd.f32 %v8902, %v9062
      %v9064 = vpop.f32.mrb[0].mxu0
      %v9065 = vpop.f32.mrb[0].mxu0
      %v9066 = vadd.f32 %v8905, %v9065
      %v9067 = vpop.f32.mrb[0].mxu0
      %9068 = vmatprep.mubr.bf16.mxu0 %v8706
      %9069 = vmatmul.mubr.bf16.gmra.mrb[0].mxu0 %v8705
      %v9070 = vpop.f32.mrb[0].mxu0
      %v9071 = vadd.f32 %v8910, %v9070
      %v9072 = vpop.f32.mrb[0].mxu0
      %v9073 = vpop.f32.mrb[0].mxu0
      %v9074 = vadd.f32 %v8913, %v9073
      %v9075 = vpop.f32.mrb[0].mxu0
      %9076 = vmatprep.mubr.bf16.mxu0 %v8710
      %9077 = vmatmul.mubr.bf16.gmra.mrb[0].mxu0 %v8709
      %v9078 = vpop.f32.mrb[0].mxu0
      %v9079 = vadd.f32 %v8918, %v9078
      %v9080 = vpop.f32.mrb[0].mxu0
      %v9081 = vpop.f32.mrb[0].mxu0
      %v9082 = vadd.f32 %v8921, %v9081
      %v9083 = vpop.f32.mrb[0].mxu0
      %9084 = vmatprep.mubr.bf16.mxu0 %v8714
      %9085 = vmatmul.mubr.bf16.gmra.mrb[0].mxu0 %v8713
      %v9086 = vpop.f32.mrb[0].mxu0
      %v9087 = vadd.f32 %v8926, %v9086
      %v9088 = vpop.f32.mrb[0].mxu0
      %v9089 = vpop.f32.mrb[0].mxu0
      %v9090 = vadd.f32 %v8929, %v9089
      %v9091 = vpop.f32.mrb[0].mxu0
      %9092 = vmatprep.mubr.bf16.mxu0 %v8718
      %9093 = vmatmul.mubr.bf16.gmra.mrb[0].mxu0 %v8717
      %v9094 = vpop.f32.mrb[0].mxu0
      %v9095 = vadd.f32 %v8934, %v9094
      %v9096 = vpop.f32.mrb[0].mxu0
      %v9097 = vpop.f32.mrb[0].mxu0
      %v9098 = vadd.f32 %v8937, %v9097
      %v9099 = vpop.f32.mrb[0].mxu0
      %9100 = vmatprep.mubr.bf16.mxu0 %v8722
      %9101 = vmatmul.mubr.bf16.gmra.mrb[0].mxu0 %v8721
      %v9102 = vpop.f32.mrb[0].mxu0
      %v9103 = vadd.f32 %v8942, %v9102
      %v9104 = vpop.f32.mrb[0].mxu0
      %v9105 = vpop.f32.mrb[0].mxu0
      %v9106 = vadd.f32 %v8945, %v9105
      %v9107 = vpop.f32.mrb[0].mxu0
      %9108 = vdwg.mxu0
      %v9109 = vmax.f32 %v8983, 0.0
      %v9110 = vmax.f32 %v8986, 0.0
      %v9111 = vmax.f32 %v8991, 0.0
      %v9112 = vmax.f32 %v8994, 0.0
      %v9113 = vmax.f32 %v8999, 0.0
      %v9114 = vmax.f32 %v9002, 0.0
      %v9115 = vmax.f32 %v9007, 0.0
      %v9116 = vmax.f32 %v9010, 0.0
      %v9117 = vmax.f32 %v9015, 0.0
      %v9118 = vmax.f32 %v9018, 0.0
      %v9119 = vmax.f32 %v9023, 0.0
      %v9120 = vmax.f32 %v9026, 0.0
      %v9121 = vmax.f32 %v9031, 0.0
      %v9122 = vmax.f32 %v9034, 0.0
      %v9123 = vmax.f32 %v9039, 0.0
      %v9124 = vmax.f32 %v9042, 0.0
      %v9125 = vmax.f32 %v9047, 0.0
      %v9126 = vmax.f32 %v9050, 0.0
      %v9127 = vmax.f32 %v9055, 0.0
      %v9128 = vmax.f32 %v9058, 0.0
      %v9129 = vmax.f32 %v9063, 0.0
      %v9130 = vmax.f32 %v9066, 0.0
      %v9131 = vmax.f32 %v9071, 0.0
      %v9132 = vmax.f32 %v9074, 0.0
      %v9133 = vmax.f32 %v9079, 0.0
      %v9134 = vmax.f32 %v9082, 0.0
      %v9135 = vmax.f32 %v9087, 0.0
      %v9136 = vmax.f32 %v9090, 0.0
      %v9137 = vmax.f32 %v9095, 0.0
      %v9138 = vmax.f32 %v9098, 0.0
      %v9139 = vmax.f32 %v9103, 0.0
      %v9140 = vmax.f32 %v9106, 0.0
      %v9141 = vld [vmem:[%s11] sm:$0xff]
      %v9142 = vld [vmem:[%s11 + $0x8] sm:$0xff]
      %v9143 = vld [vmem:[%s11 + $0x10] sm:$0xff]
      %v9144 = vld [vmem:[%s11 + $0x18] sm:$0xff]
      %v9145 = vld [vmem:[%s11 + $0x20] sm:$0xff]
      %v9146 = vld [vmem:[%s11 + $0x28] sm:$0xff]
      %v9147 = vld [vmem:[%s11 + $0x30] sm:$0xff]
      %v9148 = vld [vmem:[%s11 + $0x38] sm:$0xff]
      %v9149 = vld [vmem:[%s11 + $0x40] sm:$0xff]
      %v9150 = vld [vmem:[%s11 + $0x48] sm:$0xff]
      %v9151 = vld [vmem:[%s11 + $0x50] sm:$0xff]
      %v9152 = vld [vmem:[%s11 + $0x58] sm:$0xff]
      %v9153 = vld [vmem:[%s11 + $0x60] sm:$0xff]
      %v9154 = vld [vmem:[%s11 + $0x68] sm:$0xff]
      %v9155 = vld [vmem:[%s11 + $0x70] sm:$0xff]
      %v9156 = vld [vmem:[%s11 + $0x78] sm:$0xff]
      %v9157 = vld [vmem:[%s11 + $0x80] sm:$0xff]
      %v9158 = vld [vmem:[%s11 + $0x88] sm:$0xff]
      %v9159 = vld [vmem:[%s11 + $0x90] sm:$0xff]
      %v9160 = vld [vmem:[%s11 + $0x98] sm:$0xff]
      %v9161 = vld [vmem:[%s11 + $0xa0] sm:$0xff]
      %v9162 = vld [vmem:[%s11 + $0xa8] sm:$0xff]
      %v9163 = vld [vmem:[%s11 + $0xb0] sm:$0xff]
      %v9164 = vld [vmem:[%s11 + $0xb8] sm:$0xff]
      %v9165 = vld [vmem:[%s11 + $0xc0] sm:$0xff]
      %v9166 = vld [vmem:[%s11 + $0xc8] sm:$0xff]
      %v9167 = vld [vmem:[%s11 + $0xd0] sm:$0xff]
      %v9168 = vld [vmem:[%s11 + $0xd8] sm:$0xff]
      %v9169 = vld [vmem:[%s11 + $0xe0] sm:$0xff]
      %v9170 = vld [vmem:[%s11 + $0xe8] sm:$0xff]
      %v9171 = vld [vmem:[%s11 + $0xf0] sm:$0xff]
      %v9172 = vld [vmem:[%s11 + $0xf8] sm:$0xff]
      %v9173 = vld [vmem:[%s12] sm:$0xff]
      %v9174 = vld [vmem:[%s12 + $0x8] sm:$0xff]
      %v9175 = vld [vmem:[%s12 + $0x10] sm:$0xff]
      %v9176 = vld [vmem:[%s12 + $0x18] sm:$0xff]
      %v9177 = vld [vmem:[%s12 + $0x20] sm:$0xff]
      %v9178 = vld [vmem:[%s12 + $0x28] sm:$0xff]
      %v9179 = vld [vmem:[%s12 + $0x30] sm:$0xff]
      %v9180 = vld [vmem:[%s12 + $0x38] sm:$0xff]
      %v9181 = vld [vmem:[%s12 + $0x40] sm:$0xff]
      %v9182 = vld [vmem:[%s12 + $0x48] sm:$0xff]
      %v9183 = vld [vmem:[%s12 + $0x50] sm:$0xff]
      %v9184 = vld [vmem:[%s12 + $0x58] sm:$0xff]
      %v9185 = vld [vmem:[%s12 + $0x60] sm:$0xff]
      %v9186 = vld [vmem:[%s12 + $0x68] sm:$0xff]
      %v9187 = vld [vmem:[%s12 + $0x70] sm:$0xff]
      %v9188 = vld [vmem:[%s12 + $0x78] sm:$0xff]
      %9190 = vset.pattern.permute.xlu0 0
      %9191 = vperm.xlu0 %9190, %v9173
      %v9192 = vpop.permute.xlu0 %9191
      %9195 = vset.pattern.permute.xlu0 0
      %9196 = vperm.xlu0 %9195, %v9174
      %v9197 = vpop.permute.xlu0 %9196
      %9200 = vset.pattern.permute.xlu0 0
      %9201 = vperm.xlu0 %9200, %v9175
      %v9202 = vpop.permute.xlu0 %9201
      %9205 = vset.pattern.permute.xlu0 0
      %9206 = vperm.xlu0 %9205, %v9176
      %v9207 = vpop.permute.xlu0 %9206
      %9210 = vset.pattern.permute.xlu0 0
      %9211 = vperm.xlu0 %9210, %v9177
      %v9212 = vpop.permute.xlu0 %9211
      %9215 = vset.pattern.permute.xlu0 0
      %9216 = vperm.xlu0 %9215, %v9178
      %v9217 = vpop.permute.xlu0 %9216
      %9220 = vset.pattern.permute.xlu0 0
      %9221 = vperm.xlu0 %9220, %v9179
      %v9222 = vpop.permute.xlu0 %9221
      %9225 = vset.pattern.permute.xlu0 0
      %9226 = vperm.xlu0 %9225, %v9180
      %v9227 = vpop.permute.xlu0 %9226
      %9230 = vset.pattern.permute.xlu0 0
      %9231 = vperm.xlu0 %9230, %v9181
      %v9232 = vpop.permute.xlu0 %9231
      %9235 = vset.pattern.permute.xlu0 0
      %9236 = vperm.xlu0 %9235, %v9182
      %v9237 = vpop.permute.xlu0 %9236
      %9240 = vset.pattern.permute.xlu0 0
      %9241 = vperm.xlu0 %9240, %v9183
      %v9242 = vpop.permute.xlu0 %9241
      %9245 = vset.pattern.permute.xlu0 0
      %9246 = vperm.xlu0 %9245, %v9184
      %v9247 = vpop.permute.xlu0 %9246
      %9250 = vset.pattern.permute.xlu0 0
      %9251 = vperm.xlu0 %9250, %v9185
      %v9252 = vpop.permute.xlu0 %9251
      %9255 = vset.pattern.permute.xlu0 0
      %9256 = vperm.xlu0 %9255, %v9186
      %v9257 = vpop.permute.xlu0 %9256
      %9260 = vset.pattern.permute.xlu0 0
      %9261 = vperm.xlu0 %9260, %v9187
      %v9262 = vpop.permute.xlu0 %9261
      %9265 = vset.pattern.permute.xlu0 0
      %9266 = vperm.xlu0 %9265, %v9188
      %v9267 = vpop.permute.xlu0 %9266
      %9269 = vmatprep.subr.mxu0 0.0
      %9270 = vmatpush1.msra.mxu0 %v9109
      %9271 = vmatprep.subr.mxu0 0.0
      %9272 = vmatpush1.msra.mxu0 %v9110
      %9273 = vmatprep.subr.mxu0 0.0
      %9274 = vmatpush1.msra.mxu0 %v9111
      %9275 = vmatprep.subr.mxu0 0.0
      %9276 = vmatpush1.msra.mxu0 %v9112
      %9277 = vmatprep.subr.mxu0 0.0
      %9278 = vmatpush1.msra.mxu0 %v9113
      %9279 = vmatprep.subr.mxu0 0.0
      %9280 = vmatpush1.msra.mxu0 %v9114
      %9281 = vmatprep.subr.mxu0 0.0
      %9282 = vmatpush1.msra.mxu0 %v9115
      %9283 = vmatprep.subr.mxu0 0.0
      %9284 = vmatpush1.msra.mxu0 %v9116
      %9285 = vmatprep.subr.mxu0 0.0
      %9286 = vmatpush1.msra.mxu0 %v9117
      %9287 = vmatprep.subr.mxu0 0.0
      %9288 = vmatpush1.msra.mxu0 %v9118
      %9289 = vmatprep.subr.mxu0 0.0
      %9290 = vmatpush1.msra.mxu0 %v9119
      %9291 = vmatprep.subr.mxu0 0.0
      %9292 = vmatpush1.msra.mxu0 %v9120
      %9293 = vmatprep.subr.mxu0 0.0
      %9294 = vmatpush1.msra.mxu0 %v9121
      %9295 = vmatprep.subr.mxu0 0.0
      %9296 = vmatpush1.msra.mxu0 %v9122
      %9297 = vmatprep.subr.mxu0 0.0
      %9298 = vmatpush1.msra.mxu0 %v9123
      %9299 = vmatprep.subr.mxu0 0.0
      %9300 = vmatpush1.msra.mxu0 %v9124
      %9301 = vmatprep.subr.mxu0 0.0
      %9302 = vmatpush1.msra.mxu0 %v9125
      %9303 = vmatprep.subr.mxu0 0.0
      %9304 = vmatpush1.msra.mxu0 %v9126
      %9305 = vmatprep.subr.mxu0 0.0
      %9306 = vmatpush1.msra.mxu0 %v9127
      %9307 = vmatprep.subr.mxu0 0.0
      %9308 = vmatpush1.msra.mxu0 %v9128
      %9309 = vmatprep.subr.mxu0 0.0
      %9310 = vmatpush1.msra.mxu0 %v9129
      %9311 = vmatprep.subr.mxu0 0.0
      %9312 = vmatpush1.msra.mxu0 %v9130
      %9313 = vmatprep.subr.mxu0 0.0
      %9314 = vmatpush1.msra.mxu0 %v9131
      %9315 = vmatprep.subr.mxu0 0.0
      %9316 = vmatpush1.msra.mxu0 %v9132
      %9317 = vmatprep.subr.mxu0 0.0
      %9318 = vmatpush1.msra.mxu0 %v9133
      %9319 = vmatprep.subr.mxu0 0.0
      %9320 = vmatpush1.msra.mxu0 %v9134
      %9321 = vmatprep.subr.mxu0 0.0
      %9322 = vmatpush1.msra.mxu0 %v9135
      %9323 = vmatprep.subr.mxu0 0.0
      %9324 = vmatpush1.msra.mxu0 %v9136
      %9325 = vmatprep.subr.mxu0 0.0
      %9326 = vmatpush1.msra.mxu0 %v9137
      %9327 = vmatprep.subr.mxu0 0.0
      %9328 = vmatpush1.msra.mxu0 %v9138
      %9329 = vmatprep.subr.mxu0 0.0
      %9330 = vmatpush1.msra.mxu0 %v9139
      %9331 = vmatprep.subr.mxu0 0.0
      %9332 = vmatpush1.msra.mxu0 %v9140
      %9333 = vmatprep.mubr.f32.mxu0 %v9142
      %9334 = vmatmul.mubr.f32.gmra.mrb[0].mxu0 %v9141
      %v9335 = vpop.f32.mrb[0].mxu0
      %v9336 = vadd.f32 %v9192, %v9335
      %v9337 = vpop.f32.mrb[0].mxu0
      %9338 = vmatprep.mubr.f32.mxu0 %v9144
      %9339 = vmatmul.mubr.f32.gmra.mrb[0].mxu0 %v9143
      %v9340 = vpop.f32.mrb[0].mxu0
      %v9341 = vadd.f32 %v9197, %v9340
      %v9342 = vpop.f32.mrb[0].mxu0
      %9343 = vmatprep.mubr.f32.mxu0 %v9146
      %9344 = vmatmul.mubr.f32.gmra.mrb[0].mxu0 %v9145
      %v9345 = vpop.f32.mrb[0].mxu0
      %v9346 = vadd.f32 %v9202, %v9345
      %v9347 = vpop.f32.mrb[0].mxu0
      %9348 = vmatprep.mubr.f32.mxu0 %v9148
      %9349 = vmatmul.mubr.f32.gmra.mrb[0].mxu0 %v9147
      %v9350 = vpop.f32.mrb[0].mxu0
      %v9351 = vadd.f32 %v9207, %v9350
      %v9352 = vpop.f32.mrb[0].mxu0
      %9353 = vmatprep.mubr.f32.mxu0 %v9150
      %9354 = vmatmul.mubr.f32.gmra.mrb[0].mxu0 %v9149
      %v9355 = vpop.f32.mrb[0].mxu0
      %v9356 = vadd.f32 %v9212, %v9355
      %v9357 = vpop.f32.mrb[0].mxu0
      %9358 = vmatprep.mubr.f32.mxu0 %v9152
      %9359 = vmatmul.mubr.f32.gmra.mrb[0].mxu0 %v9151
      %v9360 = vpop.f32.mrb[0].mxu0
      %v9361 = vadd.f32 %v9217, %v9360
      %v9362 = vpop.f32.mrb[0].mxu0
      %9363 = vmatprep.mubr.f32.mxu0 %v9154
      %9364 = vmatmul.mubr.f32.gmra.mrb[0].mxu0 %v9153
      %v9365 = vpop.f32.mrb[0].mxu0
      %v9366 = vadd.f32 %v9222, %v9365
      %v9367 = vpop.f32.mrb[0].mxu0
      %9368 = vmatprep.mubr.f32.mxu0 %v9156
      %9369 = vmatmul.mubr.f32.gmra.mrb[0].mxu0 %v9155
      %v9370 = vpop.f32.mrb[0].mxu0
      %v9371 = vadd.f32 %v9227, %v9370
      %v9372 = vpop.f32.mrb[0].mxu0
      %9373 = vmatprep.mubr.f32.mxu0 %v9158
      %9374 = vmatmul.mubr.f32.gmra.mrb[0].mxu0 %v9157
      %v9375 = vpop.f32.mrb[0].mxu0
      %v9376 = vadd.f32 %v9232, %v9375
      %v9377 = vpop.f32.mrb[0].mxu0
      %9378 = vmatprep.mubr.f32.mxu0 %v9160
      %9379 = vmatmul.mubr.f32.gmra.mrb[0].mxu0 %v9159
      %v9380 = vpop.f32.mrb[0].mxu0
      %v9381 = vadd.f32 %v9237, %v9380
      %v9382 = vpop.f32.mrb[0].mxu0
      %9383 = vmatprep.mubr.f32.mxu0 %v9162
      %9384 = vmatmul.mubr.f32.gmra.mrb[0].mxu0 %v9161
      %v9385 = vpop.f32.mrb[0].mxu0
      %v9386 = vadd.f32 %v9242, %v9385
      %v9387 = vpop.f32.mrb[0].mxu0
      %9388 = vmatprep.mubr.f32.mxu0 %v9164
      %9389 = vmatmul.mubr.f32.gmra.mrb[0].mxu0 %v9163
      %v9390 = vpop.f32.mrb[0].mxu0
      %v9391 = vadd.f32 %v9247, %v9390
      %v9392 = vpop.f32.mrb[0].mxu0
      %9393 = vmatprep.mubr.f32.mxu0 %v9166
      %9394 = vmatmul.mubr.f32.gmra.mrb[0].mxu0 %v9165
      %v9395 = vpop.f32.mrb[0].mxu0
      %v9396 = vadd.f32 %v9252, %v9395
      %v9397 = vpop.f32.mrb[0].mxu0
      %9398 = vmatprep.mubr.f32.mxu0 %v9168
      %9399 = vmatmul.mubr.f32.gmra.mrb[0].mxu0 %v9167
      %v9400 = vpop.f32.mrb[0].mxu0
      %v9401 = vadd.f32 %v9257, %v9400
      %v9402 = vpop.f32.mrb[0].mxu0
      %9403 = vmatprep.mubr.f32.mxu0 %v9170
      %9404 = vmatmul.mubr.f32.gmra.mrb[0].mxu0 %v9169
      %v9405 = vpop.f32.mrb[0].mxu0
      %v9406 = vadd.f32 %v9262, %v9405
      %v9407 = vpop.f32.mrb[0].mxu0
      %9408 = vmatprep.mubr.f32.mxu0 %v9172
      %9409 = vmatmul.mubr.f32.gmra.mrb[0].mxu0 %v9171
      %v9410 = vpop.f32.mrb[0].mxu0
      %v9411 = vadd.f32 %v9267, %v9410
      %v9412 = vpop.f32.mrb[0].mxu0
      %9413 = vdwg.mxu0
      %v9414 = vld [vmem:[%s13] sm:$0xff]
      %v9415 = vld [vmem:[%s13 + $0x8] sm:$0xff]
      %v9416 = vld [vmem:[%s13 + $0x10] sm:$0xff]
      %v9417 = vld [vmem:[%s13 + $0x18] sm:$0xff]
      %v9418 = vld [vmem:[%s13 + $0x20] sm:$0xff]
      %v9419 = vld [vmem:[%s13 + $0x28] sm:$0xff]
      %v9420 = vld [vmem:[%s13 + $0x30] sm:$0xff]
      %v9421 = vld [vmem:[%s13 + $0x38] sm:$0xff]
      %v9422 = vld [vmem:[%s13 + $0x40] sm:$0xff]
      %v9423 = vld [vmem:[%s13 + $0x48] sm:$0xff]
      %v9424 = vld [vmem:[%s13 + $0x50] sm:$0xff]
      %v9425 = vld [vmem:[%s13 + $0x58] sm:$0xff]
      %v9426 = vld [vmem:[%s13 + $0x60] sm:$0xff]
      %v9427 = vld [vmem:[%s13 + $0x68] sm:$0xff]
      %v9428 = vld [vmem:[%s13 + $0x70] sm:$0xff]
      %v9429 = vld [vmem:[%s13 + $0x78] sm:$0xff]
      %9431 = vset.pattern.permute.xlu0 0
      %9432 = vperm.xlu0 %9431, %v9414
      %v9433 = vpop.permute.xlu0 %9432
      %9436 = vset.pattern.permute.xlu0 0
      %9437 = vperm.xlu0 %9436, %v9415
      %v9438 = vpop.permute.xlu0 %9437
      %9441 = vset.pattern.permute.xlu0 0
      %9442 = vperm.xlu0 %9441, %v9416
      %v9443 = vpop.permute.xlu0 %9442
      %9446 = vset.pattern.permute.xlu0 0
      %9447 = vperm.xlu0 %9446, %v9417
      %v9448 = vpop.permute.xlu0 %9447
      %9451 = vset.pattern.permute.xlu0 0
      %9452 = vperm.xlu0 %9451, %v9418
      %v9453 = vpop.permute.xlu0 %9452
      %9456 = vset.pattern.permute.xlu0 0
      %9457 = vperm.xlu0 %9456, %v9419
      %v9458 = vpop.permute.xlu0 %9457
      %9461 = vset.pattern.permute.xlu0 0
      %9462 = vperm.xlu0 %9461, %v9420
      %v9463 = vpop.permute.xlu0 %9462
      %9466 = vset.pattern.permute.xlu0 0
      %9467 = vperm.xlu0 %9466, %v9421
      %v9468 = vpop.permute.xlu0 %9467
      %9471 = vset.pattern.permute.xlu0 0
      %9472 = vperm.xlu0 %9471, %v9422
      %v9473 = vpop.permute.xlu0 %9472
      %9476 = vset.pattern.permute.xlu0 0
      %9477 = vperm.xlu0 %9476, %v9423
      %v9478 = vpop.permute.xlu0 %9477
      %9481 = vset.pattern.permute.xlu0 0
      %9482 = vperm.xlu0 %9481, %v9424
      %v9483 = vpop.permute.xlu0 %9482
      %9486 = vset.pattern.permute.xlu0 0
      %9487 = vperm.xlu0 %9486, %v9425
      %v9488 = vpop.permute.xlu0 %9487
      %9491 = vset.pattern.permute.xlu0 0
      %9492 = vperm.xlu0 %9491, %v9426
      %v9493 = vpop.permute.xlu0 %9492
      %9496 = vset.pattern.permute.xlu0 0
      %9497 = vperm.xlu0 %9496, %v9427
      %v9498 = vpop.permute.xlu0 %9497
      %9501 = vset.pattern.permute.xlu0 0
      %9502 = vperm.xlu0 %9501, %v9428
      %v9503 = vpop.permute.xlu0 %9502
      %9506 = vset.pattern.permute.xlu0 0
      %9507 = vperm.xlu0 %9506, %v9429
      %v9508 = vpop.permute.xlu0 %9507
      %v9510 = vadd.f32 %v9336, %v9433
      %v9511 = vadd.f32 %v9341, %v9438
      %v9512 = vadd.f32 %v9346, %v9443
      %v9513 = vadd.f32 %v9351, %v9448
      %v9514 = vadd.f32 %v9356, %v9453
      %v9515 = vadd.f32 %v9361, %v9458
      %v9516 = vadd.f32 %v9366, %v9463
      %v9517 = vadd.f32 %v9371, %v9468
      %v9518 = vadd.f32 %v9376, %v9473
      %v9519 = vadd.f32 %v9381, %v9478
      %v9520 = vadd.f32 %v9386, %v9483
      %v9521 = vadd.f32 %v9391, %v9488
      %v9522 = vadd.f32 %v9396, %v9493
      %v9523 = vadd.f32 %v9401, %v9498
      %v9524 = vadd.f32 %v9406, %v9503
      %v9525 = vadd.f32 %v9411, %v9508
      %9526 = vst.msk [vmem:[%s14] sm:$0xff] %vm3691, %v9510
      %9527 = vst.msk [vmem:[%s14 + $0x8] sm:$0xff] %vm3691, %v9511
      %9528 = vst.msk [vmem:[%s14 + $0x10] sm:$0xff] %vm3691, %v9512
      %9529 = vst.msk [vmem:[%s14 + $0x18] sm:$0xff] %vm3691, %v9513
      %9530 = vst.msk [vmem:[%s14 + $0x20] sm:$0xff] %vm3691, %v9514
      %9531 = vst.msk [vmem:[%s14 + $0x28] sm:$0xff] %vm3691, %v9515
      %9532 = vst.msk [vmem:[%s14 + $0x30] sm:$0xff] %vm3691, %v9516
      %9533 = vst.msk [vmem:[%s14 + $0x38] sm:$0xff] %vm3691, %v9517
      %9534 = vst.msk [vmem:[%s14 + $0x40] sm:$0xff] %vm3691, %v9518
      %9535 = vst.msk [vmem:[%s14 + $0x48] sm:$0xff] %vm3691, %v9519
      %9536 = vst.msk [vmem:[%s14 + $0x50] sm:$0xff] %vm3691, %v9520
      %9537 = vst.msk [vmem:[%s14 + $0x58] sm:$0xff] %vm3691, %v9521
      %9538 = vst.msk [vmem:[%s14 + $0x60] sm:$0xff] %vm3691, %v9522
      %9539 = vst.msk [vmem:[%s14 + $0x68] sm:$0xff] %vm3691, %v9523
      %9540 = vst.msk [vmem:[%s14 + $0x70] sm:$0xff] %vm3691, %v9524
      %9541 = vst.msk [vmem:[%s14 + $0x78] sm:$0xff] %vm3691, %v9525
    $region73: #{stn3d_forward.1} parent=1 // pred_fallthru
      _
    // Predicated region
    $region74: #{stn3d_forward.1} parent=1 // pred_check
      _
    $region75: #{stn3d_forward.1} parent=1 // pred_check_branch
      %9543 = sbr.rel (0) target = $region77
    $region76: #{stn3d_forward.1} parent=1 // pred_region
      _
    $region77: #{stn3d_forward.1} parent=1 // pred_fallthru
      _
    // Predicated region
    $region78: #{stn3d_forward.1} parent=1 // pred_check
      _
    $region79: #{stn3d_forward.1} parent=1 // pred_check_branch
      %9545 = sbr.rel (0) target = $region81
    $region80: #{stn3d_forward.1} parent=1 // pred_region
      _
    $region81: #{stn3d_forward.1} parent=1 // pred_fallthru
      _
    %9546 = vsyncpa [#allocation4], 1
    %9547 = vsyncpa [#allocation6], 1

</llo_original>
